<compile_context>
chip_gen: v5e
topology: v5e:2x2
jax: 0.10.0
libtpu: 0.0.40
codegen_flags: <defaults>
</compile_context>

<pallas_src>
import functools

import numpy as np
import jax
import jax.numpy as jnp
from jax.experimental import pallas as pl
from jax.experimental.pallas import tpu as pltpu


# ---------------------------------------------------------------------------
# Fused tower kernel: one grid step == `bt` batch samples.
# ---------------------------------------------------------------------------
def _tower_kernel(xs_ref, xsp_ref, vb56_ref, perm_ref, mask_ref,
                  w1_ref, b1_ref, w2_ref, b2_ref, w3_ref, b3_ref,
                  w4_ref, b4_ref, w56_ref, w7_ref, b7_ref, w8_ref, b8_ref,
                  o_ref,
                  a1p, p56f, p7f,
                  *, s, h1, k, k2, bt, pool):
    f32 = jnp.float32
    bf16 = jnp.bfloat16
    sp = s + 2                      # padded width of the second-half planes
    L = s * sp - 2                  # "gappy" flat output length
    inv_area = 1.0 / float(s * s)

    # ---- zero the padding once per grid step (interiors are rewritten) ----
    a1p[0:1, :, :] = jnp.zeros((1, h1 + 2, k), bf16)
    a1p[h1 + 1:h1 + 2, :, :] = jnp.zeros((1, h1 + 2, k), bf16)
    a1p[:, 0:1, :] = jnp.zeros((h1 + 2, 1, k), bf16)
    a1p[:, h1 + 1:h1 + 2, :] = jnp.zeros((h1 + 2, 1, k), bf16)
    p56f[...] = jnp.zeros((sp * sp, k), bf16)
    p7f[...] = jnp.zeros((sp * sp, k2), bf16)

    # Small constants hoisted out of the per-sample loop.
    w1 = w1_ref[...]
    b1 = b1_ref[...]
    b2 = b2_ref[...]
    b3 = b3_ref[...]
    b4 = b4_ref[...]
    b7 = b7_ref[...]
    b8 = b8_ref[...]
    w8 = w8_ref[...]
    perm = perm_ref[...]
    mask = mask_ref[...]            # (L, 1) f32; 0 on the garbage rows

    for t in range(bt):
        # ---- conv1 (2x2 / stride 2): one GEMM on space-to-depth input ------
        y1 = jnp.dot(xs_ref[t], w1, preferred_element_type=f32)
        y1 = jnp.maximum(y1 + b1, 0.0)                        # (h1*h1, k)
        a1p[1:1 + h1, 1:1 + h1, :] = y1.reshape(h1, h1, k).astype(bf16)

        # ---- conv2 (2x2 / stride 2): 4 per-tap whole-plane GEMMs on the
        #      parity-ordered conv1 activations (recomputed from the tiny
        #      parity-ordered image copy -- avoids any strided extraction) ---
        acc2 = jnp.zeros((s * s, k), f32)
        for p in range(4):
            y1p = jnp.dot(xsp_ref[t, p], w1, preferred_element_type=f32)
            y1p = jnp.maximum(y1p + b1, 0.0).astype(bf16)     # (s*s, k)
            acc2 = acc2 + jnp.dot(y1p, w2_ref[p], preferred_element_type=f32)
        skip2 = jnp.maximum(acc2 + b2, 0.0)                   # (s*s, k) f32

        # ---- conv3 (3x3 / pad 1): 9 whole-plane per-tap GEMMs --------------
        acc3 = jnp.zeros((h1 * h1, k2), f32)
        for di in range(3):
            for dj in range(3):
                win = a1p[di:di + h1, dj:dj + h1, :].reshape(h1 * h1, k)
                acc3 = acc3 + jnp.dot(win, w3_ref[di, dj],
                                      preferred_element_type=f32)
        y3 = jnp.maximum(acc3 + b3, 0.0).astype(bf16)         # (h1*h1, k2)

        # ---- conv4 (2x2 / stride 2): parity gather via a constant 0/1
        #      permutation GEMM on the MXU, then 4 per-tap GEMMs -------------
        y3p = jnp.dot(perm, y3, preferred_element_type=f32)   # (4*s*s, k2)
        acc4 = jnp.zeros((s * s, k), f32)
        for p in range(4):
            tap = y3p[p * s * s:(p + 1) * s * s, :].astype(bf16)
            acc4 = acc4 + jnp.dot(tap, w4_ref[p], preferred_element_type=f32)
        x4 = jnp.maximum(acc4 + b4, 0.0) + skip2              # (s*s, k) f32

        # ---- scatter x4 into the flat zero-padded plane (interior rows) ----
        x4b = x4.astype(bf16)
        for a in range(s):
            base = (1 + a) * sp + 1
            p56f[base:base + s, :] = x4b[a * s:(a + 1) * s, :]

        # ---- conv5 + conv6 fused (3x3 / pad 1, Cout = k + k//2); the
        #      viewpoint channels + biases are the precomputed vb56 bias -----
        acc56 = vb56_ref[t]                                   # (L, k+k2) f32
        for di in range(3):
            for dj in range(3):
                off = di * sp + dj
                acc56 = acc56 + jnp.dot(p56f[off:off + L, :], w56_ref[di, dj],
                                        preferred_element_type=f32)
        h5 = jnp.maximum(acc56[:, :k], 0.0)                   # (L, k)  skip
        h6 = jnp.maximum(acc56[:, k:], 0.0) * mask            # (L, k2)
        # garbage rows land exactly on p7's padding columns -> masked to 0.
        p7f[s + 3:s + 3 + L, :] = h6.astype(bf16)

        # ---- conv7 (3x3 / pad 1) + skip (conv5) -----------------------------
        acc7 = jnp.zeros((L, k), f32)
        for di in range(3):
            for dj in range(3):
                off = di * sp + dj
                acc7 = acc7 + jnp.dot(p7f[off:off + L, :], w7_ref[di, dj],
                                      preferred_element_type=f32)
        x7 = jnp.maximum(acc7 + b7, 0.0) + h5                 # (L, k) f32

        # ---- conv8 (1x1) + relu, fused average-pool epilogue ----------------
        r = jnp.dot(x7.astype(bf16), w8, preferred_element_type=f32)
        r = jnp.maximum(r + b8, 0.0)                          # (L, k)

        if pool:
            pooled = jnp.sum(r * mask, axis=0, keepdims=True) * inv_area
            o_ref[t:t + 1, :, :] = pooled.reshape(1, 1, k)
        else:
            o_ref[t:t + 1, :, :] = (r * mask).reshape(1, L, k)


# ---------------------------------------------------------------------------
# Parameters (deterministic synthetic init matching nn.Conv2d shapes),
# weights kept in (kh, kw, Cin, Cout) layout.
# ---------------------------------------------------------------------------
def init_params(key, n_channels, v_dim, r_dim):
    k = r_dim
    defs = {
        "conv1": (2, 2, n_channels, k),
        "conv2": (2, 2, k, k),
        "conv3": (3, 3, k, k // 2),
        "conv4": (2, 2, k // 2, k),
        "conv5": (3, 3, k + v_dim, k),
        "conv6": (3, 3, k + v_dim, k // 2),
        "conv7": (3, 3, k // 2, k),
        "conv8": (1, 1, k, k),
    }
    params = {}
    for name, shp in defs.items():
        key, wk, bk = jax.random.split(key, 3)
        fan_in = shp[0] * shp[1] * shp[2]
        scale = 1.0 / (fan_in ** 0.5)
        params[name] = (
            jax.random.uniform(wk, shp, jnp.float32, -scale, scale),
            jax.random.uniform(bk, (shp[3],), jnp.float32, -scale, scale),
        )
    return params


# ---------------------------------------------------------------------------
# Forward pass (mirrors TowerRepresentation.forward)
# ---------------------------------------------------------------------------
def tower_representation(params, x_nchw, v, *, r_dim, pool=True,
                         batch_block=None):
    f32, bf16 = jnp.float32, jnp.bfloat16
    k = r_dim
    k2 = k // 2
    s = r_dim // 16            # spatial size of the representation grid
    h1 = 2 * s                 # spatial size after conv1
    sp = s + 2
    L = s * sp - 2

    B, cin, H, W = x_nchw.shape
    assert H == W == 4 * s, "image spatial must equal 4 * (r_dim // 16)"
    assert r_dim % 64 == 0, "r_dim must be a multiple of 64"

    if batch_block is None:
        batch_block = max(d for d in (8, 4, 2, 1) if B % d == 0)
    bt = batch_block
    assert B % bt == 0

    # ---- cheap wrapper-side prep (image-sized only) -------------------------
    x = jnp.transpose(x_nchw, (0, 2, 3, 1)).astype(f32)          # NHWC
    # space-to-depth for conv1 (kernel == stride == 2), rows in spatial order.
    xs = x.reshape(B, h1, 2, h1, 2, cin).transpose(0, 1, 3, 2, 4, 5)
    xs_spat = xs.reshape(B, h1 * h1, 4 * cin)
    # the same rows reordered by conv2's stride-2 parity (i, j).
    xs_par = (xs_spat.reshape(B, s, 2, s, 2, 4 * cin)
              .transpose(0, 2, 4, 1, 3, 5)
              .reshape(B, 4, s * s, 4 * cin))

    v = v.reshape(B, -1).astype(f32)

    w1, b1 = params["conv1"]; w2, b2 = params["conv2"]
    w3, b3 = params["conv3"]; w4, b4 = params["conv4"]
    w5, b5 = params["conv5"]; w6, b6 = params["conv6"]
    w7, b7 = params["conv7"]; w8, b8 = params["conv8"]

    # Viewpoint channels are spatially constant (zero in the conv padding
    # border), so conv5/conv6's v contribution + bias folds into a tiny
    # per-position bias computed once here.
    ih = jnp.arange(s)[:, None] + jnp.arange(3)[None, :] - 1
    valid = (ih >= 0) & (ih < s)                                  # (s, 3)
    vmask = (valid[:, None, :, None] & valid[None, :, None, :]).astype(f32)
    wsum5 = jnp.einsum("hwij,ijvc->hwvc", vmask, w5[:, :, k:, :])
    wsum6 = jnp.einsum("hwij,ijvc->hwvc", vmask, w6[:, :, k:, :])
    vb5 = jnp.einsum("bv,hwvc->bhwc", v, wsum5) + b5              # (B, s, s, k)
    vb6 = jnp.einsum("bv,hwvc->bhwc", v, wsum6) + b6              # (B, s, s, k2)
    vb56 = jnp.concatenate([vb5, vb6], axis=-1)                   # (B, s, s, k+k2)
    # lay it out on the flat padded ("gappy") grid used inside the kernel.
    vb56 = jnp.pad(vb56, ((0, 0), (0, 0), (0, 2), (0, 0)))
    vb56 = vb56.reshape(B, s * sp, k + k2)[:, :L, :].astype(f32)

    # constant 0/1 permutation gathering conv3's (h1, h1) plane into conv4's
    # four stride-2 taps (used as an MXU gather inside the kernel).
    rows = np.arange(4 * s * s)
    p_idx = rows // (s * s)
    rem = rows % (s * s)
    aa, bb = rem // s, rem % s
    pi, pj = p_idx // 2, p_idx % 2
    cols = (2 * aa + pi) * h1 + (2 * bb + pj)
    perm_np = np.zeros((4 * s * s, h1 * h1), np.float32)
    perm_np[rows, cols] = 1.0
    perm = jnp.asarray(perm_np, dtype=bf16)

    # valid-row mask of the flat padded output layout.
    mask = jnp.asarray((np.arange(L) % sp < s).astype(np.float32).reshape(L, 1))

    # fuse conv5 + conv6 output channels (one GEMM per tap in-kernel).
    w56 = jnp.concatenate([w5[:, :, :k, :], w6[:, :, :k, :]], axis=-1)

    args = (
        xs_spat.astype(bf16),
        xs_par.astype(bf16),
        vb56,
        perm,
        mask,
        w1.reshape(4 * cin, k).astype(bf16), b1.reshape(1, k).astype(f32),
        w2.reshape(4, k, k).astype(bf16),    b2.reshape(1, k).astype(f32),
        w3.astype(bf16),                     b3.reshape(1, k2).astype(f32),
        w4.reshape(4, k2, k).astype(bf16),   b4.reshape(1, k).astype(f32),
        w56.astype(bf16),
        w7.astype(bf16),                     b7.reshape(1, k).astype(f32),
        w8.reshape(k, k).astype(bf16),       b8.reshape(1, k).astype(f32),
    )

    def _batch_spec(a):
        nd = a.ndim
        return pl.BlockSpec((bt,) + a.shape[1:],
                            lambda g, _nd=nd: (g,) + (0,) * (_nd - 1))

    def _const_spec(a):
        nd = a.ndim
        return pl.BlockSpec(a.shape, lambda g, _nd=nd: (0,) * _nd)

    in_specs = ([_batch_spec(a) for a in args[:3]]
                + [_const_spec(a) for a in args[3:]])

    if pool:
        out_shape = jax.ShapeDtypeStruct((B, 1, k), f32)
        out_spec = pl.BlockSpec((bt, 1, k), lambda g: (g, 0, 0))
    else:
        out_shape = jax.ShapeDtypeStruct((B, L, k), f32)
        out_spec = pl.BlockSpec((bt, L, k), lambda g: (g, 0, 0))

    scratch = [
        pltpu.VMEM((h1 + 2, h1 + 2, k), bf16),   # relu(conv1), zero-padded
        pltpu.VMEM((sp * sp, k), bf16),          # conv4 + skip plane, flat padded
        pltpu.VMEM((sp * sp, k2), bf16),         # relu(conv6) plane, flat padded
    ]

    kern = functools.partial(_tower_kernel, s=s, h1=h1, k=k, k2=k2,
                             bt=bt, pool=pool)

    out = pl.pallas_call(
        kern,
        grid=(B // bt,),
        in_specs=in_specs,
        out_specs=out_spec,
        out_shape=out_shape,
        scratch_shapes=scratch,
        compiler_params=pltpu.CompilerParams(
            dimension_semantics=("parallel",),   # batch blocks over the TCs
        ),
    )(*args)

    if pool:
        return out.reshape(B, k, 1, 1)           # matches AvgPool2d(k // 16)
    # densify the flat padded layout and return NCHW.
    full = jnp.concatenate([out, jnp.zeros((B, 2, k), out.dtype)], axis=1)
    dense = full.reshape(B, s, sp, k)[:, :, :s, :]
    return jnp.transpose(dense, (0, 3, 1, 2))


# ---------------------------------------------------------------------------
if __name__ == "__main__":
    n_channels, v_dim, r_dim = 4, 7, 64
    B = 2
    s = r_dim // 16
    H = W = 4 * s                                # 16x16 input image

    key = jax.random.PRNGKey(0)
    kx, kv, kp = jax.random.split(key, 3)
    x = jax.random.normal(kx, (B, n_channels, H, W), dtype=jnp.float32)
    v = jax.random.normal(kv, (B, v_dim), dtype=jnp.float32)
    params = init_params(kp, n_channels, v_dim, r_dim)

    fwd = jax.jit(functools.partial(tower_representation, r_dim=r_dim, pool=True))
    r = fwd(params, x, v)
    jax.block_until_ready(r)
    assert r.shape == (B, r_dim, 1, 1), r.shape
    assert bool(jnp.all(jnp.isfinite(r)))
    print("KERNEL_OK")
</pallas_src>

<mosaic_0001>
module attributes {stable_mosaic.version = 11 : i64} {
  func.func @_tower_kernel(%arg0: i32, %arg1: memref<2x64x16xbf16, #tpu.memory_space<vmem>>, %arg2: memref<2x4x16x16xbf16, #tpu.memory_space<vmem>>, %arg3: memref<2x22x96xf32, #tpu.memory_space<vmem>>, %arg4: memref<64x64xbf16, #tpu.memory_space<vmem>>, %arg5: memref<22x1xf32, #tpu.memory_space<vmem>>, %arg6: memref<16x64xbf16, #tpu.memory_space<vmem>>, %arg7: memref<1x64xf32, #tpu.memory_space<vmem>>, %arg8: memref<4x64x64xbf16, #tpu.memory_space<vmem>>, %arg9: memref<1x64xf32, #tpu.memory_space<vmem>>, %arg10: memref<3x3x64x32xbf16, #tpu.memory_space<vmem>>, %arg11: memref<1x32xf32, #tpu.memory_space<vmem>>, %arg12: memref<4x32x64xbf16, #tpu.memory_space<vmem>>, %arg13: memref<1x64xf32, #tpu.memory_space<vmem>>, %arg14: memref<3x3x64x96xbf16, #tpu.memory_space<vmem>>, %arg15: memref<3x3x32x64xbf16, #tpu.memory_space<vmem>>, %arg16: memref<1x64xf32, #tpu.memory_space<vmem>>, %arg17: memref<64x64xbf16, #tpu.memory_space<vmem>>, %arg18: memref<1x64xf32, #tpu.memory_space<vmem>>, %arg19: memref<2x1x64xf32, #tpu.memory_space<vmem>>, %arg20: memref<10x10x64xbf16, #tpu.memory_space<vmem>>, %arg21: memref<36x64xbf16, #tpu.memory_space<vmem>>, %arg22: memref<36x32xbf16, #tpu.memory_space<vmem>>) attributes {dimension_semantics = [#tpu.dimension_semantics<parallel>], iteration_bounds = array<i64: 1>, scalar_prefetch = 0 : i64, scratch_operands = 3 : i64, tpu.core_type = #tpu.core_type<tc>, window_params = [{transform_indices = @transform_0, window_bounds = array<i64: 2, 64, 16>}, {transform_indices = @transform_1, window_bounds = array<i64: 2, 4, 16, 16>}, {transform_indices = @transform_2, window_bounds = array<i64: 2, 22, 96>}, {pipeline_mode = #tpu.pipeline_mode<synchronous>, transform_indices = @transform_3, window_bounds = array<i64: 64, 64>}, {pipeline_mode = #tpu.pipeline_mode<synchronous>, transform_indices = @transform_4, window_bounds = array<i64: 22, 1>}, {pipeline_mode = #tpu.pipeline_mode<synchronous>, transform_indices = @transform_5, window_bounds = array<i64: 16, 64>}, {pipeline_mode = #tpu.pipeline_mode<synchronous>, transform_indices = @transform_6, window_bounds = array<i64: 1, 64>}, {pipeline_mode = #tpu.pipeline_mode<synchronous>, transform_indices = @transform_7, window_bounds = array<i64: 4, 64, 64>}, {pipeline_mode = #tpu.pipeline_mode<synchronous>, transform_indices = @transform_8, window_bounds = array<i64: 1, 64>}, {pipeline_mode = #tpu.pipeline_mode<synchronous>, transform_indices = @transform_9, window_bounds = array<i64: 3, 3, 64, 32>}, {pipeline_mode = #tpu.pipeline_mode<synchronous>, transform_indices = @transform_10, window_bounds = array<i64: 1, 32>}, {pipeline_mode = #tpu.pipeline_mode<synchronous>, transform_indices = @transform_11, window_bounds = array<i64: 4, 32, 64>}, {pipeline_mode = #tpu.pipeline_mode<synchronous>, transform_indices = @transform_12, window_bounds = array<i64: 1, 64>}, {pipeline_mode = #tpu.pipeline_mode<synchronous>, transform_indices = @transform_13, window_bounds = array<i64: 3, 3, 64, 96>}, {pipeline_mode = #tpu.pipeline_mode<synchronous>, transform_indices = @transform_14, window_bounds = array<i64: 3, 3, 32, 64>}, {pipeline_mode = #tpu.pipeline_mode<synchronous>, transform_indices = @transform_15, window_bounds = array<i64: 1, 64>}, {pipeline_mode = #tpu.pipeline_mode<synchronous>, transform_indices = @transform_16, window_bounds = array<i64: 64, 64>}, {pipeline_mode = #tpu.pipeline_mode<synchronous>, transform_indices = @transform_17, window_bounds = array<i64: 1, 64>}, {transform_indices = @transform_18, window_bounds = array<i64: 2, 1, 64>}]} {
    %cst = arith.constant 0.000000e+00 : bf16
    %0 = vector.broadcast %cst : bf16 to vector<1x10x64xbf16>
    %c0 = arith.constant 0 : index
    %c0_0 = arith.constant 0 : index
    %c0_1 = arith.constant 0 : index
    %1 = vector.load %arg20[%c0, %c0_0, %c0_1] : memref<10x10x64xbf16, #tpu.memory_space<vmem>>, vector<1x10x64xbf16>
    tpu.vector_store %arg20[%c0, %c0_0, %c0_1], %0 {strides = array<i32>} : memref<10x10x64xbf16, #tpu.memory_space<vmem>>, vector<1x10x64xbf16>,
    %cst_2 = arith.constant 0.000000e+00 : bf16
    %2 = vector.broadcast %cst_2 : bf16 to vector<1x10x64xbf16>
    %c9 = arith.constant 9 : index
    %c0_3 = arith.constant 0 : index
    %c0_4 = arith.constant 0 : index
    %3 = vector.load %arg20[%c9, %c0_3, %c0_4] : memref<10x10x64xbf16, #tpu.memory_space<vmem>>, vector<1x10x64xbf16>
    tpu.vector_store %arg20[%c9, %c0_3, %c0_4], %2 {strides = array<i32>} : memref<10x10x64xbf16, #tpu.memory_space<vmem>>, vector<1x10x64xbf16>,
    %cst_5 = arith.constant 0.000000e+00 : bf16
    %4 = vector.broadcast %cst_5 : bf16 to vector<10x1x64xbf16>
    %c0_6 = arith.constant 0 : index
    %c0_7 = arith.constant 0 : index
    %c0_8 = arith.constant 0 : index
    %5 = vector.load %arg20[%c0_6, %c0_7, %c0_8] : memref<10x10x64xbf16, #tpu.memory_space<vmem>>, vector<10x1x64xbf16>
    tpu.vector_store %arg20[%c0_6, %c0_7, %c0_8], %4 {strides = array<i32>} : memref<10x10x64xbf16, #tpu.memory_space<vmem>>, vector<10x1x64xbf16>,
    %cst_9 = arith.constant 0.000000e+00 : bf16
    %6 = vector.broadcast %cst_9 : bf16 to vector<10x1x64xbf16>
    %c0_10 = arith.constant 0 : index
    %c9_11 = arith.constant 9 : index
    %c0_12 = arith.constant 0 : index
    %7 = vector.load %arg20[%c0_10, %c9_11, %c0_12] : memref<10x10x64xbf16, #tpu.memory_space<vmem>>, vector<10x1x64xbf16>
    tpu.vector_store %arg20[%c0_10, %c9_11, %c0_12], %6 {strides = array<i32>} : memref<10x10x64xbf16, #tpu.memory_space<vmem>>, vector<10x1x64xbf16>,
    %cst_13 = arith.constant 0.000000e+00 : bf16
    %8 = vector.broadcast %cst_13 : bf16 to vector<36x64xbf16>
    %c0_14 = arith.constant 0 : index
    %c0_15 = arith.constant 0 : index
    %9 = vector.load %arg21[%c0_14, %c0_15] : memref<36x64xbf16, #tpu.memory_space<vmem>>, vector<36x64xbf16>
    tpu.vector_store %arg21[%c0_14, %c0_15], %8 {strides = array<i32>} : memref<36x64xbf16, #tpu.memory_space<vmem>>, vector<36x64xbf16>,
    %cst_16 = arith.constant 0.000000e+00 : bf16
    %10 = vector.broadcast %cst_16 : bf16 to vector<36x32xbf16>
    %c0_17 = arith.constant 0 : index
    %c0_18 = arith.constant 0 : index
    %11 = vector.load %arg22[%c0_17, %c0_18] : memref<36x32xbf16, #tpu.memory_space<vmem>>, vector<36x32xbf16>
    tpu.vector_store %arg22[%c0_17, %c0_18], %10 {strides = array<i32>} : memref<36x32xbf16, #tpu.memory_space<vmem>>, vector<36x32xbf16>,
    %c0_19 = arith.constant 0 : index
    %c0_20 = arith.constant 0 : index
    %12 = vector.load %arg6[%c0_19, %c0_20] : memref<16x64xbf16, #tpu.memory_space<vmem>>, vector<16x64xbf16>
    %c0_21 = arith.constant 0 : index
    %c0_22 = arith.constant 0 : index
    %13 = vector.load %arg7[%c0_21, %c0_22] : memref<1x64xf32, #tpu.memory_space<vmem>>, vector<1x64xf32>
    %c0_23 = arith.constant 0 : index
    %c0_24 = arith.constant 0 : index
    %14 = vector.load %arg9[%c0_23, %c0_24] : memref<1x64xf32, #tpu.memory_space<vmem>>, vector<1x64xf32>
    %c0_25 = arith.constant 0 : index
    %c0_26 = arith.constant 0 : index
    %15 = vector.load %arg11[%c0_25, %c0_26] : memref<1x32xf32, #tpu.memory_space<vmem>>, vector<1x32xf32>
    %c0_27 = arith.constant 0 : index
    %c0_28 = arith.constant 0 : index
    %16 = vector.load %arg13[%c0_27, %c0_28] : memref<1x64xf32, #tpu.memory_space<vmem>>, vector<1x64xf32>
    %c0_29 = arith.constant 0 : index
    %c0_30 = arith.constant 0 : index
    %17 = vector.load %arg16[%c0_29, %c0_30] : memref<1x64xf32, #tpu.memory_space<vmem>>, vector<1x64xf32>
    %c0_31 = arith.constant 0 : index
    %c0_32 = arith.constant 0 : index
    %18 = vector.load %arg18[%c0_31, %c0_32] : memref<1x64xf32, #tpu.memory_space<vmem>>, vector<1x64xf32>
    %c0_33 = arith.constant 0 : index
    %c0_34 = arith.constant 0 : index
    %19 = vector.load %arg17[%c0_33, %c0_34] : memref<64x64xbf16, #tpu.memory_space<vmem>>, vector<64x64xbf16>
    %c0_35 = arith.constant 0 : index
    %c0_36 = arith.constant 0 : index
    %20 = vector.load %arg4[%c0_35, %c0_36] : memref<64x64xbf16, #tpu.memory_space<vmem>>, vector<64x64xbf16>
    %c0_37 = arith.constant 0 : index
    %c0_38 = arith.constant 0 : index
    %21 = vector.load %arg5[%c0_37, %c0_38] : memref<22x1xf32, #tpu.memory_space<vmem>>, vector<22x1xf32>
    %c0_39 = arith.constant 0 : index
    %c0_40 = arith.constant 0 : index
    %c0_41 = arith.constant 0 : index
    %22 = vector.load %arg1[%c0_39, %c0_40, %c0_41] : memref<2x64x16xbf16, #tpu.memory_space<vmem>>, vector<1x64x16xbf16>
    %23 = vector.shape_cast %22 : vector<1x64x16xbf16> to vector<64x16xbf16>
    %cst_42 = arith.constant dense<0.000000e+00> : vector<64x64xf32>
    %24 = tpu.matmul %23, %12, %cst_42 {dimension_numbers = #tpu.dot_dimension_numbers<[1], [0], [0], [1], [0, 0, 1, 1], [], []>} : vector<64x16xbf16>, vector<16x64xbf16>, vector<64x64xf32> -> vector<64x64xf32>
    %25 = vector.broadcast %13 : vector<1x64xf32> to vector<64x64xf32>
    %26 = arith.addf %24, %25 : vector<64x64xf32>
    %cst_43 = arith.constant 0.000000e+00 : f32
    %27 = vector.broadcast %cst_43 : f32 to vector<64x64xf32>
    %28 = arith.maximumf %26, %27 : vector<64x64xf32>
    %29 = vector.shape_cast %28 : vector<64x64xf32> to vector<8x8x64xf32>
    %30 = arith.truncf %29 : vector<8x8x64xf32> to vector<8x8x64xbf16>
    %c1 = arith.constant 1 : index
    %c1_44 = arith.constant 1 : index
    %c0_45 = arith.constant 0 : index
    %31 = vector.load %arg20[%c1, %c1_44, %c0_45] : memref<10x10x64xbf16, #tpu.memory_space<vmem>>, vector<8x8x64xbf16>
    tpu.vector_store %arg20[%c1, %c1_44, %c0_45], %30 {strides = array<i32>} : memref<10x10x64xbf16, #tpu.memory_space<vmem>>, vector<8x8x64xbf16>,
    %cst_46 = arith.constant 0.000000e+00 : f32
    %32 = vector.broadcast %cst_46 : f32 to vector<16x64xf32>
    %c0_47 = arith.constant 0 : index
    %c0_48 = arith.constant 0 : index
    %c0_49 = arith.constant 0 : index
    %c0_50 = arith.constant 0 : index
    %33 = vector.load %arg2[%c0_47, %c0_48, %c0_49, %c0_50] : memref<2x4x16x16xbf16, #tpu.memory_space<vmem>>, vector<1x1x16x16xbf16>
    %34 = vector.shape_cast %33 : vector<1x1x16x16xbf16> to vector<16x16xbf16>
    %cst_51 = arith.constant dense<0.000000e+00> : vector<16x64xf32>
    %35 = tpu.matmul %34, %12, %cst_51 {dimension_numbers = #tpu.dot_dimension_numbers<[1], [0], [0], [1], [0, 0, 1, 1], [], []>} : vector<16x16xbf16>, vector<16x64xbf16>, vector<16x64xf32> -> vector<16x64xf32>
    %36 = vector.broadcast %13 : vector<1x64xf32> to vector<16x64xf32>
    %37 = arith.addf %35, %36 : vector<16x64xf32>
    %cst_52 = arith.constant 0.000000e+00 : f32
    %38 = vector.broadcast %cst_52 : f32 to vector<16x64xf32>
    %39 = arith.maximumf %37, %38 : vector<16x64xf32>
    %40 = arith.truncf %39 : vector<16x64xf32> to vector<16x64xbf16>
    %c0_53 = arith.constant 0 : index
    %c0_54 = arith.constant 0 : index
    %c0_55 = arith.constant 0 : index
    %41 = vector.load %arg8[%c0_53, %c0_54, %c0_55] : memref<4x64x64xbf16, #tpu.memory_space<vmem>>, vector<1x64x64xbf16>
    %42 = vector.shape_cast %41 : vector<1x64x64xbf16> to vector<64x64xbf16>
    %cst_56 = arith.constant dense<0.000000e+00> : vector<16x64xf32>
    %43 = tpu.matmul %40, %42, %cst_56 {dimension_numbers = #tpu.dot_dimension_numbers<[1], [0], [0], [1], [0, 0, 1, 1], [], []>} : vector<16x64xbf16>, vector<64x64xbf16>, vector<16x64xf32> -> vector<16x64xf32>
    %44 = arith.addf %32, %43 : vector<16x64xf32>
    %c0_57 = arith.constant 0 : index
    %c1_58 = arith.constant 1 : index
    %c0_59 = arith.constant 0 : index
    %c0_60 = arith.constant 0 : index
    %45 = vector.load %arg2[%c0_57, %c1_58, %c0_59, %c0_60] : memref<2x4x16x16xbf16, #tpu.memory_space<vmem>>, vector<1x1x16x16xbf16>
    %46 = vector.shape_cast %45 : vector<1x1x16x16xbf16> to vector<16x16xbf16>
    %cst_61 = arith.constant dense<0.000000e+00> : vector<16x64xf32>
    %47 = tpu.matmul %46, %12, %cst_61 {dimension_numbers = #tpu.dot_dimension_numbers<[1], [0], [0], [1], [0, 0, 1, 1], [], []>} : vector<16x16xbf16>, vector<16x64xbf16>, vector<16x64xf32> -> vector<16x64xf32>
    %48 = vector.broadcast %13 : vector<1x64xf32> to vector<16x64xf32>
    %49 = arith.addf %47, %48 : vector<16x64xf32>
    %cst_62 = arith.constant 0.000000e+00 : f32
    %50 = vector.broadcast %cst_62 : f32 to vector<16x64xf32>
    %51 = arith.maximumf %49, %50 : vector<16x64xf32>
    %52 = arith.truncf %51 : vector<16x64xf32> to vector<16x64xbf16>
    %c1_63 = arith.constant 1 : index
    %c0_64 = arith.constant 0 : index
    %c0_65 = arith.constant 0 : index
    %53 = vector.load %arg8[%c1_63, %c0_64, %c0_65] : memref<4x64x64xbf16, #tpu.memory_space<vmem>>, vector<1x64x64xbf16>
    %54 = vector.shape_cast %53 : vector<1x64x64xbf16> to vector<64x64xbf16>
    %cst_66 = arith.constant dense<0.000000e+00> : vector<16x64xf32>
    %55 = tpu.matmul %52, %54, %cst_66 {dimension_numbers = #tpu.dot_dimension_numbers<[1], [0], [0], [1], [0, 0, 1, 1], [], []>} : vector<16x64xbf16>, vector<64x64xbf16>, vector<16x64xf32> -> vector<16x64xf32>
    %56 = arith.addf %44, %55 : vector<16x64xf32>
    %c0_67 = arith.constant 0 : index
    %c2 = arith.constant 2 : index
    %c0_68 = arith.constant 0 : index
    %c0_69 = arith.constant 0 : index
    %57 = vector.load %arg2[%c0_67, %c2, %c0_68, %c0_69] : memref<2x4x16x16xbf16, #tpu.memory_space<vmem>>, vector<1x1x16x16xbf16>
    %58 = vector.shape_cast %57 : vector<1x1x16x16xbf16> to vector<16x16xbf16>
    %cst_70 = arith.constant dense<0.000000e+00> : vector<16x64xf32>
    %59 = tpu.matmul %58, %12, %cst_70 {dimension_numbers = #tpu.dot_dimension_numbers<[1], [0], [0], [1], [0, 0, 1, 1], [], []>} : vector<16x16xbf16>, vector<16x64xbf16>, vector<16x64xf32> -> vector<16x64xf32>
    %60 = vector.broadcast %13 : vector<1x64xf32> to vector<16x64xf32>
    %61 = arith.addf %59, %60 : vector<16x64xf32>
    %cst_71 = arith.constant 0.000000e+00 : f32
    %62 = vector.broadcast %cst_71 : f32 to vector<16x64xf32>
    %63 = arith.maximumf %61, %62 : vector<16x64xf32>
    %64 = arith.truncf %63 : vector<16x64xf32> to vector<16x64xbf16>
    %c2_72 = arith.constant 2 : index
    %c0_73 = arith.constant 0 : index
    %c0_74 = arith.constant 0 : index
    %65 = vector.load %arg8[%c2_72, %c0_73, %c0_74] : memref<4x64x64xbf16, #tpu.memory_space<vmem>>, vector<1x64x64xbf16>
    %66 = vector.shape_cast %65 : vector<1x64x64xbf16> to vector<64x64xbf16>
    %cst_75 = arith.constant dense<0.000000e+00> : vector<16x64xf32>
    %67 = tpu.matmul %64, %66, %cst_75 {dimension_numbers = #tpu.dot_dimension_numbers<[1], [0], [0], [1], [0, 0, 1, 1], [], []>} : vector<16x64xbf16>, vector<64x64xbf16>, vector<16x64xf32> -> vector<16x64xf32>
    %68 = arith.addf %56, %67 : vector<16x64xf32>
    %c0_76 = arith.constant 0 : index
    %c3 = arith.constant 3 : index
    %c0_77 = arith.constant 0 : index
    %c0_78 = arith.constant 0 : index
    %69 = vector.load %arg2[%c0_76, %c3, %c0_77, %c0_78] : memref<2x4x16x16xbf16, #tpu.memory_space<vmem>>, vector<1x1x16x16xbf16>
    %70 = vector.shape_cast %69 : vector<1x1x16x16xbf16> to vector<16x16xbf16>
    %cst_79 = arith.constant dense<0.000000e+00> : vector<16x64xf32>
    %71 = tpu.matmul %70, %12, %cst_79 {dimension_numbers = #tpu.dot_dimension_numbers<[1], [0], [0], [1], [0, 0, 1, 1], [], []>} : vector<16x16xbf16>, vector<16x64xbf16>, vector<16x64xf32> -> vector<16x64xf32>
    %72 = vector.broadcast %13 : vector<1x64xf32> to vector<16x64xf32>
    %73 = arith.addf %71, %72 : vector<16x64xf32>
    %cst_80 = arith.constant 0.000000e+00 : f32
    %74 = vector.broadcast %cst_80 : f32 to vector<16x64xf32>
    %75 = arith.maximumf %73, %74 : vector<16x64xf32>
    %76 = arith.truncf %75 : vector<16x64xf32> to vector<16x64xbf16>
    %c3_81 = arith.constant 3 : index
    %c0_82 = arith.constant 0 : index
    %c0_83 = arith.constant 0 : index
    %77 = vector.load %arg8[%c3_81, %c0_82, %c0_83] : memref<4x64x64xbf16, #tpu.memory_space<vmem>>, vector<1x64x64xbf16>
    %78 = vector.shape_cast %77 : vector<1x64x64xbf16> to vector<64x64xbf16>
    %cst_84 = arith.constant dense<0.000000e+00> : vector<16x64xf32>
    %79 = tpu.matmul %76, %78, %cst_84 {dimension_numbers = #tpu.dot_dimension_numbers<[1], [0], [0], [1], [0, 0, 1, 1], [], []>} : vector<16x64xbf16>, vector<64x64xbf16>, vector<16x64xf32> -> vector<16x64xf32>
    %80 = arith.addf %68, %79 : vector<16x64xf32>
    %81 = vector.broadcast %14 : vector<1x64xf32> to vector<16x64xf32>
    %82 = arith.addf %80, %81 : vector<16x64xf32>
    %cst_85 = arith.constant 0.000000e+00 : f32
    %83 = vector.broadcast %cst_85 : f32 to vector<16x64xf32>
    %84 = arith.maximumf %82, %83 : vector<16x64xf32>
    %cst_86 = arith.constant 0.000000e+00 : f32
    %85 = vector.broadcast %cst_86 : f32 to vector<64x32xf32>
    %c0_87 = arith.constant 0 : index
    %c0_88 = arith.constant 0 : index
    %c0_89 = arith.constant 0 : index
    %86 = vector.load %arg20[%c0_87, %c0_88, %c0_89] : memref<10x10x64xbf16, #tpu.memory_space<vmem>>, vector<8x8x64xbf16>
    %87 = vector.shape_cast %86 : vector<8x8x64xbf16> to vector<64x64xbf16>
    %c0_90 = arith.constant 0 : index
    %c0_91 = arith.constant 0 : index
    %c0_92 = arith.constant 0 : index
    %c0_93 = arith.constant 0 : index
    %88 = vector.load %arg10[%c0_90, %c0_91, %c0_92, %c0_93] : memref<3x3x64x32xbf16, #tpu.memory_space<vmem>>, vector<1x1x64x32xbf16>
    %89 = vector.shape_cast %88 : vector<1x1x64x32xbf16> to vector<64x32xbf16>
    %cst_94 = arith.constant dense<0.000000e+00> : vector<64x32xf32>
    %90 = tpu.matmul %87, %89, %cst_94 {dimension_numbers = #tpu.dot_dimension_numbers<[1], [0], [0], [1], [0, 0, 1, 1], [], []>} : vector<64x64xbf16>, vector<64x32xbf16>, vector<64x32xf32> -> vector<64x32xf32>
    %91 = arith.addf %85, %90 : vector<64x32xf32>
    %c0_95 = arith.constant 0 : index
    %c1_96 = arith.constant 1 : index
    %c0_97 = arith.constant 0 : index
    %92 = vector.load %arg20[%c0_95, %c1_96, %c0_97] : memref<10x10x64xbf16, #tpu.memory_space<vmem>>, vector<8x8x64xbf16>
    %93 = vector.shape_cast %92 : vector<8x8x64xbf16> to vector<64x64xbf16>
    %c0_98 = arith.constant 0 : index
    %c1_99 = arith.constant 1 : index
    %c0_100 = arith.constant 0 : index
    %c0_101 = arith.constant 0 : index
    %94 = vector.load %arg10[%c0_98, %c1_99, %c0_100, %c0_101] : memref<3x3x64x32xbf16, #tpu.memory_space<vmem>>, vector<1x1x64x32xbf16>
    %95 = vector.shape_cast %94 : vector<1x1x64x32xbf16> to vector<64x32xbf16>
    %cst_102 = arith.constant dense<0.000000e+00> : vector<64x32xf32>
    %96 = tpu.matmul %93, %95, %cst_102 {dimension_numbers = #tpu.dot_dimension_numbers<[1], [0], [0], [1], [0, 0, 1, 1], [], []>} : vector<64x64xbf16>, vector<64x32xbf16>, vector<64x32xf32> -> vector<64x32xf32>
    %97 = arith.addf %91, %96 : vector<64x32xf32>
    %c0_103 = arith.constant 0 : index
    %c2_104 = arith.constant 2 : index
    %c0_105 = arith.constant 0 : index
    %98 = vector.load %arg20[%c0_103, %c2_104, %c0_105] : memref<10x10x64xbf16, #tpu.memory_space<vmem>>, vector<8x8x64xbf16>
    %99 = vector.shape_cast %98 : vector<8x8x64xbf16> to vector<64x64xbf16>
    %c0_106 = arith.constant 0 : index
    %c2_107 = arith.constant 2 : index
    %c0_108 = arith.constant 0 : index
    %c0_109 = arith.constant 0 : index
    %100 = vector.load %arg10[%c0_106, %c2_107, %c0_108, %c0_109] : memref<3x3x64x32xbf16, #tpu.memory_space<vmem>>, vector<1x1x64x32xbf16>
    %101 = vector.shape_cast %100 : vector<1x1x64x32xbf16> to vector<64x32xbf16>
    %cst_110 = arith.constant dense<0.000000e+00> : vector<64x32xf32>
    %102 = tpu.matmul %99, %101, %cst_110 {dimension_numbers = #tpu.dot_dimension_numbers<[1], [0], [0], [1], [0, 0, 1, 1], [], []>} : vector<64x64xbf16>, vector<64x32xbf16>, vector<64x32xf32> -> vector<64x32xf32>
    %103 = arith.addf %97, %102 : vector<64x32xf32>
    %c1_111 = arith.constant 1 : index
    %c0_112 = arith.constant 0 : index
    %c0_113 = arith.constant 0 : index
    %104 = vector.load %arg20[%c1_111, %c0_112, %c0_113] : memref<10x10x64xbf16, #tpu.memory_space<vmem>>, vector<8x8x64xbf16>
    %105 = vector.shape_cast %104 : vector<8x8x64xbf16> to vector<64x64xbf16>
    %c1_114 = arith.constant 1 : index
    %c0_115 = arith.constant 0 : index
    %c0_116 = arith.constant 0 : index
    %c0_117 = arith.constant 0 : index
    %106 = vector.load %arg10[%c1_114, %c0_115, %c0_116, %c0_117] : memref<3x3x64x32xbf16, #tpu.memory_space<vmem>>, vector<1x1x64x32xbf16>
    %107 = vector.shape_cast %106 : vector<1x1x64x32xbf16> to vector<64x32xbf16>
    %cst_118 = arith.constant dense<0.000000e+00> : vector<64x32xf32>
    %108 = tpu.matmul %105, %107, %cst_118 {dimension_numbers = #tpu.dot_dimension_numbers<[1], [0], [0], [1], [0, 0, 1, 1], [], []>} : vector<64x64xbf16>, vector<64x32xbf16>, vector<64x32xf32> -> vector<64x32xf32>
    %109 = arith.addf %103, %108 : vector<64x32xf32>
    %c1_119 = arith.constant 1 : index
    %c1_120 = arith.constant 1 : index
    %c0_121 = arith.constant 0 : index
    %110 = vector.load %arg20[%c1_119, %c1_120, %c0_121] : memref<10x10x64xbf16, #tpu.memory_space<vmem>>, vector<8x8x64xbf16>
    %111 = vector.shape_cast %110 : vector<8x8x64xbf16> to vector<64x64xbf16>
    %c1_122 = arith.constant 1 : index
    %c1_123 = arith.constant 1 : index
    %c0_124 = arith.constant 0 : index
    %c0_125 = arith.constant 0 : index
    %112 = vector.load %arg10[%c1_122, %c1_123, %c0_124, %c0_125] : memref<3x3x64x32xbf16, #tpu.memory_space<vmem>>, vector<1x1x64x32xbf16>
    %113 = vector.shape_cast %112 : vector<1x1x64x32xbf16> to vector<64x32xbf16>
    %cst_126 = arith.constant dense<0.000000e+00> : vector<64x32xf32>
    %114 = tpu.matmul %111, %113, %cst_126 {dimension_numbers = #tpu.dot_dimension_numbers<[1], [0], [0], [1], [0, 0, 1, 1], [], []>} : vector<64x64xbf16>, vector<64x32xbf16>, vector<64x32xf32> -> vector<64x32xf32>
    %115 = arith.addf %109, %114 : vector<64x32xf32>
    %c1_127 = arith.constant 1 : index
    %c2_128 = arith.constant 2 : index
    %c0_129 = arith.constant 0 : index
    %116 = vector.load %arg20[%c1_127, %c2_128, %c0_129] : memref<10x10x64xbf16, #tpu.memory_space<vmem>>, vector<8x8x64xbf16>
    %117 = vector.shape_cast %116 : vector<8x8x64xbf16> to vector<64x64xbf16>
    %c1_130 = arith.constant 1 : index
    %c2_131 = arith.constant 2 : index
    %c0_132 = arith.constant 0 : index
    %c0_133 = arith.constant 0 : index
    %118 = vector.load %arg10[%c1_130, %c2_131, %c0_132, %c0_133] : memref<3x3x64x32xbf16, #tpu.memory_space<vmem>>, vector<1x1x64x32xbf16>
    %119 = vector.shape_cast %118 : vector<1x1x64x32xbf16> to vector<64x32xbf16>
    %cst_134 = arith.constant dense<0.000000e+00> : vector<64x32xf32>
    %120 = tpu.matmul %117, %119, %cst_134 {dimension_numbers = #tpu.dot_dimension_numbers<[1], [0], [0], [1], [0, 0, 1, 1], [], []>} : vector<64x64xbf16>, vector<64x32xbf16>, vector<64x32xf32> -> vector<64x32xf32>
    %121 = arith.addf %115, %120 : vector<64x32xf32>
    %c2_135 = arith.constant 2 : index
    %c0_136 = arith.constant 0 : index
    %c0_137 = arith.constant 0 : index
    %122 = vector.load %arg20[%c2_135, %c0_136, %c0_137] : memref<10x10x64xbf16, #tpu.memory_space<vmem>>, vector<8x8x64xbf16>
    %123 = vector.shape_cast %122 : vector<8x8x64xbf16> to vector<64x64xbf16>
    %c2_138 = arith.constant 2 : index
    %c0_139 = arith.constant 0 : index
    %c0_140 = arith.constant 0 : index
    %c0_141 = arith.constant 0 : index
    %124 = vector.load %arg10[%c2_138, %c0_139, %c0_140, %c0_141] : memref<3x3x64x32xbf16, #tpu.memory_space<vmem>>, vector<1x1x64x32xbf16>
    %125 = vector.shape_cast %124 : vector<1x1x64x32xbf16> to vector<64x32xbf16>
    %cst_142 = arith.constant dense<0.000000e+00> : vector<64x32xf32>
    %126 = tpu.matmul %123, %125, %cst_142 {dimension_numbers = #tpu.dot_dimension_numbers<[1], [0], [0], [1], [0, 0, 1, 1], [], []>} : vector<64x64xbf16>, vector<64x32xbf16>, vector<64x32xf32> -> vector<64x32xf32>
    %127 = arith.addf %121, %126 : vector<64x32xf32>
    %c2_143 = arith.constant 2 : index
    %c1_144 = arith.constant 1 : index
    %c0_145 = arith.constant 0 : index
    %128 = vector.load %arg20[%c2_143, %c1_144, %c0_145] : memref<10x10x64xbf16, #tpu.memory_space<vmem>>, vector<8x8x64xbf16>
    %129 = vector.shape_cast %128 : vector<8x8x64xbf16> to vector<64x64xbf16>
    %c2_146 = arith.constant 2 : index
    %c1_147 = arith.constant 1 : index
    %c0_148 = arith.constant 0 : index
    %c0_149 = arith.constant 0 : index
    %130 = vector.load %arg10[%c2_146, %c1_147, %c0_148, %c0_149] : memref<3x3x64x32xbf16, #tpu.memory_space<vmem>>, vector<1x1x64x32xbf16>
    %131 = vector.shape_cast %130 : vector<1x1x64x32xbf16> to vector<64x32xbf16>
    %cst_150 = arith.constant dense<0.000000e+00> : vector<64x32xf32>
    %132 = tpu.matmul %129, %131, %cst_150 {dimension_numbers = #tpu.dot_dimension_numbers<[1], [0], [0], [1], [0, 0, 1, 1], [], []>} : vector<64x64xbf16>, vector<64x32xbf16>, vector<64x32xf32> -> vector<64x32xf32>
    %133 = arith.addf %127, %132 : vector<64x32xf32>
    %c2_151 = arith.constant 2 : index
    %c2_152 = arith.constant 2 : index
    %c0_153 = arith.constant 0 : index
    %134 = vector.load %arg20[%c2_151, %c2_152, %c0_153] : memref<10x10x64xbf16, #tpu.memory_space<vmem>>, vector<8x8x64xbf16>
    %135 = vector.shape_cast %134 : vector<8x8x64xbf16> to vector<64x64xbf16>
    %c2_154 = arith.constant 2 : index
    %c2_155 = arith.constant 2 : index
    %c0_156 = arith.constant 0 : index
    %c0_157 = arith.constant 0 : index
    %136 = vector.load %arg10[%c2_154, %c2_155, %c0_156, %c0_157] : memref<3x3x64x32xbf16, #tpu.memory_space<vmem>>, vector<1x1x64x32xbf16>
    %137 = vector.shape_cast %136 : vector<1x1x64x32xbf16> to vector<64x32xbf16>
    %cst_158 = arith.constant dense<0.000000e+00> : vector<64x32xf32>
    %138 = tpu.matmul %135, %137, %cst_158 {dimension_numbers = #tpu.dot_dimension_numbers<[1], [0], [0], [1], [0, 0, 1, 1], [], []>} : vector<64x64xbf16>, vector<64x32xbf16>, vector<64x32xf32> -> vector<64x32xf32>
    %139 = arith.addf %133, %138 : vector<64x32xf32>
    %140 = vector.broadcast %15 : vector<1x32xf32> to vector<64x32xf32>
    %141 = arith.addf %139, %140 : vector<64x32xf32>
    %cst_159 = arith.constant 0.000000e+00 : f32
    %142 = vector.broadcast %cst_159 : f32 to vector<64x32xf32>
    %143 = arith.maximumf %141, %142 : vector<64x32xf32>
    %144 = arith.truncf %143 : vector<64x32xf32> to vector<64x32xbf16>
    %cst_160 = arith.constant dense<0.000000e+00> : vector<64x32xf32>
    %145 = tpu.matmul %20, %144, %cst_160 {dimension_numbers = #tpu.dot_dimension_numbers<[1], [0], [0], [1], [0, 0, 1, 1], [], []>} : vector<64x64xbf16>, vector<64x32xbf16>, vector<64x32xf32> -> vector<64x32xf32>
    %cst_161 = arith.constant 0.000000e+00 : f32
    %146 = vector.broadcast %cst_161 : f32 to vector<16x64xf32>
    %147 = vector.extract_strided_slice %145 {offsets = [0, 0], sizes = [16, 32], strides = [1, 1]} : vector<64x32xf32> to vector<16x32xf32>
    %148 = arith.truncf %147 : vector<16x32xf32> to vector<16x32xbf16>
    %c0_162 = arith.constant 0 : index
    %c0_163 = arith.constant 0 : index
    %c0_164 = arith.constant 0 : index
    %149 = vector.load %arg12[%c0_162, %c0_163, %c0_164] : memref<4x32x64xbf16, #tpu.memory_space<vmem>>, vector<1x32x64xbf16>
    %150 = vector.shape_cast %149 : vector<1x32x64xbf16> to vector<32x64xbf16>
    %cst_165 = arith.constant dense<0.000000e+00> : vector<16x64xf32>
    %151 = tpu.matmul %148, %150, %cst_165 {dimension_numbers = #tpu.dot_dimension_numbers<[1], [0], [0], [1], [0, 0, 1, 1], [], []>} : vector<16x32xbf16>, vector<32x64xbf16>, vector<16x64xf32> -> vector<16x64xf32>
    %152 = arith.addf %146, %151 : vector<16x64xf32>
    %153 = vector.extract_strided_slice %145 {offsets = [16, 0], sizes = [16, 32], strides = [1, 1]} : vector<64x32xf32> to vector<16x32xf32>
    %154 = arith.truncf %153 : vector<16x32xf32> to vector<16x32xbf16>
    %c1_166 = arith.constant 1 : index
    %c0_167 = arith.constant 0 : index
    %c0_168 = arith.constant 0 : index
    %155 = vector.load %arg12[%c1_166, %c0_167, %c0_168] : memref<4x32x64xbf16, #tpu.memory_space<vmem>>, vector<1x32x64xbf16>
    %156 = vector.shape_cast %155 : vector<1x32x64xbf16> to vector<32x64xbf16>
    %cst_169 = arith.constant dense<0.000000e+00> : vector<16x64xf32>
    %157 = tpu.matmul %154, %156, %cst_169 {dimension_numbers = #tpu.dot_dimension_numbers<[1], [0], [0], [1], [0, 0, 1, 1], [], []>} : vector<16x32xbf16>, vector<32x64xbf16>, vector<16x64xf32> -> vector<16x64xf32>
    %158 = arith.addf %152, %157 : vector<16x64xf32>
    %159 = vector.extract_strided_slice %145 {offsets = [32, 0], sizes = [16, 32], strides = [1, 1]} : vector<64x32xf32> to vector<16x32xf32>
    %160 = arith.truncf %159 : vector<16x32xf32> to vector<16x32xbf16>
    %c2_170 = arith.constant 2 : index
    %c0_171 = arith.constant 0 : index
    %c0_172 = arith.constant 0 : index
    %161 = vector.load %arg12[%c2_170, %c0_171, %c0_172] : memref<4x32x64xbf16, #tpu.memory_space<vmem>>, vector<1x32x64xbf16>
    %162 = vector.shape_cast %161 : vector<1x32x64xbf16> to vector<32x64xbf16>
    %cst_173 = arith.constant dense<0.000000e+00> : vector<16x64xf32>
    %163 = tpu.matmul %160, %162, %cst_173 {dimension_numbers = #tpu.dot_dimension_numbers<[1], [0], [0], [1], [0, 0, 1, 1], [], []>} : vector<16x32xbf16>, vector<32x64xbf16>, vector<16x64xf32> -> vector<16x64xf32>
    %164 = arith.addf %158, %163 : vector<16x64xf32>
    %165 = vector.extract_strided_slice %145 {offsets = [48, 0], sizes = [16, 32], strides = [1, 1]} : vector<64x32xf32> to vector<16x32xf32>
    %166 = arith.truncf %165 : vector<16x32xf32> to vector<16x32xbf16>
    %c3_174 = arith.constant 3 : index
    %c0_175 = arith.constant 0 : index
    %c0_176 = arith.constant 0 : index
    %167 = vector.load %arg12[%c3_174, %c0_175, %c0_176] : memref<4x32x64xbf16, #tpu.memory_space<vmem>>, vector<1x32x64xbf16>
    %168 = vector.shape_cast %167 : vector<1x32x64xbf16> to vector<32x64xbf16>
    %cst_177 = arith.constant dense<0.000000e+00> : vector<16x64xf32>
    %169 = tpu.matmul %166, %168, %cst_177 {dimension_numbers = #tpu.dot_dimension_numbers<[1], [0], [0], [1], [0, 0, 1, 1], [], []>} : vector<16x32xbf16>, vector<32x64xbf16>, vector<16x64xf32> -> vector<16x64xf32>
    %170 = arith.addf %164, %169 : vector<16x64xf32>
    %171 = vector.broadcast %16 : vector<1x64xf32> to vector<16x64xf32>
    %172 = arith.addf %170, %171 : vector<16x64xf32>
    %cst_178 = arith.constant 0.000000e+00 : f32
    %173 = vector.broadcast %cst_178 : f32 to vector<16x64xf32>
    %174 = arith.maximumf %172, %173 : vector<16x64xf32>
    %175 = arith.addf %174, %84 : vector<16x64xf32>
    %176 = arith.truncf %175 : vector<16x64xf32> to vector<16x64xbf16>
    %177 = vector.extract_strided_slice %176 {offsets = [0, 0], sizes = [4, 64], strides = [1, 1]} : vector<16x64xbf16> to vector<4x64xbf16>
    %c7 = arith.constant 7 : index
    %c0_179 = arith.constant 0 : index
    %178 = vector.load %arg21[%c7, %c0_179] : memref<36x64xbf16, #tpu.memory_space<vmem>>, vector<4x64xbf16>
    tpu.vector_store %arg21[%c7, %c0_179], %177 {strides = array<i32>} : memref<36x64xbf16, #tpu.memory_space<vmem>>, vector<4x64xbf16>,
    %179 = vector.extract_strided_slice %176 {offsets = [4, 0], sizes = [4, 64], strides = [1, 1]} : vector<16x64xbf16> to vector<4x64xbf16>
    %c13 = arith.constant 13 : index
    %c0_180 = arith.constant 0 : index
    %180 = vector.load %arg21[%c13, %c0_180] : memref<36x64xbf16, #tpu.memory_space<vmem>>, vector<4x64xbf16>
    tpu.vector_store %arg21[%c13, %c0_180], %179 {strides = array<i32>} : memref<36x64xbf16, #tpu.memory_space<vmem>>, vector<4x64xbf16>,
    %181 = vector.extract_strided_slice %176 {offsets = [8, 0], sizes = [4, 64], strides = [1, 1]} : vector<16x64xbf16> to vector<4x64xbf16>
    %c19 = arith.constant 19 : index
    %c0_181 = arith.constant 0 : index
    %182 = vector.load %arg21[%c19, %c0_181] : memref<36x64xbf16, #tpu.memory_space<vmem>>, vector<4x64xbf16>
    tpu.vector_store %arg21[%c19, %c0_181], %181 {strides = array<i32>} : memref<36x64xbf16, #tpu.memory_space<vmem>>, vector<4x64xbf16>,
    %183 = vector.extract_strided_slice %176 {offsets = [12, 0], sizes = [4, 64], strides = [1, 1]} : vector<16x64xbf16> to vector<4x64xbf16>
    %c25 = arith.constant 25 : index
    %c0_182 = arith.constant 0 : index
    %184 = vector.load %arg21[%c25, %c0_182] : memref<36x64xbf16, #tpu.memory_space<vmem>>, vector<4x64xbf16>
    tpu.vector_store %arg21[%c25, %c0_182], %183 {strides = array<i32>} : memref<36x64xbf16, #tpu.memory_space<vmem>>, vector<4x64xbf16>,
    %c0_183 = arith.constant 0 : index
    %c0_184 = arith.constant 0 : index
    %c0_185 = arith.constant 0 : index
    %185 = vector.load %arg3[%c0_183, %c0_184, %c0_185] : memref<2x22x96xf32, #tpu.memory_space<vmem>>, vector<1x22x96xf32>
    %186 = vector.shape_cast %185 : vector<1x22x96xf32> to vector<22x96xf32>
    %c0_186 = arith.constant 0 : index
    %c0_187 = arith.constant 0 : index
    %187 = vector.load %arg21[%c0_186, %c0_187] : memref<36x64xbf16, #tpu.memory_space<vmem>>, vector<22x64xbf16>
    %c0_188 = arith.constant 0 : index
    %c0_189 = arith.constant 0 : index
    %c0_190 = arith.constant 0 : index
    %c0_191 = arith.constant 0 : index
    %188 = vector.load %arg14[%c0_188, %c0_189, %c0_190, %c0_191] : memref<3x3x64x96xbf16, #tpu.memory_space<vmem>>, vector<1x1x64x96xbf16>
    %189 = vector.shape_cast %188 : vector<1x1x64x96xbf16> to vector<64x96xbf16>
    %cst_192 = arith.constant dense<0.000000e+00> : vector<22x96xf32>
    %190 = tpu.matmul %187, %189, %cst_192 {dimension_numbers = #tpu.dot_dimension_numbers<[1], [0], [0], [1], [0, 0, 1, 1], [], []>} : vector<22x64xbf16>, vector<64x96xbf16>, vector<22x96xf32> -> vector<22x96xf32>
    %191 = arith.addf %186, %190 : vector<22x96xf32>
    %c1_193 = arith.constant 1 : index
    %c0_194 = arith.constant 0 : index
    %192 = vector.load %arg21[%c1_193, %c0_194] : memref<36x64xbf16, #tpu.memory_space<vmem>>, vector<22x64xbf16>
    %c0_195 = arith.constant 0 : index
    %c1_196 = arith.constant 1 : index
    %c0_197 = arith.constant 0 : index
    %c0_198 = arith.constant 0 : index
    %193 = vector.load %arg14[%c0_195, %c1_196, %c0_197, %c0_198] : memref<3x3x64x96xbf16, #tpu.memory_space<vmem>>, vector<1x1x64x96xbf16>
    %194 = vector.shape_cast %193 : vector<1x1x64x96xbf16> to vector<64x96xbf16>
    %cst_199 = arith.constant dense<0.000000e+00> : vector<22x96xf32>
    %195 = tpu.matmul %192, %194, %cst_199 {dimension_numbers = #tpu.dot_dimension_numbers<[1], [0], [0], [1], [0, 0, 1, 1], [], []>} : vector<22x64xbf16>, vector<64x96xbf16>, vector<22x96xf32> -> vector<22x96xf32>
    %196 = arith.addf %191, %195 : vector<22x96xf32>
    %c2_200 = arith.constant 2 : index
    %c0_201 = arith.constant 0 : index
    %197 = vector.load %arg21[%c2_200, %c0_201] : memref<36x64xbf16, #tpu.memory_space<vmem>>, vector<22x64xbf16>
    %c0_202 = arith.constant 0 : index
    %c2_203 = arith.constant 2 : index
    %c0_204 = arith.constant 0 : index
    %c0_205 = arith.constant 0 : index
    %198 = vector.load %arg14[%c0_202, %c2_203, %c0_204, %c0_205] : memref<3x3x64x96xbf16, #tpu.memory_space<vmem>>, vector<1x1x64x96xbf16>
    %199 = vector.shape_cast %198 : vector<1x1x64x96xbf16> to vector<64x96xbf16>
    %cst_206 = arith.constant dense<0.000000e+00> : vector<22x96xf32>
    %200 = tpu.matmul %197, %199, %cst_206 {dimension_numbers = #tpu.dot_dimension_numbers<[1], [0], [0], [1], [0, 0, 1, 1], [], []>} : vector<22x64xbf16>, vector<64x96xbf16>, vector<22x96xf32> -> vector<22x96xf32>
    %201 = arith.addf %196, %200 : vector<22x96xf32>
    %c6 = arith.constant 6 : index
    %c0_207 = arith.constant 0 : index
    %202 = vector.load %arg21[%c6, %c0_207] : memref<36x64xbf16, #tpu.memory_space<vmem>>, vector<22x64xbf16>
    %c1_208 = arith.constant 1 : index
    %c0_209 = arith.constant 0 : index
    %c0_210 = arith.constant 0 : index
    %c0_211 = arith.constant 0 : index
    %203 = vector.load %arg14[%c1_208, %c0_209, %c0_210, %c0_211] : memref<3x3x64x96xbf16, #tpu.memory_space<vmem>>, vector<1x1x64x96xbf16>
    %204 = vector.shape_cast %203 : vector<1x1x64x96xbf16> to vector<64x96xbf16>
    %cst_212 = arith.constant dense<0.000000e+00> : vector<22x96xf32>
    %205 = tpu.matmul %202, %204, %cst_212 {dimension_numbers = #tpu.dot_dimension_numbers<[1], [0], [0], [1], [0, 0, 1, 1], [], []>} : vector<22x64xbf16>, vector<64x96xbf16>, vector<22x96xf32> -> vector<22x96xf32>
    %206 = arith.addf %201, %205 : vector<22x96xf32>
    %c7_213 = arith.constant 7 : index
    %c0_214 = arith.constant 0 : index
    %207 = vector.load %arg21[%c7_213, %c0_214] : memref<36x64xbf16, #tpu.memory_space<vmem>>, vector<22x64xbf16>
    %c1_215 = arith.constant 1 : index
    %c1_216 = arith.constant 1 : index
    %c0_217 = arith.constant 0 : index
    %c0_218 = arith.constant 0 : index
    %208 = vector.load %arg14[%c1_215, %c1_216, %c0_217, %c0_218] : memref<3x3x64x96xbf16, #tpu.memory_space<vmem>>, vector<1x1x64x96xbf16>
    %209 = vector.shape_cast %208 : vector<1x1x64x96xbf16> to vector<64x96xbf16>
    %cst_219 = arith.constant dense<0.000000e+00> : vector<22x96xf32>
    %210 = tpu.matmul %207, %209, %cst_219 {dimension_numbers = #tpu.dot_dimension_numbers<[1], [0], [0], [1], [0, 0, 1, 1], [], []>} : vector<22x64xbf16>, vector<64x96xbf16>, vector<22x96xf32> -> vector<22x96xf32>
    %211 = arith.addf %206, %210 : vector<22x96xf32>
    %c8 = arith.constant 8 : index
    %c0_220 = arith.constant 0 : index
    %212 = vector.load %arg21[%c8, %c0_220] : memref<36x64xbf16, #tpu.memory_space<vmem>>, vector<22x64xbf16>
    %c1_221 = arith.constant 1 : index
    %c2_222 = arith.constant 2 : index
    %c0_223 = arith.constant 0 : index
    %c0_224 = arith.constant 0 : index
    %213 = vector.load %arg14[%c1_221, %c2_222, %c0_223, %c0_224] : memref<3x3x64x96xbf16, #tpu.memory_space<vmem>>, vector<1x1x64x96xbf16>
    %214 = vector.shape_cast %213 : vector<1x1x64x96xbf16> to vector<64x96xbf16>
    %cst_225 = arith.constant dense<0.000000e+00> : vector<22x96xf32>
    %215 = tpu.matmul %212, %214, %cst_225 {dimension_numbers = #tpu.dot_dimension_numbers<[1], [0], [0], [1], [0, 0, 1, 1], [], []>} : vector<22x64xbf16>, vector<64x96xbf16>, vector<22x96xf32> -> vector<22x96xf32>
    %216 = arith.addf %211, %215 : vector<22x96xf32>
    %c12 = arith.constant 12 : index
    %c0_226 = arith.constant 0 : index
    %217 = vector.load %arg21[%c12, %c0_226] : memref<36x64xbf16, #tpu.memory_space<vmem>>, vector<22x64xbf16>
    %c2_227 = arith.constant 2 : index
    %c0_228 = arith.constant 0 : index
    %c0_229 = arith.constant 0 : index
    %c0_230 = arith.constant 0 : index
    %218 = vector.load %arg14[%c2_227, %c0_228, %c0_229, %c0_230] : memref<3x3x64x96xbf16, #tpu.memory_space<vmem>>, vector<1x1x64x96xbf16>
    %219 = vector.shape_cast %218 : vector<1x1x64x96xbf16> to vector<64x96xbf16>
    %cst_231 = arith.constant dense<0.000000e+00> : vector<22x96xf32>
    %220 = tpu.matmul %217, %219, %cst_231 {dimension_numbers = #tpu.dot_dimension_numbers<[1], [0], [0], [1], [0, 0, 1, 1], [], []>} : vector<22x64xbf16>, vector<64x96xbf16>, vector<22x96xf32> -> vector<22x96xf32>
    %221 = arith.addf %216, %220 : vector<22x96xf32>
    %c13_232 = arith.constant 13 : index
    %c0_233 = arith.constant 0 : index
    %222 = vector.load %arg21[%c13_232, %c0_233] : memref<36x64xbf16, #tpu.memory_space<vmem>>, vector<22x64xbf16>
    %c2_234 = arith.constant 2 : index
    %c1_235 = arith.constant 1 : index
    %c0_236 = arith.constant 0 : index
    %c0_237 = arith.constant 0 : index
    %223 = vector.load %arg14[%c2_234, %c1_235, %c0_236, %c0_237] : memref<3x3x64x96xbf16, #tpu.memory_space<vmem>>, vector<1x1x64x96xbf16>
    %224 = vector.shape_cast %223 : vector<1x1x64x96xbf16> to vector<64x96xbf16>
    %cst_238 = arith.constant dense<0.000000e+00> : vector<22x96xf32>
    %225 = tpu.matmul %222, %224, %cst_238 {dimension_numbers = #tpu.dot_dimension_numbers<[1], [0], [0], [1], [0, 0, 1, 1], [], []>} : vector<22x64xbf16>, vector<64x96xbf16>, vector<22x96xf32> -> vector<22x96xf32>
    %226 = arith.addf %221, %225 : vector<22x96xf32>
    %c14 = arith.constant 14 : index
    %c0_239 = arith.constant 0 : index
    %227 = vector.load %arg21[%c14, %c0_239] : memref<36x64xbf16, #tpu.memory_space<vmem>>, vector<22x64xbf16>
    %c2_240 = arith.constant 2 : index
    %c2_241 = arith.constant 2 : index
    %c0_242 = arith.constant 0 : index
    %c0_243 = arith.constant 0 : index
    %228 = vector.load %arg14[%c2_240, %c2_241, %c0_242, %c0_243] : memref<3x3x64x96xbf16, #tpu.memory_space<vmem>>, vector<1x1x64x96xbf16>
    %229 = vector.shape_cast %228 : vector<1x1x64x96xbf16> to vector<64x96xbf16>
    %cst_244 = arith.constant dense<0.000000e+00> : vector<22x96xf32>
    %230 = tpu.matmul %227, %229, %cst_244 {dimension_numbers = #tpu.dot_dimension_numbers<[1], [0], [0], [1], [0, 0, 1, 1], [], []>} : vector<22x64xbf16>, vector<64x96xbf16>, vector<22x96xf32> -> vector<22x96xf32>
    %231 = arith.addf %226, %230 : vector<22x96xf32>
    %232 = vector.extract_strided_slice %231 {offsets = [0, 0], sizes = [22, 64], strides = [1, 1]} : vector<22x96xf32> to vector<22x64xf32>
    %cst_245 = arith.constant 0.000000e+00 : f32
    %233 = vector.broadcast %cst_245 : f32 to vector<22x64xf32>
    %234 = arith.maximumf %232, %233 : vector<22x64xf32>
    %235 = vector.extract_strided_slice %231 {offsets = [0, 64], sizes = [22, 32], strides = [1, 1]} : vector<22x96xf32> to vector<22x32xf32>
    %cst_246 = arith.constant 0.000000e+00 : f32
    %236 = vector.broadcast %cst_246 : f32 to vector<22x32xf32>
    %237 = arith.maximumf %235, %236 : vector<22x32xf32>
    %238 = vector.broadcast %21 : vector<22x1xf32> to vector<22x32xf32>
    %239 = arith.mulf %237, %238 : vector<22x32xf32>
    %240 = arith.truncf %239 : vector<22x32xf32> to vector<22x32xbf16>
    %c7_247 = arith.constant 7 : index
    %c0_248 = arith.constant 0 : index
    %241 = vector.load %arg22[%c7_247, %c0_248] : memref<36x32xbf16, #tpu.memory_space<vmem>>, vector<22x32xbf16>
    tpu.vector_store %arg22[%c7_247, %c0_248], %240 {strides = array<i32>} : memref<36x32xbf16, #tpu.memory_space<vmem>>, vector<22x32xbf16>,
    %cst_249 = arith.constant 0.000000e+00 : f32
    %242 = vector.broadcast %cst_249 : f32 to vector<22x64xf32>
    %c0_250 = arith.constant 0 : index
    %c0_251 = arith.constant 0 : index
    %243 = vector.load %arg22[%c0_250, %c0_251] : memref<36x32xbf16, #tpu.memory_space<vmem>>, vector<22x32xbf16>
    %c0_252 = arith.constant 0 : index
    %c0_253 = arith.constant 0 : index
    %c0_254 = arith.constant 0 : index
    %c0_255 = arith.constant 0 : index
    %244 = vector.load %arg15[%c0_252, %c0_253, %c0_254, %c0_255] : memref<3x3x32x64xbf16, #tpu.memory_space<vmem>>, vector<1x1x32x64xbf16>
    %245 = vector.shape_cast %244 : vector<1x1x32x64xbf16> to vector<32x64xbf16>
    %cst_256 = arith.constant dense<0.000000e+00> : vector<22x64xf32>
    %246 = tpu.matmul %243, %245, %cst_256 {dimension_numbers = #tpu.dot_dimension_numbers<[1], [0], [0], [1], [0, 0, 1, 1], [], []>} : vector<22x32xbf16>, vector<32x64xbf16>, vector<22x64xf32> -> vector<22x64xf32>
    %247 = arith.addf %242, %246 : vector<22x64xf32>
    %c1_257 = arith.constant 1 : index
    %c0_258 = arith.constant 0 : index
    %248 = vector.load %arg22[%c1_257, %c0_258] : memref<36x32xbf16, #tpu.memory_space<vmem>>, vector<22x32xbf16>
    %c0_259 = arith.constant 0 : index
    %c1_260 = arith.constant 1 : index
    %c0_261 = arith.constant 0 : index
    %c0_262 = arith.constant 0 : index
    %249 = vector.load %arg15[%c0_259, %c1_260, %c0_261, %c0_262] : memref<3x3x32x64xbf16, #tpu.memory_space<vmem>>, vector<1x1x32x64xbf16>
    %250 = vector.shape_cast %249 : vector<1x1x32x64xbf16> to vector<32x64xbf16>
    %cst_263 = arith.constant dense<0.000000e+00> : vector<22x64xf32>
    %251 = tpu.matmul %248, %250, %cst_263 {dimension_numbers = #tpu.dot_dimension_numbers<[1], [0], [0], [1], [0, 0, 1, 1], [], []>} : vector<22x32xbf16>, vector<32x64xbf16>, vector<22x64xf32> -> vector<22x64xf32>
    %252 = arith.addf %247, %251 : vector<22x64xf32>
    %c2_264 = arith.constant 2 : index
    %c0_265 = arith.constant 0 : index
    %253 = vector.load %arg22[%c2_264, %c0_265] : memref<36x32xbf16, #tpu.memory_space<vmem>>, vector<22x32xbf16>
    %c0_266 = arith.constant 0 : index
    %c2_267 = arith.constant 2 : index
    %c0_268 = arith.constant 0 : index
    %c0_269 = arith.constant 0 : index
    %254 = vector.load %arg15[%c0_266, %c2_267, %c0_268, %c0_269] : memref<3x3x32x64xbf16, #tpu.memory_space<vmem>>, vector<1x1x32x64xbf16>
    %255 = vector.shape_cast %254 : vector<1x1x32x64xbf16> to vector<32x64xbf16>
    %cst_270 = arith.constant dense<0.000000e+00> : vector<22x64xf32>
    %256 = tpu.matmul %253, %255, %cst_270 {dimension_numbers = #tpu.dot_dimension_numbers<[1], [0], [0], [1], [0, 0, 1, 1], [], []>} : vector<22x32xbf16>, vector<32x64xbf16>, vector<22x64xf32> -> vector<22x64xf32>
    %257 = arith.addf %252, %256 : vector<22x64xf32>
    %c6_271 = arith.constant 6 : index
    %c0_272 = arith.constant 0 : index
    %258 = vector.load %arg22[%c6_271, %c0_272] : memref<36x32xbf16, #tpu.memory_space<vmem>>, vector<22x32xbf16>
    %c1_273 = arith.constant 1 : index
    %c0_274 = arith.constant 0 : index
    %c0_275 = arith.constant 0 : index
    %c0_276 = arith.constant 0 : index
    %259 = vector.load %arg15[%c1_273, %c0_274, %c0_275, %c0_276] : memref<3x3x32x64xbf16, #tpu.memory_space<vmem>>, vector<1x1x32x64xbf16>
    %260 = vector.shape_cast %259 : vector<1x1x32x64xbf16> to vector<32x64xbf16>
    %cst_277 = arith.constant dense<0.000000e+00> : vector<22x64xf32>
    %261 = tpu.matmul %258, %260, %cst_277 {dimension_numbers = #tpu.dot_dimension_numbers<[1], [0], [0], [1], [0, 0, 1, 1], [], []>} : vector<22x32xbf16>, vector<32x64xbf16>, vector<22x64xf32> -> vector<22x64xf32>
    %262 = arith.addf %257, %261 : vector<22x64xf32>
    %c7_278 = arith.constant 7 : index
    %c0_279 = arith.constant 0 : index
    %263 = vector.load %arg22[%c7_278, %c0_279] : memref<36x32xbf16, #tpu.memory_space<vmem>>, vector<22x32xbf16>
    %c1_280 = arith.constant 1 : index
    %c1_281 = arith.constant 1 : index
    %c0_282 = arith.constant 0 : index
    %c0_283 = arith.constant 0 : index
    %264 = vector.load %arg15[%c1_280, %c1_281, %c0_282, %c0_283] : memref<3x3x32x64xbf16, #tpu.memory_space<vmem>>, vector<1x1x32x64xbf16>
    %265 = vector.shape_cast %264 : vector<1x1x32x64xbf16> to vector<32x64xbf16>
    %cst_284 = arith.constant dense<0.000000e+00> : vector<22x64xf32>
    %266 = tpu.matmul %263, %265, %cst_284 {dimension_numbers = #tpu.dot_dimension_numbers<[1], [0], [0], [1], [0, 0, 1, 1], [], []>} : vector<22x32xbf16>, vector<32x64xbf16>, vector<22x64xf32> -> vector<22x64xf32>
    %267 = arith.addf %262, %266 : vector<22x64xf32>
    %c8_285 = arith.constant 8 : index
    %c0_286 = arith.constant 0 : index
    %268 = vector.load %arg22[%c8_285, %c0_286] : memref<36x32xbf16, #tpu.memory_space<vmem>>, vector<22x32xbf16>
    %c1_287 = arith.constant 1 : index
    %c2_288 = arith.constant 2 : index
    %c0_289 = arith.constant 0 : index
    %c0_290 = arith.constant 0 : index
    %269 = vector.load %arg15[%c1_287, %c2_288, %c0_289, %c0_290] : memref<3x3x32x64xbf16, #tpu.memory_space<vmem>>, vector<1x1x32x64xbf16>
    %270 = vector.shape_cast %269 : vector<1x1x32x64xbf16> to vector<32x64xbf16>
    %cst_291 = arith.constant dense<0.000000e+00> : vector<22x64xf32>
    %271 = tpu.matmul %268, %270, %cst_291 {dimension_numbers = #tpu.dot_dimension_numbers<[1], [0], [0], [1], [0, 0, 1, 1], [], []>} : vector<22x32xbf16>, vector<32x64xbf16>, vector<22x64xf32> -> vector<22x64xf32>
    %272 = arith.addf %267, %271 : vector<22x64xf32>
    %c12_292 = arith.constant 12 : index
    %c0_293 = arith.constant 0 : index
    %273 = vector.load %arg22[%c12_292, %c0_293] : memref<36x32xbf16, #tpu.memory_space<vmem>>, vector<22x32xbf16>
    %c2_294 = arith.constant 2 : index
    %c0_295 = arith.constant 0 : index
    %c0_296 = arith.constant 0 : index
    %c0_297 = arith.constant 0 : index
    %274 = vector.load %arg15[%c2_294, %c0_295, %c0_296, %c0_297] : memref<3x3x32x64xbf16, #tpu.memory_space<vmem>>, vector<1x1x32x64xbf16>
    %275 = vector.shape_cast %274 : vector<1x1x32x64xbf16> to vector<32x64xbf16>
    %cst_298 = arith.constant dense<0.000000e+00> : vector<22x64xf32>
    %276 = tpu.matmul %273, %275, %cst_298 {dimension_numbers = #tpu.dot_dimension_numbers<[1], [0], [0], [1], [0, 0, 1, 1], [], []>} : vector<22x32xbf16>, vector<32x64xbf16>, vector<22x64xf32> -> vector<22x64xf32>
    %277 = arith.addf %272, %276 : vector<22x64xf32>
    %c13_299 = arith.constant 13 : index
    %c0_300 = arith.constant 0 : index
    %278 = vector.load %arg22[%c13_299, %c0_300] : memref<36x32xbf16, #tpu.memory_space<vmem>>, vector<22x32xbf16>
    %c2_301 = arith.constant 2 : index
    %c1_302 = arith.constant 1 : index
    %c0_303 = arith.constant 0 : index
    %c0_304 = arith.constant 0 : index
    %279 = vector.load %arg15[%c2_301, %c1_302, %c0_303, %c0_304] : memref<3x3x32x64xbf16, #tpu.memory_space<vmem>>, vector<1x1x32x64xbf16>
    %280 = vector.shape_cast %279 : vector<1x1x32x64xbf16> to vector<32x64xbf16>
    %cst_305 = arith.constant dense<0.000000e+00> : vector<22x64xf32>
    %281 = tpu.matmul %278, %280, %cst_305 {dimension_numbers = #tpu.dot_dimension_numbers<[1], [0], [0], [1], [0, 0, 1, 1], [], []>} : vector<22x32xbf16>, vector<32x64xbf16>, vector<22x64xf32> -> vector<22x64xf32>
    %282 = arith.addf %277, %281 : vector<22x64xf32>
    %c14_306 = arith.constant 14 : index
    %c0_307 = arith.constant 0 : index
    %283 = vector.load %arg22[%c14_306, %c0_307] : memref<36x32xbf16, #tpu.memory_space<vmem>>, vector<22x32xbf16>
    %c2_308 = arith.constant 2 : index
    %c2_309 = arith.constant 2 : index
    %c0_310 = arith.constant 0 : index
    %c0_311 = arith.constant 0 : index
    %284 = vector.load %arg15[%c2_308, %c2_309, %c0_310, %c0_311] : memref<3x3x32x64xbf16, #tpu.memory_space<vmem>>, vector<1x1x32x64xbf16>
    %285 = vector.shape_cast %284 : vector<1x1x32x64xbf16> to vector<32x64xbf16>
    %cst_312 = arith.constant dense<0.000000e+00> : vector<22x64xf32>
    %286 = tpu.matmul %283, %285, %cst_312 {dimension_numbers = #tpu.dot_dimension_numbers<[1], [0], [0], [1], [0, 0, 1, 1], [], []>} : vector<22x32xbf16>, vector<32x64xbf16>, vector<22x64xf32> -> vector<22x64xf32>
    %287 = arith.addf %282, %286 : vector<22x64xf32>
    %288 = vector.broadcast %17 : vector<1x64xf32> to vector<22x64xf32>
    %289 = arith.addf %287, %288 : vector<22x64xf32>
    %cst_313 = arith.constant 0.000000e+00 : f32
    %290 = vector.broadcast %cst_313 : f32 to vector<22x64xf32>
    %291 = arith.maximumf %289, %290 : vector<22x64xf32>
    %292 = arith.addf %291, %234 : vector<22x64xf32>
    %293 = arith.truncf %292 : vector<22x64xf32> to vector<22x64xbf16>
    %cst_314 = arith.constant dense<0.000000e+00> : vector<22x64xf32>
    %294 = tpu.matmul %293, %19, %cst_314 {dimension_numbers = #tpu.dot_dimension_numbers<[1], [0], [0], [1], [0, 0, 1, 1], [], []>} : vector<22x64xbf16>, vector<64x64xbf16>, vector<22x64xf32> -> vector<22x64xf32>
    %295 = vector.broadcast %18 : vector<1x64xf32> to vector<22x64xf32>
    %296 = arith.addf %294, %295 : vector<22x64xf32>
    %cst_315 = arith.constant 0.000000e+00 : f32
    %297 = vector.broadcast %cst_315 : f32 to vector<22x64xf32>
    %298 = arith.maximumf %296, %297 : vector<22x64xf32>
    %299 = vector.broadcast %21 : vector<22x1xf32> to vector<22x64xf32>
    %300 = arith.mulf %298, %299 : vector<22x64xf32>
    %cst_316 = arith.constant dense<0.000000e+00> : vector<64xf32>
    %301 = vector.multi_reduction <add>, %300, %cst_316 [0] : vector<22x64xf32> to vector<64xf32>
    %302 = vector.shape_cast %301 : vector<64xf32> to vector<1x64xf32>
    %cst_317 = arith.constant 6.250000e-02 : f32
    %303 = vector.broadcast %cst_317 : f32 to vector<1x64xf32>
    %304 = arith.mulf %302, %303 : vector<1x64xf32>
    %305 = vector.shape_cast %304 : vector<1x64xf32> to vector<1x1x64xf32>
    %c0_318 = arith.constant 0 : index
    %c0_319 = arith.constant 0 : index
    %c0_320 = arith.constant 0 : index
    %306 = vector.load %arg19[%c0_318, %c0_319, %c0_320] : memref<2x1x64xf32, #tpu.memory_space<vmem>>, vector<1x1x64xf32>
    tpu.vector_store %arg19[%c0_318, %c0_319, %c0_320], %305 {strides = array<i32>} : memref<2x1x64xf32, #tpu.memory_space<vmem>>, vector<1x1x64xf32>,
    %c1_321 = arith.constant 1 : index
    %c0_322 = arith.constant 0 : index
    %c0_323 = arith.constant 0 : index
    %307 = vector.load %arg1[%c1_321, %c0_322, %c0_323] : memref<2x64x16xbf16, #tpu.memory_space<vmem>>, vector<1x64x16xbf16>
    %308 = vector.shape_cast %307 : vector<1x64x16xbf16> to vector<64x16xbf16>
    %cst_324 = arith.constant dense<0.000000e+00> : vector<64x64xf32>
    %309 = tpu.matmul %308, %12, %cst_324 {dimension_numbers = #tpu.dot_dimension_numbers<[1], [0], [0], [1], [0, 0, 1, 1], [], []>} : vector<64x16xbf16>, vector<16x64xbf16>, vector<64x64xf32> -> vector<64x64xf32>
    %310 = vector.broadcast %13 : vector<1x64xf32> to vector<64x64xf32>
    %311 = arith.addf %309, %310 : vector<64x64xf32>
    %cst_325 = arith.constant 0.000000e+00 : f32
    %312 = vector.broadcast %cst_325 : f32 to vector<64x64xf32>
    %313 = arith.maximumf %311, %312 : vector<64x64xf32>
    %314 = vector.shape_cast %313 : vector<64x64xf32> to vector<8x8x64xf32>
    %315 = arith.truncf %314 : vector<8x8x64xf32> to vector<8x8x64xbf16>
    %c1_326 = arith.constant 1 : index
    %c1_327 = arith.constant 1 : index
    %c0_328 = arith.constant 0 : index
    %316 = vector.load %arg20[%c1_326, %c1_327, %c0_328] : memref<10x10x64xbf16, #tpu.memory_space<vmem>>, vector<8x8x64xbf16>
    tpu.vector_store %arg20[%c1_326, %c1_327, %c0_328], %315 {strides = array<i32>} : memref<10x10x64xbf16, #tpu.memory_space<vmem>>, vector<8x8x64xbf16>,
    %cst_329 = arith.constant 0.000000e+00 : f32
    %317 = vector.broadcast %cst_329 : f32 to vector<16x64xf32>
    %c1_330 = arith.constant 1 : index
    %c0_331 = arith.constant 0 : index
    %c0_332 = arith.constant 0 : index
    %c0_333 = arith.constant 0 : index
    %318 = vector.load %arg2[%c1_330, %c0_331, %c0_332, %c0_333] : memref<2x4x16x16xbf16, #tpu.memory_space<vmem>>, vector<1x1x16x16xbf16>
    %319 = vector.shape_cast %318 : vector<1x1x16x16xbf16> to vector<16x16xbf16>
    %cst_334 = arith.constant dense<0.000000e+00> : vector<16x64xf32>
    %320 = tpu.matmul %319, %12, %cst_334 {dimension_numbers = #tpu.dot_dimension_numbers<[1], [0], [0], [1], [0, 0, 1, 1], [], []>} : vector<16x16xbf16>, vector<16x64xbf16>, vector<16x64xf32> -> vector<16x64xf32>
    %321 = vector.broadcast %13 : vector<1x64xf32> to vector<16x64xf32>
    %322 = arith.addf %320, %321 : vector<16x64xf32>
    %cst_335 = arith.constant 0.000000e+00 : f32
    %323 = vector.broadcast %cst_335 : f32 to vector<16x64xf32>
    %324 = arith.maximumf %322, %323 : vector<16x64xf32>
    %325 = arith.truncf %324 : vector<16x64xf32> to vector<16x64xbf16>
    %c0_336 = arith.constant 0 : index
    %c0_337 = arith.constant 0 : index
    %c0_338 = arith.constant 0 : index
    %326 = vector.load %arg8[%c0_336, %c0_337, %c0_338] : memref<4x64x64xbf16, #tpu.memory_space<vmem>>, vector<1x64x64xbf16>
    %327 = vector.shape_cast %326 : vector<1x64x64xbf16> to vector<64x64xbf16>
    %cst_339 = arith.constant dense<0.000000e+00> : vector<16x64xf32>
    %328 = tpu.matmul %325, %327, %cst_339 {dimension_numbers = #tpu.dot_dimension_numbers<[1], [0], [0], [1], [0, 0, 1, 1], [], []>} : vector<16x64xbf16>, vector<64x64xbf16>, vector<16x64xf32> -> vector<16x64xf32>
    %329 = arith.addf %317, %328 : vector<16x64xf32>
    %c1_340 = arith.constant 1 : index
    %c1_341 = arith.constant 1 : index
    %c0_342 = arith.constant 0 : index
    %c0_343 = arith.constant 0 : index
    %330 = vector.load %arg2[%c1_340, %c1_341, %c0_342, %c0_343] : memref<2x4x16x16xbf16, #tpu.memory_space<vmem>>, vector<1x1x16x16xbf16>
    %331 = vector.shape_cast %330 : vector<1x1x16x16xbf16> to vector<16x16xbf16>
    %cst_344 = arith.constant dense<0.000000e+00> : vector<16x64xf32>
    %332 = tpu.matmul %331, %12, %cst_344 {dimension_numbers = #tpu.dot_dimension_numbers<[1], [0], [0], [1], [0, 0, 1, 1], [], []>} : vector<16x16xbf16>, vector<16x64xbf16>, vector<16x64xf32> -> vector<16x64xf32>
    %333 = vector.broadcast %13 : vector<1x64xf32> to vector<16x64xf32>
    %334 = arith.addf %332, %333 : vector<16x64xf32>
    %cst_345 = arith.constant 0.000000e+00 : f32
    %335 = vector.broadcast %cst_345 : f32 to vector<16x64xf32>
    %336 = arith.maximumf %334, %335 : vector<16x64xf32>
    %337 = arith.truncf %336 : vector<16x64xf32> to vector<16x64xbf16>
    %c1_346 = arith.constant 1 : index
    %c0_347 = arith.constant 0 : index
    %c0_348 = arith.constant 0 : index
    %338 = vector.load %arg8[%c1_346, %c0_347, %c0_348] : memref<4x64x64xbf16, #tpu.memory_space<vmem>>, vector<1x64x64xbf16>
    %339 = vector.shape_cast %338 : vector<1x64x64xbf16> to vector<64x64xbf16>
    %cst_349 = arith.constant dense<0.000000e+00> : vector<16x64xf32>
    %340 = tpu.matmul %337, %339, %cst_349 {dimension_numbers = #tpu.dot_dimension_numbers<[1], [0], [0], [1], [0, 0, 1, 1], [], []>} : vector<16x64xbf16>, vector<64x64xbf16>, vector<16x64xf32> -> vector<16x64xf32>
    %341 = arith.addf %329, %340 : vector<16x64xf32>
    %c1_350 = arith.constant 1 : index
    %c2_351 = arith.constant 2 : index
    %c0_352 = arith.constant 0 : index
    %c0_353 = arith.constant 0 : index
    %342 = vector.load %arg2[%c1_350, %c2_351, %c0_352, %c0_353] : memref<2x4x16x16xbf16, #tpu.memory_space<vmem>>, vector<1x1x16x16xbf16>
    %343 = vector.shape_cast %342 : vector<1x1x16x16xbf16> to vector<16x16xbf16>
    %cst_354 = arith.constant dense<0.000000e+00> : vector<16x64xf32>
    %344 = tpu.matmul %343, %12, %cst_354 {dimension_numbers = #tpu.dot_dimension_numbers<[1], [0], [0], [1], [0, 0, 1, 1], [], []>} : vector<16x16xbf16>, vector<16x64xbf16>, vector<16x64xf32> -> vector<16x64xf32>
    %345 = vector.broadcast %13 : vector<1x64xf32> to vector<16x64xf32>
    %346 = arith.addf %344, %345 : vector<16x64xf32>
    %cst_355 = arith.constant 0.000000e+00 : f32
    %347 = vector.broadcast %cst_355 : f32 to vector<16x64xf32>
    %348 = arith.maximumf %346, %347 : vector<16x64xf32>
    %349 = arith.truncf %348 : vector<16x64xf32> to vector<16x64xbf16>
    %c2_356 = arith.constant 2 : index
    %c0_357 = arith.constant 0 : index
    %c0_358 = arith.constant 0 : index
    %350 = vector.load %arg8[%c2_356, %c0_357, %c0_358] : memref<4x64x64xbf16, #tpu.memory_space<vmem>>, vector<1x64x64xbf16>
    %351 = vector.shape_cast %350 : vector<1x64x64xbf16> to vector<64x64xbf16>
    %cst_359 = arith.constant dense<0.000000e+00> : vector<16x64xf32>
    %352 = tpu.matmul %349, %351, %cst_359 {dimension_numbers = #tpu.dot_dimension_numbers<[1], [0], [0], [1], [0, 0, 1, 1], [], []>} : vector<16x64xbf16>, vector<64x64xbf16>, vector<16x64xf32> -> vector<16x64xf32>
    %353 = arith.addf %341, %352 : vector<16x64xf32>
    %c1_360 = arith.constant 1 : index
    %c3_361 = arith.constant 3 : index
    %c0_362 = arith.constant 0 : index
    %c0_363 = arith.constant 0 : index
    %354 = vector.load %arg2[%c1_360, %c3_361, %c0_362, %c0_363] : memref<2x4x16x16xbf16, #tpu.memory_space<vmem>>, vector<1x1x16x16xbf16>
    %355 = vector.shape_cast %354 : vector<1x1x16x16xbf16> to vector<16x16xbf16>
    %cst_364 = arith.constant dense<0.000000e+00> : vector<16x64xf32>
    %356 = tpu.matmul %355, %12, %cst_364 {dimension_numbers = #tpu.dot_dimension_numbers<[1], [0], [0], [1], [0, 0, 1, 1], [], []>} : vector<16x16xbf16>, vector<16x64xbf16>, vector<16x64xf32> -> vector<16x64xf32>
    %357 = vector.broadcast %13 : vector<1x64xf32> to vector<16x64xf32>
    %358 = arith.addf %356, %357 : vector<16x64xf32>
    %cst_365 = arith.constant 0.000000e+00 : f32
    %359 = vector.broadcast %cst_365 : f32 to vector<16x64xf32>
    %360 = arith.maximumf %358, %359 : vector<16x64xf32>
    %361 = arith.truncf %360 : vector<16x64xf32> to vector<16x64xbf16>
    %c3_366 = arith.constant 3 : index
    %c0_367 = arith.constant 0 : index
    %c0_368 = arith.constant 0 : index
    %362 = vector.load %arg8[%c3_366, %c0_367, %c0_368] : memref<4x64x64xbf16, #tpu.memory_space<vmem>>, vector<1x64x64xbf16>
    %363 = vector.shape_cast %362 : vector<1x64x64xbf16> to vector<64x64xbf16>
    %cst_369 = arith.constant dense<0.000000e+00> : vector<16x64xf32>
    %364 = tpu.matmul %361, %363, %cst_369 {dimension_numbers = #tpu.dot_dimension_numbers<[1], [0], [0], [1], [0, 0, 1, 1], [], []>} : vector<16x64xbf16>, vector<64x64xbf16>, vector<16x64xf32> -> vector<16x64xf32>
    %365 = arith.addf %353, %364 : vector<16x64xf32>
    %366 = vector.broadcast %14 : vector<1x64xf32> to vector<16x64xf32>
    %367 = arith.addf %365, %366 : vector<16x64xf32>
    %cst_370 = arith.constant 0.000000e+00 : f32
    %368 = vector.broadcast %cst_370 : f32 to vector<16x64xf32>
    %369 = arith.maximumf %367, %368 : vector<16x64xf32>
    %cst_371 = arith.constant 0.000000e+00 : f32
    %370 = vector.broadcast %cst_371 : f32 to vector<64x32xf32>
    %c0_372 = arith.constant 0 : index
    %c0_373 = arith.constant 0 : index
    %c0_374 = arith.constant 0 : index
    %371 = vector.load %arg20[%c0_372, %c0_373, %c0_374] : memref<10x10x64xbf16, #tpu.memory_space<vmem>>, vector<8x8x64xbf16>
    %372 = vector.shape_cast %371 : vector<8x8x64xbf16> to vector<64x64xbf16>
    %c0_375 = arith.constant 0 : index
    %c0_376 = arith.constant 0 : index
    %c0_377 = arith.constant 0 : index
    %c0_378 = arith.constant 0 : index
    %373 = vector.load %arg10[%c0_375, %c0_376, %c0_377, %c0_378] : memref<3x3x64x32xbf16, #tpu.memory_space<vmem>>, vector<1x1x64x32xbf16>
    %374 = vector.shape_cast %373 : vector<1x1x64x32xbf16> to vector<64x32xbf16>
    %cst_379 = arith.constant dense<0.000000e+00> : vector<64x32xf32>
    %375 = tpu.matmul %372, %374, %cst_379 {dimension_numbers = #tpu.dot_dimension_numbers<[1], [0], [0], [1], [0, 0, 1, 1], [], []>} : vector<64x64xbf16>, vector<64x32xbf16>, vector<64x32xf32> -> vector<64x32xf32>
    %376 = arith.addf %370, %375 : vector<64x32xf32>
    %c0_380 = arith.constant 0 : index
    %c1_381 = arith.constant 1 : index
    %c0_382 = arith.constant 0 : index
    %377 = vector.load %arg20[%c0_380, %c1_381, %c0_382] : memref<10x10x64xbf16, #tpu.memory_space<vmem>>, vector<8x8x64xbf16>
    %378 = vector.shape_cast %377 : vector<8x8x64xbf16> to vector<64x64xbf16>
    %c0_383 = arith.constant 0 : index
    %c1_384 = arith.constant 1 : index
    %c0_385 = arith.constant 0 : index
    %c0_386 = arith.constant 0 : index
    %379 = vector.load %arg10[%c0_383, %c1_384, %c0_385, %c0_386] : memref<3x3x64x32xbf16, #tpu.memory_space<vmem>>, vector<1x1x64x32xbf16>
    %380 = vector.shape_cast %379 : vector<1x1x64x32xbf16> to vector<64x32xbf16>
    %cst_387 = arith.constant dense<0.000000e+00> : vector<64x32xf32>
    %381 = tpu.matmul %378, %380, %cst_387 {dimension_numbers = #tpu.dot_dimension_numbers<[1], [0], [0], [1], [0, 0, 1, 1], [], []>} : vector<64x64xbf16>, vector<64x32xbf16>, vector<64x32xf32> -> vector<64x32xf32>
    %382 = arith.addf %376, %381 : vector<64x32xf32>
    %c0_388 = arith.constant 0 : index
    %c2_389 = arith.constant 2 : index
    %c0_390 = arith.constant 0 : index
    %383 = vector.load %arg20[%c0_388, %c2_389, %c0_390] : memref<10x10x64xbf16, #tpu.memory_space<vmem>>, vector<8x8x64xbf16>
    %384 = vector.shape_cast %383 : vector<8x8x64xbf16> to vector<64x64xbf16>
    %c0_391 = arith.constant 0 : index
    %c2_392 = arith.constant 2 : index
    %c0_393 = arith.constant 0 : index
    %c0_394 = arith.constant 0 : index
    %385 = vector.load %arg10[%c0_391, %c2_392, %c0_393, %c0_394] : memref<3x3x64x32xbf16, #tpu.memory_space<vmem>>, vector<1x1x64x32xbf16>
    %386 = vector.shape_cast %385 : vector<1x1x64x32xbf16> to vector<64x32xbf16>
    %cst_395 = arith.constant dense<0.000000e+00> : vector<64x32xf32>
    %387 = tpu.matmul %384, %386, %cst_395 {dimension_numbers = #tpu.dot_dimension_numbers<[1], [0], [0], [1], [0, 0, 1, 1], [], []>} : vector<64x64xbf16>, vector<64x32xbf16>, vector<64x32xf32> -> vector<64x32xf32>
    %388 = arith.addf %382, %387 : vector<64x32xf32>
    %c1_396 = arith.constant 1 : index
    %c0_397 = arith.constant 0 : index
    %c0_398 = arith.constant 0 : index
    %389 = vector.load %arg20[%c1_396, %c0_397, %c0_398] : memref<10x10x64xbf16, #tpu.memory_space<vmem>>, vector<8x8x64xbf16>
    %390 = vector.shape_cast %389 : vector<8x8x64xbf16> to vector<64x64xbf16>
    %c1_399 = arith.constant 1 : index
    %c0_400 = arith.constant 0 : index
    %c0_401 = arith.constant 0 : index
    %c0_402 = arith.constant 0 : index
    %391 = vector.load %arg10[%c1_399, %c0_400, %c0_401, %c0_402] : memref<3x3x64x32xbf16, #tpu.memory_space<vmem>>, vector<1x1x64x32xbf16>
    %392 = vector.shape_cast %391 : vector<1x1x64x32xbf16> to vector<64x32xbf16>
    %cst_403 = arith.constant dense<0.000000e+00> : vector<64x32xf32>
    %393 = tpu.matmul %390, %392, %cst_403 {dimension_numbers = #tpu.dot_dimension_numbers<[1], [0], [0], [1], [0, 0, 1, 1], [], []>} : vector<64x64xbf16>, vector<64x32xbf16>, vector<64x32xf32> -> vector<64x32xf32>
    %394 = arith.addf %388, %393 : vector<64x32xf32>
    %c1_404 = arith.constant 1 : index
    %c1_405 = arith.constant 1 : index
    %c0_406 = arith.constant 0 : index
    %395 = vector.load %arg20[%c1_404, %c1_405, %c0_406] : memref<10x10x64xbf16, #tpu.memory_space<vmem>>, vector<8x8x64xbf16>
    %396 = vector.shape_cast %395 : vector<8x8x64xbf16> to vector<64x64xbf16>
    %c1_407 = arith.constant 1 : index
    %c1_408 = arith.constant 1 : index
    %c0_409 = arith.constant 0 : index
    %c0_410 = arith.constant 0 : index
    %397 = vector.load %arg10[%c1_407, %c1_408, %c0_409, %c0_410] : memref<3x3x64x32xbf16, #tpu.memory_space<vmem>>, vector<1x1x64x32xbf16>
    %398 = vector.shape_cast %397 : vector<1x1x64x32xbf16> to vector<64x32xbf16>
    %cst_411 = arith.constant dense<0.000000e+00> : vector<64x32xf32>
    %399 = tpu.matmul %396, %398, %cst_411 {dimension_numbers = #tpu.dot_dimension_numbers<[1], [0], [0], [1], [0, 0, 1, 1], [], []>} : vector<64x64xbf16>, vector<64x32xbf16>, vector<64x32xf32> -> vector<64x32xf32>
    %400 = arith.addf %394, %399 : vector<64x32xf32>
    %c1_412 = arith.constant 1 : index
    %c2_413 = arith.constant 2 : index
    %c0_414 = arith.constant 0 : index
    %401 = vector.load %arg20[%c1_412, %c2_413, %c0_414] : memref<10x10x64xbf16, #tpu.memory_space<vmem>>, vector<8x8x64xbf16>
    %402 = vector.shape_cast %401 : vector<8x8x64xbf16> to vector<64x64xbf16>
    %c1_415 = arith.constant 1 : index
    %c2_416 = arith.constant 2 : index
    %c0_417 = arith.constant 0 : index
    %c0_418 = arith.constant 0 : index
    %403 = vector.load %arg10[%c1_415, %c2_416, %c0_417, %c0_418] : memref<3x3x64x32xbf16, #tpu.memory_space<vmem>>, vector<1x1x64x32xbf16>
    %404 = vector.shape_cast %403 : vector<1x1x64x32xbf16> to vector<64x32xbf16>
    %cst_419 = arith.constant dense<0.000000e+00> : vector<64x32xf32>
    %405 = tpu.matmul %402, %404, %cst_419 {dimension_numbers = #tpu.dot_dimension_numbers<[1], [0], [0], [1], [0, 0, 1, 1], [], []>} : vector<64x64xbf16>, vector<64x32xbf16>, vector<64x32xf32> -> vector<64x32xf32>
    %406 = arith.addf %400, %405 : vector<64x32xf32>
    %c2_420 = arith.constant 2 : index
    %c0_421 = arith.constant 0 : index
    %c0_422 = arith.constant 0 : index
    %407 = vector.load %arg20[%c2_420, %c0_421, %c0_422] : memref<10x10x64xbf16, #tpu.memory_space<vmem>>, vector<8x8x64xbf16>
    %408 = vector.shape_cast %407 : vector<8x8x64xbf16> to vector<64x64xbf16>
    %c2_423 = arith.constant 2 : index
    %c0_424 = arith.constant 0 : index
    %c0_425 = arith.constant 0 : index
    %c0_426 = arith.constant 0 : index
    %409 = vector.load %arg10[%c2_423, %c0_424, %c0_425, %c0_426] : memref<3x3x64x32xbf16, #tpu.memory_space<vmem>>, vector<1x1x64x32xbf16>
    %410 = vector.shape_cast %409 : vector<1x1x64x32xbf16> to vector<64x32xbf16>
    %cst_427 = arith.constant dense<0.000000e+00> : vector<64x32xf32>
    %411 = tpu.matmul %408, %410, %cst_427 {dimension_numbers = #tpu.dot_dimension_numbers<[1], [0], [0], [1], [0, 0, 1, 1], [], []>} : vector<64x64xbf16>, vector<64x32xbf16>, vector<64x32xf32> -> vector<64x32xf32>
    %412 = arith.addf %406, %411 : vector<64x32xf32>
    %c2_428 = arith.constant 2 : index
    %c1_429 = arith.constant 1 : index
    %c0_430 = arith.constant 0 : index
    %413 = vector.load %arg20[%c2_428, %c1_429, %c0_430] : memref<10x10x64xbf16, #tpu.memory_space<vmem>>, vector<8x8x64xbf16>
    %414 = vector.shape_cast %413 : vector<8x8x64xbf16> to vector<64x64xbf16>
    %c2_431 = arith.constant 2 : index
    %c1_432 = arith.constant 1 : index
    %c0_433 = arith.constant 0 : index
    %c0_434 = arith.constant 0 : index
    %415 = vector.load %arg10[%c2_431, %c1_432, %c0_433, %c0_434] : memref<3x3x64x32xbf16, #tpu.memory_space<vmem>>, vector<1x1x64x32xbf16>
    %416 = vector.shape_cast %415 : vector<1x1x64x32xbf16> to vector<64x32xbf16>
    %cst_435 = arith.constant dense<0.000000e+00> : vector<64x32xf32>
    %417 = tpu.matmul %414, %416, %cst_435 {dimension_numbers = #tpu.dot_dimension_numbers<[1], [0], [0], [1], [0, 0, 1, 1], [], []>} : vector<64x64xbf16>, vector<64x32xbf16>, vector<64x32xf32> -> vector<64x32xf32>
    %418 = arith.addf %412, %417 : vector<64x32xf32>
    %c2_436 = arith.constant 2 : index
    %c2_437 = arith.constant 2 : index
    %c0_438 = arith.constant 0 : index
    %419 = vector.load %arg20[%c2_436, %c2_437, %c0_438] : memref<10x10x64xbf16, #tpu.memory_space<vmem>>, vector<8x8x64xbf16>
    %420 = vector.shape_cast %419 : vector<8x8x64xbf16> to vector<64x64xbf16>
    %c2_439 = arith.constant 2 : index
    %c2_440 = arith.constant 2 : index
    %c0_441 = arith.constant 0 : index
    %c0_442 = arith.constant 0 : index
    %421 = vector.load %arg10[%c2_439, %c2_440, %c0_441, %c0_442] : memref<3x3x64x32xbf16, #tpu.memory_space<vmem>>, vector<1x1x64x32xbf16>
    %422 = vector.shape_cast %421 : vector<1x1x64x32xbf16> to vector<64x32xbf16>
    %cst_443 = arith.constant dense<0.000000e+00> : vector<64x32xf32>
    %423 = tpu.matmul %420, %422, %cst_443 {dimension_numbers = #tpu.dot_dimension_numbers<[1], [0], [0], [1], [0, 0, 1, 1], [], []>} : vector<64x64xbf16>, vector<64x32xbf16>, vector<64x32xf32> -> vector<64x32xf32>
    %424 = arith.addf %418, %423 : vector<64x32xf32>
    %425 = vector.broadcast %15 : vector<1x32xf32> to vector<64x32xf32>
    %426 = arith.addf %424, %425 : vector<64x32xf32>
    %cst_444 = arith.constant 0.000000e+00 : f32
    %427 = vector.broadcast %cst_444 : f32 to vector<64x32xf32>
    %428 = arith.maximumf %426, %427 : vector<64x32xf32>
    %429 = arith.truncf %428 : vector<64x32xf32> to vector<64x32xbf16>
    %cst_445 = arith.constant dense<0.000000e+00> : vector<64x32xf32>
    %430 = tpu.matmul %20, %429, %cst_445 {dimension_numbers = #tpu.dot_dimension_numbers<[1], [0], [0], [1], [0, 0, 1, 1], [], []>} : vector<64x64xbf16>, vector<64x32xbf16>, vector<64x32xf32> -> vector<64x32xf32>
    %cst_446 = arith.constant 0.000000e+00 : f32
    %431 = vector.broadcast %cst_446 : f32 to vector<16x64xf32>
    %432 = vector.extract_strided_slice %430 {offsets = [0, 0], sizes = [16, 32], strides = [1, 1]} : vector<64x32xf32> to vector<16x32xf32>
    %433 = arith.truncf %432 : vector<16x32xf32> to vector<16x32xbf16>
    %c0_447 = arith.constant 0 : index
    %c0_448 = arith.constant 0 : index
    %c0_449 = arith.constant 0 : index
    %434 = vector.load %arg12[%c0_447, %c0_448, %c0_449] : memref<4x32x64xbf16, #tpu.memory_space<vmem>>, vector<1x32x64xbf16>
    %435 = vector.shape_cast %434 : vector<1x32x64xbf16> to vector<32x64xbf16>
    %cst_450 = arith.constant dense<0.000000e+00> : vector<16x64xf32>
    %436 = tpu.matmul %433, %435, %cst_450 {dimension_numbers = #tpu.dot_dimension_numbers<[1], [0], [0], [1], [0, 0, 1, 1], [], []>} : vector<16x32xbf16>, vector<32x64xbf16>, vector<16x64xf32> -> vector<16x64xf32>
    %437 = arith.addf %431, %436 : vector<16x64xf32>
    %438 = vector.extract_strided_slice %430 {offsets = [16, 0], sizes = [16, 32], strides = [1, 1]} : vector<64x32xf32> to vector<16x32xf32>
    %439 = arith.truncf %438 : vector<16x32xf32> to vector<16x32xbf16>
    %c1_451 = arith.constant 1 : index
    %c0_452 = arith.constant 0 : index
    %c0_453 = arith.constant 0 : index
    %440 = vector.load %arg12[%c1_451, %c0_452, %c0_453] : memref<4x32x64xbf16, #tpu.memory_space<vmem>>, vector<1x32x64xbf16>
    %441 = vector.shape_cast %440 : vector<1x32x64xbf16> to vector<32x64xbf16>
    %cst_454 = arith.constant dense<0.000000e+00> : vector<16x64xf32>
    %442 = tpu.matmul %439, %441, %cst_454 {dimension_numbers = #tpu.dot_dimension_numbers<[1], [0], [0], [1], [0, 0, 1, 1], [], []>} : vector<16x32xbf16>, vector<32x64xbf16>, vector<16x64xf32> -> vector<16x64xf32>
    %443 = arith.addf %437, %442 : vector<16x64xf32>
    %444 = vector.extract_strided_slice %430 {offsets = [32, 0], sizes = [16, 32], strides = [1, 1]} : vector<64x32xf32> to vector<16x32xf32>
    %445 = arith.truncf %444 : vector<16x32xf32> to vector<16x32xbf16>
    %c2_455 = arith.constant 2 : index
    %c0_456 = arith.constant 0 : index
    %c0_457 = arith.constant 0 : index
    %446 = vector.load %arg12[%c2_455, %c0_456, %c0_457] : memref<4x32x64xbf16, #tpu.memory_space<vmem>>, vector<1x32x64xbf16>
    %447 = vector.shape_cast %446 : vector<1x32x64xbf16> to vector<32x64xbf16>
    %cst_458 = arith.constant dense<0.000000e+00> : vector<16x64xf32>
    %448 = tpu.matmul %445, %447, %cst_458 {dimension_numbers = #tpu.dot_dimension_numbers<[1], [0], [0], [1], [0, 0, 1, 1], [], []>} : vector<16x32xbf16>, vector<32x64xbf16>, vector<16x64xf32> -> vector<16x64xf32>
    %449 = arith.addf %443, %448 : vector<16x64xf32>
    %450 = vector.extract_strided_slice %430 {offsets = [48, 0], sizes = [16, 32], strides = [1, 1]} : vector<64x32xf32> to vector<16x32xf32>
    %451 = arith.truncf %450 : vector<16x32xf32> to vector<16x32xbf16>
    %c3_459 = arith.constant 3 : index
    %c0_460 = arith.constant 0 : index
    %c0_461 = arith.constant 0 : index
    %452 = vector.load %arg12[%c3_459, %c0_460, %c0_461] : memref<4x32x64xbf16, #tpu.memory_space<vmem>>, vector<1x32x64xbf16>
    %453 = vector.shape_cast %452 : vector<1x32x64xbf16> to vector<32x64xbf16>
    %cst_462 = arith.constant dense<0.000000e+00> : vector<16x64xf32>
    %454 = tpu.matmul %451, %453, %cst_462 {dimension_numbers = #tpu.dot_dimension_numbers<[1], [0], [0], [1], [0, 0, 1, 1], [], []>} : vector<16x32xbf16>, vector<32x64xbf16>, vector<16x64xf32> -> vector<16x64xf32>
    %455 = arith.addf %449, %454 : vector<16x64xf32>
    %456 = vector.broadcast %16 : vector<1x64xf32> to vector<16x64xf32>
    %457 = arith.addf %455, %456 : vector<16x64xf32>
    %cst_463 = arith.constant 0.000000e+00 : f32
    %458 = vector.broadcast %cst_463 : f32 to vector<16x64xf32>
    %459 = arith.maximumf %457, %458 : vector<16x64xf32>
    %460 = arith.addf %459, %369 : vector<16x64xf32>
    %461 = arith.truncf %460 : vector<16x64xf32> to vector<16x64xbf16>
    %462 = vector.extract_strided_slice %461 {offsets = [0, 0], sizes = [4, 64], strides = [1, 1]} : vector<16x64xbf16> to vector<4x64xbf16>
    %c7_464 = arith.constant 7 : index
    %c0_465 = arith.constant 0 : index
    %463 = vector.load %arg21[%c7_464, %c0_465] : memref<36x64xbf16, #tpu.memory_space<vmem>>, vector<4x64xbf16>
    tpu.vector_store %arg21[%c7_464, %c0_465], %462 {strides = array<i32>} : memref<36x64xbf16, #tpu.memory_space<vmem>>, vector<4x64xbf16>,
    %464 = vector.extract_strided_slice %461 {offsets = [4, 0], sizes = [4, 64], strides = [1, 1]} : vector<16x64xbf16> to vector<4x64xbf16>
    %c13_466 = arith.constant 13 : index
    %c0_467 = arith.constant 0 : index
    %465 = vector.load %arg21[%c13_466, %c0_467] : memref<36x64xbf16, #tpu.memory_space<vmem>>, vector<4x64xbf16>
    tpu.vector_store %arg21[%c13_466, %c0_467], %464 {strides = array<i32>} : memref<36x64xbf16, #tpu.memory_space<vmem>>, vector<4x64xbf16>,
    %466 = vector.extract_strided_slice %461 {offsets = [8, 0], sizes = [4, 64], strides = [1, 1]} : vector<16x64xbf16> to vector<4x64xbf16>
    %c19_468 = arith.constant 19 : index
    %c0_469 = arith.constant 0 : index
    %467 = vector.load %arg21[%c19_468, %c0_469] : memref<36x64xbf16, #tpu.memory_space<vmem>>, vector<4x64xbf16>
    tpu.vector_store %arg21[%c19_468, %c0_469], %466 {strides = array<i32>} : memref<36x64xbf16, #tpu.memory_space<vmem>>, vector<4x64xbf16>,
    %468 = vector.extract_strided_slice %461 {offsets = [12, 0], sizes = [4, 64], strides = [1, 1]} : vector<16x64xbf16> to vector<4x64xbf16>
    %c25_470 = arith.constant 25 : index
    %c0_471 = arith.constant 0 : index
    %469 = vector.load %arg21[%c25_470, %c0_471] : memref<36x64xbf16, #tpu.memory_space<vmem>>, vector<4x64xbf16>
    tpu.vector_store %arg21[%c25_470, %c0_471], %468 {strides = array<i32>} : memref<36x64xbf16, #tpu.memory_space<vmem>>, vector<4x64xbf16>,
    %c1_472 = arith.constant 1 : index
    %c0_473 = arith.constant 0 : index
    %c0_474 = arith.constant 0 : index
    %470 = vector.load %arg3[%c1_472, %c0_473, %c0_474] : memref<2x22x96xf32, #tpu.memory_space<vmem>>, vector<1x22x96xf32>
    %471 = vector.shape_cast %470 : vector<1x22x96xf32> to vector<22x96xf32>
    %c0_475 = arith.constant 0 : index
    %c0_476 = arith.constant 0 : index
    %472 = vector.load %arg21[%c0_475, %c0_476] : memref<36x64xbf16, #tpu.memory_space<vmem>>, vector<22x64xbf16>
    %c0_477 = arith.constant 0 : index
    %c0_478 = arith.constant 0 : index
    %c0_479 = arith.constant 0 : index
    %c0_480 = arith.constant 0 : index
    %473 = vector.load %arg14[%c0_477, %c0_478, %c0_479, %c0_480] : memref<3x3x64x96xbf16, #tpu.memory_space<vmem>>, vector<1x1x64x96xbf16>
    %474 = vector.shape_cast %473 : vector<1x1x64x96xbf16> to vector<64x96xbf16>
    %cst_481 = arith.constant dense<0.000000e+00> : vector<22x96xf32>
    %475 = tpu.matmul %472, %474, %cst_481 {dimension_numbers = #tpu.dot_dimension_numbers<[1], [0], [0], [1], [0, 0, 1, 1], [], []>} : vector<22x64xbf16>, vector<64x96xbf16>, vector<22x96xf32> -> vector<22x96xf32>
    %476 = arith.addf %471, %475 : vector<22x96xf32>
    %c1_482 = arith.constant 1 : index
    %c0_483 = arith.constant 0 : index
    %477 = vector.load %arg21[%c1_482, %c0_483] : memref<36x64xbf16, #tpu.memory_space<vmem>>, vector<22x64xbf16>
    %c0_484 = arith.constant 0 : index
    %c1_485 = arith.constant 1 : index
    %c0_486 = arith.constant 0 : index
    %c0_487 = arith.constant 0 : index
    %478 = vector.load %arg14[%c0_484, %c1_485, %c0_486, %c0_487] : memref<3x3x64x96xbf16, #tpu.memory_space<vmem>>, vector<1x1x64x96xbf16>
    %479 = vector.shape_cast %478 : vector<1x1x64x96xbf16> to vector<64x96xbf16>
    %cst_488 = arith.constant dense<0.000000e+00> : vector<22x96xf32>
    %480 = tpu.matmul %477, %479, %cst_488 {dimension_numbers = #tpu.dot_dimension_numbers<[1], [0], [0], [1], [0, 0, 1, 1], [], []>} : vector<22x64xbf16>, vector<64x96xbf16>, vector<22x96xf32> -> vector<22x96xf32>
    %481 = arith.addf %476, %480 : vector<22x96xf32>
    %c2_489 = arith.constant 2 : index
    %c0_490 = arith.constant 0 : index
    %482 = vector.load %arg21[%c2_489, %c0_490] : memref<36x64xbf16, #tpu.memory_space<vmem>>, vector<22x64xbf16>
    %c0_491 = arith.constant 0 : index
    %c2_492 = arith.constant 2 : index
    %c0_493 = arith.constant 0 : index
    %c0_494 = arith.constant 0 : index
    %483 = vector.load %arg14[%c0_491, %c2_492, %c0_493, %c0_494] : memref<3x3x64x96xbf16, #tpu.memory_space<vmem>>, vector<1x1x64x96xbf16>
    %484 = vector.shape_cast %483 : vector<1x1x64x96xbf16> to vector<64x96xbf16>
    %cst_495 = arith.constant dense<0.000000e+00> : vector<22x96xf32>
    %485 = tpu.matmul %482, %484, %cst_495 {dimension_numbers = #tpu.dot_dimension_numbers<[1], [0], [0], [1], [0, 0, 1, 1], [], []>} : vector<22x64xbf16>, vector<64x96xbf16>, vector<22x96xf32> -> vector<22x96xf32>
    %486 = arith.addf %481, %485 : vector<22x96xf32>
    %c6_496 = arith.constant 6 : index
    %c0_497 = arith.constant 0 : index
    %487 = vector.load %arg21[%c6_496, %c0_497] : memref<36x64xbf16, #tpu.memory_space<vmem>>, vector<22x64xbf16>
    %c1_498 = arith.constant 1 : index
    %c0_499 = arith.constant 0 : index
    %c0_500 = arith.constant 0 : index
    %c0_501 = arith.constant 0 : index
    %488 = vector.load %arg14[%c1_498, %c0_499, %c0_500, %c0_501] : memref<3x3x64x96xbf16, #tpu.memory_space<vmem>>, vector<1x1x64x96xbf16>
    %489 = vector.shape_cast %488 : vector<1x1x64x96xbf16> to vector<64x96xbf16>
    %cst_502 = arith.constant dense<0.000000e+00> : vector<22x96xf32>
    %490 = tpu.matmul %487, %489, %cst_502 {dimension_numbers = #tpu.dot_dimension_numbers<[1], [0], [0], [1], [0, 0, 1, 1], [], []>} : vector<22x64xbf16>, vector<64x96xbf16>, vector<22x96xf32> -> vector<22x96xf32>
    %491 = arith.addf %486, %490 : vector<22x96xf32>
    %c7_503 = arith.constant 7 : index
    %c0_504 = arith.constant 0 : index
    %492 = vector.load %arg21[%c7_503, %c0_504] : memref<36x64xbf16, #tpu.memory_space<vmem>>, vector<22x64xbf16>
    %c1_505 = arith.constant 1 : index
    %c1_506 = arith.constant 1 : index
    %c0_507 = arith.constant 0 : index
    %c0_508 = arith.constant 0 : index
    %493 = vector.load %arg14[%c1_505, %c1_506, %c0_507, %c0_508] : memref<3x3x64x96xbf16, #tpu.memory_space<vmem>>, vector<1x1x64x96xbf16>
    %494 = vector.shape_cast %493 : vector<1x1x64x96xbf16> to vector<64x96xbf16>
    %cst_509 = arith.constant dense<0.000000e+00> : vector<22x96xf32>
    %495 = tpu.matmul %492, %494, %cst_509 {dimension_numbers = #tpu.dot_dimension_numbers<[1], [0], [0], [1], [0, 0, 1, 1], [], []>} : vector<22x64xbf16>, vector<64x96xbf16>, vector<22x96xf32> -> vector<22x96xf32>
    %496 = arith.addf %491, %495 : vector<22x96xf32>
    %c8_510 = arith.constant 8 : index
    %c0_511 = arith.constant 0 : index
    %497 = vector.load %arg21[%c8_510, %c0_511] : memref<36x64xbf16, #tpu.memory_space<vmem>>, vector<22x64xbf16>
    %c1_512 = arith.constant 1 : index
    %c2_513 = arith.constant 2 : index
    %c0_514 = arith.constant 0 : index
    %c0_515 = arith.constant 0 : index
    %498 = vector.load %arg14[%c1_512, %c2_513, %c0_514, %c0_515] : memref<3x3x64x96xbf16, #tpu.memory_space<vmem>>, vector<1x1x64x96xbf16>
    %499 = vector.shape_cast %498 : vector<1x1x64x96xbf16> to vector<64x96xbf16>
    %cst_516 = arith.constant dense<0.000000e+00> : vector<22x96xf32>
    %500 = tpu.matmul %497, %499, %cst_516 {dimension_numbers = #tpu.dot_dimension_numbers<[1], [0], [0], [1], [0, 0, 1, 1], [], []>} : vector<22x64xbf16>, vector<64x96xbf16>, vector<22x96xf32> -> vector<22x96xf32>
    %501 = arith.addf %496, %500 : vector<22x96xf32>
    %c12_517 = arith.constant 12 : index
    %c0_518 = arith.constant 0 : index
    %502 = vector.load %arg21[%c12_517, %c0_518] : memref<36x64xbf16, #tpu.memory_space<vmem>>, vector<22x64xbf16>
    %c2_519 = arith.constant 2 : index
    %c0_520 = arith.constant 0 : index
    %c0_521 = arith.constant 0 : index
    %c0_522 = arith.constant 0 : index
    %503 = vector.load %arg14[%c2_519, %c0_520, %c0_521, %c0_522] : memref<3x3x64x96xbf16, #tpu.memory_space<vmem>>, vector<1x1x64x96xbf16>
    %504 = vector.shape_cast %503 : vector<1x1x64x96xbf16> to vector<64x96xbf16>
    %cst_523 = arith.constant dense<0.000000e+00> : vector<22x96xf32>
    %505 = tpu.matmul %502, %504, %cst_523 {dimension_numbers = #tpu.dot_dimension_numbers<[1], [0], [0], [1], [0, 0, 1, 1], [], []>} : vector<22x64xbf16>, vector<64x96xbf16>, vector<22x96xf32> -> vector<22x96xf32>
    %506 = arith.addf %501, %505 : vector<22x96xf32>
    %c13_524 = arith.constant 13 : index
    %c0_525 = arith.constant 0 : index
    %507 = vector.load %arg21[%c13_524, %c0_525] : memref<36x64xbf16, #tpu.memory_space<vmem>>, vector<22x64xbf16>
    %c2_526 = arith.constant 2 : index
    %c1_527 = arith.constant 1 : index
    %c0_528 = arith.constant 0 : index
    %c0_529 = arith.constant 0 : index
    %508 = vector.load %arg14[%c2_526, %c1_527, %c0_528, %c0_529] : memref<3x3x64x96xbf16, #tpu.memory_space<vmem>>, vector<1x1x64x96xbf16>
    %509 = vector.shape_cast %508 : vector<1x1x64x96xbf16> to vector<64x96xbf16>
    %cst_530 = arith.constant dense<0.000000e+00> : vector<22x96xf32>
    %510 = tpu.matmul %507, %509, %cst_530 {dimension_numbers = #tpu.dot_dimension_numbers<[1], [0], [0], [1], [0, 0, 1, 1], [], []>} : vector<22x64xbf16>, vector<64x96xbf16>, vector<22x96xf32> -> vector<22x96xf32>
    %511 = arith.addf %506, %510 : vector<22x96xf32>
    %c14_531 = arith.constant 14 : index
    %c0_532 = arith.constant 0 : index
    %512 = vector.load %arg21[%c14_531, %c0_532] : memref<36x64xbf16, #tpu.memory_space<vmem>>, vector<22x64xbf16>
    %c2_533 = arith.constant 2 : index
    %c2_534 = arith.constant 2 : index
    %c0_535 = arith.constant 0 : index
    %c0_536 = arith.constant 0 : index
    %513 = vector.load %arg14[%c2_533, %c2_534, %c0_535, %c0_536] : memref<3x3x64x96xbf16, #tpu.memory_space<vmem>>, vector<1x1x64x96xbf16>
    %514 = vector.shape_cast %513 : vector<1x1x64x96xbf16> to vector<64x96xbf16>
    %cst_537 = arith.constant dense<0.000000e+00> : vector<22x96xf32>
    %515 = tpu.matmul %512, %514, %cst_537 {dimension_numbers = #tpu.dot_dimension_numbers<[1], [0], [0], [1], [0, 0, 1, 1], [], []>} : vector<22x64xbf16>, vector<64x96xbf16>, vector<22x96xf32> -> vector<22x96xf32>
    %516 = arith.addf %511, %515 : vector<22x96xf32>
    %517 = vector.extract_strided_slice %516 {offsets = [0, 0], sizes = [22, 64], strides = [1, 1]} : vector<22x96xf32> to vector<22x64xf32>
    %cst_538 = arith.constant 0.000000e+00 : f32
    %518 = vector.broadcast %cst_538 : f32 to vector<22x64xf32>
    %519 = arith.maximumf %517, %518 : vector<22x64xf32>
    %520 = vector.extract_strided_slice %516 {offsets = [0, 64], sizes = [22, 32], strides = [1, 1]} : vector<22x96xf32> to vector<22x32xf32>
    %cst_539 = arith.constant 0.000000e+00 : f32
    %521 = vector.broadcast %cst_539 : f32 to vector<22x32xf32>
    %522 = arith.maximumf %520, %521 : vector<22x32xf32>
    %523 = vector.broadcast %21 : vector<22x1xf32> to vector<22x32xf32>
    %524 = arith.mulf %522, %523 : vector<22x32xf32>
    %525 = arith.truncf %524 : vector<22x32xf32> to vector<22x32xbf16>
    %c7_540 = arith.constant 7 : index
    %c0_541 = arith.constant 0 : index
    %526 = vector.load %arg22[%c7_540, %c0_541] : memref<36x32xbf16, #tpu.memory_space<vmem>>, vector<22x32xbf16>
    tpu.vector_store %arg22[%c7_540, %c0_541], %525 {strides = array<i32>} : memref<36x32xbf16, #tpu.memory_space<vmem>>, vector<22x32xbf16>,
    %cst_542 = arith.constant 0.000000e+00 : f32
    %527 = vector.broadcast %cst_542 : f32 to vector<22x64xf32>
    %c0_543 = arith.constant 0 : index
    %c0_544 = arith.constant 0 : index
    %528 = vector.load %arg22[%c0_543, %c0_544] : memref<36x32xbf16, #tpu.memory_space<vmem>>, vector<22x32xbf16>
    %c0_545 = arith.constant 0 : index
    %c0_546 = arith.constant 0 : index
    %c0_547 = arith.constant 0 : index
    %c0_548 = arith.constant 0 : index
    %529 = vector.load %arg15[%c0_545, %c0_546, %c0_547, %c0_548] : memref<3x3x32x64xbf16, #tpu.memory_space<vmem>>, vector<1x1x32x64xbf16>
    %530 = vector.shape_cast %529 : vector<1x1x32x64xbf16> to vector<32x64xbf16>
    %cst_549 = arith.constant dense<0.000000e+00> : vector<22x64xf32>
    %531 = tpu.matmul %528, %530, %cst_549 {dimension_numbers = #tpu.dot_dimension_numbers<[1], [0], [0], [1], [0, 0, 1, 1], [], []>} : vector<22x32xbf16>, vector<32x64xbf16>, vector<22x64xf32> -> vector<22x64xf32>
    %532 = arith.addf %527, %531 : vector<22x64xf32>
    %c1_550 = arith.constant 1 : index
    %c0_551 = arith.constant 0 : index
    %533 = vector.load %arg22[%c1_550, %c0_551] : memref<36x32xbf16, #tpu.memory_space<vmem>>, vector<22x32xbf16>
    %c0_552 = arith.constant 0 : index
    %c1_553 = arith.constant 1 : index
    %c0_554 = arith.constant 0 : index
    %c0_555 = arith.constant 0 : index
    %534 = vector.load %arg15[%c0_552, %c1_553, %c0_554, %c0_555] : memref<3x3x32x64xbf16, #tpu.memory_space<vmem>>, vector<1x1x32x64xbf16>
    %535 = vector.shape_cast %534 : vector<1x1x32x64xbf16> to vector<32x64xbf16>
    %cst_556 = arith.constant dense<0.000000e+00> : vector<22x64xf32>
    %536 = tpu.matmul %533, %535, %cst_556 {dimension_numbers = #tpu.dot_dimension_numbers<[1], [0], [0], [1], [0, 0, 1, 1], [], []>} : vector<22x32xbf16>, vector<32x64xbf16>, vector<22x64xf32> -> vector<22x64xf32>
    %537 = arith.addf %532, %536 : vector<22x64xf32>
    %c2_557 = arith.constant 2 : index
    %c0_558 = arith.constant 0 : index
    %538 = vector.load %arg22[%c2_557, %c0_558] : memref<36x32xbf16, #tpu.memory_space<vmem>>, vector<22x32xbf16>
    %c0_559 = arith.constant 0 : index
    %c2_560 = arith.constant 2 : index
    %c0_561 = arith.constant 0 : index
    %c0_562 = arith.constant 0 : index
    %539 = vector.load %arg15[%c0_559, %c2_560, %c0_561, %c0_562] : memref<3x3x32x64xbf16, #tpu.memory_space<vmem>>, vector<1x1x32x64xbf16>
    %540 = vector.shape_cast %539 : vector<1x1x32x64xbf16> to vector<32x64xbf16>
    %cst_563 = arith.constant dense<0.000000e+00> : vector<22x64xf32>
    %541 = tpu.matmul %538, %540, %cst_563 {dimension_numbers = #tpu.dot_dimension_numbers<[1], [0], [0], [1], [0, 0, 1, 1], [], []>} : vector<22x32xbf16>, vector<32x64xbf16>, vector<22x64xf32> -> vector<22x64xf32>
    %542 = arith.addf %537, %541 : vector<22x64xf32>
    %c6_564 = arith.constant 6 : index
    %c0_565 = arith.constant 0 : index
    %543 = vector.load %arg22[%c6_564, %c0_565] : memref<36x32xbf16, #tpu.memory_space<vmem>>, vector<22x32xbf16>
    %c1_566 = arith.constant 1 : index
    %c0_567 = arith.constant 0 : index
    %c0_568 = arith.constant 0 : index
    %c0_569 = arith.constant 0 : index
    %544 = vector.load %arg15[%c1_566, %c0_567, %c0_568, %c0_569] : memref<3x3x32x64xbf16, #tpu.memory_space<vmem>>, vector<1x1x32x64xbf16>
    %545 = vector.shape_cast %544 : vector<1x1x32x64xbf16> to vector<32x64xbf16>
    %cst_570 = arith.constant dense<0.000000e+00> : vector<22x64xf32>
    %546 = tpu.matmul %543, %545, %cst_570 {dimension_numbers = #tpu.dot_dimension_numbers<[1], [0], [0], [1], [0, 0, 1, 1], [], []>} : vector<22x32xbf16>, vector<32x64xbf16>, vector<22x64xf32> -> vector<22x64xf32>
    %547 = arith.addf %542, %546 : vector<22x64xf32>
    %c7_571 = arith.constant 7 : index
    %c0_572 = arith.constant 0 : index
    %548 = vector.load %arg22[%c7_571, %c0_572] : memref<36x32xbf16, #tpu.memory_space<vmem>>, vector<22x32xbf16>
    %c1_573 = arith.constant 1 : index
    %c1_574 = arith.constant 1 : index
    %c0_575 = arith.constant 0 : index
    %c0_576 = arith.constant 0 : index
    %549 = vector.load %arg15[%c1_573, %c1_574, %c0_575, %c0_576] : memref<3x3x32x64xbf16, #tpu.memory_space<vmem>>, vector<1x1x32x64xbf16>
    %550 = vector.shape_cast %549 : vector<1x1x32x64xbf16> to vector<32x64xbf16>
    %cst_577 = arith.constant dense<0.000000e+00> : vector<22x64xf32>
    %551 = tpu.matmul %548, %550, %cst_577 {dimension_numbers = #tpu.dot_dimension_numbers<[1], [0], [0], [1], [0, 0, 1, 1], [], []>} : vector<22x32xbf16>, vector<32x64xbf16>, vector<22x64xf32> -> vector<22x64xf32>
    %552 = arith.addf %547, %551 : vector<22x64xf32>
    %c8_578 = arith.constant 8 : index
    %c0_579 = arith.constant 0 : index
    %553 = vector.load %arg22[%c8_578, %c0_579] : memref<36x32xbf16, #tpu.memory_space<vmem>>, vector<22x32xbf16>
    %c1_580 = arith.constant 1 : index
    %c2_581 = arith.constant 2 : index
    %c0_582 = arith.constant 0 : index
    %c0_583 = arith.constant 0 : index
    %554 = vector.load %arg15[%c1_580, %c2_581, %c0_582, %c0_583] : memref<3x3x32x64xbf16, #tpu.memory_space<vmem>>, vector<1x1x32x64xbf16>
    %555 = vector.shape_cast %554 : vector<1x1x32x64xbf16> to vector<32x64xbf16>
    %cst_584 = arith.constant dense<0.000000e+00> : vector<22x64xf32>
    %556 = tpu.matmul %553, %555, %cst_584 {dimension_numbers = #tpu.dot_dimension_numbers<[1], [0], [0], [1], [0, 0, 1, 1], [], []>} : vector<22x32xbf16>, vector<32x64xbf16>, vector<22x64xf32> -> vector<22x64xf32>
    %557 = arith.addf %552, %556 : vector<22x64xf32>
    %c12_585 = arith.constant 12 : index
    %c0_586 = arith.constant 0 : index
    %558 = vector.load %arg22[%c12_585, %c0_586] : memref<36x32xbf16, #tpu.memory_space<vmem>>, vector<22x32xbf16>
    %c2_587 = arith.constant 2 : index
    %c0_588 = arith.constant 0 : index
    %c0_589 = arith.constant 0 : index
    %c0_590 = arith.constant 0 : index
    %559 = vector.load %arg15[%c2_587, %c0_588, %c0_589, %c0_590] : memref<3x3x32x64xbf16, #tpu.memory_space<vmem>>, vector<1x1x32x64xbf16>
    %560 = vector.shape_cast %559 : vector<1x1x32x64xbf16> to vector<32x64xbf16>
    %cst_591 = arith.constant dense<0.000000e+00> : vector<22x64xf32>
    %561 = tpu.matmul %558, %560, %cst_591 {dimension_numbers = #tpu.dot_dimension_numbers<[1], [0], [0], [1], [0, 0, 1, 1], [], []>} : vector<22x32xbf16>, vector<32x64xbf16>, vector<22x64xf32> -> vector<22x64xf32>
    %562 = arith.addf %557, %561 : vector<22x64xf32>
    %c13_592 = arith.constant 13 : index
    %c0_593 = arith.constant 0 : index
    %563 = vector.load %arg22[%c13_592, %c0_593] : memref<36x32xbf16, #tpu.memory_space<vmem>>, vector<22x32xbf16>
    %c2_594 = arith.constant 2 : index
    %c1_595 = arith.constant 1 : index
    %c0_596 = arith.constant 0 : index
    %c0_597 = arith.constant 0 : index
    %564 = vector.load %arg15[%c2_594, %c1_595, %c0_596, %c0_597] : memref<3x3x32x64xbf16, #tpu.memory_space<vmem>>, vector<1x1x32x64xbf16>
    %565 = vector.shape_cast %564 : vector<1x1x32x64xbf16> to vector<32x64xbf16>
    %cst_598 = arith.constant dense<0.000000e+00> : vector<22x64xf32>
    %566 = tpu.matmul %563, %565, %cst_598 {dimension_numbers = #tpu.dot_dimension_numbers<[1], [0], [0], [1], [0, 0, 1, 1], [], []>} : vector<22x32xbf16>, vector<32x64xbf16>, vector<22x64xf32> -> vector<22x64xf32>
    %567 = arith.addf %562, %566 : vector<22x64xf32>
    %c14_599 = arith.constant 14 : index
    %c0_600 = arith.constant 0 : index
    %568 = vector.load %arg22[%c14_599, %c0_600] : memref<36x32xbf16, #tpu.memory_space<vmem>>, vector<22x32xbf16>
    %c2_601 = arith.constant 2 : index
    %c2_602 = arith.constant 2 : index
    %c0_603 = arith.constant 0 : index
    %c0_604 = arith.constant 0 : index
    %569 = vector.load %arg15[%c2_601, %c2_602, %c0_603, %c0_604] : memref<3x3x32x64xbf16, #tpu.memory_space<vmem>>, vector<1x1x32x64xbf16>
    %570 = vector.shape_cast %569 : vector<1x1x32x64xbf16> to vector<32x64xbf16>
    %cst_605 = arith.constant dense<0.000000e+00> : vector<22x64xf32>
    %571 = tpu.matmul %568, %570, %cst_605 {dimension_numbers = #tpu.dot_dimension_numbers<[1], [0], [0], [1], [0, 0, 1, 1], [], []>} : vector<22x32xbf16>, vector<32x64xbf16>, vector<22x64xf32> -> vector<22x64xf32>
    %572 = arith.addf %567, %571 : vector<22x64xf32>
    %573 = vector.broadcast %17 : vector<1x64xf32> to vector<22x64xf32>
    %574 = arith.addf %572, %573 : vector<22x64xf32>
    %cst_606 = arith.constant 0.000000e+00 : f32
    %575 = vector.broadcast %cst_606 : f32 to vector<22x64xf32>
    %576 = arith.maximumf %574, %575 : vector<22x64xf32>
    %577 = arith.addf %576, %519 : vector<22x64xf32>
    %578 = arith.truncf %577 : vector<22x64xf32> to vector<22x64xbf16>
    %cst_607 = arith.constant dense<0.000000e+00> : vector<22x64xf32>
    %579 = tpu.matmul %578, %19, %cst_607 {dimension_numbers = #tpu.dot_dimension_numbers<[1], [0], [0], [1], [0, 0, 1, 1], [], []>} : vector<22x64xbf16>, vector<64x64xbf16>, vector<22x64xf32> -> vector<22x64xf32>
    %580 = vector.broadcast %18 : vector<1x64xf32> to vector<22x64xf32>
    %581 = arith.addf %579, %580 : vector<22x64xf32>
    %cst_608 = arith.constant 0.000000e+00 : f32
    %582 = vector.broadcast %cst_608 : f32 to vector<22x64xf32>
    %583 = arith.maximumf %581, %582 : vector<22x64xf32>
    %584 = vector.broadcast %21 : vector<22x1xf32> to vector<22x64xf32>
    %585 = arith.mulf %583, %584 : vector<22x64xf32>
    %cst_609 = arith.constant dense<0.000000e+00> : vector<64xf32>
    %586 = vector.multi_reduction <add>, %585, %cst_609 [0] : vector<22x64xf32> to vector<64xf32>
    %587 = vector.shape_cast %586 : vector<64xf32> to vector<1x64xf32>
    %cst_610 = arith.constant 6.250000e-02 : f32
    %588 = vector.broadcast %cst_610 : f32 to vector<1x64xf32>
    %589 = arith.mulf %587, %588 : vector<1x64xf32>
    %590 = vector.shape_cast %589 : vector<1x64xf32> to vector<1x1x64xf32>
    %c1_611 = arith.constant 1 : index
    %c0_612 = arith.constant 0 : index
    %c0_613 = arith.constant 0 : index
    %591 = vector.load %arg19[%c1_611, %c0_612, %c0_613] : memref<2x1x64xf32, #tpu.memory_space<vmem>>, vector<1x1x64xf32>
    tpu.vector_store %arg19[%c1_611, %c0_612, %c0_613], %590 {strides = array<i32>} : memref<2x1x64xf32, #tpu.memory_space<vmem>>, vector<1x1x64xf32>,
    return
  }
  func.func @transform_0(%arg0: i32) -> (i32, i32, i32) {
    %c0_i32 = arith.constant 0 : i32
    %c0_i32_0 = arith.constant 0 : i32
    %c0_i32_1 = arith.constant 0 : i32
    return %arg0, %c0_i32, %c0_i32_0 : i32, i32, i32
  }
  func.func @transform_1(%arg0: i32) -> (i32, i32, i32, i32) {
    %c0_i32 = arith.constant 0 : i32
    %c0_i32_0 = arith.constant 0 : i32
    %c0_i32_1 = arith.constant 0 : i32
    %c0_i32_2 = arith.constant 0 : i32
    return %arg0, %c0_i32, %c0_i32_0, %c0_i32_1 : i32, i32, i32, i32
  }
  func.func @transform_2(%arg0: i32) -> (i32, i32, i32) {
    %c0_i32 = arith.constant 0 : i32
    %c0_i32_0 = arith.constant 0 : i32
    %c0_i32_1 = arith.constant 0 : i32
    return %arg0, %c0_i32, %c0_i32_0 : i32, i32, i32
  }
  func.func @transform_3(%arg0: i32) -> (i32, i32) {
    %c0_i32 = arith.constant 0 : i32
    %c0_i32_0 = arith.constant 0 : i32
    %c0_i32_1 = arith.constant 0 : i32
    return %c0_i32, %c0_i32_0 : i32, i32
  }
  func.func @transform_4(%arg0: i32) -> (i32, i32) {
    %c0_i32 = arith.constant 0 : i32
    %c0_i32_0 = arith.constant 0 : i32
    %c0_i32_1 = arith.constant 0 : i32
    return %c0_i32, %c0_i32_0 : i32, i32
  }
  func.func @transform_5(%arg0: i32) -> (i32, i32) {
    %c0_i32 = arith.constant 0 : i32
    %c0_i32_0 = arith.constant 0 : i32
    %c0_i32_1 = arith.constant 0 : i32
    return %c0_i32, %c0_i32_0 : i32, i32
  }
  func.func @transform_6(%arg0: i32) -> (i32, i32) {
    %c0_i32 = arith.constant 0 : i32
    %c0_i32_0 = arith.constant 0 : i32
    %c0_i32_1 = arith.constant 0 : i32
    return %c0_i32, %c0_i32_0 : i32, i32
  }
  func.func @transform_7(%arg0: i32) -> (i32, i32, i32) {
    %c0_i32 = arith.constant 0 : i32
    %c0_i32_0 = arith.constant 0 : i32
    %c0_i32_1 = arith.constant 0 : i32
    %c0_i32_2 = arith.constant 0 : i32
    return %c0_i32, %c0_i32_0, %c0_i32_1 : i32, i32, i32
  }
  func.func @transform_8(%arg0: i32) -> (i32, i32) {
    %c0_i32 = arith.constant 0 : i32
    %c0_i32_0 = arith.constant 0 : i32
    %c0_i32_1 = arith.constant 0 : i32
    return %c0_i32, %c0_i32_0 : i32, i32
  }
  func.func @transform_9(%arg0: i32) -> (i32, i32, i32, i32) {
    %c0_i32 = arith.constant 0 : i32
    %c0_i32_0 = arith.constant 0 : i32
    %c0_i32_1 = arith.constant 0 : i32
    %c0_i32_2 = arith.constant 0 : i32
    %c0_i32_3 = arith.constant 0 : i32
    return %c0_i32, %c0_i32_0, %c0_i32_1, %c0_i32_2 : i32, i32, i32, i32
  }
  func.func @transform_10(%arg0: i32) -> (i32, i32) {
    %c0_i32 = arith.constant 0 : i32
    %c0_i32_0 = arith.constant 0 : i32
    %c0_i32_1 = arith.constant 0 : i32
    return %c0_i32, %c0_i32_0 : i32, i32
  }
  func.func @transform_11(%arg0: i32) -> (i32, i32, i32) {
    %c0_i32 = arith.constant 0 : i32
    %c0_i32_0 = arith.constant 0 : i32
    %c0_i32_1 = arith.constant 0 : i32
    %c0_i32_2 = arith.constant 0 : i32
    return %c0_i32, %c0_i32_0, %c0_i32_1 : i32, i32, i32
  }
  func.func @transform_12(%arg0: i32) -> (i32, i32) {
    %c0_i32 = arith.constant 0 : i32
    %c0_i32_0 = arith.constant 0 : i32
    %c0_i32_1 = arith.constant 0 : i32
    return %c0_i32, %c0_i32_0 : i32, i32
  }
  func.func @transform_13(%arg0: i32) -> (i32, i32, i32, i32) {
    %c0_i32 = arith.constant 0 : i32
    %c0_i32_0 = arith.constant 0 : i32
    %c0_i32_1 = arith.constant 0 : i32
    %c0_i32_2 = arith.constant 0 : i32
    %c0_i32_3 = arith.constant 0 : i32
    return %c0_i32, %c0_i32_0, %c0_i32_1, %c0_i32_2 : i32, i32, i32, i32
  }
  func.func @transform_14(%arg0: i32) -> (i32, i32, i32, i32) {
    %c0_i32 = arith.constant 0 : i32
    %c0_i32_0 = arith.constant 0 : i32
    %c0_i32_1 = arith.constant 0 : i32
    %c0_i32_2 = arith.constant 0 : i32
    %c0_i32_3 = arith.constant 0 : i32
    return %c0_i32, %c0_i32_0, %c0_i32_1, %c0_i32_2 : i32, i32, i32, i32
  }
  func.func @transform_15(%arg0: i32) -> (i32, i32) {
    %c0_i32 = arith.constant 0 : i32
    %c0_i32_0 = arith.constant 0 : i32
    %c0_i32_1 = arith.constant 0 : i32
    return %c0_i32, %c0_i32_0 : i32, i32
  }
  func.func @transform_16(%arg0: i32) -> (i32, i32) {
    %c0_i32 = arith.constant 0 : i32
    %c0_i32_0 = arith.constant 0 : i32
    %c0_i32_1 = arith.constant 0 : i32
    return %c0_i32, %c0_i32_0 : i32, i32
  }
  func.func @transform_17(%arg0: i32) -> (i32, i32) {
    %c0_i32 = arith.constant 0 : i32
    %c0_i32_0 = arith.constant 0 : i32
    %c0_i32_1 = arith.constant 0 : i32
    return %c0_i32, %c0_i32_0 : i32, i32
  }
  func.func @transform_18(%arg0: i32) -> (i32, i32, i32) {
    %c0_i32 = arith.constant 0 : i32
    %c0_i32_0 = arith.constant 0 : i32
    %c0_i32_1 = arith.constant 0 : i32
    return %arg0, %c0_i32, %c0_i32_0 : i32, i32, i32
  }
}

</mosaic_0001>

<llo_original>
// kernel: tower_representation.1
$region0: #{tower_representation.1}
  #allocation0 [shape = 'u32[]', space=smem, size = 0x4, offset = 0x4, fixed_abs, tag = 'smem constant byte address 0x4 - core index']
  #allocation1 [shape = 'u32[72,128]{1,0:T(1,128)}', space=vmem, size = 0x9000, scoped, tag = 'internal scratch']
  #allocation2 [shape = 'bf16[10,10,64]{2,1,0:T(8,128)(2,1)}', space=vmem, size = 0xa000, scoped, tag = 'scratch operand']
  #allocation3 [shape = 'bf16[36,64]{1,0:T(8,128)(2,1)}', space=vmem, size = 0x2800, scoped, tag = 'scratch operand']
  #allocation4 [shape = 'bf16[36,32]{1,0:T(8,128)(2,1)}', space=vmem, size = 0x2800, scoped, tag = 'scratch operand']
  %s0 = inlined_call_operand.vmem [shape: bf16[2,64,16], index: 0, kind: input, shape index: {}]
  %s1 = inlined_call_operand.vmem [shape: bf16[2,4,16,16], index: 1, kind: input, shape index: {}]
  %s2 = inlined_call_operand.vmem [shape: f32[2,22,96], index: 2, kind: input, shape index: {}]
  %s3 = inlined_call_operand.vmem [shape: bf16[64,64], index: 3, kind: input, shape index: {}]
  %s4 = inlined_call_operand.vmem [shape: f32[22,1], index: 4, kind: input, shape index: {}]
  %s5 = inlined_call_operand.vmem [shape: bf16[16,64], index: 5, kind: input, shape index: {}]
  %s6 = inlined_call_operand.vmem [shape: f32[1,64], index: 6, kind: input, shape index: {}]
  %s7 = inlined_call_operand.vmem [shape: bf16[4,64,64], index: 7, kind: input, shape index: {}]
  %s8 = inlined_call_operand.vmem [shape: f32[1,64], index: 8, kind: input, shape index: {}]
  %s9 = inlined_call_operand.vmem [shape: bf16[3,3,64,32], index: 9, kind: input, shape index: {}]
  %s10 = inlined_call_operand.vmem [shape: f32[1,32], index: 10, kind: input, shape index: {}]
  %s11 = inlined_call_operand.vmem [shape: bf16[4,32,64], index: 11, kind: input, shape index: {}]
  %s12 = inlined_call_operand.vmem [shape: f32[1,64], index: 12, kind: input, shape index: {}]
  %s13 = inlined_call_operand.vmem [shape: bf16[3,3,64,96], index: 13, kind: input, shape index: {}]
  %s14 = inlined_call_operand.vmem [shape: bf16[3,3,32,64], index: 14, kind: input, shape index: {}]
  %s15 = inlined_call_operand.vmem [shape: f32[1,64], index: 15, kind: input, shape index: {}]
  %s16 = inlined_call_operand.vmem [shape: bf16[64,64], index: 16, kind: input, shape index: {}]
  %s17 = inlined_call_operand.vmem [shape: f32[1,64], index: 17, kind: input, shape index: {}]
  %s18 = inlined_call_operand.hbm [shape: f32[2,1,64], index: 18, kind: output, shape index: {}]
  %s19 = sld [smem:[#allocation0]]
  $region82: #{tower_representation.1} parent=0
    _
  %s21 = ssub.s32 1, %s19
  %s22 = scalar_select 0, %s21, %s19
  $region1: #{tower_representation.1} parent=0
    #allocation5 [shape = 'u8[1024]{0}', space=vmem, size = 0x400, scoped, tag = 'output window, operand 0, single buffered']
    #allocation6 [shape = 's32[1]{0}', space=sflag, size = 0x4, scoped, tag = 'scoped memory for tower_representation.1']
    %23 = vsyncpa [#allocation6], 0
    // Predicated region
    $region2: #{tower_representation.1} parent=1 // pred_check
      _
    $region3: #{tower_representation.1} parent=1 // pred_check_branch
      %25 = sbr.rel (0) target = $region5
    $region4: #{tower_representation.1} parent=1 // pred_region
      _
    $region5: #{tower_representation.1} parent=1 // pred_fallthru
      _
    // Predicated region
    $region6: #{tower_representation.1} parent=1 // pred_check
      _
    $region7: #{tower_representation.1} parent=1 // pred_check_branch
      %27 = sbr.rel (0) target = $region9
    $region8: #{tower_representation.1} parent=1 // pred_region
      _
    $region9: #{tower_representation.1} parent=1 // pred_fallthru
      _
    // Predicated region
    $region10: #{tower_representation.1} parent=1 // pred_check
      _
    $region11: #{tower_representation.1} parent=1 // pred_check_branch
      %29 = sbr.rel (0) target = $region13
    $region12: #{tower_representation.1} parent=1 // pred_region
      _
    $region13: #{tower_representation.1} parent=1 // pred_fallthru
      _
    // Predicated region
    $region14: #{tower_representation.1} parent=1 // pred_check
      _
    $region15: #{tower_representation.1} parent=1 // pred_check_branch
      %31 = sbr.rel (0) target = $region17
    $region16: #{tower_representation.1} parent=1 // pred_region
      _
    $region17: #{tower_representation.1} parent=1 // pred_fallthru
      _
    // Predicated region
    $region18: #{tower_representation.1} parent=1 // pred_check
      _
    $region19: #{tower_representation.1} parent=1 // pred_check_branch
      %33 = sbr.rel (0) target = $region21
    $region20: #{tower_representation.1} parent=1 // pred_region
      _
    $region21: #{tower_representation.1} parent=1 // pred_fallthru
      _
    // Predicated region
    $region22: #{tower_representation.1} parent=1 // pred_check
      _
    $region23: #{tower_representation.1} parent=1 // pred_check_branch
      %35 = sbr.rel (0) target = $region25
    $region24: #{tower_representation.1} parent=1 // pred_region
      _
    $region25: #{tower_representation.1} parent=1 // pred_fallthru
      _
    // Predicated region
    $region26: #{tower_representation.1} parent=1 // pred_check
      _
    $region27: #{tower_representation.1} parent=1 // pred_check_branch
      %37 = sbr.rel (0) target = $region29
    $region28: #{tower_representation.1} parent=1 // pred_region
      _
    $region29: #{tower_representation.1} parent=1 // pred_fallthru
      _
    // Predicated region
    $region30: #{tower_representation.1} parent=1 // pred_check
      _
    $region31: #{tower_representation.1} parent=1 // pred_check_branch
      %39 = sbr.rel (0) target = $region33
    $region32: #{tower_representation.1} parent=1 // pred_region
      _
    $region33: #{tower_representation.1} parent=1 // pred_fallthru
      _
    // Predicated region
    $region34: #{tower_representation.1} parent=1 // pred_check
      _
    $region35: #{tower_representation.1} parent=1 // pred_check_branch
      %41 = sbr.rel (0) target = $region37
    $region36: #{tower_representation.1} parent=1 // pred_region
      _
    $region37: #{tower_representation.1} parent=1 // pred_fallthru
      _
    // Predicated region
    $region38: #{tower_representation.1} parent=1 // pred_check
      _
    $region39: #{tower_representation.1} parent=1 // pred_check_branch
      %43 = sbr.rel (0) target = $region41
    $region40: #{tower_representation.1} parent=1 // pred_region
      _
    $region41: #{tower_representation.1} parent=1 // pred_fallthru
      _
    // Predicated region
    $region42: #{tower_representation.1} parent=1 // pred_check
      _
    $region43: #{tower_representation.1} parent=1 // pred_check_branch
      %45 = sbr.rel (0) target = $region45
    $region44: #{tower_representation.1} parent=1 // pred_region
      _
    $region45: #{tower_representation.1} parent=1 // pred_fallthru
      _
    // Predicated region
    $region46: #{tower_representation.1} parent=1 // pred_check
      _
    $region47: #{tower_representation.1} parent=1 // pred_check_branch
      %47 = sbr.rel (0) target = $region49
    $region48: #{tower_representation.1} parent=1 // pred_region
      _
    $region49: #{tower_representation.1} parent=1 // pred_fallthru
      _
    // Predicated region
    $region50: #{tower_representation.1} parent=1 // pred_check
      _
    $region51: #{tower_representation.1} parent=1 // pred_check_branch
      %49 = sbr.rel (0) target = $region53
    $region52: #{tower_representation.1} parent=1 // pred_region
      _
    $region53: #{tower_representation.1} parent=1 // pred_fallthru
      _
    // Predicated region
    $region54: #{tower_representation.1} parent=1 // pred_check
      _
    $region55: #{tower_representation.1} parent=1 // pred_check_branch
      %51 = sbr.rel (0) target = $region57
    $region56: #{tower_representation.1} parent=1 // pred_region
      _
    $region57: #{tower_representation.1} parent=1 // pred_fallthru
      _
    // Predicated region
    $region58: #{tower_representation.1} parent=1 // pred_check
      _
    $region59: #{tower_representation.1} parent=1 // pred_check_branch
      %53 = sbr.rel (0) target = $region61
    $region60: #{tower_representation.1} parent=1 // pred_region
      _
    $region61: #{tower_representation.1} parent=1 // pred_fallthru
      _
    // Predicated region
    $region62: #{tower_representation.1} parent=1 // pred_check
      _
    $region63: #{tower_representation.1} parent=1 // pred_check_branch
      %55 = sbr.rel (0) target = $region65
    $region64: #{tower_representation.1} parent=1 // pred_region
      _
    $region65: #{tower_representation.1} parent=1 // pred_fallthru
      _
    // Predicated region
    $region66: #{tower_representation.1} parent=1 // pred_check
      _
    $region67: #{tower_representation.1} parent=1 // pred_check_branch
      %57 = sbr.rel (0) target = $region69
    $region68: #{tower_representation.1} parent=1 // pred_region
      _
    $region69: #{tower_representation.1} parent=1 // pred_fallthru
      _
    // Predicated region
    $region70: #{tower_representation.1} parent=1 // pred_check
      _
    $region71: #{tower_representation.1} parent=1 // pred_check_branch
      %59 = sbr.rel (0) target = $region73
    $region72: #{tower_representation.1} parent=1 // pred_region
      _
    $region73: #{tower_representation.1} parent=1 // pred_fallthru
      _
    %vm61 = vcmask 519168
    %62 = vst.msk [vmem:[#allocation2] sm:$0xf] %vm61, 0
    %vm63 = vcmask 516096
    %64 = vst.msk [vmem:[#allocation2 + $0x4] sm:$0x1] %vm63, 0
    %s65 = scalar_lea.vmem [#allocation2], 72
    %66 = vst.msk [vmem:[%s65] sm:$0xf] %vm61, 0
    %67 = vst.msk [vmem:[%s65 + $0x4] sm:$0x1] %vm63, 0
    %vm68 = vcmask 516096
    %vm69 = vsmask.f32 256
    %vm70 = vmand %vm68, %vm69
    %v71 = vld [vmem:[#allocation2] sm:$0x1]
    %v72 = vsel %vm70, 0, %v71
    %73 = vst [vmem:[#allocation2] sm:$0x1] %v72
    %v74 = vld [vmem:[#allocation2 + $0x8] sm:$0x1]
    %v75 = vsel %vm70, 0, %v74
    %76 = vst [vmem:[#allocation2 + $0x8] sm:$0x1] %v75
    %v77 = vld [vmem:[#allocation2 + $0x10] sm:$0x1]
    %v78 = vsel %vm70, 0, %v77
    %79 = vst [vmem:[#allocation2 + $0x10] sm:$0x1] %v78
    %v80 = vld [vmem:[#allocation2 + $0x18] sm:$0x1]
    %v81 = vsel %vm70, 0, %v80
    %82 = vst [vmem:[#allocation2 + $0x18] sm:$0x1] %v81
    %v83 = vld [vmem:[#allocation2 + $0x20] sm:$0x1]
    %v84 = vsel %vm70, 0, %v83
    %85 = vst [vmem:[#allocation2 + $0x20] sm:$0x1] %v84
    %v86 = vld [vmem:[#allocation2 + $0x28] sm:$0x1]
    %v87 = vsel %vm70, 0, %v86
    %88 = vst [vmem:[#allocation2 + $0x28] sm:$0x1] %v87
    %v89 = vld [vmem:[#allocation2 + $0x30] sm:$0x1]
    %v90 = vsel %vm70, 0, %v89
    %91 = vst [vmem:[#allocation2 + $0x30] sm:$0x1] %v90
    %v92 = vld [vmem:[#allocation2 + $0x38] sm:$0x1]
    %v93 = vsel %vm70, 0, %v92
    %94 = vst [vmem:[#allocation2 + $0x38] sm:$0x1] %v93
    %v95 = vld [vmem:[#allocation2 + $0x40] sm:$0x1]
    %v96 = vsel %vm70, 0, %v95
    %97 = vst [vmem:[#allocation2 + $0x40] sm:$0x1] %v96
    %v98 = vld [vmem:[#allocation2 + $0x48] sm:$0x1]
    %v99 = vsel %vm70, 0, %v98
    %100 = vst [vmem:[#allocation2 + $0x48] sm:$0x1] %v99
    %vm101 = vsmask.f32 7938
    %vm102 = vmand %vm68, %vm101
    %v103 = vld [vmem:[#allocation2 + $0x4] sm:$0x1]
    %v104 = vsel %vm102, 0, %v103
    %105 = vst [vmem:[#allocation2 + $0x4] sm:$0x1] %v104
    %v106 = vld [vmem:[#allocation2 + $0xc] sm:$0x1]
    %v107 = vsel %vm102, 0, %v106
    %108 = vst [vmem:[#allocation2 + $0xc] sm:$0x1] %v107
    %v109 = vld [vmem:[#allocation2 + $0x14] sm:$0x1]
    %v110 = vsel %vm102, 0, %v109
    %111 = vst [vmem:[#allocation2 + $0x14] sm:$0x1] %v110
    %v112 = vld [vmem:[#allocation2 + $0x1c] sm:$0x1]
    %v113 = vsel %vm102, 0, %v112
    %114 = vst [vmem:[#allocation2 + $0x1c] sm:$0x1] %v113
    %v115 = vld [vmem:[#allocation2 + $0x24] sm:$0x1]
    %v116 = vsel %vm102, 0, %v115
    %117 = vst [vmem:[#allocation2 + $0x24] sm:$0x1] %v116
    %v118 = vld [vmem:[#allocation2 + $0x2c] sm:$0x1]
    %v119 = vsel %vm102, 0, %v118
    %120 = vst [vmem:[#allocation2 + $0x2c] sm:$0x1] %v119
    %v121 = vld [vmem:[#allocation2 + $0x34] sm:$0x1]
    %v122 = vsel %vm102, 0, %v121
    %123 = vst [vmem:[#allocation2 + $0x34] sm:$0x1] %v122
    %v124 = vld [vmem:[#allocation2 + $0x3c] sm:$0x1]
    %v125 = vsel %vm102, 0, %v124
    %126 = vst [vmem:[#allocation2 + $0x3c] sm:$0x1] %v125
    %v127 = vld [vmem:[#allocation2 + $0x44] sm:$0x1]
    %v128 = vsel %vm102, 0, %v127
    %129 = vst [vmem:[#allocation2 + $0x44] sm:$0x1] %v128
    %v130 = vld [vmem:[#allocation2 + $0x4c] sm:$0x1]
    %v131 = vsel %vm102, 0, %v130
    %132 = vst [vmem:[#allocation2 + $0x4c] sm:$0x1] %v131
    %133 = vst.msk [vmem:[#allocation3] sm:$0xf] %vm61, 0
    %134 = vst.msk [vmem:[#allocation3 + $0x4] sm:$0xf] %vm61, 0
    %135 = vst.msk [vmem:[#allocation3 + $0x8] sm:$0xf] %vm61, 0
    %136 = vst.msk [vmem:[#allocation3 + $0xc] sm:$0xf] %vm61, 0
    %vm137 = vcmask 517120
    %138 = vst.msk [vmem:[#allocation3 + $0x10] sm:$0x3] %vm137, 0
    %vm139 = vcmask 257024
    %140 = vst.msk [vmem:[#allocation4] sm:$0xf] %vm139, 0
    %141 = vst.msk [vmem:[#allocation4 + $0x4] sm:$0xf] %vm139, 0
    %142 = vst.msk [vmem:[#allocation4 + $0x8] sm:$0xf] %vm139, 0
    %143 = vst.msk [vmem:[#allocation4 + $0xc] sm:$0xf] %vm139, 0
    %vm144 = vcmask 254976
    %145 = vst.msk [vmem:[#allocation4 + $0x10] sm:$0x3] %vm144, 0
    %v146 = vld [vmem:[%s5] sm:$0xf]
    %v147 = vld [vmem:[%s5 + $0x4] sm:$0xf]
    %v148 = vld [vmem:[%s6] sm:$0x1]
    %v149 = vld [vmem:[%s8] sm:$0x1]
    %v150 = vld [vmem:[%s10] sm:$0x1]
    %v151 = vld [vmem:[%s12] sm:$0x1]
    %v152 = vld [vmem:[%s15] sm:$0x1]
    %v153 = vld [vmem:[%s17] sm:$0x1]
    %v154 = vld [vmem:[%s16] sm:$0xf]
    %v155 = vld [vmem:[%s16 + $0x4] sm:$0xf]
    %v156 = vld [vmem:[%s16 + $0x8] sm:$0xf]
    %v157 = vld [vmem:[%s16 + $0xc] sm:$0xf]
    %v158 = vld [vmem:[%s16 + $0x10] sm:$0xf]
    %v159 = vld [vmem:[%s16 + $0x14] sm:$0xf]
    %v160 = vld [vmem:[%s16 + $0x18] sm:$0xf]
    %v161 = vld [vmem:[%s16 + $0x1c] sm:$0xf]
    %v162 = vld [vmem:[%s3] sm:$0xf]
    %v163 = vld [vmem:[%s3 + $0x4] sm:$0xf]
    %v164 = vld [vmem:[%s3 + $0x8] sm:$0xf]
    %v165 = vld [vmem:[%s3 + $0xc] sm:$0xf]
    %v166 = vld [vmem:[%s3 + $0x10] sm:$0xf]
    %v167 = vld [vmem:[%s3 + $0x14] sm:$0xf]
    %v168 = vld [vmem:[%s3 + $0x18] sm:$0xf]
    %v169 = vld [vmem:[%s3 + $0x1c] sm:$0xf]
    %v170 = vld [vmem:[%s4] sm:$0xff]
    %v171 = vld [vmem:[%s4 + $0x8] sm:$0xff]
    %v172 = vld [vmem:[%s4 + $0x10] sm:$0x3f]
    %v173 = vld [vmem:[%s0] sm:$0xf]
    %v174 = vld [vmem:[%s0 + $0x4] sm:$0xf]
    %v175 = vld [vmem:[%s0 + $0x8] sm:$0xf]
    %v176 = vld [vmem:[%s0 + $0xc] sm:$0xf]
    %v177 = vld [vmem:[%s0 + $0x10] sm:$0xf]
    %v178 = vld [vmem:[%s0 + $0x14] sm:$0xf]
    %v179 = vld [vmem:[%s0 + $0x18] sm:$0xf]
    %v180 = vld [vmem:[%s0 + $0x1c] sm:$0xf]
    %v182 = vperm.slane %v148, 0
    %v192 = vunpack.c.l.b16 %v173
    %v193 = vunpack.c.l.b16 %v174
    %v194 = vunpack.c.l.b16 %v175
    %v195 = vunpack.c.l.b16 %v176
    %v196 = vunpack.c.l.b16 %v177
    %v197 = vunpack.c.l.b16 %v178
    %v198 = vunpack.c.l.b16 %v179
    %v199 = vunpack.c.l.b16 %v180
    %v200 = vpack.c.b16 %v193, %v192
    %v201 = vpack.c.b16 %v195, %v194
    %v202 = vpack.c.b16 %v197, %v196
    %v203 = vpack.c.b16 %v199, %v198
    %v206 = vunpack.c.l.b16 %v146
    %v207 = vunpack.c.l.b16 %v147
    %v208 = vpack.c.b16 %v207, %v206
    %vm210 = vcmask 130048
    %v212 = vsel %vm210, %v200, 0
    %v215 = vsel %vm210, %v201, 0
    %v218 = vsel %vm210, %v202, 0
    %v221 = vsel %vm210, %v203, 0
    %223 = vmatpush.bf16.msra.mxu0 0
    %224 = vmatpush.bf16.msra.mxu0 0
    %225 = vmatpush.bf16.msra.mxu0 0
    %226 = vmatpush.bf16.msra.mxu0 0
    %227 = vmatpush.bf16.msra.mxu0 0
    %228 = vmatpush.bf16.msra.mxu0 0
    %229 = vmatpush.bf16.msra.mxu0 0
    %230 = vmatpush.bf16.msra.mxu0 %v208
    %231 = vmatmul.bf16.gmra.mxu0 %v212
    %v232 = vpop.f32.mrf.mxu0
    %v233 = vadd.f32 %v182, %v232
    %v234 = vpop.f32.mrf.mxu0
    %v235 = vadd.f32 %v182, %v234
    %236 = vmatmul.bf16.gmra.mxu0 %v215
    %v237 = vpop.f32.mrf.mxu0
    %v238 = vadd.f32 %v182, %v237
    %v239 = vpop.f32.mrf.mxu0
    %v240 = vadd.f32 %v182, %v239
    %241 = vmatmul.bf16.gmra.mxu0 %v218
    %v242 = vpop.f32.mrf.mxu0
    %v243 = vadd.f32 %v182, %v242
    %v244 = vpop.f32.mrf.mxu0
    %v245 = vadd.f32 %v182, %v244
    %246 = vmatmul.bf16.gmra.mxu0 %v221
    %v247 = vpop.f32.mrf.mxu0
    %v248 = vadd.f32 %v182, %v247
    %v249 = vpop.f32.mrf.mxu0
    %v250 = vadd.f32 %v182, %v249
    %251 = vdwg.mxu0
    %v252 = vmax.f32 %v233, 0.0
    %v253 = vmax.f32 %v235, 0.0
    %v254 = vmax.f32 %v238, 0.0
    %v255 = vmax.f32 %v240, 0.0
    %v256 = vmax.f32 %v243, 0.0
    %v257 = vmax.f32 %v245, 0.0
    %v258 = vmax.f32 %v248, 0.0
    %v259 = vmax.f32 %v250, 0.0
    %v260 = vpack.c.bf16 %v252, %v252
    %v261 = vpack.c.bf16 %v253, %v253
    %v262 = vpack.c.bf16 %v254, %v254
    %v263 = vpack.c.bf16 %v255, %v255
    %v264 = vpack.c.bf16 %v256, %v256
    %v265 = vpack.c.bf16 %v257, %v257
    %v266 = vpack.c.bf16 %v258, %v258
    %v267 = vpack.c.bf16 %v259, %v259
    %v269 = vshrl.u32 %v260, 16
    %v271 = vrot.slane %v269, 7
    %v272 = vshll.u32 %v260, 16
    %v274 = vor.u32 %v271, %v272
    %v275 = vrot.slane %v271, 4
    %v277 = vshrl.u32 %v261, 16
    %v279 = vrot.slane %v277, 7
    %v280 = vshll.u32 %v261, 16
    %v282 = vor.u32 %v279, %v280
    %v283 = vrot.slane %v279, 4
    %v285 = vshrl.u32 %v262, 16
    %v287 = vrot.slane %v285, 7
    %v288 = vshll.u32 %v262, 16
    %v290 = vor.u32 %v287, %v288
    %v291 = vrot.slane %v287, 4
    %v293 = vshrl.u32 %v263, 16
    %v295 = vrot.slane %v293, 7
    %v296 = vshll.u32 %v263, 16
    %v298 = vor.u32 %v295, %v296
    %v299 = vrot.slane %v295, 4
    %v301 = vshrl.u32 %v264, 16
    %v303 = vrot.slane %v301, 7
    %v304 = vshll.u32 %v264, 16
    %v306 = vor.u32 %v303, %v304
    %v307 = vrot.slane %v303, 4
    %v309 = vshrl.u32 %v265, 16
    %v311 = vrot.slane %v309, 7
    %v312 = vshll.u32 %v265, 16
    %v314 = vor.u32 %v311, %v312
    %v315 = vrot.slane %v311, 4
    %v317 = vshrl.u32 %v266, 16
    %v319 = vrot.slane %v317, 7
    %v320 = vshll.u32 %v266, 16
    %v322 = vor.u32 %v319, %v320
    %v323 = vrot.slane %v319, 4
    %v325 = vshrl.u32 %v267, 16
    %v327 = vrot.slane %v325, 7
    %v328 = vshll.u32 %v267, 16
    %v330 = vor.u32 %v327, %v328
    %v331 = vrot.slane %v327, 4
    %s348 = scalar_lea.vmem [#allocation2], 8
    %vm349 = vcmask 519168
    %vm350 = vmand %vm349, %vm101
    %v351 = vld [vmem:[%s348] sm:$0xf]
    %v352 = vsel %vm350, %v274, %v351
    %353 = vst [vmem:[%s348] sm:$0xf] %v352
    %v354 = vld [vmem:[%s348 + $0x4] sm:$0x1]
    %v355 = vsel %vm70, %v275, %v354
    %356 = vst [vmem:[%s348 + $0x4] sm:$0x1] %v355
    %v357 = vld [vmem:[%s348 + $0x8] sm:$0xf]
    %v358 = vsel %vm350, %v282, %v357
    %359 = vst [vmem:[%s348 + $0x8] sm:$0xf] %v358
    %v360 = vld [vmem:[%s348 + $0xc] sm:$0x1]
    %v361 = vsel %vm70, %v283, %v360
    %362 = vst [vmem:[%s348 + $0xc] sm:$0x1] %v361
    %v363 = vld [vmem:[%s348 + $0x10] sm:$0xf]
    %v364 = vsel %vm350, %v290, %v363
    %365 = vst [vmem:[%s348 + $0x10] sm:$0xf] %v364
    %v366 = vld [vmem:[%s348 + $0x14] sm:$0x1]
    %v367 = vsel %vm70, %v291, %v366
    %368 = vst [vmem:[%s348 + $0x14] sm:$0x1] %v367
    %v369 = vld [vmem:[%s348 + $0x18] sm:$0xf]
    %v370 = vsel %vm350, %v298, %v369
    %371 = vst [vmem:[%s348 + $0x18] sm:$0xf] %v370
    %v372 = vld [vmem:[%s348 + $0x1c] sm:$0x1]
    %v373 = vsel %vm70, %v299, %v372
    %374 = vst [vmem:[%s348 + $0x1c] sm:$0x1] %v373
    %v375 = vld [vmem:[%s348 + $0x20] sm:$0xf]
    %v376 = vsel %vm350, %v306, %v375
    %377 = vst [vmem:[%s348 + $0x20] sm:$0xf] %v376
    %v378 = vld [vmem:[%s348 + $0x24] sm:$0x1]
    %v379 = vsel %vm70, %v307, %v378
    %380 = vst [vmem:[%s348 + $0x24] sm:$0x1] %v379
    %v381 = vld [vmem:[%s348 + $0x28] sm:$0xf]
    %v382 = vsel %vm350, %v314, %v381
    %383 = vst [vmem:[%s348 + $0x28] sm:$0xf] %v382
    %v384 = vld [vmem:[%s348 + $0x2c] sm:$0x1]
    %v385 = vsel %vm70, %v315, %v384
    %386 = vst [vmem:[%s348 + $0x2c] sm:$0x1] %v385
    %v387 = vld [vmem:[%s348 + $0x30] sm:$0xf]
    %v388 = vsel %vm350, %v322, %v387
    %389 = vst [vmem:[%s348 + $0x30] sm:$0xf] %v388
    %v390 = vld [vmem:[%s348 + $0x34] sm:$0x1]
    %v391 = vsel %vm70, %v323, %v390
    %392 = vst [vmem:[%s348 + $0x34] sm:$0x1] %v391
    %v393 = vld [vmem:[%s348 + $0x38] sm:$0xf]
    %v394 = vsel %vm350, %v330, %v393
    %395 = vst [vmem:[%s348 + $0x38] sm:$0xf] %v394
    %v396 = vld [vmem:[%s348 + $0x3c] sm:$0x1]
    %v397 = vsel %vm70, %v331, %v396
    %398 = vst [vmem:[%s348 + $0x3c] sm:$0x1] %v397
    %v399 = vld [vmem:[%s1] sm:$0xf]
    %v400 = vld [vmem:[%s1 + $0x4] sm:$0xf]
    %v403 = vunpack.c.l.b16 %v399
    %v404 = vunpack.c.l.b16 %v400
    %v405 = vpack.c.b16 %v404, %v403
    %v407 = vsel %vm210, %v405, 0
    %409 = vmatpush.bf16.msra.mxu0 0
    %410 = vmatpush.bf16.msra.mxu0 0
    %411 = vmatpush.bf16.msra.mxu0 0
    %412 = vmatpush.bf16.msra.mxu0 0
    %413 = vmatpush.bf16.msra.mxu0 0
    %414 = vmatpush.bf16.msra.mxu0 0
    %415 = vmatpush.bf16.msra.mxu0 0
    %416 = vmatpush.bf16.msra.mxu0 %v208
    %417 = vmatmul.bf16.gmra.mxu0 %v407
    %v418 = vpop.f32.mrf.mxu0
    %v419 = vadd.f32 %v182, %v418
    %v420 = vpop.f32.mrf.mxu0
    %v421 = vadd.f32 %v182, %v420
    %422 = vdwg.mxu0
    %v423 = vmax.f32 %v419, 0.0
    %v424 = vmax.f32 %v421, 0.0
    %v425 = vpack.c.bf16 %v424, %v423
    %v426 = vld [vmem:[%s7] sm:$0xf]
    %v427 = vld [vmem:[%s7 + $0x4] sm:$0xf]
    %v428 = vld [vmem:[%s7 + $0x8] sm:$0xf]
    %v429 = vld [vmem:[%s7 + $0xc] sm:$0xf]
    %v430 = vld [vmem:[%s7 + $0x10] sm:$0xf]
    %v431 = vld [vmem:[%s7 + $0x14] sm:$0xf]
    %v432 = vld [vmem:[%s7 + $0x18] sm:$0xf]
    %v433 = vld [vmem:[%s7 + $0x1c] sm:$0xf]
    %s434 = scalar_lea.vmem %s1, 8
    %v435 = vld [vmem:[%s434] sm:$0xf]
    %v436 = vld [vmem:[%s434 + $0x4] sm:$0xf]
    %v439 = vunpack.c.l.b16 %v435
    %v440 = vunpack.c.l.b16 %v436
    %v441 = vpack.c.b16 %v440, %v439
    %v443 = vsel %vm210, %v441, 0
    %445 = vmatpush.bf16.msra.mxu0 0
    %446 = vmatpush.bf16.msra.mxu0 0
    %447 = vmatpush.bf16.msra.mxu0 0
    %448 = vmatpush.bf16.msra.mxu0 0
    %449 = vmatpush.bf16.msra.mxu0 0
    %450 = vmatpush.bf16.msra.mxu0 0
    %451 = vmatpush.bf16.msra.mxu0 0
    %452 = vmatpush.bf16.msra.mxu0 %v208
    %453 = vmatmul.bf16.gmra.mxu0 %v443
    %v454 = vpop.f32.mrf.mxu0
    %v455 = vadd.f32 %v182, %v454
    %v456 = vpop.f32.mrf.mxu0
    %v457 = vadd.f32 %v182, %v456
    %458 = vdwg.mxu0
    %v459 = vmax.f32 %v455, 0.0
    %v460 = vmax.f32 %v457, 0.0
    %v461 = vpack.c.bf16 %v460, %v459
    %s462 = scalar_lea.vmem %s7, 32
    %v463 = vld [vmem:[%s462] sm:$0xf]
    %v464 = vld [vmem:[%s462 + $0x4] sm:$0xf]
    %v465 = vld [vmem:[%s462 + $0x8] sm:$0xf]
    %v466 = vld [vmem:[%s462 + $0xc] sm:$0xf]
    %v467 = vld [vmem:[%s462 + $0x10] sm:$0xf]
    %v468 = vld [vmem:[%s462 + $0x14] sm:$0xf]
    %v469 = vld [vmem:[%s462 + $0x18] sm:$0xf]
    %v470 = vld [vmem:[%s462 + $0x1c] sm:$0xf]
    %v479 = vunpack.c.l.b16 %v463
    %v480 = vunpack.c.l.b16 %v464
    %v481 = vunpack.c.l.b16 %v465
    %v482 = vunpack.c.l.b16 %v466
    %v483 = vunpack.c.l.b16 %v467
    %v484 = vunpack.c.l.b16 %v468
    %v485 = vunpack.c.l.b16 %v469
    %v486 = vunpack.c.l.b16 %v470
    %v487 = vpack.c.b16 %v480, %v479
    %v488 = vpack.c.b16 %v482, %v481
    %v489 = vpack.c.b16 %v484, %v483
    %v490 = vpack.c.b16 %v486, %v485
    %vm495 = vcmask 523264
    %v497 = vsel %vm495, %v461, 0
    %499 = vmatpush.bf16.msra.mxu0 0
    %500 = vmatpush.bf16.msra.mxu0 0
    %501 = vmatpush.bf16.msra.mxu0 0
    %502 = vmatpush.bf16.msra.mxu0 0
    %503 = vmatpush.bf16.msra.mxu0 %v490
    %504 = vmatpush.bf16.msra.mxu0 %v489
    %505 = vmatpush.bf16.msra.mxu0 %v488
    %506 = vmatpush.bf16.msra.mxu0 %v487
    %507 = vmatmul.bf16.gmra.mxu0 %v497
    %v508 = vpop.f32.mrf.mxu0
    %v509 = vadd.f32 0.0, %v508
    %v510 = vpop.f32.mrf.mxu0
    %v511 = vadd.f32 0.0, %v510
    %512 = vdwg.mxu0
    %v521 = vunpack.c.l.b16 %v426
    %v522 = vunpack.c.l.b16 %v427
    %v523 = vunpack.c.l.b16 %v428
    %v524 = vunpack.c.l.b16 %v429
    %v525 = vunpack.c.l.b16 %v430
    %v526 = vunpack.c.l.b16 %v431
    %v527 = vunpack.c.l.b16 %v432
    %v528 = vunpack.c.l.b16 %v433
    %v529 = vpack.c.b16 %v522, %v521
    %v530 = vpack.c.b16 %v524, %v523
    %v531 = vpack.c.b16 %v526, %v525
    %v532 = vpack.c.b16 %v528, %v527
    %v538 = vsel %vm495, %v425, 0
    %540 = vmatpush.bf16.msra.mxu0 0
    %541 = vmatpush.bf16.msra.mxu0 0
    %542 = vmatpush.bf16.msra.mxu0 0
    %543 = vmatpush.bf16.msra.mxu0 0
    %544 = vmatpush.bf16.msra.mxu0 %v532
    %545 = vmatpush.bf16.msra.mxu0 %v531
    %546 = vmatpush.bf16.msra.mxu0 %v530
    %547 = vmatpush.bf16.msra.mxu0 %v529
    %548 = vmatmul.bf16.gmra.mxu0 %v538
    %v549 = vpop.f32.mrf.mxu0
    %v550 = vadd.f32 %v509, %v549
    %v551 = vpop.f32.mrf.mxu0
    %v552 = vadd.f32 %v511, %v551
    %553 = vdwg.mxu0
    %s554 = scalar_lea.vmem %s1, 16
    %v555 = vld [vmem:[%s554] sm:$0xf]
    %v556 = vld [vmem:[%s554 + $0x4] sm:$0xf]
    %v559 = vunpack.c.l.b16 %v555
    %v560 = vunpack.c.l.b16 %v556
    %v561 = vpack.c.b16 %v560, %v559
    %v563 = vsel %vm210, %v561, 0
    %565 = vmatpush.bf16.msra.mxu0 0
    %566 = vmatpush.bf16.msra.mxu0 0
    %567 = vmatpush.bf16.msra.mxu0 0
    %568 = vmatpush.bf16.msra.mxu0 0
    %569 = vmatpush.bf16.msra.mxu0 0
    %570 = vmatpush.bf16.msra.mxu0 0
    %571 = vmatpush.bf16.msra.mxu0 0
    %572 = vmatpush.bf16.msra.mxu0 %v208
    %573 = vmatmul.bf16.gmra.mxu0 %v563
    %v574 = vpop.f32.mrf.mxu0
    %v575 = vadd.f32 %v182, %v574
    %v576 = vpop.f32.mrf.mxu0
    %v577 = vadd.f32 %v182, %v576
    %578 = vdwg.mxu0
    %v579 = vmax.f32 %v575, 0.0
    %v580 = vmax.f32 %v577, 0.0
    %v581 = vpack.c.bf16 %v580, %v579
    %s582 = scalar_lea.vmem %s7, 64
    %v583 = vld [vmem:[%s582] sm:$0xf]
    %v584 = vld [vmem:[%s582 + $0x4] sm:$0xf]
    %v585 = vld [vmem:[%s582 + $0x8] sm:$0xf]
    %v586 = vld [vmem:[%s582 + $0xc] sm:$0xf]
    %v587 = vld [vmem:[%s582 + $0x10] sm:$0xf]
    %v588 = vld [vmem:[%s582 + $0x14] sm:$0xf]
    %v589 = vld [vmem:[%s582 + $0x18] sm:$0xf]
    %v590 = vld [vmem:[%s582 + $0x1c] sm:$0xf]
    %v599 = vunpack.c.l.b16 %v583
    %v600 = vunpack.c.l.b16 %v584
    %v601 = vunpack.c.l.b16 %v585
    %v602 = vunpack.c.l.b16 %v586
    %v603 = vunpack.c.l.b16 %v587
    %v604 = vunpack.c.l.b16 %v588
    %v605 = vunpack.c.l.b16 %v589
    %v606 = vunpack.c.l.b16 %v590
    %v607 = vpack.c.b16 %v600, %v599
    %v608 = vpack.c.b16 %v602, %v601
    %v609 = vpack.c.b16 %v604, %v603
    %v610 = vpack.c.b16 %v606, %v605
    %v616 = vsel %vm495, %v581, 0
    %618 = vmatpush.bf16.msra.mxu0 0
    %619 = vmatpush.bf16.msra.mxu0 0
    %620 = vmatpush.bf16.msra.mxu0 0
    %621 = vmatpush.bf16.msra.mxu0 0
    %622 = vmatpush.bf16.msra.mxu0 %v610
    %623 = vmatpush.bf16.msra.mxu0 %v609
    %624 = vmatpush.bf16.msra.mxu0 %v608
    %625 = vmatpush.bf16.msra.mxu0 %v607
    %626 = vmatmul.bf16.gmra.mxu0 %v616
    %v627 = vpop.f32.mrf.mxu0
    %v628 = vadd.f32 0.0, %v627
    %v629 = vpop.f32.mrf.mxu0
    %v630 = vadd.f32 0.0, %v629
    %631 = vdwg.mxu0
    %v632 = vadd.f32 %v550, %v628
    %v633 = vadd.f32 %v552, %v630
    %s634 = scalar_lea.vmem %s1, 24
    %v635 = vld [vmem:[%s634] sm:$0xf]
    %v636 = vld [vmem:[%s634 + $0x4] sm:$0xf]
    %v639 = vunpack.c.l.b16 %v635
    %v640 = vunpack.c.l.b16 %v636
    %v641 = vpack.c.b16 %v640, %v639
    %v643 = vsel %vm210, %v641, 0
    %645 = vmatpush.bf16.msra.mxu0 0
    %646 = vmatpush.bf16.msra.mxu0 0
    %647 = vmatpush.bf16.msra.mxu0 0
    %648 = vmatpush.bf16.msra.mxu0 0
    %649 = vmatpush.bf16.msra.mxu0 0
    %650 = vmatpush.bf16.msra.mxu0 0
    %651 = vmatpush.bf16.msra.mxu0 0
    %652 = vmatpush.bf16.msra.mxu0 %v208
    %653 = vmatmul.bf16.gmra.mxu0 %v643
    %v654 = vpop.f32.mrf.mxu0
    %v655 = vadd.f32 %v182, %v654
    %v656 = vpop.f32.mrf.mxu0
    %v657 = vadd.f32 %v182, %v656
    %658 = vdwg.mxu0
    %v659 = vmax.f32 %v655, 0.0
    %v660 = vmax.f32 %v657, 0.0
    %v661 = vpack.c.bf16 %v660, %v659
    %s662 = scalar_lea.vmem %s7, 96
    %v663 = vld [vmem:[%s662] sm:$0xf]
    %v664 = vld [vmem:[%s662 + $0x4] sm:$0xf]
    %v665 = vld [vmem:[%s662 + $0x8] sm:$0xf]
    %v666 = vld [vmem:[%s662 + $0xc] sm:$0xf]
    %v667 = vld [vmem:[%s662 + $0x10] sm:$0xf]
    %v668 = vld [vmem:[%s662 + $0x14] sm:$0xf]
    %v669 = vld [vmem:[%s662 + $0x18] sm:$0xf]
    %v670 = vld [vmem:[%s662 + $0x1c] sm:$0xf]
    %v679 = vunpack.c.l.b16 %v663
    %v680 = vunpack.c.l.b16 %v664
    %v681 = vunpack.c.l.b16 %v665
    %v682 = vunpack.c.l.b16 %v666
    %v683 = vunpack.c.l.b16 %v667
    %v684 = vunpack.c.l.b16 %v668
    %v685 = vunpack.c.l.b16 %v669
    %v686 = vunpack.c.l.b16 %v670
    %v687 = vpack.c.b16 %v680, %v679
    %v688 = vpack.c.b16 %v682, %v681
    %v689 = vpack.c.b16 %v684, %v683
    %v690 = vpack.c.b16 %v686, %v685
    %v696 = vsel %vm495, %v661, 0
    %698 = vmatpush.bf16.msra.mxu0 0
    %699 = vmatpush.bf16.msra.mxu0 0
    %700 = vmatpush.bf16.msra.mxu0 0
    %701 = vmatpush.bf16.msra.mxu0 0
    %702 = vmatpush.bf16.msra.mxu0 %v690
    %703 = vmatpush.bf16.msra.mxu0 %v689
    %704 = vmatpush.bf16.msra.mxu0 %v688
    %705 = vmatpush.bf16.msra.mxu0 %v687
    %706 = vmatmul.bf16.gmra.mxu0 %v696
    %v707 = vpop.f32.mrf.mxu0
    %v708 = vadd.f32 0.0, %v707
    %v709 = vpop.f32.mrf.mxu0
    %v710 = vadd.f32 0.0, %v709
    %711 = vdwg.mxu0
    %v712 = vadd.f32 %v632, %v708
    %v713 = vadd.f32 %v633, %v710
    %v715 = vperm.slane %v149, 0
    %v717 = vadd.f32 %v712, %v715
    %v718 = vadd.f32 %v713, %v715
    %v719 = vmax.f32 %v717, 0.0
    %v720 = vmax.f32 %v718, 0.0
    %v721 = vld [vmem:[#allocation2] sm:$0xf]
    %v722 = vld [vmem:[#allocation2 + $0x8] sm:$0xf]
    %v723 = vld [vmem:[#allocation2 + $0x10] sm:$0xf]
    %v724 = vld [vmem:[#allocation2 + $0x18] sm:$0xf]
    %v725 = vld [vmem:[#allocation2 + $0x20] sm:$0xf]
    %v726 = vld [vmem:[#allocation2 + $0x28] sm:$0xf]
    %v727 = vld [vmem:[#allocation2 + $0x30] sm:$0xf]
    %v728 = vld [vmem:[#allocation2 + $0x38] sm:$0xf]
    %v729 = vld [vmem:[%s9] sm:$0xf]
    %v730 = vld [vmem:[%s9 + $0x4] sm:$0xf]
    %v731 = vld [vmem:[%s9 + $0x8] sm:$0xf]
    %v732 = vld [vmem:[%s9 + $0xc] sm:$0xf]
    %v733 = vld [vmem:[%s9 + $0x10] sm:$0xf]
    %v734 = vld [vmem:[%s9 + $0x14] sm:$0xf]
    %v735 = vld [vmem:[%s9 + $0x18] sm:$0xf]
    %v736 = vld [vmem:[%s9 + $0x1c] sm:$0xf]
    %v737 = vld [vmem:[#allocation2 + $0x4] sm:$0x1]
    %v738 = vld [vmem:[#allocation2 + $0xc] sm:$0x1]
    %v739 = vld [vmem:[#allocation2 + $0x14] sm:$0x1]
    %v740 = vld [vmem:[#allocation2 + $0x1c] sm:$0x1]
    %v741 = vld [vmem:[#allocation2 + $0x24] sm:$0x1]
    %v742 = vld [vmem:[#allocation2 + $0x2c] sm:$0x1]
    %v743 = vld [vmem:[#allocation2 + $0x34] sm:$0x1]
    %v744 = vld [vmem:[#allocation2 + $0x3c] sm:$0x1]
    %vm745 = vsmask.f32 3328
    %vm746 = vsmask.f32 7440
    %vm747 = vmor %vm745, %vm746
    %v749 = vshrl.u32 %v721, 16
    %v751 = vrot.slane %v749, 4
    %v752 = vshll.u32 %v721, 16
    %v754 = vrot.slane %v752, 5
    %v755 = vor.u32 %v751, %v754
    %v756 = vrot.slane %v755, 4
    %v758 = vshll.u32 %v737, 16
    %v760 = vrot.slane %v758, 5
    %v761 = vsel %vm747, %v756, %v760
    %v763 = vshrl.u32 %v722, 16
    %v765 = vrot.slane %v763, 4
    %v766 = vshll.u32 %v722, 16
    %v768 = vrot.slane %v766, 5
    %v769 = vor.u32 %v765, %v768
    %v770 = vrot.slane %v769, 4
    %v772 = vshll.u32 %v738, 16
    %v774 = vrot.slane %v772, 5
    %v775 = vsel %vm747, %v770, %v774
    %v777 = vshrl.u32 %v723, 16
    %v779 = vrot.slane %v777, 4
    %v780 = vshll.u32 %v723, 16
    %v782 = vrot.slane %v780, 5
    %v783 = vor.u32 %v779, %v782
    %v784 = vrot.slane %v783, 4
    %v786 = vshll.u32 %v739, 16
    %v788 = vrot.slane %v786, 5
    %v789 = vsel %vm747, %v784, %v788
    %v791 = vshrl.u32 %v724, 16
    %v793 = vrot.slane %v791, 4
    %v794 = vshll.u32 %v724, 16
    %v796 = vrot.slane %v794, 5
    %v797 = vor.u32 %v793, %v796
    %v798 = vrot.slane %v797, 4
    %v800 = vshll.u32 %v740, 16
    %v802 = vrot.slane %v800, 5
    %v803 = vsel %vm747, %v798, %v802
    %v805 = vshrl.u32 %v725, 16
    %v807 = vrot.slane %v805, 4
    %v808 = vshll.u32 %v725, 16
    %v810 = vrot.slane %v808, 5
    %v811 = vor.u32 %v807, %v810
    %v812 = vrot.slane %v811, 4
    %v814 = vshll.u32 %v741, 16
    %v816 = vrot.slane %v814, 5
    %v817 = vsel %vm747, %v812, %v816
    %v819 = vshrl.u32 %v726, 16
    %v821 = vrot.slane %v819, 4
    %v822 = vshll.u32 %v726, 16
    %v824 = vrot.slane %v822, 5
    %v825 = vor.u32 %v821, %v824
    %v826 = vrot.slane %v825, 4
    %v828 = vshll.u32 %v742, 16
    %v830 = vrot.slane %v828, 5
    %v831 = vsel %vm747, %v826, %v830
    %v833 = vshrl.u32 %v727, 16
    %v835 = vrot.slane %v833, 4
    %v836 = vshll.u32 %v727, 16
    %v838 = vrot.slane %v836, 5
    %v839 = vor.u32 %v835, %v838
    %v840 = vrot.slane %v839, 4
    %v842 = vshll.u32 %v743, 16
    %v844 = vrot.slane %v842, 5
    %v845 = vsel %vm747, %v840, %v844
    %v847 = vshrl.u32 %v728, 16
    %v849 = vrot.slane %v847, 4
    %v850 = vshll.u32 %v728, 16
    %v852 = vrot.slane %v850, 5
    %v853 = vor.u32 %v849, %v852
    %v854 = vrot.slane %v853, 4
    %v856 = vshll.u32 %v744, 16
    %v858 = vrot.slane %v856, 5
    %v859 = vsel %vm747, %v854, %v858
    %s860 = scalar_lea.vmem %s9, 32
    %v861 = vld [vmem:[%s860] sm:$0xf]
    %v862 = vld [vmem:[%s860 + $0x4] sm:$0xf]
    %v863 = vld [vmem:[%s860 + $0x8] sm:$0xf]
    %v864 = vld [vmem:[%s860 + $0xc] sm:$0xf]
    %v865 = vld [vmem:[%s860 + $0x10] sm:$0xf]
    %v866 = vld [vmem:[%s860 + $0x14] sm:$0xf]
    %v867 = vld [vmem:[%s860 + $0x18] sm:$0xf]
    %v868 = vld [vmem:[%s860 + $0x1c] sm:$0xf]
    %v869 = vunpack.c.l.b16 %v761
    %v870 = vunpack.c.l.b16 %v775
    %v871 = vunpack.c.l.b16 %v789
    %v872 = vunpack.c.l.b16 %v803
    %v873 = vunpack.c.l.b16 %v817
    %v874 = vunpack.c.l.b16 %v831
    %v875 = vunpack.c.l.b16 %v845
    %v876 = vunpack.c.l.b16 %v859
    %v877 = vpack.c.b16 %v870, %v869
    %v878 = vpack.c.b16 %v872, %v871
    %v879 = vpack.c.b16 %v874, %v873
    %v880 = vpack.c.b16 %v876, %v875
    %v889 = vunpack.c.l.b16 %v861
    %v890 = vunpack.c.l.b16 %v862
    %v891 = vunpack.c.l.b16 %v863
    %v892 = vunpack.c.l.b16 %v864
    %v893 = vunpack.c.l.b16 %v865
    %v894 = vunpack.c.l.b16 %v866
    %v895 = vunpack.c.l.b16 %v867
    %v896 = vunpack.c.l.b16 %v868
    %v897 = vpack.c.b16 %v890, %v889
    %v898 = vpack.c.b16 %v892, %v891
    %v899 = vpack.c.b16 %v894, %v893
    %v900 = vpack.c.b16 %v896, %v895
    %v906 = vsel %vm495, %v877, 0
    %v909 = vsel %vm495, %v878, 0
    %v912 = vsel %vm495, %v879, 0
    %v915 = vsel %vm495, %v880, 0
    %917 = vmatpush.bf16.msra.mxu0 0
    %918 = vmatpush.bf16.msra.mxu0 0
    %919 = vmatpush.bf16.msra.mxu0 0
    %920 = vmatpush.bf16.msra.mxu0 0
    %921 = vmatpush.bf16.msra.mxu0 %v900
    %922 = vmatpush.bf16.msra.mxu0 %v899
    %923 = vmatpush.bf16.msra.mxu0 %v898
    %924 = vmatpush.bf16.msra.mxu0 %v897
    %925 = vmatmul.bf16.gmra.mxu0 %v906
    %v926 = vpop.f32.mrf.mxu0
    %v927 = vadd.f32 0.0, %v926
    %v928 = vpop.f32.mrf.mxu0
    %v929 = vadd.f32 0.0, %v928
    %930 = vmatmul.bf16.gmra.mxu0 %v909
    %v931 = vpop.f32.mrf.mxu0
    %v932 = vadd.f32 0.0, %v931
    %v933 = vpop.f32.mrf.mxu0
    %v934 = vadd.f32 0.0, %v933
    %935 = vmatmul.bf16.gmra.mxu0 %v912
    %v936 = vpop.f32.mrf.mxu0
    %v937 = vadd.f32 0.0, %v936
    %v938 = vpop.f32.mrf.mxu0
    %v939 = vadd.f32 0.0, %v938
    %940 = vmatmul.bf16.gmra.mxu0 %v915
    %v941 = vpop.f32.mrf.mxu0
    %v942 = vadd.f32 0.0, %v941
    %v943 = vpop.f32.mrf.mxu0
    %v944 = vadd.f32 0.0, %v943
    %945 = vdwg.mxu0
    %v954 = vunpack.c.l.b16 %v721
    %v955 = vunpack.c.l.b16 %v722
    %v956 = vunpack.c.l.b16 %v723
    %v957 = vunpack.c.l.b16 %v724
    %v958 = vunpack.c.l.b16 %v725
    %v959 = vunpack.c.l.b16 %v726
    %v960 = vunpack.c.l.b16 %v727
    %v961 = vunpack.c.l.b16 %v728
    %v962 = vpack.c.b16 %v955, %v954
    %v963 = vpack.c.b16 %v957, %v956
    %v964 = vpack.c.b16 %v959, %v958
    %v965 = vpack.c.b16 %v961, %v960
    %v974 = vunpack.c.l.b16 %v729
    %v975 = vunpack.c.l.b16 %v730
    %v976 = vunpack.c.l.b16 %v731
    %v977 = vunpack.c.l.b16 %v732
    %v978 = vunpack.c.l.b16 %v733
    %v979 = vunpack.c.l.b16 %v734
    %v980 = vunpack.c.l.b16 %v735
    %v981 = vunpack.c.l.b16 %v736
    %v982 = vpack.c.b16 %v975, %v974
    %v983 = vpack.c.b16 %v977, %v976
    %v984 = vpack.c.b16 %v979, %v978
    %v985 = vpack.c.b16 %v981, %v980
    %v991 = vsel %vm495, %v962, 0
    %v994 = vsel %vm495, %v963, 0
    %v997 = vsel %vm495, %v964, 0
    %v1000 = vsel %vm495, %v965, 0
    %1002 = vmatpush.bf16.msra.mxu0 0
    %1003 = vmatpush.bf16.msra.mxu0 0
    %1004 = vmatpush.bf16.msra.mxu0 0
    %1005 = vmatpush.bf16.msra.mxu0 0
    %1006 = vmatpush.bf16.msra.mxu0 %v985
    %1007 = vmatpush.bf16.msra.mxu0 %v984
    %1008 = vmatpush.bf16.msra.mxu0 %v983
    %1009 = vmatpush.bf16.msra.mxu0 %v982
    %1010 = vmatmul.bf16.gmra.mxu0 %v991
    %v1011 = vpop.f32.mrf.mxu0
    %v1012 = vadd.f32 %v927, %v1011
    %v1013 = vpop.f32.mrf.mxu0
    %v1014 = vadd.f32 %v929, %v1013
    %1015 = vmatmul.bf16.gmra.mxu0 %v994
    %v1016 = vpop.f32.mrf.mxu0
    %v1017 = vadd.f32 %v932, %v1016
    %v1018 = vpop.f32.mrf.mxu0
    %v1019 = vadd.f32 %v934, %v1018
    %1020 = vmatmul.bf16.gmra.mxu0 %v997
    %v1021 = vpop.f32.mrf.mxu0
    %v1022 = vadd.f32 %v937, %v1021
    %v1023 = vpop.f32.mrf.mxu0
    %v1024 = vadd.f32 %v939, %v1023
    %1025 = vmatmul.bf16.gmra.mxu0 %v1000
    %v1026 = vpop.f32.mrf.mxu0
    %v1027 = vadd.f32 %v942, %v1026
    %v1028 = vpop.f32.mrf.mxu0
    %v1029 = vadd.f32 %v944, %v1028
    %1030 = vdwg.mxu0
    %v1031 = vld [vmem:[#allocation2] sm:$0xe]
    %v1032 = vld [vmem:[#allocation2 + $0x8] sm:$0xe]
    %v1033 = vld [vmem:[#allocation2 + $0x10] sm:$0xe]
    %v1034 = vld [vmem:[#allocation2 + $0x18] sm:$0xe]
    %v1035 = vld [vmem:[#allocation2 + $0x20] sm:$0xe]
    %v1036 = vld [vmem:[#allocation2 + $0x28] sm:$0xe]
    %v1037 = vld [vmem:[#allocation2 + $0x30] sm:$0xe]
    %v1038 = vld [vmem:[#allocation2 + $0x38] sm:$0xe]
    %vm1055 = vcmask 1042432
    %vm1056 = vcmask 1046532
    %vm1057 = vmor %vm1055, %vm1056
    %v1058 = vrot.slane %v1031, 5
    %v1059 = vrot.slane %v1058, 4
    %v1060 = vrot.slane %v737, 5
    %v1061 = vsel %vm1057, %v1059, %v1060
    %v1062 = vrot.slane %v1032, 5
    %v1063 = vrot.slane %v1062, 4
    %v1064 = vrot.slane %v738, 5
    %v1065 = vsel %vm1057, %v1063, %v1064
    %v1066 = vrot.slane %v1033, 5
    %v1067 = vrot.slane %v1066, 4
    %v1068 = vrot.slane %v739, 5
    %v1069 = vsel %vm1057, %v1067, %v1068
    %v1070 = vrot.slane %v1034, 5
    %v1071 = vrot.slane %v1070, 4
    %v1072 = vrot.slane %v740, 5
    %v1073 = vsel %vm1057, %v1071, %v1072
    %v1074 = vrot.slane %v1035, 5
    %v1075 = vrot.slane %v1074, 4
    %v1076 = vrot.slane %v741, 5
    %v1077 = vsel %vm1057, %v1075, %v1076
    %v1078 = vrot.slane %v1036, 5
    %v1079 = vrot.slane %v1078, 4
    %v1080 = vrot.slane %v742, 5
    %v1081 = vsel %vm1057, %v1079, %v1080
    %v1082 = vrot.slane %v1037, 5
    %v1083 = vrot.slane %v1082, 4
    %v1084 = vrot.slane %v743, 5
    %v1085 = vsel %vm1057, %v1083, %v1084
    %v1086 = vrot.slane %v1038, 5
    %v1087 = vrot.slane %v1086, 4
    %v1088 = vrot.slane %v744, 5
    %v1089 = vsel %vm1057, %v1087, %v1088
    %s1090 = scalar_lea.vmem %s9, 64
    %v1091 = vld [vmem:[%s1090] sm:$0xf]
    %v1092 = vld [vmem:[%s1090 + $0x4] sm:$0xf]
    %v1093 = vld [vmem:[%s1090 + $0x8] sm:$0xf]
    %v1094 = vld [vmem:[%s1090 + $0xc] sm:$0xf]
    %v1095 = vld [vmem:[%s1090 + $0x10] sm:$0xf]
    %v1096 = vld [vmem:[%s1090 + $0x14] sm:$0xf]
    %v1097 = vld [vmem:[%s1090 + $0x18] sm:$0xf]
    %v1098 = vld [vmem:[%s1090 + $0x1c] sm:$0xf]
    %v1099 = vunpack.c.l.b16 %v1061
    %v1100 = vunpack.c.l.b16 %v1065
    %v1101 = vunpack.c.l.b16 %v1069
    %v1102 = vunpack.c.l.b16 %v1073
    %v1103 = vunpack.c.l.b16 %v1077
    %v1104 = vunpack.c.l.b16 %v1081
    %v1105 = vunpack.c.l.b16 %v1085
    %v1106 = vunpack.c.l.b16 %v1089
    %v1107 = vpack.c.b16 %v1100, %v1099
    %v1108 = vpack.c.b16 %v1102, %v1101
    %v1109 = vpack.c.b16 %v1104, %v1103
    %v1110 = vpack.c.b16 %v1106, %v1105
    %v1119 = vunpack.c.l.b16 %v1091
    %v1120 = vunpack.c.l.b16 %v1092
    %v1121 = vunpack.c.l.b16 %v1093
    %v1122 = vunpack.c.l.b16 %v1094
    %v1123 = vunpack.c.l.b16 %v1095
    %v1124 = vunpack.c.l.b16 %v1096
    %v1125 = vunpack.c.l.b16 %v1097
    %v1126 = vunpack.c.l.b16 %v1098
    %v1127 = vpack.c.b16 %v1120, %v1119
    %v1128 = vpack.c.b16 %v1122, %v1121
    %v1129 = vpack.c.b16 %v1124, %v1123
    %v1130 = vpack.c.b16 %v1126, %v1125
    %v1136 = vsel %vm495, %v1107, 0
    %v1139 = vsel %vm495, %v1108, 0
    %v1142 = vsel %vm495, %v1109, 0
    %v1145 = vsel %vm495, %v1110, 0
    %1147 = vmatpush.bf16.msra.mxu0 0
    %1148 = vmatpush.bf16.msra.mxu0 0
    %1149 = vmatpush.bf16.msra.mxu0 0
    %1150 = vmatpush.bf16.msra.mxu0 0
    %1151 = vmatpush.bf16.msra.mxu0 %v1130
    %1152 = vmatpush.bf16.msra.mxu0 %v1129
    %1153 = vmatpush.bf16.msra.mxu0 %v1128
    %1154 = vmatpush.bf16.msra.mxu0 %v1127
    %1155 = vmatmul.bf16.gmra.mxu0 %v1136
    %v1156 = vpop.f32.mrf.mxu0
    %v1157 = vadd.f32 0.0, %v1156
    %v1158 = vpop.f32.mrf.mxu0
    %v1159 = vadd.f32 0.0, %v1158
    %1160 = vmatmul.bf16.gmra.mxu0 %v1139
    %v1161 = vpop.f32.mrf.mxu0
    %v1162 = vadd.f32 0.0, %v1161
    %v1163 = vpop.f32.mrf.mxu0
    %v1164 = vadd.f32 0.0, %v1163
    %1165 = vmatmul.bf16.gmra.mxu0 %v1142
    %v1166 = vpop.f32.mrf.mxu0
    %v1167 = vadd.f32 0.0, %v1166
    %v1168 = vpop.f32.mrf.mxu0
    %v1169 = vadd.f32 0.0, %v1168
    %1170 = vmatmul.bf16.gmra.mxu0 %v1145
    %v1171 = vpop.f32.mrf.mxu0
    %v1172 = vadd.f32 0.0, %v1171
    %v1173 = vpop.f32.mrf.mxu0
    %v1174 = vadd.f32 0.0, %v1173
    %1175 = vdwg.mxu0
    %v1176 = vadd.f32 %v1012, %v1157
    %v1177 = vadd.f32 %v1014, %v1159
    %v1178 = vadd.f32 %v1017, %v1162
    %v1179 = vadd.f32 %v1019, %v1164
    %v1180 = vadd.f32 %v1022, %v1167
    %v1181 = vadd.f32 %v1024, %v1169
    %v1182 = vadd.f32 %v1027, %v1172
    %v1183 = vadd.f32 %v1029, %v1174
    %v1184 = vld [vmem:[%s348] sm:$0xf]
    %v1185 = vld [vmem:[%s348 + $0x8] sm:$0xf]
    %v1186 = vld [vmem:[%s348 + $0x10] sm:$0xf]
    %v1187 = vld [vmem:[%s348 + $0x18] sm:$0xf]
    %v1188 = vld [vmem:[%s348 + $0x20] sm:$0xf]
    %v1189 = vld [vmem:[%s348 + $0x28] sm:$0xf]
    %v1190 = vld [vmem:[%s348 + $0x30] sm:$0xf]
    %v1191 = vld [vmem:[%s348 + $0x38] sm:$0xf]
    %s1192 = scalar_lea.vmem %s9, 96
    %v1193 = vld [vmem:[%s1192] sm:$0xf]
    %v1194 = vld [vmem:[%s1192 + $0x4] sm:$0xf]
    %v1195 = vld [vmem:[%s1192 + $0x8] sm:$0xf]
    %v1196 = vld [vmem:[%s1192 + $0xc] sm:$0xf]
    %v1197 = vld [vmem:[%s1192 + $0x10] sm:$0xf]
    %v1198 = vld [vmem:[%s1192 + $0x14] sm:$0xf]
    %v1199 = vld [vmem:[%s1192 + $0x18] sm:$0xf]
    %v1200 = vld [vmem:[%s1192 + $0x1c] sm:$0xf]
    %v1209 = vunpack.c.l.b16 %v1184
    %v1210 = vunpack.c.l.b16 %v1185
    %v1211 = vunpack.c.l.b16 %v1186
    %v1212 = vunpack.c.l.b16 %v1187
    %v1213 = vunpack.c.l.b16 %v1188
    %v1214 = vunpack.c.l.b16 %v1189
    %v1215 = vunpack.c.l.b16 %v1190
    %v1216 = vunpack.c.l.b16 %v1191
    %v1217 = vpack.c.b16 %v1210, %v1209
    %v1218 = vpack.c.b16 %v1212, %v1211
    %v1219 = vpack.c.b16 %v1214, %v1213
    %v1220 = vpack.c.b16 %v1216, %v1215
    %v1229 = vunpack.c.l.b16 %v1193
    %v1230 = vunpack.c.l.b16 %v1194
    %v1231 = vunpack.c.l.b16 %v1195
    %v1232 = vunpack.c.l.b16 %v1196
    %v1233 = vunpack.c.l.b16 %v1197
    %v1234 = vunpack.c.l.b16 %v1198
    %v1235 = vunpack.c.l.b16 %v1199
    %v1236 = vunpack.c.l.b16 %v1200
    %v1237 = vpack.c.b16 %v1230, %v1229
    %v1238 = vpack.c.b16 %v1232, %v1231
    %v1239 = vpack.c.b16 %v1234, %v1233
    %v1240 = vpack.c.b16 %v1236, %v1235
    %v1246 = vsel %vm495, %v1217, 0
    %v1249 = vsel %vm495, %v1218, 0
    %v1252 = vsel %vm495, %v1219, 0
    %v1255 = vsel %vm495, %v1220, 0
    %1257 = vmatpush.bf16.msra.mxu0 0
    %1258 = vmatpush.bf16.msra.mxu0 0
    %1259 = vmatpush.bf16.msra.mxu0 0
    %1260 = vmatpush.bf16.msra.mxu0 0
    %1261 = vmatpush.bf16.msra.mxu0 %v1240
    %1262 = vmatpush.bf16.msra.mxu0 %v1239
    %1263 = vmatpush.bf16.msra.mxu0 %v1238
    %1264 = vmatpush.bf16.msra.mxu0 %v1237
    %1265 = vmatmul.bf16.gmra.mxu0 %v1246
    %v1266 = vpop.f32.mrf.mxu0
    %v1267 = vadd.f32 0.0, %v1266
    %v1268 = vpop.f32.mrf.mxu0
    %v1269 = vadd.f32 0.0, %v1268
    %1270 = vmatmul.bf16.gmra.mxu0 %v1249
    %v1271 = vpop.f32.mrf.mxu0
    %v1272 = vadd.f32 0.0, %v1271
    %v1273 = vpop.f32.mrf.mxu0
    %v1274 = vadd.f32 0.0, %v1273
    %1275 = vmatmul.bf16.gmra.mxu0 %v1252
    %v1276 = vpop.f32.mrf.mxu0
    %v1277 = vadd.f32 0.0, %v1276
    %v1278 = vpop.f32.mrf.mxu0
    %v1279 = vadd.f32 0.0, %v1278
    %1280 = vmatmul.bf16.gmra.mxu0 %v1255
    %v1281 = vpop.f32.mrf.mxu0
    %v1282 = vadd.f32 0.0, %v1281
    %v1283 = vpop.f32.mrf.mxu0
    %v1284 = vadd.f32 0.0, %v1283
    %1285 = vdwg.mxu0
    %v1286 = vadd.f32 %v1176, %v1267
    %v1287 = vadd.f32 %v1177, %v1269
    %v1288 = vadd.f32 %v1178, %v1272
    %v1289 = vadd.f32 %v1179, %v1274
    %v1290 = vadd.f32 %v1180, %v1277
    %v1291 = vadd.f32 %v1181, %v1279
    %v1292 = vadd.f32 %v1182, %v1282
    %v1293 = vadd.f32 %v1183, %v1284
    %v1294 = vld [vmem:[%s348] sm:$0xf]
    %v1295 = vld [vmem:[%s348 + $0x4] sm:$0x1]
    %v1296 = vld [vmem:[%s348 + $0x8] sm:$0xf]
    %v1297 = vld [vmem:[%s348 + $0xc] sm:$0x1]
    %v1298 = vld [vmem:[%s348 + $0x10] sm:$0xf]
    %v1299 = vld [vmem:[%s348 + $0x14] sm:$0x1]
    %v1300 = vld [vmem:[%s348 + $0x18] sm:$0xf]
    %v1301 = vld [vmem:[%s348 + $0x1c] sm:$0x1]
    %v1302 = vld [vmem:[%s348 + $0x20] sm:$0xf]
    %v1303 = vld [vmem:[%s348 + $0x24] sm:$0x1]
    %v1304 = vld [vmem:[%s348 + $0x28] sm:$0xf]
    %v1305 = vld [vmem:[%s348 + $0x2c] sm:$0x1]
    %v1306 = vld [vmem:[%s348 + $0x30] sm:$0xf]
    %v1307 = vld [vmem:[%s348 + $0x34] sm:$0x1]
    %v1308 = vld [vmem:[%s348 + $0x38] sm:$0xf]
    %v1309 = vld [vmem:[%s348 + $0x3c] sm:$0x1]
    %v1311 = vshrl.u32 %v1294, 16
    %v1313 = vrot.slane %v1311, 4
    %v1314 = vshll.u32 %v1294, 16
    %v1316 = vrot.slane %v1314, 5
    %v1317 = vor.u32 %v1313, %v1316
    %v1318 = vrot.slane %v1317, 4
    %v1320 = vshll.u32 %v1295, 16
    %v1322 = vrot.slane %v1320, 5
    %v1323 = vsel %vm747, %v1318, %v1322
    %v1325 = vshrl.u32 %v1296, 16
    %v1327 = vrot.slane %v1325, 4
    %v1328 = vshll.u32 %v1296, 16
    %v1330 = vrot.slane %v1328, 5
    %v1331 = vor.u32 %v1327, %v1330
    %v1332 = vrot.slane %v1331, 4
    %v1334 = vshll.u32 %v1297, 16
    %v1336 = vrot.slane %v1334, 5
    %v1337 = vsel %vm747, %v1332, %v1336
    %v1339 = vshrl.u32 %v1298, 16
    %v1341 = vrot.slane %v1339, 4
    %v1342 = vshll.u32 %v1298, 16
    %v1344 = vrot.slane %v1342, 5
    %v1345 = vor.u32 %v1341, %v1344
    %v1346 = vrot.slane %v1345, 4
    %v1348 = vshll.u32 %v1299, 16
    %v1350 = vrot.slane %v1348, 5
    %v1351 = vsel %vm747, %v1346, %v1350
    %v1353 = vshrl.u32 %v1300, 16
    %v1355 = vrot.slane %v1353, 4
    %v1356 = vshll.u32 %v1300, 16
    %v1358 = vrot.slane %v1356, 5
    %v1359 = vor.u32 %v1355, %v1358
    %v1360 = vrot.slane %v1359, 4
    %v1362 = vshll.u32 %v1301, 16
    %v1364 = vrot.slane %v1362, 5
    %v1365 = vsel %vm747, %v1360, %v1364
    %v1367 = vshrl.u32 %v1302, 16
    %v1369 = vrot.slane %v1367, 4
    %v1370 = vshll.u32 %v1302, 16
    %v1372 = vrot.slane %v1370, 5
    %v1373 = vor.u32 %v1369, %v1372
    %v1374 = vrot.slane %v1373, 4
    %v1376 = vshll.u32 %v1303, 16
    %v1378 = vrot.slane %v1376, 5
    %v1379 = vsel %vm747, %v1374, %v1378
    %v1381 = vshrl.u32 %v1304, 16
    %v1383 = vrot.slane %v1381, 4
    %v1384 = vshll.u32 %v1304, 16
    %v1386 = vrot.slane %v1384, 5
    %v1387 = vor.u32 %v1383, %v1386
    %v1388 = vrot.slane %v1387, 4
    %v1390 = vshll.u32 %v1305, 16
    %v1392 = vrot.slane %v1390, 5
    %v1393 = vsel %vm747, %v1388, %v1392
    %v1395 = vshrl.u32 %v1306, 16
    %v1397 = vrot.slane %v1395, 4
    %v1398 = vshll.u32 %v1306, 16
    %v1400 = vrot.slane %v1398, 5
    %v1401 = vor.u32 %v1397, %v1400
    %v1402 = vrot.slane %v1401, 4
    %v1404 = vshll.u32 %v1307, 16
    %v1406 = vrot.slane %v1404, 5
    %v1407 = vsel %vm747, %v1402, %v1406
    %v1409 = vshrl.u32 %v1308, 16
    %v1411 = vrot.slane %v1409, 4
    %v1412 = vshll.u32 %v1308, 16
    %v1414 = vrot.slane %v1412, 5
    %v1415 = vor.u32 %v1411, %v1414
    %v1416 = vrot.slane %v1415, 4
    %v1418 = vshll.u32 %v1309, 16
    %v1420 = vrot.slane %v1418, 5
    %v1421 = vsel %vm747, %v1416, %v1420
    %s1422 = scalar_lea.vmem %s9, 128
    %v1423 = vld [vmem:[%s1422] sm:$0xf]
    %v1424 = vld [vmem:[%s1422 + $0x4] sm:$0xf]
    %v1425 = vld [vmem:[%s1422 + $0x8] sm:$0xf]
    %v1426 = vld [vmem:[%s1422 + $0xc] sm:$0xf]
    %v1427 = vld [vmem:[%s1422 + $0x10] sm:$0xf]
    %v1428 = vld [vmem:[%s1422 + $0x14] sm:$0xf]
    %v1429 = vld [vmem:[%s1422 + $0x18] sm:$0xf]
    %v1430 = vld [vmem:[%s1422 + $0x1c] sm:$0xf]
    %v1431 = vunpack.c.l.b16 %v1323
    %v1432 = vunpack.c.l.b16 %v1337
    %v1433 = vunpack.c.l.b16 %v1351
    %v1434 = vunpack.c.l.b16 %v1365
    %v1435 = vunpack.c.l.b16 %v1379
    %v1436 = vunpack.c.l.b16 %v1393
    %v1437 = vunpack.c.l.b16 %v1407
    %v1438 = vunpack.c.l.b16 %v1421
    %v1439 = vpack.c.b16 %v1432, %v1431
    %v1440 = vpack.c.b16 %v1434, %v1433
    %v1441 = vpack.c.b16 %v1436, %v1435
    %v1442 = vpack.c.b16 %v1438, %v1437
    %v1451 = vunpack.c.l.b16 %v1423
    %v1452 = vunpack.c.l.b16 %v1424
    %v1453 = vunpack.c.l.b16 %v1425
    %v1454 = vunpack.c.l.b16 %v1426
    %v1455 = vunpack.c.l.b16 %v1427
    %v1456 = vunpack.c.l.b16 %v1428
    %v1457 = vunpack.c.l.b16 %v1429
    %v1458 = vunpack.c.l.b16 %v1430
    %v1459 = vpack.c.b16 %v1452, %v1451
    %v1460 = vpack.c.b16 %v1454, %v1453
    %v1461 = vpack.c.b16 %v1456, %v1455
    %v1462 = vpack.c.b16 %v1458, %v1457
    %v1468 = vsel %vm495, %v1439, 0
    %v1471 = vsel %vm495, %v1440, 0
    %v1474 = vsel %vm495, %v1441, 0
    %v1477 = vsel %vm495, %v1442, 0
    %1479 = vmatpush.bf16.msra.mxu0 0
    %1480 = vmatpush.bf16.msra.mxu0 0
    %1481 = vmatpush.bf16.msra.mxu0 0
    %1482 = vmatpush.bf16.msra.mxu0 0
    %1483 = vmatpush.bf16.msra.mxu0 %v1462
    %1484 = vmatpush.bf16.msra.mxu0 %v1461
    %1485 = vmatpush.bf16.msra.mxu0 %v1460
    %1486 = vmatpush.bf16.msra.mxu0 %v1459
    %1487 = vmatmul.bf16.gmra.mxu0 %v1468
    %v1488 = vpop.f32.mrf.mxu0
    %v1489 = vadd.f32 0.0, %v1488
    %v1490 = vpop.f32.mrf.mxu0
    %v1491 = vadd.f32 0.0, %v1490
    %1492 = vmatmul.bf16.gmra.mxu0 %v1471
    %v1493 = vpop.f32.mrf.mxu0
    %v1494 = vadd.f32 0.0, %v1493
    %v1495 = vpop.f32.mrf.mxu0
    %v1496 = vadd.f32 0.0, %v1495
    %1497 = vmatmul.bf16.gmra.mxu0 %v1474
    %v1498 = vpop.f32.mrf.mxu0
    %v1499 = vadd.f32 0.0, %v1498
    %v1500 = vpop.f32.mrf.mxu0
    %v1501 = vadd.f32 0.0, %v1500
    %1502 = vmatmul.bf16.gmra.mxu0 %v1477
    %v1503 = vpop.f32.mrf.mxu0
    %v1504 = vadd.f32 0.0, %v1503
    %v1505 = vpop.f32.mrf.mxu0
    %v1506 = vadd.f32 0.0, %v1505
    %1507 = vdwg.mxu0
    %v1508 = vadd.f32 %v1286, %v1489
    %v1509 = vadd.f32 %v1287, %v1491
    %v1510 = vadd.f32 %v1288, %v1494
    %v1511 = vadd.f32 %v1289, %v1496
    %v1512 = vadd.f32 %v1290, %v1499
    %v1513 = vadd.f32 %v1291, %v1501
    %v1514 = vadd.f32 %v1292, %v1504
    %v1515 = vadd.f32 %v1293, %v1506
    %v1516 = vld [vmem:[%s348] sm:$0xe]
    %v1517 = vld [vmem:[%s348 + $0x8] sm:$0xe]
    %v1518 = vld [vmem:[%s348 + $0x10] sm:$0xe]
    %v1519 = vld [vmem:[%s348 + $0x18] sm:$0xe]
    %v1520 = vld [vmem:[%s348 + $0x20] sm:$0xe]
    %v1521 = vld [vmem:[%s348 + $0x28] sm:$0xe]
    %v1522 = vld [vmem:[%s348 + $0x30] sm:$0xe]
    %v1523 = vld [vmem:[%s348 + $0x38] sm:$0xe]
    %v1540 = vrot.slane %v1516, 5
    %v1541 = vrot.slane %v1540, 4
    %v1542 = vrot.slane %v1295, 5
    %v1543 = vsel %vm1057, %v1541, %v1542
    %v1544 = vrot.slane %v1517, 5
    %v1545 = vrot.slane %v1544, 4
    %v1546 = vrot.slane %v1297, 5
    %v1547 = vsel %vm1057, %v1545, %v1546
    %v1548 = vrot.slane %v1518, 5
    %v1549 = vrot.slane %v1548, 4
    %v1550 = vrot.slane %v1299, 5
    %v1551 = vsel %vm1057, %v1549, %v1550
    %v1552 = vrot.slane %v1519, 5
    %v1553 = vrot.slane %v1552, 4
    %v1554 = vrot.slane %v1301, 5
    %v1555 = vsel %vm1057, %v1553, %v1554
    %v1556 = vrot.slane %v1520, 5
    %v1557 = vrot.slane %v1556, 4
    %v1558 = vrot.slane %v1303, 5
    %v1559 = vsel %vm1057, %v1557, %v1558
    %v1560 = vrot.slane %v1521, 5
    %v1561 = vrot.slane %v1560, 4
    %v1562 = vrot.slane %v1305, 5
    %v1563 = vsel %vm1057, %v1561, %v1562
    %v1564 = vrot.slane %v1522, 5
    %v1565 = vrot.slane %v1564, 4
    %v1566 = vrot.slane %v1307, 5
    %v1567 = vsel %vm1057, %v1565, %v1566
    %v1568 = vrot.slane %v1523, 5
    %v1569 = vrot.slane %v1568, 4
    %v1570 = vrot.slane %v1309, 5
    %v1571 = vsel %vm1057, %v1569, %v1570
    %s1572 = scalar_lea.vmem %s9, 160
    %v1573 = vld [vmem:[%s1572] sm:$0xf]
    %v1574 = vld [vmem:[%s1572 + $0x4] sm:$0xf]
    %v1575 = vld [vmem:[%s1572 + $0x8] sm:$0xf]
    %v1576 = vld [vmem:[%s1572 + $0xc] sm:$0xf]
    %v1577 = vld [vmem:[%s1572 + $0x10] sm:$0xf]
    %v1578 = vld [vmem:[%s1572 + $0x14] sm:$0xf]
    %v1579 = vld [vmem:[%s1572 + $0x18] sm:$0xf]
    %v1580 = vld [vmem:[%s1572 + $0x1c] sm:$0xf]
    %v1581 = vunpack.c.l.b16 %v1543
    %v1582 = vunpack.c.l.b16 %v1547
    %v1583 = vunpack.c.l.b16 %v1551
    %v1584 = vunpack.c.l.b16 %v1555
    %v1585 = vunpack.c.l.b16 %v1559
    %v1586 = vunpack.c.l.b16 %v1563
    %v1587 = vunpack.c.l.b16 %v1567
    %v1588 = vunpack.c.l.b16 %v1571
    %v1589 = vpack.c.b16 %v1582, %v1581
    %v1590 = vpack.c.b16 %v1584, %v1583
    %v1591 = vpack.c.b16 %v1586, %v1585
    %v1592 = vpack.c.b16 %v1588, %v1587
    %v1601 = vunpack.c.l.b16 %v1573
    %v1602 = vunpack.c.l.b16 %v1574
    %v1603 = vunpack.c.l.b16 %v1575
    %v1604 = vunpack.c.l.b16 %v1576
    %v1605 = vunpack.c.l.b16 %v1577
    %v1606 = vunpack.c.l.b16 %v1578
    %v1607 = vunpack.c.l.b16 %v1579
    %v1608 = vunpack.c.l.b16 %v1580
    %v1609 = vpack.c.b16 %v1602, %v1601
    %v1610 = vpack.c.b16 %v1604, %v1603
    %v1611 = vpack.c.b16 %v1606, %v1605
    %v1612 = vpack.c.b16 %v1608, %v1607
    %v1618 = vsel %vm495, %v1589, 0
    %v1621 = vsel %vm495, %v1590, 0
    %v1624 = vsel %vm495, %v1591, 0
    %v1627 = vsel %vm495, %v1592, 0
    %1629 = vmatpush.bf16.msra.mxu0 0
    %1630 = vmatpush.bf16.msra.mxu0 0
    %1631 = vmatpush.bf16.msra.mxu0 0
    %1632 = vmatpush.bf16.msra.mxu0 0
    %1633 = vmatpush.bf16.msra.mxu0 %v1612
    %1634 = vmatpush.bf16.msra.mxu0 %v1611
    %1635 = vmatpush.bf16.msra.mxu0 %v1610
    %1636 = vmatpush.bf16.msra.mxu0 %v1609
    %1637 = vmatmul.bf16.gmra.mxu0 %v1618
    %v1638 = vpop.f32.mrf.mxu0
    %v1639 = vadd.f32 0.0, %v1638
    %v1640 = vpop.f32.mrf.mxu0
    %v1641 = vadd.f32 0.0, %v1640
    %1642 = vmatmul.bf16.gmra.mxu0 %v1621
    %v1643 = vpop.f32.mrf.mxu0
    %v1644 = vadd.f32 0.0, %v1643
    %v1645 = vpop.f32.mrf.mxu0
    %v1646 = vadd.f32 0.0, %v1645
    %1647 = vmatmul.bf16.gmra.mxu0 %v1624
    %v1648 = vpop.f32.mrf.mxu0
    %v1649 = vadd.f32 0.0, %v1648
    %v1650 = vpop.f32.mrf.mxu0
    %v1651 = vadd.f32 0.0, %v1650
    %1652 = vmatmul.bf16.gmra.mxu0 %v1627
    %v1653 = vpop.f32.mrf.mxu0
    %v1654 = vadd.f32 0.0, %v1653
    %v1655 = vpop.f32.mrf.mxu0
    %v1656 = vadd.f32 0.0, %v1655
    %1657 = vdwg.mxu0
    %v1658 = vadd.f32 %v1508, %v1639
    %v1659 = vadd.f32 %v1509, %v1641
    %v1660 = vadd.f32 %v1510, %v1644
    %v1661 = vadd.f32 %v1511, %v1646
    %v1662 = vadd.f32 %v1512, %v1649
    %v1663 = vadd.f32 %v1513, %v1651
    %v1664 = vadd.f32 %v1514, %v1654
    %v1665 = vadd.f32 %v1515, %v1656
    %s1666 = scalar_lea.vmem [#allocation2], 16
    %v1667 = vld [vmem:[%s1666] sm:$0xf]
    %v1668 = vld [vmem:[%s1666 + $0x8] sm:$0xf]
    %v1669 = vld [vmem:[%s1666 + $0x10] sm:$0xf]
    %v1670 = vld [vmem:[%s1666 + $0x18] sm:$0xf]
    %v1671 = vld [vmem:[%s1666 + $0x20] sm:$0xf]
    %v1672 = vld [vmem:[%s1666 + $0x28] sm:$0xf]
    %v1673 = vld [vmem:[%s1666 + $0x30] sm:$0xf]
    %v1674 = vld [vmem:[%s1666 + $0x38] sm:$0xf]
    %s1675 = scalar_lea.vmem %s9, 192
    %v1676 = vld [vmem:[%s1675] sm:$0xf]
    %v1677 = vld [vmem:[%s1675 + $0x4] sm:$0xf]
    %v1678 = vld [vmem:[%s1675 + $0x8] sm:$0xf]
    %v1679 = vld [vmem:[%s1675 + $0xc] sm:$0xf]
    %v1680 = vld [vmem:[%s1675 + $0x10] sm:$0xf]
    %v1681 = vld [vmem:[%s1675 + $0x14] sm:$0xf]
    %v1682 = vld [vmem:[%s1675 + $0x18] sm:$0xf]
    %v1683 = vld [vmem:[%s1675 + $0x1c] sm:$0xf]
    %v1692 = vunpack.c.l.b16 %v1667
    %v1693 = vunpack.c.l.b16 %v1668
    %v1694 = vunpack.c.l.b16 %v1669
    %v1695 = vunpack.c.l.b16 %v1670
    %v1696 = vunpack.c.l.b16 %v1671
    %v1697 = vunpack.c.l.b16 %v1672
    %v1698 = vunpack.c.l.b16 %v1673
    %v1699 = vunpack.c.l.b16 %v1674
    %v1700 = vpack.c.b16 %v1693, %v1692
    %v1701 = vpack.c.b16 %v1695, %v1694
    %v1702 = vpack.c.b16 %v1697, %v1696
    %v1703 = vpack.c.b16 %v1699, %v1698
    %v1712 = vunpack.c.l.b16 %v1676
    %v1713 = vunpack.c.l.b16 %v1677
    %v1714 = vunpack.c.l.b16 %v1678
    %v1715 = vunpack.c.l.b16 %v1679
    %v1716 = vunpack.c.l.b16 %v1680
    %v1717 = vunpack.c.l.b16 %v1681
    %v1718 = vunpack.c.l.b16 %v1682
    %v1719 = vunpack.c.l.b16 %v1683
    %v1720 = vpack.c.b16 %v1713, %v1712
    %v1721 = vpack.c.b16 %v1715, %v1714
    %v1722 = vpack.c.b16 %v1717, %v1716
    %v1723 = vpack.c.b16 %v1719, %v1718
    %v1729 = vsel %vm495, %v1700, 0
    %v1732 = vsel %vm495, %v1701, 0
    %v1735 = vsel %vm495, %v1702, 0
    %v1738 = vsel %vm495, %v1703, 0
    %1740 = vmatpush.bf16.msra.mxu0 0
    %1741 = vmatpush.bf16.msra.mxu0 0
    %1742 = vmatpush.bf16.msra.mxu0 0
    %1743 = vmatpush.bf16.msra.mxu0 0
    %1744 = vmatpush.bf16.msra.mxu0 %v1723
    %1745 = vmatpush.bf16.msra.mxu0 %v1722
    %1746 = vmatpush.bf16.msra.mxu0 %v1721
    %1747 = vmatpush.bf16.msra.mxu0 %v1720
    %1748 = vmatmul.bf16.gmra.mxu0 %v1729
    %v1749 = vpop.f32.mrf.mxu0
    %v1750 = vadd.f32 0.0, %v1749
    %v1751 = vpop.f32.mrf.mxu0
    %v1752 = vadd.f32 0.0, %v1751
    %1753 = vmatmul.bf16.gmra.mxu0 %v1732
    %v1754 = vpop.f32.mrf.mxu0
    %v1755 = vadd.f32 0.0, %v1754
    %v1756 = vpop.f32.mrf.mxu0
    %v1757 = vadd.f32 0.0, %v1756
    %1758 = vmatmul.bf16.gmra.mxu0 %v1735
    %v1759 = vpop.f32.mrf.mxu0
    %v1760 = vadd.f32 0.0, %v1759
    %v1761 = vpop.f32.mrf.mxu0
    %v1762 = vadd.f32 0.0, %v1761
    %1763 = vmatmul.bf16.gmra.mxu0 %v1738
    %v1764 = vpop.f32.mrf.mxu0
    %v1765 = vadd.f32 0.0, %v1764
    %v1766 = vpop.f32.mrf.mxu0
    %v1767 = vadd.f32 0.0, %v1766
    %1768 = vdwg.mxu0
    %v1769 = vadd.f32 %v1658, %v1750
    %v1770 = vadd.f32 %v1659, %v1752
    %v1771 = vadd.f32 %v1660, %v1755
    %v1772 = vadd.f32 %v1661, %v1757
    %v1773 = vadd.f32 %v1662, %v1760
    %v1774 = vadd.f32 %v1663, %v1762
    %v1775 = vadd.f32 %v1664, %v1765
    %v1776 = vadd.f32 %v1665, %v1767
    %v1777 = vld [vmem:[%s1666] sm:$0xf]
    %v1778 = vld [vmem:[%s1666 + $0x4] sm:$0x1]
    %v1779 = vld [vmem:[%s1666 + $0x8] sm:$0xf]
    %v1780 = vld [vmem:[%s1666 + $0xc] sm:$0x1]
    %v1781 = vld [vmem:[%s1666 + $0x10] sm:$0xf]
    %v1782 = vld [vmem:[%s1666 + $0x14] sm:$0x1]
    %v1783 = vld [vmem:[%s1666 + $0x18] sm:$0xf]
    %v1784 = vld [vmem:[%s1666 + $0x1c] sm:$0x1]
    %v1785 = vld [vmem:[%s1666 + $0x20] sm:$0xf]
    %v1786 = vld [vmem:[%s1666 + $0x24] sm:$0x1]
    %v1787 = vld [vmem:[%s1666 + $0x28] sm:$0xf]
    %v1788 = vld [vmem:[%s1666 + $0x2c] sm:$0x1]
    %v1789 = vld [vmem:[%s1666 + $0x30] sm:$0xf]
    %v1790 = vld [vmem:[%s1666 + $0x34] sm:$0x1]
    %v1791 = vld [vmem:[%s1666 + $0x38] sm:$0xf]
    %v1792 = vld [vmem:[%s1666 + $0x3c] sm:$0x1]
    %v1794 = vshrl.u32 %v1777, 16
    %v1796 = vrot.slane %v1794, 4
    %v1797 = vshll.u32 %v1777, 16
    %v1799 = vrot.slane %v1797, 5
    %v1800 = vor.u32 %v1796, %v1799
    %v1801 = vrot.slane %v1800, 4
    %v1803 = vshll.u32 %v1778, 16
    %v1805 = vrot.slane %v1803, 5
    %v1806 = vsel %vm747, %v1801, %v1805
    %v1808 = vshrl.u32 %v1779, 16
    %v1810 = vrot.slane %v1808, 4
    %v1811 = vshll.u32 %v1779, 16
    %v1813 = vrot.slane %v1811, 5
    %v1814 = vor.u32 %v1810, %v1813
    %v1815 = vrot.slane %v1814, 4
    %v1817 = vshll.u32 %v1780, 16
    %v1819 = vrot.slane %v1817, 5
    %v1820 = vsel %vm747, %v1815, %v1819
    %v1822 = vshrl.u32 %v1781, 16
    %v1824 = vrot.slane %v1822, 4
    %v1825 = vshll.u32 %v1781, 16
    %v1827 = vrot.slane %v1825, 5
    %v1828 = vor.u32 %v1824, %v1827
    %v1829 = vrot.slane %v1828, 4
    %v1831 = vshll.u32 %v1782, 16
    %v1833 = vrot.slane %v1831, 5
    %v1834 = vsel %vm747, %v1829, %v1833
    %v1836 = vshrl.u32 %v1783, 16
    %v1838 = vrot.slane %v1836, 4
    %v1839 = vshll.u32 %v1783, 16
    %v1841 = vrot.slane %v1839, 5
    %v1842 = vor.u32 %v1838, %v1841
    %v1843 = vrot.slane %v1842, 4
    %v1845 = vshll.u32 %v1784, 16
    %v1847 = vrot.slane %v1845, 5
    %v1848 = vsel %vm747, %v1843, %v1847
    %v1850 = vshrl.u32 %v1785, 16
    %v1852 = vrot.slane %v1850, 4
    %v1853 = vshll.u32 %v1785, 16
    %v1855 = vrot.slane %v1853, 5
    %v1856 = vor.u32 %v1852, %v1855
    %v1857 = vrot.slane %v1856, 4
    %v1859 = vshll.u32 %v1786, 16
    %v1861 = vrot.slane %v1859, 5
    %v1862 = vsel %vm747, %v1857, %v1861
    %v1864 = vshrl.u32 %v1787, 16
    %v1866 = vrot.slane %v1864, 4
    %v1867 = vshll.u32 %v1787, 16
    %v1869 = vrot.slane %v1867, 5
    %v1870 = vor.u32 %v1866, %v1869
    %v1871 = vrot.slane %v1870, 4
    %v1873 = vshll.u32 %v1788, 16
    %v1875 = vrot.slane %v1873, 5
    %v1876 = vsel %vm747, %v1871, %v1875
    %v1878 = vshrl.u32 %v1789, 16
    %v1880 = vrot.slane %v1878, 4
    %v1881 = vshll.u32 %v1789, 16
    %v1883 = vrot.slane %v1881, 5
    %v1884 = vor.u32 %v1880, %v1883
    %v1885 = vrot.slane %v1884, 4
    %v1887 = vshll.u32 %v1790, 16
    %v1889 = vrot.slane %v1887, 5
    %v1890 = vsel %vm747, %v1885, %v1889
    %v1892 = vshrl.u32 %v1791, 16
    %v1894 = vrot.slane %v1892, 4
    %v1895 = vshll.u32 %v1791, 16
    %v1897 = vrot.slane %v1895, 5
    %v1898 = vor.u32 %v1894, %v1897
    %v1899 = vrot.slane %v1898, 4
    %v1901 = vshll.u32 %v1792, 16
    %v1903 = vrot.slane %v1901, 5
    %v1904 = vsel %vm747, %v1899, %v1903
    %s1905 = scalar_lea.vmem %s9, 224
    %v1906 = vld [vmem:[%s1905] sm:$0xf]
    %v1907 = vld [vmem:[%s1905 + $0x4] sm:$0xf]
    %v1908 = vld [vmem:[%s1905 + $0x8] sm:$0xf]
    %v1909 = vld [vmem:[%s1905 + $0xc] sm:$0xf]
    %v1910 = vld [vmem:[%s1905 + $0x10] sm:$0xf]
    %v1911 = vld [vmem:[%s1905 + $0x14] sm:$0xf]
    %v1912 = vld [vmem:[%s1905 + $0x18] sm:$0xf]
    %v1913 = vld [vmem:[%s1905 + $0x1c] sm:$0xf]
    %v1914 = vunpack.c.l.b16 %v1806
    %v1915 = vunpack.c.l.b16 %v1820
    %v1916 = vunpack.c.l.b16 %v1834
    %v1917 = vunpack.c.l.b16 %v1848
    %v1918 = vunpack.c.l.b16 %v1862
    %v1919 = vunpack.c.l.b16 %v1876
    %v1920 = vunpack.c.l.b16 %v1890
    %v1921 = vunpack.c.l.b16 %v1904
    %v1922 = vpack.c.b16 %v1915, %v1914
    %v1923 = vpack.c.b16 %v1917, %v1916
    %v1924 = vpack.c.b16 %v1919, %v1918
    %v1925 = vpack.c.b16 %v1921, %v1920
    %v1934 = vunpack.c.l.b16 %v1906
    %v1935 = vunpack.c.l.b16 %v1907
    %v1936 = vunpack.c.l.b16 %v1908
    %v1937 = vunpack.c.l.b16 %v1909
    %v1938 = vunpack.c.l.b16 %v1910
    %v1939 = vunpack.c.l.b16 %v1911
    %v1940 = vunpack.c.l.b16 %v1912
    %v1941 = vunpack.c.l.b16 %v1913
    %v1942 = vpack.c.b16 %v1935, %v1934
    %v1943 = vpack.c.b16 %v1937, %v1936
    %v1944 = vpack.c.b16 %v1939, %v1938
    %v1945 = vpack.c.b16 %v1941, %v1940
    %v1951 = vsel %vm495, %v1922, 0
    %v1954 = vsel %vm495, %v1923, 0
    %v1957 = vsel %vm495, %v1924, 0
    %v1960 = vsel %vm495, %v1925, 0
    %1962 = vmatpush.bf16.msra.mxu0 0
    %1963 = vmatpush.bf16.msra.mxu0 0
    %1964 = vmatpush.bf16.msra.mxu0 0
    %1965 = vmatpush.bf16.msra.mxu0 0
    %1966 = vmatpush.bf16.msra.mxu0 %v1945
    %1967 = vmatpush.bf16.msra.mxu0 %v1944
    %1968 = vmatpush.bf16.msra.mxu0 %v1943
    %1969 = vmatpush.bf16.msra.mxu0 %v1942
    %1970 = vmatmul.bf16.gmra.mxu0 %v1951
    %v1971 = vpop.f32.mrf.mxu0
    %v1972 = vadd.f32 0.0, %v1971
    %v1973 = vpop.f32.mrf.mxu0
    %v1974 = vadd.f32 0.0, %v1973
    %1975 = vmatmul.bf16.gmra.mxu0 %v1954
    %v1976 = vpop.f32.mrf.mxu0
    %v1977 = vadd.f32 0.0, %v1976
    %v1978 = vpop.f32.mrf.mxu0
    %v1979 = vadd.f32 0.0, %v1978
    %1980 = vmatmul.bf16.gmra.mxu0 %v1957
    %v1981 = vpop.f32.mrf.mxu0
    %v1982 = vadd.f32 0.0, %v1981
    %v1983 = vpop.f32.mrf.mxu0
    %v1984 = vadd.f32 0.0, %v1983
    %1985 = vmatmul.bf16.gmra.mxu0 %v1960
    %v1986 = vpop.f32.mrf.mxu0
    %v1987 = vadd.f32 0.0, %v1986
    %v1988 = vpop.f32.mrf.mxu0
    %v1989 = vadd.f32 0.0, %v1988
    %1990 = vdwg.mxu0
    %v1991 = vadd.f32 %v1769, %v1972
    %v1992 = vadd.f32 %v1770, %v1974
    %v1993 = vadd.f32 %v1771, %v1977
    %v1994 = vadd.f32 %v1772, %v1979
    %v1995 = vadd.f32 %v1773, %v1982
    %v1996 = vadd.f32 %v1774, %v1984
    %v1997 = vadd.f32 %v1775, %v1987
    %v1998 = vadd.f32 %v1776, %v1989
    %v1999 = vld [vmem:[%s1666] sm:$0xe]
    %v2000 = vld [vmem:[%s1666 + $0x8] sm:$0xe]
    %v2001 = vld [vmem:[%s1666 + $0x10] sm:$0xe]
    %v2002 = vld [vmem:[%s1666 + $0x18] sm:$0xe]
    %v2003 = vld [vmem:[%s1666 + $0x20] sm:$0xe]
    %v2004 = vld [vmem:[%s1666 + $0x28] sm:$0xe]
    %v2005 = vld [vmem:[%s1666 + $0x30] sm:$0xe]
    %v2006 = vld [vmem:[%s1666 + $0x38] sm:$0xe]
    %v2023 = vrot.slane %v1999, 5
    %v2024 = vrot.slane %v2023, 4
    %v2025 = vrot.slane %v1778, 5
    %v2026 = vsel %vm1057, %v2024, %v2025
    %v2027 = vrot.slane %v2000, 5
    %v2028 = vrot.slane %v2027, 4
    %v2029 = vrot.slane %v1780, 5
    %v2030 = vsel %vm1057, %v2028, %v2029
    %v2031 = vrot.slane %v2001, 5
    %v2032 = vrot.slane %v2031, 4
    %v2033 = vrot.slane %v1782, 5
    %v2034 = vsel %vm1057, %v2032, %v2033
    %v2035 = vrot.slane %v2002, 5
    %v2036 = vrot.slane %v2035, 4
    %v2037 = vrot.slane %v1784, 5
    %v2038 = vsel %vm1057, %v2036, %v2037
    %v2039 = vrot.slane %v2003, 5
    %v2040 = vrot.slane %v2039, 4
    %v2041 = vrot.slane %v1786, 5
    %v2042 = vsel %vm1057, %v2040, %v2041
    %v2043 = vrot.slane %v2004, 5
    %v2044 = vrot.slane %v2043, 4
    %v2045 = vrot.slane %v1788, 5
    %v2046 = vsel %vm1057, %v2044, %v2045
    %v2047 = vrot.slane %v2005, 5
    %v2048 = vrot.slane %v2047, 4
    %v2049 = vrot.slane %v1790, 5
    %v2050 = vsel %vm1057, %v2048, %v2049
    %v2051 = vrot.slane %v2006, 5
    %v2052 = vrot.slane %v2051, 4
    %v2053 = vrot.slane %v1792, 5
    %v2054 = vsel %vm1057, %v2052, %v2053
    %s2055 = scalar_lea.vmem %s9, 256
    %v2056 = vld [vmem:[%s2055] sm:$0xf]
    %v2057 = vld [vmem:[%s2055 + $0x4] sm:$0xf]
    %v2058 = vld [vmem:[%s2055 + $0x8] sm:$0xf]
    %v2059 = vld [vmem:[%s2055 + $0xc] sm:$0xf]
    %v2060 = vld [vmem:[%s2055 + $0x10] sm:$0xf]
    %v2061 = vld [vmem:[%s2055 + $0x14] sm:$0xf]
    %v2062 = vld [vmem:[%s2055 + $0x18] sm:$0xf]
    %v2063 = vld [vmem:[%s2055 + $0x1c] sm:$0xf]
    %v2064 = vunpack.c.l.b16 %v2026
    %v2065 = vunpack.c.l.b16 %v2030
    %v2066 = vunpack.c.l.b16 %v2034
    %v2067 = vunpack.c.l.b16 %v2038
    %v2068 = vunpack.c.l.b16 %v2042
    %v2069 = vunpack.c.l.b16 %v2046
    %v2070 = vunpack.c.l.b16 %v2050
    %v2071 = vunpack.c.l.b16 %v2054
    %v2072 = vpack.c.b16 %v2065, %v2064
    %v2073 = vpack.c.b16 %v2067, %v2066
    %v2074 = vpack.c.b16 %v2069, %v2068
    %v2075 = vpack.c.b16 %v2071, %v2070
    %v2084 = vunpack.c.l.b16 %v2056
    %v2085 = vunpack.c.l.b16 %v2057
    %v2086 = vunpack.c.l.b16 %v2058
    %v2087 = vunpack.c.l.b16 %v2059
    %v2088 = vunpack.c.l.b16 %v2060
    %v2089 = vunpack.c.l.b16 %v2061
    %v2090 = vunpack.c.l.b16 %v2062
    %v2091 = vunpack.c.l.b16 %v2063
    %v2092 = vpack.c.b16 %v2085, %v2084
    %v2093 = vpack.c.b16 %v2087, %v2086
    %v2094 = vpack.c.b16 %v2089, %v2088
    %v2095 = vpack.c.b16 %v2091, %v2090
    %v2101 = vsel %vm495, %v2072, 0
    %v2104 = vsel %vm495, %v2073, 0
    %v2107 = vsel %vm495, %v2074, 0
    %v2110 = vsel %vm495, %v2075, 0
    %2112 = vmatpush.bf16.msra.mxu0 0
    %2113 = vmatpush.bf16.msra.mxu0 0
    %2114 = vmatpush.bf16.msra.mxu0 0
    %2115 = vmatpush.bf16.msra.mxu0 0
    %2116 = vmatpush.bf16.msra.mxu0 %v2095
    %2117 = vmatpush.bf16.msra.mxu0 %v2094
    %2118 = vmatpush.bf16.msra.mxu0 %v2093
    %2119 = vmatpush.bf16.msra.mxu0 %v2092
    %2120 = vmatmul.bf16.gmra.mxu0 %v2101
    %v2121 = vpop.f32.mrf.mxu0
    %v2122 = vadd.f32 0.0, %v2121
    %v2123 = vpop.f32.mrf.mxu0
    %v2124 = vadd.f32 0.0, %v2123
    %2125 = vmatmul.bf16.gmra.mxu0 %v2104
    %v2126 = vpop.f32.mrf.mxu0
    %v2127 = vadd.f32 0.0, %v2126
    %v2128 = vpop.f32.mrf.mxu0
    %v2129 = vadd.f32 0.0, %v2128
    %2130 = vmatmul.bf16.gmra.mxu0 %v2107
    %v2131 = vpop.f32.mrf.mxu0
    %v2132 = vadd.f32 0.0, %v2131
    %v2133 = vpop.f32.mrf.mxu0
    %v2134 = vadd.f32 0.0, %v2133
    %2135 = vmatmul.bf16.gmra.mxu0 %v2110
    %v2136 = vpop.f32.mrf.mxu0
    %v2137 = vadd.f32 0.0, %v2136
    %v2138 = vpop.f32.mrf.mxu0
    %v2139 = vadd.f32 0.0, %v2138
    %2140 = vdwg.mxu0
    %v2141 = vadd.f32 %v1991, %v2122
    %v2142 = vadd.f32 %v1992, %v2124
    %v2143 = vadd.f32 %v1993, %v2127
    %v2144 = vadd.f32 %v1994, %v2129
    %v2145 = vadd.f32 %v1995, %v2132
    %v2146 = vadd.f32 %v1996, %v2134
    %v2147 = vadd.f32 %v1997, %v2137
    %v2148 = vadd.f32 %v1998, %v2139
    %v2150 = vperm.slane %v150, 0
    %v2152 = vadd.f32 %v2141, %v2150
    %v2153 = vadd.f32 %v2142, %v2150
    %v2154 = vadd.f32 %v2143, %v2150
    %v2155 = vadd.f32 %v2144, %v2150
    %v2156 = vadd.f32 %v2145, %v2150
    %v2157 = vadd.f32 %v2146, %v2150
    %v2158 = vadd.f32 %v2147, %v2150
    %v2159 = vadd.f32 %v2148, %v2150
    %v2160 = vmax.f32 %v2152, 0.0
    %v2161 = vmax.f32 %v2153, 0.0
    %v2162 = vmax.f32 %v2154, 0.0
    %v2163 = vmax.f32 %v2155, 0.0
    %v2164 = vmax.f32 %v2156, 0.0
    %v2165 = vmax.f32 %v2157, 0.0
    %v2166 = vmax.f32 %v2158, 0.0
    %v2167 = vmax.f32 %v2159, 0.0
    %v2168 = vpack.c.bf16 %v2161, %v2160
    %v2169 = vpack.c.bf16 %v2163, %v2162
    %v2170 = vpack.c.bf16 %v2165, %v2164
    %v2171 = vpack.c.bf16 %v2167, %v2166
    %v2180 = vunpack.c.l.b16 %v162
    %v2181 = vunpack.c.l.b16 %v163
    %v2182 = vunpack.c.l.b16 %v164
    %v2183 = vunpack.c.l.b16 %v165
    %v2184 = vunpack.c.l.b16 %v166
    %v2185 = vunpack.c.l.b16 %v167
    %v2186 = vunpack.c.l.b16 %v168
    %v2187 = vunpack.c.l.b16 %v169
    %v2188 = vpack.c.b16 %v2181, %v2180
    %v2189 = vpack.c.b16 %v2183, %v2182
    %v2190 = vpack.c.b16 %v2185, %v2184
    %v2191 = vpack.c.b16 %v2187, %v2186
    %v2193 = vsel %vm495, %v2188, 0
    %v2196 = vsel %vm495, %v2189, 0
    %v2199 = vsel %vm495, %v2190, 0
    %v2202 = vsel %vm495, %v2191, 0
    %2204 = vmatpush.bf16.msra.mxu0 0
    %2205 = vmatpush.bf16.msra.mxu0 0
    %2206 = vmatpush.bf16.msra.mxu0 0
    %2207 = vmatpush.bf16.msra.mxu0 0
    %2208 = vmatpush.bf16.msra.mxu0 %v2171
    %2209 = vmatpush.bf16.msra.mxu0 %v2170
    %2210 = vmatpush.bf16.msra.mxu0 %v2169
    %2211 = vmatpush.bf16.msra.mxu0 %v2168
    %2212 = vmatmul.bf16.gmra.mxu0 %v2193
    %v2213 = vpop.f32.mrf.mxu0
    %v2214 = vadd.f32 0.0, %v2213
    %v2215 = vpop.f32.mrf.mxu0
    %v2216 = vadd.f32 0.0, %v2215
    %2217 = vmatmul.bf16.gmra.mxu0 %v2196
    %v2218 = vpop.f32.mrf.mxu0
    %v2219 = vadd.f32 0.0, %v2218
    %v2220 = vpop.f32.mrf.mxu0
    %v2221 = vadd.f32 0.0, %v2220
    %2222 = vmatmul.bf16.gmra.mxu0 %v2199
    %v2223 = vpop.f32.mrf.mxu0
    %v2224 = vadd.f32 0.0, %v2223
    %v2225 = vpop.f32.mrf.mxu0
    %v2226 = vadd.f32 0.0, %v2225
    %2227 = vmatmul.bf16.gmra.mxu0 %v2202
    %v2228 = vpop.f32.mrf.mxu0
    %v2229 = vadd.f32 0.0, %v2228
    %v2230 = vpop.f32.mrf.mxu0
    %v2231 = vadd.f32 0.0, %v2230
    %2232 = vdwg.mxu0
    %v2233 = vpack.c.bf16 %v2216, %v2214
    %v2234 = vld [vmem:[%s11] sm:$0xf]
    %v2235 = vld [vmem:[%s11 + $0x4] sm:$0xf]
    %v2236 = vld [vmem:[%s11 + $0x8] sm:$0xf]
    %v2237 = vld [vmem:[%s11 + $0xc] sm:$0xf]
    %v2238 = vpack.c.bf16 %v2221, %v2219
    %s2239 = scalar_lea.vmem %s11, 16
    %v2240 = vld [vmem:[%s2239] sm:$0xf]
    %v2241 = vld [vmem:[%s2239 + $0x4] sm:$0xf]
    %v2242 = vld [vmem:[%s2239 + $0x8] sm:$0xf]
    %v2243 = vld [vmem:[%s2239 + $0xc] sm:$0xf]
    %v2248 = vunpack.c.l.b16 %v2240
    %v2249 = vunpack.c.l.b16 %v2241
    %v2250 = vunpack.c.l.b16 %v2242
    %v2251 = vunpack.c.l.b16 %v2243
    %v2252 = vpack.c.b16 %v2249, %v2248
    %v2253 = vpack.c.b16 %v2251, %v2250
    %vm2256 = vcmask 261120
    %v2258 = vsel %vm2256, %v2238, 0
    %2260 = vmatpush.bf16.msra.mxu0 0
    %2261 = vmatpush.bf16.msra.mxu0 0
    %2262 = vmatpush.bf16.msra.mxu0 0
    %2263 = vmatpush.bf16.msra.mxu0 0
    %2264 = vmatpush.bf16.msra.mxu0 0
    %2265 = vmatpush.bf16.msra.mxu0 0
    %2266 = vmatpush.bf16.msra.mxu0 %v2253
    %2267 = vmatpush.bf16.msra.mxu0 %v2252
    %2268 = vmatmul.bf16.gmra.mxu0 %v2258
    %v2269 = vpop.f32.mrf.mxu0
    %v2270 = vadd.f32 0.0, %v2269
    %v2271 = vpop.f32.mrf.mxu0
    %v2272 = vadd.f32 0.0, %v2271
    %2273 = vdwg.mxu0
    %v2278 = vunpack.c.l.b16 %v2234
    %v2279 = vunpack.c.l.b16 %v2235
    %v2280 = vunpack.c.l.b16 %v2236
    %v2281 = vunpack.c.l.b16 %v2237
    %v2282 = vpack.c.b16 %v2279, %v2278
    %v2283 = vpack.c.b16 %v2281, %v2280
    %v2287 = vsel %vm2256, %v2233, 0
    %2289 = vmatpush.bf16.msra.mxu0 0
    %2290 = vmatpush.bf16.msra.mxu0 0
    %2291 = vmatpush.bf16.msra.mxu0 0
    %2292 = vmatpush.bf16.msra.mxu0 0
    %2293 = vmatpush.bf16.msra.mxu0 0
    %2294 = vmatpush.bf16.msra.mxu0 0
    %2295 = vmatpush.bf16.msra.mxu0 %v2283
    %2296 = vmatpush.bf16.msra.mxu0 %v2282
    %2297 = vmatmul.bf16.gmra.mxu0 %v2287
    %v2298 = vpop.f32.mrf.mxu0
    %v2299 = vadd.f32 %v2270, %v2298
    %v2300 = vpop.f32.mrf.mxu0
    %v2301 = vadd.f32 %v2272, %v2300
    %2302 = vdwg.mxu0
    %v2303 = vpack.c.bf16 %v2226, %v2224
    %s2304 = scalar_lea.vmem %s11, 32
    %v2305 = vld [vmem:[%s2304] sm:$0xf]
    %v2306 = vld [vmem:[%s2304 + $0x4] sm:$0xf]
    %v2307 = vld [vmem:[%s2304 + $0x8] sm:$0xf]
    %v2308 = vld [vmem:[%s2304 + $0xc] sm:$0xf]
    %v2313 = vunpack.c.l.b16 %v2305
    %v2314 = vunpack.c.l.b16 %v2306
    %v2315 = vunpack.c.l.b16 %v2307
    %v2316 = vunpack.c.l.b16 %v2308
    %v2317 = vpack.c.b16 %v2314, %v2313
    %v2318 = vpack.c.b16 %v2316, %v2315
    %v2322 = vsel %vm2256, %v2303, 0
    %2324 = vmatpush.bf16.msra.mxu0 0
    %2325 = vmatpush.bf16.msra.mxu0 0
    %2326 = vmatpush.bf16.msra.mxu0 0
    %2327 = vmatpush.bf16.msra.mxu0 0
    %2328 = vmatpush.bf16.msra.mxu0 0
    %2329 = vmatpush.bf16.msra.mxu0 0
    %2330 = vmatpush.bf16.msra.mxu0 %v2318
    %2331 = vmatpush.bf16.msra.mxu0 %v2317
    %2332 = vmatmul.bf16.gmra.mxu0 %v2322
    %v2333 = vpop.f32.mrf.mxu0
    %v2334 = vadd.f32 0.0, %v2333
    %v2335 = vpop.f32.mrf.mxu0
    %v2336 = vadd.f32 0.0, %v2335
    %2337 = vdwg.mxu0
    %v2338 = vadd.f32 %v2299, %v2334
    %v2339 = vadd.f32 %v2301, %v2336
    %v2340 = vpack.c.bf16 %v2231, %v2229
    %s2341 = scalar_lea.vmem %s11, 48
    %v2342 = vld [vmem:[%s2341] sm:$0xf]
    %v2343 = vld [vmem:[%s2341 + $0x4] sm:$0xf]
    %v2344 = vld [vmem:[%s2341 + $0x8] sm:$0xf]
    %v2345 = vld [vmem:[%s2341 + $0xc] sm:$0xf]
    %v2350 = vunpack.c.l.b16 %v2342
    %v2351 = vunpack.c.l.b16 %v2343
    %v2352 = vunpack.c.l.b16 %v2344
    %v2353 = vunpack.c.l.b16 %v2345
    %v2354 = vpack.c.b16 %v2351, %v2350
    %v2355 = vpack.c.b16 %v2353, %v2352
    %v2359 = vsel %vm2256, %v2340, 0
    %2361 = vmatpush.bf16.msra.mxu0 0
    %2362 = vmatpush.bf16.msra.mxu0 0
    %2363 = vmatpush.bf16.msra.mxu0 0
    %2364 = vmatpush.bf16.msra.mxu0 0
    %2365 = vmatpush.bf16.msra.mxu0 0
    %2366 = vmatpush.bf16.msra.mxu0 0
    %2367 = vmatpush.bf16.msra.mxu0 %v2355
    %2368 = vmatpush.bf16.msra.mxu0 %v2354
    %2369 = vmatmul.bf16.gmra.mxu0 %v2359
    %v2370 = vpop.f32.mrf.mxu0
    %v2371 = vadd.f32 0.0, %v2370
    %v2372 = vpop.f32.mrf.mxu0
    %v2373 = vadd.f32 0.0, %v2372
    %2374 = vdwg.mxu0
    %v2375 = vadd.f32 %v2338, %v2371
    %v2376 = vadd.f32 %v2339, %v2373
    %v2378 = vperm.slane %v151, 0
    %v2380 = vadd.f32 %v2375, %v2378
    %v2381 = vadd.f32 %v2376, %v2378
    %v2382 = vmax.f32 %v2380, 0.0
    %v2383 = vmax.f32 %v2381, 0.0
    %v2384 = vadd.f32 %v2382, %v719
    %v2385 = vadd.f32 %v2383, %v720
    %v2386 = vpack.c.bf16 %v2384, %v2384
    %v2387 = vpack.c.bf16 %v2385, %v2385
    %v2389 = vshll.u32 %v2386, 16
    %v2391 = vrot.slane %v2389, 5
    %v2392 = vshrl.u32 %v2386, 16
    %v2394 = vrot.slane %v2392, 4
    %v2395 = vor.u32 %v2394, %v2391
    %v2396 = vrot.slane %v2395, 4
    %vm2399 = vcmask 519171
    %vm2400 = vsmask.f32 7950
    %vm2401 = vmand %vm2399, %vm2400
    %v2402 = vld [vmem:[#allocation3] sm:$0x8]
    %v2403 = vsel %vm2401, %v2391, %v2402
    %2404 = vst [vmem:[#allocation3] sm:$0x8] %v2403
    %vm2405 = vcmask 517120
    %vm2406 = vsmask.f32 1280
    %vm2407 = vmand %vm2405, %vm2406
    %v2408 = vld [vmem:[#allocation3 + $0x4] sm:$0x3]
    %v2409 = vsel %vm2407, %v2396, %v2408
    %2410 = vst [vmem:[#allocation3 + $0x4] sm:$0x3] %v2409
    %v2411 = vrot.slane %v2392, 7
    %v2412 = vor.u32 %v2411, %v2389
    %v2413 = vrot.slane %v2411, 4
    %vm2416 = vcmask 519170
    %vm2417 = vsmask.f32 7946
    %vm2418 = vmand %vm2416, %vm2417
    %v2419 = vld [vmem:[#allocation3 + $0x4] sm:$0xc]
    %v2420 = vsel %vm2418, %v2412, %v2419
    %2421 = vst [vmem:[#allocation3 + $0x4] sm:$0xc] %v2420
    %v2422 = vld [vmem:[#allocation3 + $0x8] sm:$0x1]
    %v2423 = vsel %vm70, %v2413, %v2422
    %2424 = vst [vmem:[#allocation3 + $0x8] sm:$0x1] %v2423
    %v2426 = vshrl.u32 %v2387, 16
    %v2428 = vrot.slane %v2426, 6
    %v2429 = vshll.u32 %v2387, 16
    %v2431 = vrot.slane %v2429, 7
    %v2432 = vor.u32 %v2428, %v2431
    %vm2434 = vcmask 519169
    %vm2435 = vsmask.f32 3334
    %vm2436 = vmand %vm2434, %vm2435
    %v2437 = vld [vmem:[#allocation3 + $0x8] sm:$0xe]
    %v2438 = vsel %vm2436, %v2432, %v2437
    %2439 = vst [vmem:[#allocation3 + $0x8] sm:$0xe] %v2438
    %v2440 = vrot.slane %v2426, 5
    %v2441 = vrot.slane %v2429, 6
    %v2442 = vor.u32 %v2440, %v2441
    %v2443 = vrot.slane %v2442, 4
    %vm2445 = vcmask 518144
    %vm2446 = vsmask.f32 2306
    %vm2447 = vmand %vm2445, %vm2446
    %v2448 = vld [vmem:[#allocation3 + $0xc] sm:$0x7]
    %v2449 = vsel %vm2447, %v2443, %v2448
    %2450 = vst [vmem:[#allocation3 + $0xc] sm:$0x7] %v2449
    %v2451 = vld [vmem:[%s2] sm:$0xff]
    %v2452 = vld [vmem:[%s2 + $0x8] sm:$0xff]
    %v2453 = vld [vmem:[%s2 + $0x10] sm:$0x3f]
    %v2454 = vld [vmem:[#allocation3] sm:$0xf]
    %v2455 = vld [vmem:[#allocation3 + $0x4] sm:$0xf]
    %v2456 = vld [vmem:[#allocation3 + $0x8] sm:$0x7]
    %v2457 = vld [vmem:[%s13] sm:$0xf]
    %v2458 = vld [vmem:[%s13 + $0x4] sm:$0xf]
    %v2459 = vld [vmem:[%s13 + $0x8] sm:$0xf]
    %v2460 = vld [vmem:[%s13 + $0xc] sm:$0xf]
    %v2461 = vld [vmem:[%s13 + $0x10] sm:$0xf]
    %v2462 = vld [vmem:[%s13 + $0x14] sm:$0xf]
    %v2463 = vld [vmem:[%s13 + $0x18] sm:$0xf]
    %v2464 = vld [vmem:[%s13 + $0x1c] sm:$0xf]
    %v2468 = vunpack.c.l.b16 %v2454
    %v2469 = vunpack.c.l.b16 %v2455
    %v2470 = vunpack.c.l.b16 %v2456
    %v2471 = vpack.c.b16 %v2469, %v2468
    %v2472 = vpack.c.b16 %v2470, %v2470
    %v2481 = vunpack.c.l.b16 %v2457
    %v2482 = vunpack.c.l.b16 %v2458
    %v2483 = vunpack.c.l.b16 %v2459
    %v2484 = vunpack.c.l.b16 %v2460
    %v2485 = vunpack.c.l.b16 %v2461
    %v2486 = vunpack.c.l.b16 %v2462
    %v2487 = vunpack.c.l.b16 %v2463
    %v2488 = vunpack.c.l.b16 %v2464
    %v2489 = vpack.c.b16 %v2482, %v2481
    %v2490 = vpack.c.b16 %v2484, %v2483
    %v2491 = vpack.c.b16 %v2486, %v2485
    %v2492 = vpack.c.b16 %v2488, %v2487
    %v2498 = vsel %vm495, %v2471, 0
    %v2501 = vsel %vm495, %v2472, 0
    %2503 = vmatpush.bf16.msra.mxu0 0
    %2504 = vmatpush.bf16.msra.mxu0 0
    %2505 = vmatpush.bf16.msra.mxu0 0
    %2506 = vmatpush.bf16.msra.mxu0 0
    %2507 = vmatpush.bf16.msra.mxu0 %v2492
    %2508 = vmatpush.bf16.msra.mxu0 %v2491
    %2509 = vmatpush.bf16.msra.mxu0 %v2490
    %2510 = vmatpush.bf16.msra.mxu0 %v2489
    %2511 = vmatmul.bf16.gmra.mxu0 %v2498
    %v2512 = vpop.f32.mrf.mxu0
    %v2513 = vadd.f32 0.0, %v2512
    %v2514 = vpop.f32.mrf.mxu0
    %v2515 = vadd.f32 0.0, %v2514
    %2516 = vmatmul.bf16.gmra.mxu0 %v2501
    %v2517 = vpop.f32.mrf.mxu0
    %v2518 = vadd.f32 0.0, %v2517
    %v2519 = vpop.f32.mrf.mxu0
    %2520 = vdwg.mxu0
    %v2521 = vadd.f32 %v2451, %v2513
    %v2522 = vadd.f32 %v2452, %v2515
    %v2523 = vadd.f32 %v2453, %v2518
    %v2524 = vld [vmem:[#allocation3 + $0x8] sm:$0xf]
    %s2525 = scalar_lea.vmem %s13, 32
    %v2526 = vld [vmem:[%s2525] sm:$0xf]
    %v2527 = vld [vmem:[%s2525 + $0x4] sm:$0xf]
    %v2528 = vld [vmem:[%s2525 + $0x8] sm:$0xf]
    %v2529 = vld [vmem:[%s2525 + $0xc] sm:$0xf]
    %v2530 = vld [vmem:[%s2525 + $0x10] sm:$0xf]
    %v2531 = vld [vmem:[%s2525 + $0x14] sm:$0xf]
    %v2532 = vld [vmem:[%s2525 + $0x18] sm:$0xf]
    %v2533 = vld [vmem:[%s2525 + $0x1c] sm:$0xf]
    %v2535 = vunpack.c.l.b16 %v2524
    %v2536 = vpack.c.b16 %v2535, %v2535
    %vm2537 = vsmask.f32 7424
    %v2538 = vshrl.u32 %v2471, 16
    %v2540 = vshll.u32 %v2471, 16
    %v2542 = vrot.slane %v2540, 1
    %v2543 = vor.u32 %v2538, %v2542
    %v2545 = vshll.u32 %v2536, 16
    %v2547 = vrot.slane %v2545, 1
    %v2548 = vsel %vm2537, %v2543, %v2547
    %v2549 = vshrl.u32 %v2536, 16
    %v2551 = vor.u32 %v2549, %v2547
    %v2560 = vunpack.c.l.b16 %v2526
    %v2561 = vunpack.c.l.b16 %v2527
    %v2562 = vunpack.c.l.b16 %v2528
    %v2563 = vunpack.c.l.b16 %v2529
    %v2564 = vunpack.c.l.b16 %v2530
    %v2565 = vunpack.c.l.b16 %v2531
    %v2566 = vunpack.c.l.b16 %v2532
    %v2567 = vunpack.c.l.b16 %v2533
    %v2568 = vpack.c.b16 %v2561, %v2560
    %v2569 = vpack.c.b16 %v2563, %v2562
    %v2570 = vpack.c.b16 %v2565, %v2564
    %v2571 = vpack.c.b16 %v2567, %v2566
    %v2577 = vsel %vm495, %v2548, 0
    %v2580 = vsel %vm495, %v2551, 0
    %2582 = vmatpush.bf16.msra.mxu0 0
    %2583 = vmatpush.bf16.msra.mxu0 0
    %2584 = vmatpush.bf16.msra.mxu0 0
    %2585 = vmatpush.bf16.msra.mxu0 0
    %2586 = vmatpush.bf16.msra.mxu0 %v2571
    %2587 = vmatpush.bf16.msra.mxu0 %v2570
    %2588 = vmatpush.bf16.msra.mxu0 %v2569
    %2589 = vmatpush.bf16.msra.mxu0 %v2568
    %2590 = vmatmul.bf16.gmra.mxu0 %v2577
    %v2591 = vpop.f32.mrf.mxu0
    %v2592 = vadd.f32 0.0, %v2591
    %v2593 = vpop.f32.mrf.mxu0
    %v2594 = vadd.f32 0.0, %v2593
    %2595 = vmatmul.bf16.gmra.mxu0 %v2580
    %v2596 = vpop.f32.mrf.mxu0
    %v2597 = vadd.f32 0.0, %v2596
    %v2598 = vpop.f32.mrf.mxu0
    %2599 = vdwg.mxu0
    %v2600 = vadd.f32 %v2521, %v2592
    %v2601 = vadd.f32 %v2522, %v2594
    %v2602 = vadd.f32 %v2523, %v2597
    %v2603 = vld [vmem:[#allocation3] sm:$0xe]
    %s2604 = scalar_lea.vmem %s13, 64
    %v2605 = vld [vmem:[%s2604] sm:$0xf]
    %v2606 = vld [vmem:[%s2604 + $0x4] sm:$0xf]
    %v2607 = vld [vmem:[%s2604 + $0x8] sm:$0xf]
    %v2608 = vld [vmem:[%s2604 + $0xc] sm:$0xf]
    %v2609 = vld [vmem:[%s2604 + $0x10] sm:$0xf]
    %v2610 = vld [vmem:[%s2604 + $0x14] sm:$0xf]
    %v2611 = vld [vmem:[%s2604 + $0x18] sm:$0xf]
    %v2612 = vld [vmem:[%s2604 + $0x1c] sm:$0xf]
    %v2614 = vunpack.c.l.b16 %v2603
    %v2615 = vpack.c.b16 %v2469, %v2614
    %vm2616 = vcmask 1046528
    %v2617 = vrot.slane %v2615, 1
    %v2618 = vrot.slane %v2536, 1
    %v2619 = vsel %vm2616, %v2617, %v2618
    %v2628 = vunpack.c.l.b16 %v2605
    %v2629 = vunpack.c.l.b16 %v2606
    %v2630 = vunpack.c.l.b16 %v2607
    %v2631 = vunpack.c.l.b16 %v2608
    %v2632 = vunpack.c.l.b16 %v2609
    %v2633 = vunpack.c.l.b16 %v2610
    %v2634 = vunpack.c.l.b16 %v2611
    %v2635 = vunpack.c.l.b16 %v2612
    %v2636 = vpack.c.b16 %v2629, %v2628
    %v2637 = vpack.c.b16 %v2631, %v2630
    %v2638 = vpack.c.b16 %v2633, %v2632
    %v2639 = vpack.c.b16 %v2635, %v2634
    %v2645 = vsel %vm495, %v2619, 0
    %v2648 = vsel %vm495, %v2618, 0
    %2650 = vmatpush.bf16.msra.mxu0 0
    %2651 = vmatpush.bf16.msra.mxu0 0
    %2652 = vmatpush.bf16.msra.mxu0 0
    %2653 = vmatpush.bf16.msra.mxu0 0
    %2654 = vmatpush.bf16.msra.mxu0 %v2639
    %2655 = vmatpush.bf16.msra.mxu0 %v2638
    %2656 = vmatpush.bf16.msra.mxu0 %v2637
    %2657 = vmatpush.bf16.msra.mxu0 %v2636
    %2658 = vmatmul.bf16.gmra.mxu0 %v2645
    %v2659 = vpop.f32.mrf.mxu0
    %v2660 = vadd.f32 0.0, %v2659
    %v2661 = vpop.f32.mrf.mxu0
    %v2662 = vadd.f32 0.0, %v2661
    %2663 = vmatmul.bf16.gmra.mxu0 %v2648
    %v2664 = vpop.f32.mrf.mxu0
    %v2665 = vadd.f32 0.0, %v2664
    %v2666 = vpop.f32.mrf.mxu0
    %2667 = vdwg.mxu0
    %v2668 = vadd.f32 %v2600, %v2660
    %v2669 = vadd.f32 %v2601, %v2662
    %v2670 = vadd.f32 %v2602, %v2665
    %v2671 = vld [vmem:[#allocation3] sm:$0x8]
    %v2672 = vld [vmem:[#allocation3 + $0x4] sm:$0xf]
    %v2673 = vld [vmem:[#allocation3 + $0x8] sm:$0xf]
    %v2674 = vld [vmem:[#allocation3 + $0xc] sm:$0x3]
    %s2675 = scalar_lea.vmem %s13, 96
    %v2676 = vld [vmem:[%s2675] sm:$0xf]
    %v2677 = vld [vmem:[%s2675 + $0x4] sm:$0xf]
    %v2678 = vld [vmem:[%s2675 + $0x8] sm:$0xf]
    %v2679 = vld [vmem:[%s2675 + $0xc] sm:$0xf]
    %v2680 = vld [vmem:[%s2675 + $0x10] sm:$0xf]
    %v2681 = vld [vmem:[%s2675 + $0x14] sm:$0xf]
    %v2682 = vld [vmem:[%s2675 + $0x18] sm:$0xf]
    %v2683 = vld [vmem:[%s2675 + $0x1c] sm:$0xf]
    %v2688 = vunpack.c.l.b16 %v2671
    %v2689 = vunpack.c.l.b16 %v2672
    %v2690 = vunpack.c.l.b16 %v2673
    %v2691 = vunpack.c.l.b16 %v2674
    %v2692 = vpack.c.b16 %v2689, %v2688
    %v2693 = vpack.c.b16 %v2691, %v2690
    %vm2694 = vcmask 1044480
    %v2695 = vrot.slane %v2692, 3
    %v2696 = vrot.slane %v2693, 3
    %v2697 = vsel %vm2694, %v2695, %v2696
    %v2706 = vunpack.c.l.b16 %v2676
    %v2707 = vunpack.c.l.b16 %v2677
    %v2708 = vunpack.c.l.b16 %v2678
    %v2709 = vunpack.c.l.b16 %v2679
    %v2710 = vunpack.c.l.b16 %v2680
    %v2711 = vunpack.c.l.b16 %v2681
    %v2712 = vunpack.c.l.b16 %v2682
    %v2713 = vunpack.c.l.b16 %v2683
    %v2714 = vpack.c.b16 %v2707, %v2706
    %v2715 = vpack.c.b16 %v2709, %v2708
    %v2716 = vpack.c.b16 %v2711, %v2710
    %v2717 = vpack.c.b16 %v2713, %v2712
    %v2723 = vsel %vm495, %v2697, 0
    %v2726 = vsel %vm495, %v2696, 0
    %2728 = vmatpush.bf16.msra.mxu0 0
    %2729 = vmatpush.bf16.msra.mxu0 0
    %2730 = vmatpush.bf16.msra.mxu0 0
    %2731 = vmatpush.bf16.msra.mxu0 0
    %2732 = vmatpush.bf16.msra.mxu0 %v2717
    %2733 = vmatpush.bf16.msra.mxu0 %v2716
    %2734 = vmatpush.bf16.msra.mxu0 %v2715
    %2735 = vmatpush.bf16.msra.mxu0 %v2714
    %2736 = vmatmul.bf16.gmra.mxu0 %v2723
    %v2737 = vpop.f32.mrf.mxu0
    %v2738 = vadd.f32 0.0, %v2737
    %v2739 = vpop.f32.mrf.mxu0
    %v2740 = vadd.f32 0.0, %v2739
    %2741 = vmatmul.bf16.gmra.mxu0 %v2726
    %v2742 = vpop.f32.mrf.mxu0
    %v2743 = vadd.f32 0.0, %v2742
    %v2744 = vpop.f32.mrf.mxu0
    %2745 = vdwg.mxu0
    %v2746 = vadd.f32 %v2668, %v2738
    %v2747 = vadd.f32 %v2669, %v2740
    %v2748 = vadd.f32 %v2670, %v2743
    %v2749 = vld [vmem:[#allocation3 + $0xc] sm:$0x7]
    %s2750 = scalar_lea.vmem %s13, 128
    %v2751 = vld [vmem:[%s2750] sm:$0xf]
    %v2752 = vld [vmem:[%s2750 + $0x4] sm:$0xf]
    %v2753 = vld [vmem:[%s2750 + $0x8] sm:$0xf]
    %v2754 = vld [vmem:[%s2750 + $0xc] sm:$0xf]
    %v2755 = vld [vmem:[%s2750 + $0x10] sm:$0xf]
    %v2756 = vld [vmem:[%s2750 + $0x14] sm:$0xf]
    %v2757 = vld [vmem:[%s2750 + $0x18] sm:$0xf]
    %v2758 = vld [vmem:[%s2750 + $0x1c] sm:$0xf]
    %v2760 = vunpack.c.l.b16 %v2749
    %v2761 = vpack.c.b16 %v2760, %v2690
    %vm2762 = vsmask.f32 4352
    %v2764 = vshrl.u32 %v2692, 16
    %v2766 = vrot.slane %v2764, 3
    %v2767 = vshll.u32 %v2692, 16
    %v2769 = vrot.slane %v2767, 4
    %v2770 = vor.u32 %v2766, %v2769
    %v2772 = vshrl.u32 %v2761, 16
    %v2774 = vrot.slane %v2772, 3
    %v2775 = vshll.u32 %v2761, 16
    %v2777 = vrot.slane %v2775, 4
    %v2778 = vor.u32 %v2774, %v2777
    %v2779 = vsel %vm2762, %v2770, %v2778
    %v2788 = vunpack.c.l.b16 %v2751
    %v2789 = vunpack.c.l.b16 %v2752
    %v2790 = vunpack.c.l.b16 %v2753
    %v2791 = vunpack.c.l.b16 %v2754
    %v2792 = vunpack.c.l.b16 %v2755
    %v2793 = vunpack.c.l.b16 %v2756
    %v2794 = vunpack.c.l.b16 %v2757
    %v2795 = vunpack.c.l.b16 %v2758
    %v2796 = vpack.c.b16 %v2789, %v2788
    %v2797 = vpack.c.b16 %v2791, %v2790
    %v2798 = vpack.c.b16 %v2793, %v2792
    %v2799 = vpack.c.b16 %v2795, %v2794
    %v2805 = vsel %vm495, %v2779, 0
    %v2808 = vsel %vm495, %v2778, 0
    %2810 = vmatpush.bf16.msra.mxu0 0
    %2811 = vmatpush.bf16.msra.mxu0 0
    %2812 = vmatpush.bf16.msra.mxu0 0
    %2813 = vmatpush.bf16.msra.mxu0 0
    %2814 = vmatpush.bf16.msra.mxu0 %v2799
    %2815 = vmatpush.bf16.msra.mxu0 %v2798
    %2816 = vmatpush.bf16.msra.mxu0 %v2797
    %2817 = vmatpush.bf16.msra.mxu0 %v2796
    %2818 = vmatmul.bf16.gmra.mxu0 %v2805
    %v2819 = vpop.f32.mrf.mxu0
    %v2820 = vadd.f32 0.0, %v2819
    %v2821 = vpop.f32.mrf.mxu0
    %v2822 = vadd.f32 0.0, %v2821
    %2823 = vmatmul.bf16.gmra.mxu0 %v2808
    %v2824 = vpop.f32.mrf.mxu0
    %v2825 = vadd.f32 0.0, %v2824
    %v2826 = vpop.f32.mrf.mxu0
    %2827 = vdwg.mxu0
    %v2828 = vadd.f32 %v2746, %v2820
    %v2829 = vadd.f32 %v2747, %v2822
    %v2830 = vadd.f32 %v2748, %v2825
    %s2831 = scalar_lea.vmem %s13, 160
    %v2832 = vld [vmem:[%s2831] sm:$0xf]
    %v2833 = vld [vmem:[%s2831 + $0x4] sm:$0xf]
    %v2834 = vld [vmem:[%s2831 + $0x8] sm:$0xf]
    %v2835 = vld [vmem:[%s2831 + $0xc] sm:$0xf]
    %v2836 = vld [vmem:[%s2831 + $0x10] sm:$0xf]
    %v2837 = vld [vmem:[%s2831 + $0x14] sm:$0xf]
    %v2838 = vld [vmem:[%s2831 + $0x18] sm:$0xf]
    %v2839 = vld [vmem:[%s2831 + $0x1c] sm:$0xf]
    %v2840 = vpack.c.b16 %v2690, %v2689
    %v2841 = vpack.c.b16 %v2760, %v2760
    %v2850 = vunpack.c.l.b16 %v2832
    %v2851 = vunpack.c.l.b16 %v2833
    %v2852 = vunpack.c.l.b16 %v2834
    %v2853 = vunpack.c.l.b16 %v2835
    %v2854 = vunpack.c.l.b16 %v2836
    %v2855 = vunpack.c.l.b16 %v2837
    %v2856 = vunpack.c.l.b16 %v2838
    %v2857 = vunpack.c.l.b16 %v2839
    %v2858 = vpack.c.b16 %v2851, %v2850
    %v2859 = vpack.c.b16 %v2853, %v2852
    %v2860 = vpack.c.b16 %v2855, %v2854
    %v2861 = vpack.c.b16 %v2857, %v2856
    %v2867 = vsel %vm495, %v2840, 0
    %v2870 = vsel %vm495, %v2841, 0
    %2872 = vmatpush.bf16.msra.mxu0 0
    %2873 = vmatpush.bf16.msra.mxu0 0
    %2874 = vmatpush.bf16.msra.mxu0 0
    %2875 = vmatpush.bf16.msra.mxu0 0
    %2876 = vmatpush.bf16.msra.mxu0 %v2861
    %2877 = vmatpush.bf16.msra.mxu0 %v2860
    %2878 = vmatpush.bf16.msra.mxu0 %v2859
    %2879 = vmatpush.bf16.msra.mxu0 %v2858
    %2880 = vmatmul.bf16.gmra.mxu0 %v2867
    %v2881 = vpop.f32.mrf.mxu0
    %v2882 = vadd.f32 0.0, %v2881
    %v2883 = vpop.f32.mrf.mxu0
    %v2884 = vadd.f32 0.0, %v2883
    %2885 = vmatmul.bf16.gmra.mxu0 %v2870
    %v2886 = vpop.f32.mrf.mxu0
    %v2887 = vadd.f32 0.0, %v2886
    %v2888 = vpop.f32.mrf.mxu0
    %2889 = vdwg.mxu0
    %v2890 = vadd.f32 %v2828, %v2882
    %v2891 = vadd.f32 %v2829, %v2884
    %v2892 = vadd.f32 %v2830, %v2887
    %v2893 = vld [vmem:[#allocation3 + $0x4] sm:$0xc]
    %v2894 = vld [vmem:[#allocation3 + $0x8] sm:$0xf]
    %v2895 = vld [vmem:[#allocation3 + $0xc] sm:$0xf]
    %v2896 = vld [vmem:[#allocation3 + $0x10] sm:$0x1]
    %s2897 = scalar_lea.vmem %s13, 192
    %v2898 = vld [vmem:[%s2897] sm:$0xf]
    %v2899 = vld [vmem:[%s2897 + $0x4] sm:$0xf]
    %v2900 = vld [vmem:[%s2897 + $0x8] sm:$0xf]
    %v2901 = vld [vmem:[%s2897 + $0xc] sm:$0xf]
    %v2902 = vld [vmem:[%s2897 + $0x10] sm:$0xf]
    %v2903 = vld [vmem:[%s2897 + $0x14] sm:$0xf]
    %v2904 = vld [vmem:[%s2897 + $0x18] sm:$0xf]
    %v2905 = vld [vmem:[%s2897 + $0x1c] sm:$0xf]
    %v2910 = vunpack.c.l.b16 %v2893
    %v2911 = vunpack.c.l.b16 %v2894
    %v2912 = vunpack.c.l.b16 %v2895
    %v2913 = vunpack.c.l.b16 %v2896
    %v2914 = vpack.c.b16 %v2911, %v2910
    %v2915 = vpack.c.b16 %v2913, %v2912
    %vm2916 = vcmask 1045504
    %v2917 = vrot.slane %v2914, 2
    %v2918 = vrot.slane %v2915, 2
    %v2919 = vsel %vm2916, %v2917, %v2918
    %v2928 = vunpack.c.l.b16 %v2898
    %v2929 = vunpack.c.l.b16 %v2899
    %v2930 = vunpack.c.l.b16 %v2900
    %v2931 = vunpack.c.l.b16 %v2901
    %v2932 = vunpack.c.l.b16 %v2902
    %v2933 = vunpack.c.l.b16 %v2903
    %v2934 = vunpack.c.l.b16 %v2904
    %v2935 = vunpack.c.l.b16 %v2905
    %v2936 = vpack.c.b16 %v2929, %v2928
    %v2937 = vpack.c.b16 %v2931, %v2930
    %v2938 = vpack.c.b16 %v2933, %v2932
    %v2939 = vpack.c.b16 %v2935, %v2934
    %v2945 = vsel %vm495, %v2919, 0
    %v2948 = vsel %vm495, %v2918, 0
    %2950 = vmatpush.bf16.msra.mxu0 0
    %2951 = vmatpush.bf16.msra.mxu0 0
    %2952 = vmatpush.bf16.msra.mxu0 0
    %2953 = vmatpush.bf16.msra.mxu0 0
    %2954 = vmatpush.bf16.msra.mxu0 %v2939
    %2955 = vmatpush.bf16.msra.mxu0 %v2938
    %2956 = vmatpush.bf16.msra.mxu0 %v2937
    %2957 = vmatpush.bf16.msra.mxu0 %v2936
    %2958 = vmatmul.bf16.gmra.mxu0 %v2945
    %v2959 = vpop.f32.mrf.mxu0
    %v2960 = vadd.f32 0.0, %v2959
    %v2961 = vpop.f32.mrf.mxu0
    %v2962 = vadd.f32 0.0, %v2961
    %2963 = vmatmul.bf16.gmra.mxu0 %v2948
    %v2964 = vpop.f32.mrf.mxu0
    %v2965 = vadd.f32 0.0, %v2964
    %v2966 = vpop.f32.mrf.mxu0
    %2967 = vdwg.mxu0
    %v2968 = vadd.f32 %v2890, %v2960
    %v2969 = vadd.f32 %v2891, %v2962
    %v2970 = vadd.f32 %v2892, %v2965
    %v2971 = vld [vmem:[#allocation3 + $0x10] sm:$0x3]
    %s2972 = scalar_lea.vmem %s13, 224
    %v2973 = vld [vmem:[%s2972] sm:$0xf]
    %v2974 = vld [vmem:[%s2972 + $0x4] sm:$0xf]
    %v2975 = vld [vmem:[%s2972 + $0x8] sm:$0xf]
    %v2976 = vld [vmem:[%s2972 + $0xc] sm:$0xf]
    %v2977 = vld [vmem:[%s2972 + $0x10] sm:$0xf]
    %v2978 = vld [vmem:[%s2972 + $0x14] sm:$0xf]
    %v2979 = vld [vmem:[%s2972 + $0x18] sm:$0xf]
    %v2980 = vld [vmem:[%s2972 + $0x1c] sm:$0xf]
    %v2982 = vunpack.c.l.b16 %v2971
    %v2983 = vpack.c.b16 %v2982, %v2912
    %vm2984 = vsmask.f32 5376
    %v2986 = vshrl.u32 %v2914, 16
    %v2988 = vrot.slane %v2986, 2
    %v2989 = vshll.u32 %v2914, 16
    %v2991 = vrot.slane %v2989, 3
    %v2992 = vor.u32 %v2988, %v2991
    %v2994 = vshrl.u32 %v2983, 16
    %v2996 = vrot.slane %v2994, 2
    %v2997 = vshll.u32 %v2983, 16
    %v2999 = vrot.slane %v2997, 3
    %v3000 = vor.u32 %v2996, %v2999
    %v3001 = vsel %vm2984, %v2992, %v3000
    %v3010 = vunpack.c.l.b16 %v2973
    %v3011 = vunpack.c.l.b16 %v2974
    %v3012 = vunpack.c.l.b16 %v2975
    %v3013 = vunpack.c.l.b16 %v2976
    %v3014 = vunpack.c.l.b16 %v2977
    %v3015 = vunpack.c.l.b16 %v2978
    %v3016 = vunpack.c.l.b16 %v2979
    %v3017 = vunpack.c.l.b16 %v2980
    %v3018 = vpack.c.b16 %v3011, %v3010
    %v3019 = vpack.c.b16 %v3013, %v3012
    %v3020 = vpack.c.b16 %v3015, %v3014
    %v3021 = vpack.c.b16 %v3017, %v3016
    %v3027 = vsel %vm495, %v3001, 0
    %v3030 = vsel %vm495, %v3000, 0
    %3032 = vmatpush.bf16.msra.mxu0 0
    %3033 = vmatpush.bf16.msra.mxu0 0
    %3034 = vmatpush.bf16.msra.mxu0 0
    %3035 = vmatpush.bf16.msra.mxu0 0
    %3036 = vmatpush.bf16.msra.mxu0 %v3021
    %3037 = vmatpush.bf16.msra.mxu0 %v3020
    %3038 = vmatpush.bf16.msra.mxu0 %v3019
    %3039 = vmatpush.bf16.msra.mxu0 %v3018
    %3040 = vmatmul.bf16.gmra.mxu0 %v3027
    %v3041 = vpop.f32.mrf.mxu0
    %v3042 = vadd.f32 0.0, %v3041
    %v3043 = vpop.f32.mrf.mxu0
    %v3044 = vadd.f32 0.0, %v3043
    %3045 = vmatmul.bf16.gmra.mxu0 %v3030
    %v3046 = vpop.f32.mrf.mxu0
    %v3047 = vadd.f32 0.0, %v3046
    %v3048 = vpop.f32.mrf.mxu0
    %3049 = vdwg.mxu0
    %v3050 = vadd.f32 %v2968, %v3042
    %v3051 = vadd.f32 %v2969, %v3044
    %v3052 = vadd.f32 %v2970, %v3047
    %v3053 = vld [vmem:[#allocation3 + $0x4] sm:$0x8]
    %s3054 = scalar_lea.vmem %s13, 256
    %v3055 = vld [vmem:[%s3054] sm:$0xf]
    %v3056 = vld [vmem:[%s3054 + $0x4] sm:$0xf]
    %v3057 = vld [vmem:[%s3054 + $0x8] sm:$0xf]
    %v3058 = vld [vmem:[%s3054 + $0xc] sm:$0xf]
    %v3059 = vld [vmem:[%s3054 + $0x10] sm:$0xf]
    %v3060 = vld [vmem:[%s3054 + $0x14] sm:$0xf]
    %v3061 = vld [vmem:[%s3054 + $0x18] sm:$0xf]
    %v3062 = vld [vmem:[%s3054 + $0x1c] sm:$0xf]
    %v3064 = vunpack.c.l.b16 %v3053
    %v3065 = vpack.c.b16 %v2911, %v3064
    %v3066 = vrot.slane %v3065, 3
    %v3067 = vrot.slane %v2983, 3
    %v3068 = vsel %vm2694, %v3066, %v3067
    %v3077 = vunpack.c.l.b16 %v3055
    %v3078 = vunpack.c.l.b16 %v3056
    %v3079 = vunpack.c.l.b16 %v3057
    %v3080 = vunpack.c.l.b16 %v3058
    %v3081 = vunpack.c.l.b16 %v3059
    %v3082 = vunpack.c.l.b16 %v3060
    %v3083 = vunpack.c.l.b16 %v3061
    %v3084 = vunpack.c.l.b16 %v3062
    %v3085 = vpack.c.b16 %v3078, %v3077
    %v3086 = vpack.c.b16 %v3080, %v3079
    %v3087 = vpack.c.b16 %v3082, %v3081
    %v3088 = vpack.c.b16 %v3084, %v3083
    %v3094 = vsel %vm495, %v3068, 0
    %v3097 = vsel %vm495, %v3067, 0
    %3099 = vmatpush.bf16.msra.mxu0 0
    %3100 = vmatpush.bf16.msra.mxu0 0
    %3101 = vmatpush.bf16.msra.mxu0 0
    %3102 = vmatpush.bf16.msra.mxu0 0
    %3103 = vmatpush.bf16.msra.mxu0 %v3088
    %3104 = vmatpush.bf16.msra.mxu0 %v3087
    %3105 = vmatpush.bf16.msra.mxu0 %v3086
    %3106 = vmatpush.bf16.msra.mxu0 %v3085
    %3107 = vmatmul.bf16.gmra.mxu0 %v3094
    %v3108 = vpop.f32.mrf.mxu0
    %v3109 = vadd.f32 0.0, %v3108
    %v3110 = vpop.f32.mrf.mxu0
    %v3111 = vadd.f32 0.0, %v3110
    %3112 = vmatmul.bf16.gmra.mxu0 %v3097
    %v3113 = vpop.f32.mrf.mxu0
    %v3114 = vadd.f32 0.0, %v3113
    %v3115 = vpop.f32.mrf.mxu0
    %3116 = vdwg.mxu0
    %v3117 = vadd.f32 %v3050, %v3109
    %v3118 = vadd.f32 %v3051, %v3111
    %v3119 = vadd.f32 %v3052, %v3114
    %v3120 = vmax.f32 %v3117, 0.0
    %v3121 = vmax.f32 %v3118, 0.0
    %v3122 = vmax.f32 %v3119, 0.0
    %3124 = vset.pattern.permute.xlu0 0
    %3125 = vperm.xlu0 %3124, %v170
    %v3126 = vpop.permute.xlu0 %3125
    %3129 = vset.pattern.permute.xlu0 0
    %3130 = vperm.xlu0 %3129, %v171
    %v3131 = vpop.permute.xlu0 %3130
    %3134 = vset.pattern.permute.xlu0 0
    %3135 = vperm.xlu0 %3134, %v172
    %v3136 = vpop.permute.xlu0 %3135
    %v3138 = vmul.f32 %v3120, %v3126
    %v3139 = vmul.f32 %v3121, %v3131
    %v3140 = vmul.f32 %v3122, %v3136
    %v3141 = vpack.c.bf16 %v3138, %v3138
    %v3142 = vpack.c.bf16 %v3139, %v3139
    %v3143 = vpack.c.bf16 %v3140, %v3140
    %v3145 = vshll.u32 %v3141, 16
    %v3147 = vrot.slane %v3145, 5
    %v3148 = vshrl.u32 %v3141, 16
    %v3150 = vrot.slane %v3148, 4
    %v3151 = vor.u32 %v3150, %v3147
    %v3152 = vrot.slane %v3151, 4
    %v3154 = vshll.u32 %v3142, 16
    %v3156 = vrot.slane %v3154, 5
    %v3157 = vsel %vm747, %v3152, %v3156
    %v3158 = vshrl.u32 %v3142, 16
    %v3160 = vrot.slane %v3158, 4
    %v3161 = vor.u32 %v3160, %v3156
    %v3162 = vrot.slane %v3161, 4
    %v3164 = vshll.u32 %v3143, 16
    %v3166 = vrot.slane %v3164, 5
    %v3167 = vsel %vm747, %v3162, %v3166
    %v3168 = vshrl.u32 %v3143, 16
    %v3170 = vrot.slane %v3168, 4
    %v3171 = vor.u32 %v3170, %v3166
    %v3172 = vrot.slane %v3171, 4
    %3173 = vrot.lane.b32.xlu0 %v3147, 64
    %v3174 = vpop.permute.xlu0 %3173
    %3175 = vrot.lane.b32.xlu0 %v3157, 64
    %v3176 = vpop.permute.xlu0 %3175
    %3177 = vrot.lane.b32.xlu0 %v3167, 64
    %v3178 = vpop.permute.xlu0 %3177
    %3179 = vrot.lane.b32.xlu0 %v3172, 64
    %v3180 = vpop.permute.xlu0 %3179
    %vm3185 = vcmask 257027
    %vm3186 = vmand %vm3185, %vm2400
    %v3187 = vld [vmem:[#allocation4] sm:$0x8]
    %v3188 = vsel %vm3186, %v3174, %v3187
    %3189 = vst [vmem:[#allocation4] sm:$0x8] %v3188
    %3190 = vst.msk [vmem:[#allocation4 + $0x4] sm:$0xf] %vm139, %v3176
    %3191 = vst.msk [vmem:[#allocation4 + $0x8] sm:$0xf] %vm139, %v3178
    %vm3192 = vcmask 256000
    %vm3193 = vsmask.f32 2304
    %vm3194 = vmand %vm3192, %vm3193
    %v3195 = vld [vmem:[#allocation4 + $0xc] sm:$0x7]
    %v3196 = vsel %vm3194, %v3180, %v3195
    %3197 = vst [vmem:[#allocation4 + $0xc] sm:$0x7] %v3196
    %v3198 = vld [vmem:[#allocation4] sm:$0xf]
    %v3199 = vld [vmem:[#allocation4 + $0x4] sm:$0xf]
    %v3200 = vld [vmem:[#allocation4 + $0x8] sm:$0x7]
    %v3201 = vld [vmem:[%s14] sm:$0xf]
    %v3202 = vld [vmem:[%s14 + $0x4] sm:$0xf]
    %v3203 = vld [vmem:[%s14 + $0x8] sm:$0xf]
    %v3204 = vld [vmem:[%s14 + $0xc] sm:$0xf]
    %v3205 = vld [vmem:[#allocation4 + $0x8] sm:$0xf]
    %s3206 = scalar_lea.vmem %s14, 16
    %v3207 = vld [vmem:[%s3206] sm:$0xf]
    %v3208 = vld [vmem:[%s3206 + $0x4] sm:$0xf]
    %v3209 = vld [vmem:[%s3206 + $0x8] sm:$0xf]
    %v3210 = vld [vmem:[%s3206 + $0xc] sm:$0xf]
    %v3214 = vunpack.c.l.b16 %v3198
    %v3215 = vunpack.c.l.b16 %v3199
    %v3216 = vunpack.c.l.b16 %v3205
    %v3217 = vpack.c.b16 %v3215, %v3214
    %v3218 = vpack.c.b16 %v3216, %v3216
    %v3220 = vshrl.u32 %v3217, 16
    %v3222 = vshll.u32 %v3217, 16
    %v3224 = vrot.slane %v3222, 1
    %v3225 = vor.u32 %v3220, %v3224
    %v3227 = vshll.u32 %v3218, 16
    %v3229 = vrot.slane %v3227, 1
    %v3230 = vsel %vm2537, %v3225, %v3229
    %v3231 = vshrl.u32 %v3218, 16
    %v3233 = vor.u32 %v3231, %v3229
    %v3238 = vunpack.c.l.b16 %v3207
    %v3239 = vunpack.c.l.b16 %v3208
    %v3240 = vunpack.c.l.b16 %v3209
    %v3241 = vunpack.c.l.b16 %v3210
    %v3242 = vpack.c.b16 %v3239, %v3238
    %v3243 = vpack.c.b16 %v3241, %v3240
    %v3247 = vsel %vm2256, %v3230, 0
    %v3250 = vsel %vm2256, %v3233, 0
    %3252 = vmatpush.bf16.msra.mxu0 0
    %3253 = vmatpush.bf16.msra.mxu0 0
    %3254 = vmatpush.bf16.msra.mxu0 0
    %3255 = vmatpush.bf16.msra.mxu0 0
    %3256 = vmatpush.bf16.msra.mxu0 0
    %3257 = vmatpush.bf16.msra.mxu0 0
    %3258 = vmatpush.bf16.msra.mxu0 %v3243
    %3259 = vmatpush.bf16.msra.mxu0 %v3242
    %3260 = vmatmul.bf16.gmra.mxu0 %v3247
    %v3261 = vpop.f32.mrf.mxu0
    %v3262 = vadd.f32 0.0, %v3261
    %v3263 = vpop.f32.mrf.mxu0
    %v3264 = vadd.f32 0.0, %v3263
    %3265 = vmatmul.bf16.gmra.mxu0 %v3250
    %v3266 = vpop.f32.mrf.mxu0
    %v3267 = vadd.f32 0.0, %v3266
    %v3268 = vpop.f32.mrf.mxu0
    %3269 = vdwg.mxu0
    %v3271 = vunpack.c.l.b16 %v3200
    %v3272 = vpack.c.b16 %v3271, %v3271
    %v3277 = vunpack.c.l.b16 %v3201
    %v3278 = vunpack.c.l.b16 %v3202
    %v3279 = vunpack.c.l.b16 %v3203
    %v3280 = vunpack.c.l.b16 %v3204
    %v3281 = vpack.c.b16 %v3278, %v3277
    %v3282 = vpack.c.b16 %v3280, %v3279
    %v3285 = vsel %vm2256, %v3217, 0
    %v3288 = vsel %vm2256, %v3272, 0
    %3290 = vmatpush.bf16.msra.mxu0 0
    %3291 = vmatpush.bf16.msra.mxu0 0
    %3292 = vmatpush.bf16.msra.mxu0 0
    %3293 = vmatpush.bf16.msra.mxu0 0
    %3294 = vmatpush.bf16.msra.mxu0 0
    %3295 = vmatpush.bf16.msra.mxu0 0
    %3296 = vmatpush.bf16.msra.mxu0 %v3282
    %3297 = vmatpush.bf16.msra.mxu0 %v3281
    %3298 = vmatmul.bf16.gmra.mxu0 %v3285
    %v3299 = vpop.f32.mrf.mxu0
    %v3300 = vadd.f32 %v3262, %v3299
    %v3301 = vpop.f32.mrf.mxu0
    %v3302 = vadd.f32 %v3264, %v3301
    %3303 = vmatmul.bf16.gmra.mxu0 %v3288
    %v3304 = vpop.f32.mrf.mxu0
    %v3305 = vadd.f32 %v3267, %v3304
    %v3306 = vpop.f32.mrf.mxu0
    %3307 = vdwg.mxu0
    %v3308 = vld [vmem:[#allocation4] sm:$0xe]
    %s3309 = scalar_lea.vmem %s14, 32
    %v3310 = vld [vmem:[%s3309] sm:$0xf]
    %v3311 = vld [vmem:[%s3309 + $0x4] sm:$0xf]
    %v3312 = vld [vmem:[%s3309 + $0x8] sm:$0xf]
    %v3313 = vld [vmem:[%s3309 + $0xc] sm:$0xf]
    %v3315 = vunpack.c.l.b16 %v3308
    %v3316 = vpack.c.b16 %v3215, %v3315
    %v3317 = vrot.slane %v3316, 1
    %v3318 = vrot.slane %v3218, 1
    %v3319 = vsel %vm2616, %v3317, %v3318
    %v3324 = vunpack.c.l.b16 %v3310
    %v3325 = vunpack.c.l.b16 %v3311
    %v3326 = vunpack.c.l.b16 %v3312
    %v3327 = vunpack.c.l.b16 %v3313
    %v3328 = vpack.c.b16 %v3325, %v3324
    %v3329 = vpack.c.b16 %v3327, %v3326
    %v3333 = vsel %vm2256, %v3319, 0
    %v3336 = vsel %vm2256, %v3318, 0
    %3338 = vmatpush.bf16.msra.mxu0 0
    %3339 = vmatpush.bf16.msra.mxu0 0
    %3340 = vmatpush.bf16.msra.mxu0 0
    %3341 = vmatpush.bf16.msra.mxu0 0
    %3342 = vmatpush.bf16.msra.mxu0 0
    %3343 = vmatpush.bf16.msra.mxu0 0
    %3344 = vmatpush.bf16.msra.mxu0 %v3329
    %3345 = vmatpush.bf16.msra.mxu0 %v3328
    %3346 = vmatmul.bf16.gmra.mxu0 %v3333
    %v3347 = vpop.f32.mrf.mxu0
    %v3348 = vadd.f32 0.0, %v3347
    %v3349 = vpop.f32.mrf.mxu0
    %v3350 = vadd.f32 0.0, %v3349
    %3351 = vmatmul.bf16.gmra.mxu0 %v3336
    %v3352 = vpop.f32.mrf.mxu0
    %v3353 = vadd.f32 0.0, %v3352
    %v3354 = vpop.f32.mrf.mxu0
    %3355 = vdwg.mxu0
    %v3356 = vadd.f32 %v3300, %v3348
    %v3357 = vadd.f32 %v3302, %v3350
    %v3358 = vadd.f32 %v3305, %v3353
    %v3359 = vld [vmem:[#allocation4] sm:$0x8]
    %v3360 = vld [vmem:[#allocation4 + $0x4] sm:$0xf]
    %v3361 = vld [vmem:[#allocation4 + $0x8] sm:$0xf]
    %v3362 = vld [vmem:[#allocation4 + $0xc] sm:$0x3]
    %s3363 = scalar_lea.vmem %s14, 48
    %v3364 = vld [vmem:[%s3363] sm:$0xf]
    %v3365 = vld [vmem:[%s3363 + $0x4] sm:$0xf]
    %v3366 = vld [vmem:[%s3363 + $0x8] sm:$0xf]
    %v3367 = vld [vmem:[%s3363 + $0xc] sm:$0xf]
    %v3372 = vunpack.c.l.b16 %v3359
    %v3373 = vunpack.c.l.b16 %v3360
    %v3374 = vunpack.c.l.b16 %v3361
    %v3375 = vunpack.c.l.b16 %v3362
    %v3376 = vpack.c.b16 %v3373, %v3372
    %v3377 = vpack.c.b16 %v3375, %v3374
    %v3378 = vrot.slane %v3376, 3
    %v3379 = vrot.slane %v3377, 3
    %v3380 = vsel %vm2694, %v3378, %v3379
    %v3385 = vunpack.c.l.b16 %v3364
    %v3386 = vunpack.c.l.b16 %v3365
    %v3387 = vunpack.c.l.b16 %v3366
    %v3388 = vunpack.c.l.b16 %v3367
    %v3389 = vpack.c.b16 %v3386, %v3385
    %v3390 = vpack.c.b16 %v3388, %v3387
    %v3394 = vsel %vm2256, %v3380, 0
    %v3397 = vsel %vm2256, %v3379, 0
    %3399 = vmatpush.bf16.msra.mxu0 0
    %3400 = vmatpush.bf16.msra.mxu0 0
    %3401 = vmatpush.bf16.msra.mxu0 0
    %3402 = vmatpush.bf16.msra.mxu0 0
    %3403 = vmatpush.bf16.msra.mxu0 0
    %3404 = vmatpush.bf16.msra.mxu0 0
    %3405 = vmatpush.bf16.msra.mxu0 %v3390
    %3406 = vmatpush.bf16.msra.mxu0 %v3389
    %3407 = vmatmul.bf16.gmra.mxu0 %v3394
    %v3408 = vpop.f32.mrf.mxu0
    %v3409 = vadd.f32 0.0, %v3408
    %v3410 = vpop.f32.mrf.mxu0
    %v3411 = vadd.f32 0.0, %v3410
    %3412 = vmatmul.bf16.gmra.mxu0 %v3397
    %v3413 = vpop.f32.mrf.mxu0
    %v3414 = vadd.f32 0.0, %v3413
    %v3415 = vpop.f32.mrf.mxu0
    %3416 = vdwg.mxu0
    %v3417 = vadd.f32 %v3356, %v3409
    %v3418 = vadd.f32 %v3357, %v3411
    %v3419 = vadd.f32 %v3358, %v3414
    %v3420 = vld [vmem:[#allocation4 + $0xc] sm:$0x7]
    %s3421 = scalar_lea.vmem %s14, 64
    %v3422 = vld [vmem:[%s3421] sm:$0xf]
    %v3423 = vld [vmem:[%s3421 + $0x4] sm:$0xf]
    %v3424 = vld [vmem:[%s3421 + $0x8] sm:$0xf]
    %v3425 = vld [vmem:[%s3421 + $0xc] sm:$0xf]
    %v3427 = vunpack.c.l.b16 %v3420
    %v3428 = vpack.c.b16 %v3427, %v3374
    %v3430 = vshrl.u32 %v3376, 16
    %v3432 = vrot.slane %v3430, 3
    %v3433 = vshll.u32 %v3376, 16
    %v3435 = vrot.slane %v3433, 4
    %v3436 = vor.u32 %v3432, %v3435
    %v3438 = vshrl.u32 %v3428, 16
    %v3440 = vrot.slane %v3438, 3
    %v3441 = vshll.u32 %v3428, 16
    %v3443 = vrot.slane %v3441, 4
    %v3444 = vor.u32 %v3440, %v3443
    %v3445 = vsel %vm2762, %v3436, %v3444
    %v3450 = vunpack.c.l.b16 %v3422
    %v3451 = vunpack.c.l.b16 %v3423
    %v3452 = vunpack.c.l.b16 %v3424
    %v3453 = vunpack.c.l.b16 %v3425
    %v3454 = vpack.c.b16 %v3451, %v3450
    %v3455 = vpack.c.b16 %v3453, %v3452
    %v3459 = vsel %vm2256, %v3445, 0
    %v3462 = vsel %vm2256, %v3444, 0
    %3464 = vmatpush.bf16.msra.mxu0 0
    %3465 = vmatpush.bf16.msra.mxu0 0
    %3466 = vmatpush.bf16.msra.mxu0 0
    %3467 = vmatpush.bf16.msra.mxu0 0
    %3468 = vmatpush.bf16.msra.mxu0 0
    %3469 = vmatpush.bf16.msra.mxu0 0
    %3470 = vmatpush.bf16.msra.mxu0 %v3455
    %3471 = vmatpush.bf16.msra.mxu0 %v3454
    %3472 = vmatmul.bf16.gmra.mxu0 %v3459
    %v3473 = vpop.f32.mrf.mxu0
    %v3474 = vadd.f32 0.0, %v3473
    %v3475 = vpop.f32.mrf.mxu0
    %v3476 = vadd.f32 0.0, %v3475
    %3477 = vmatmul.bf16.gmra.mxu0 %v3462
    %v3478 = vpop.f32.mrf.mxu0
    %v3479 = vadd.f32 0.0, %v3478
    %v3480 = vpop.f32.mrf.mxu0
    %3481 = vdwg.mxu0
    %v3482 = vadd.f32 %v3417, %v3474
    %v3483 = vadd.f32 %v3418, %v3476
    %v3484 = vadd.f32 %v3419, %v3479
    %s3485 = scalar_lea.vmem %s14, 80
    %v3486 = vld [vmem:[%s3485] sm:$0xf]
    %v3487 = vld [vmem:[%s3485 + $0x4] sm:$0xf]
    %v3488 = vld [vmem:[%s3485 + $0x8] sm:$0xf]
    %v3489 = vld [vmem:[%s3485 + $0xc] sm:$0xf]
    %v3490 = vpack.c.b16 %v3374, %v3373
    %v3491 = vpack.c.b16 %v3427, %v3427
    %v3496 = vunpack.c.l.b16 %v3486
    %v3497 = vunpack.c.l.b16 %v3487
    %v3498 = vunpack.c.l.b16 %v3488
    %v3499 = vunpack.c.l.b16 %v3489
    %v3500 = vpack.c.b16 %v3497, %v3496
    %v3501 = vpack.c.b16 %v3499, %v3498
    %v3505 = vsel %vm2256, %v3490, 0
    %v3508 = vsel %vm2256, %v3491, 0
    %3510 = vmatpush.bf16.msra.mxu0 0
    %3511 = vmatpush.bf16.msra.mxu0 0
    %3512 = vmatpush.bf16.msra.mxu0 0
    %3513 = vmatpush.bf16.msra.mxu0 0
    %3514 = vmatpush.bf16.msra.mxu0 0
    %3515 = vmatpush.bf16.msra.mxu0 0
    %3516 = vmatpush.bf16.msra.mxu0 %v3501
    %3517 = vmatpush.bf16.msra.mxu0 %v3500
    %3518 = vmatmul.bf16.gmra.mxu0 %v3505
    %v3519 = vpop.f32.mrf.mxu0
    %v3520 = vadd.f32 0.0, %v3519
    %v3521 = vpop.f32.mrf.mxu0
    %v3522 = vadd.f32 0.0, %v3521
    %3523 = vmatmul.bf16.gmra.mxu0 %v3508
    %v3524 = vpop.f32.mrf.mxu0
    %v3525 = vadd.f32 0.0, %v3524
    %v3526 = vpop.f32.mrf.mxu0
    %3527 = vdwg.mxu0
    %v3528 = vadd.f32 %v3482, %v3520
    %v3529 = vadd.f32 %v3483, %v3522
    %v3530 = vadd.f32 %v3484, %v3525
    %v3531 = vld [vmem:[#allocation4 + $0x4] sm:$0xc]
    %v3532 = vld [vmem:[#allocation4 + $0x8] sm:$0xf]
    %v3533 = vld [vmem:[#allocation4 + $0xc] sm:$0xf]
    %v3534 = vld [vmem:[#allocation4 + $0x10] sm:$0x1]
    %s3535 = scalar_lea.vmem %s14, 96
    %v3536 = vld [vmem:[%s3535] sm:$0xf]
    %v3537 = vld [vmem:[%s3535 + $0x4] sm:$0xf]
    %v3538 = vld [vmem:[%s3535 + $0x8] sm:$0xf]
    %v3539 = vld [vmem:[%s3535 + $0xc] sm:$0xf]
    %v3544 = vunpack.c.l.b16 %v3531
    %v3545 = vunpack.c.l.b16 %v3532
    %v3546 = vunpack.c.l.b16 %v3533
    %v3547 = vunpack.c.l.b16 %v3534
    %v3548 = vpack.c.b16 %v3545, %v3544
    %v3549 = vpack.c.b16 %v3547, %v3546
    %v3550 = vrot.slane %v3548, 2
    %v3551 = vrot.slane %v3549, 2
    %v3552 = vsel %vm2916, %v3550, %v3551
    %v3557 = vunpack.c.l.b16 %v3536
    %v3558 = vunpack.c.l.b16 %v3537
    %v3559 = vunpack.c.l.b16 %v3538
    %v3560 = vunpack.c.l.b16 %v3539
    %v3561 = vpack.c.b16 %v3558, %v3557
    %v3562 = vpack.c.b16 %v3560, %v3559
    %v3566 = vsel %vm2256, %v3552, 0
    %v3569 = vsel %vm2256, %v3551, 0
    %3571 = vmatpush.bf16.msra.mxu0 0
    %3572 = vmatpush.bf16.msra.mxu0 0
    %3573 = vmatpush.bf16.msra.mxu0 0
    %3574 = vmatpush.bf16.msra.mxu0 0
    %3575 = vmatpush.bf16.msra.mxu0 0
    %3576 = vmatpush.bf16.msra.mxu0 0
    %3577 = vmatpush.bf16.msra.mxu0 %v3562
    %3578 = vmatpush.bf16.msra.mxu0 %v3561
    %3579 = vmatmul.bf16.gmra.mxu0 %v3566
    %v3580 = vpop.f32.mrf.mxu0
    %v3581 = vadd.f32 0.0, %v3580
    %v3582 = vpop.f32.mrf.mxu0
    %v3583 = vadd.f32 0.0, %v3582
    %3584 = vmatmul.bf16.gmra.mxu0 %v3569
    %v3585 = vpop.f32.mrf.mxu0
    %v3586 = vadd.f32 0.0, %v3585
    %v3587 = vpop.f32.mrf.mxu0
    %3588 = vdwg.mxu0
    %v3589 = vadd.f32 %v3528, %v3581
    %v3590 = vadd.f32 %v3529, %v3583
    %v3591 = vadd.f32 %v3530, %v3586
    %v3592 = vld [vmem:[#allocation4 + $0x10] sm:$0x3]
    %s3593 = scalar_lea.vmem %s14, 112
    %v3594 = vld [vmem:[%s3593] sm:$0xf]
    %v3595 = vld [vmem:[%s3593 + $0x4] sm:$0xf]
    %v3596 = vld [vmem:[%s3593 + $0x8] sm:$0xf]
    %v3597 = vld [vmem:[%s3593 + $0xc] sm:$0xf]
    %v3599 = vunpack.c.l.b16 %v3592
    %v3600 = vpack.c.b16 %v3599, %v3546
    %v3602 = vshrl.u32 %v3548, 16
    %v3604 = vrot.slane %v3602, 2
    %v3605 = vshll.u32 %v3548, 16
    %v3607 = vrot.slane %v3605, 3
    %v3608 = vor.u32 %v3604, %v3607
    %v3610 = vshrl.u32 %v3600, 16
    %v3612 = vrot.slane %v3610, 2
    %v3613 = vshll.u32 %v3600, 16
    %v3615 = vrot.slane %v3613, 3
    %v3616 = vor.u32 %v3612, %v3615
    %v3617 = vsel %vm2984, %v3608, %v3616
    %v3622 = vunpack.c.l.b16 %v3594
    %v3623 = vunpack.c.l.b16 %v3595
    %v3624 = vunpack.c.l.b16 %v3596
    %v3625 = vunpack.c.l.b16 %v3597
    %v3626 = vpack.c.b16 %v3623, %v3622
    %v3627 = vpack.c.b16 %v3625, %v3624
    %v3631 = vsel %vm2256, %v3617, 0
    %v3634 = vsel %vm2256, %v3616, 0
    %3636 = vmatpush.bf16.msra.mxu0 0
    %3637 = vmatpush.bf16.msra.mxu0 0
    %3638 = vmatpush.bf16.msra.mxu0 0
    %3639 = vmatpush.bf16.msra.mxu0 0
    %3640 = vmatpush.bf16.msra.mxu0 0
    %3641 = vmatpush.bf16.msra.mxu0 0
    %3642 = vmatpush.bf16.msra.mxu0 %v3627
    %3643 = vmatpush.bf16.msra.mxu0 %v3626
    %3644 = vmatmul.bf16.gmra.mxu0 %v3631
    %v3645 = vpop.f32.mrf.mxu0
    %v3646 = vadd.f32 0.0, %v3645
    %v3647 = vpop.f32.mrf.mxu0
    %v3648 = vadd.f32 0.0, %v3647
    %3649 = vmatmul.bf16.gmra.mxu0 %v3634
    %v3650 = vpop.f32.mrf.mxu0
    %v3651 = vadd.f32 0.0, %v3650
    %v3652 = vpop.f32.mrf.mxu0
    %3653 = vdwg.mxu0
    %v3654 = vadd.f32 %v3589, %v3646
    %v3655 = vadd.f32 %v3590, %v3648
    %v3656 = vadd.f32 %v3591, %v3651
    %v3657 = vld [vmem:[#allocation4 + $0x4] sm:$0x8]
    %s3658 = scalar_lea.vmem %s14, 128
    %v3659 = vld [vmem:[%s3658] sm:$0xf]
    %v3660 = vld [vmem:[%s3658 + $0x4] sm:$0xf]
    %v3661 = vld [vmem:[%s3658 + $0x8] sm:$0xf]
    %v3662 = vld [vmem:[%s3658 + $0xc] sm:$0xf]
    %v3664 = vunpack.c.l.b16 %v3657
    %v3665 = vpack.c.b16 %v3545, %v3664
    %v3666 = vrot.slane %v3665, 3
    %v3667 = vrot.slane %v3600, 3
    %v3668 = vsel %vm2694, %v3666, %v3667
    %v3673 = vunpack.c.l.b16 %v3659
    %v3674 = vunpack.c.l.b16 %v3660
    %v3675 = vunpack.c.l.b16 %v3661
    %v3676 = vunpack.c.l.b16 %v3662
    %v3677 = vpack.c.b16 %v3674, %v3673
    %v3678 = vpack.c.b16 %v3676, %v3675
    %v3682 = vsel %vm2256, %v3668, 0
    %v3685 = vsel %vm2256, %v3667, 0
    %3687 = vmatpush.bf16.msra.mxu0 0
    %3688 = vmatpush.bf16.msra.mxu0 0
    %3689 = vmatpush.bf16.msra.mxu0 0
    %3690 = vmatpush.bf16.msra.mxu0 0
    %3691 = vmatpush.bf16.msra.mxu0 0
    %3692 = vmatpush.bf16.msra.mxu0 0
    %3693 = vmatpush.bf16.msra.mxu0 %v3678
    %3694 = vmatpush.bf16.msra.mxu0 %v3677
    %3695 = vmatmul.bf16.gmra.mxu0 %v3682
    %v3696 = vpop.f32.mrf.mxu0
    %v3697 = vadd.f32 0.0, %v3696
    %v3698 = vpop.f32.mrf.mxu0
    %v3699 = vadd.f32 0.0, %v3698
    %3700 = vmatmul.bf16.gmra.mxu0 %v3685
    %v3701 = vpop.f32.mrf.mxu0
    %v3702 = vadd.f32 0.0, %v3701
    %v3703 = vpop.f32.mrf.mxu0
    %3704 = vdwg.mxu0
    %v3705 = vadd.f32 %v3654, %v3697
    %v3706 = vadd.f32 %v3655, %v3699
    %v3707 = vadd.f32 %v3656, %v3702
    %v3709 = vperm.slane %v152, 0
    %v3711 = vadd.f32 %v3705, %v3709
    %v3712 = vadd.f32 %v3706, %v3709
    %v3713 = vadd.f32 %v3707, %v3709
    %v3714 = vmax.f32 %v3711, 0.0
    %v3715 = vmax.f32 %v3712, 0.0
    %v3716 = vmax.f32 %v3713, 0.0
    %v3717 = vadd.f32 %v3714, %v3120
    %v3718 = vadd.f32 %v3715, %v3121
    %v3719 = vadd.f32 %v3716, %v3122
    %v3720 = vpack.c.bf16 %v3718, %v3717
    %v3721 = vpack.c.bf16 %v3719, %v3719
    %v3723 = vperm.slane %v153, 0
    %v3733 = vunpack.c.l.b16 %v154
    %v3734 = vunpack.c.l.b16 %v155
    %v3735 = vunpack.c.l.b16 %v156
    %v3736 = vunpack.c.l.b16 %v157
    %v3737 = vunpack.c.l.b16 %v158
    %v3738 = vunpack.c.l.b16 %v159
    %v3739 = vunpack.c.l.b16 %v160
    %v3740 = vunpack.c.l.b16 %v161
    %v3741 = vpack.c.b16 %v3734, %v3733
    %v3742 = vpack.c.b16 %v3736, %v3735
    %v3743 = vpack.c.b16 %v3738, %v3737
    %v3744 = vpack.c.b16 %v3740, %v3739
    %v3750 = vsel %vm495, %v3720, 0
    %v3753 = vsel %vm495, %v3721, 0
    %3755 = vmatpush.bf16.msra.mxu0 0
    %3756 = vmatpush.bf16.msra.mxu0 0
    %3757 = vmatpush.bf16.msra.mxu0 0
    %3758 = vmatpush.bf16.msra.mxu0 0
    %3759 = vmatpush.bf16.msra.mxu0 %v3744
    %3760 = vmatpush.bf16.msra.mxu0 %v3743
    %3761 = vmatpush.bf16.msra.mxu0 %v3742
    %3762 = vmatpush.bf16.msra.mxu0 %v3741
    %3763 = vmatmul.bf16.gmra.mxu0 %v3750
    %v3764 = vpop.f32.mrf.mxu0
    %v3765 = vadd.f32 %v3723, %v3764
    %v3766 = vpop.f32.mrf.mxu0
    %v3767 = vadd.f32 %v3723, %v3766
    %3768 = vmatmul.bf16.gmra.mxu0 %v3753
    %v3769 = vpop.f32.mrf.mxu0
    %v3770 = vadd.f32 %v3723, %v3769
    %v3771 = vpop.f32.mrf.mxu0
    %3772 = vdwg.mxu0
    %v3773 = vmax.f32 %v3765, 0.0
    %v3774 = vmax.f32 %v3767, 0.0
    %v3775 = vmax.f32 %v3770, 0.0
    %v3776 = vmul.f32 %v3773, %v3126
    %v3777 = vmul.f32 %v3774, %v3131
    %v3778 = vmul.f32 %v3775, %v3136
    %v3779 = vsel %vm495, %v3776, 0.0
    %v3780 = vsel %vm495, %v3777, 0.0
    %v3781 = vadd.f32 %v3779, %v3780
    %vm3782 = vcmask 521216
    %v3783 = vsel %vm3782, %v3778, 0.0
    %v3784 = vadd.f32 %v3781, %v3783
    %v3785 = vrot.slane %v3784, 4
    %v3786 = vadd.f32 %v3784, %v3785
    %v3787 = vrot.slane %v3786, 2
    %v3788 = vadd.f32 %v3786, %v3787
    %v3789 = vrot.slane %v3788, 1
    %v3790 = vadd.f32 %v3788, %v3789
    %v3791 = vmul.f32 %v3790, 0.0625
    %3792 = vst.msk [vmem:[#allocation5] sm:$0x1] %vm63, %v3791
    %s3793 = scalar_lea.vmem %s0, 32
    %v3794 = vld [vmem:[%s3793] sm:$0xf]
    %v3795 = vld [vmem:[%s3793 + $0x4] sm:$0xf]
    %v3796 = vld [vmem:[%s3793 + $0x8] sm:$0xf]
    %v3797 = vld [vmem:[%s3793 + $0xc] sm:$0xf]
    %v3798 = vld [vmem:[%s3793 + $0x10] sm:$0xf]
    %v3799 = vld [vmem:[%s3793 + $0x14] sm:$0xf]
    %v3800 = vld [vmem:[%s3793 + $0x18] sm:$0xf]
    %v3801 = vld [vmem:[%s3793 + $0x1c] sm:$0xf]
    %v3810 = vunpack.c.l.b16 %v3794
    %v3811 = vunpack.c.l.b16 %v3795
    %v3812 = vunpack.c.l.b16 %v3796
    %v3813 = vunpack.c.l.b16 %v3797
    %v3814 = vunpack.c.l.b16 %v3798
    %v3815 = vunpack.c.l.b16 %v3799
    %v3816 = vunpack.c.l.b16 %v3800
    %v3817 = vunpack.c.l.b16 %v3801
    %v3818 = vpack.c.b16 %v3811, %v3810
    %v3819 = vpack.c.b16 %v3813, %v3812
    %v3820 = vpack.c.b16 %v3815, %v3814
    %v3821 = vpack.c.b16 %v3817, %v3816
    %v3823 = vsel %vm210, %v3818, 0
    %v3826 = vsel %vm210, %v3819, 0
    %v3829 = vsel %vm210, %v3820, 0
    %v3832 = vsel %vm210, %v3821, 0
    %3834 = vmatpush.bf16.msra.mxu0 0
    %3835 = vmatpush.bf16.msra.mxu0 0
    %3836 = vmatpush.bf16.msra.mxu0 0
    %3837 = vmatpush.bf16.msra.mxu0 0
    %3838 = vmatpush.bf16.msra.mxu0 0
    %3839 = vmatpush.bf16.msra.mxu0 0
    %3840 = vmatpush.bf16.msra.mxu0 0
    %3841 = vmatpush.bf16.msra.mxu0 %v208
    %3842 = vmatmul.bf16.gmra.mxu0 %v3823
    %v3843 = vpop.f32.mrf.mxu0
    %v3844 = vadd.f32 %v182, %v3843
    %v3845 = vpop.f32.mrf.mxu0
    %v3846 = vadd.f32 %v182, %v3845
    %3847 = vmatmul.bf16.gmra.mxu0 %v3826
    %v3848 = vpop.f32.mrf.mxu0
    %v3849 = vadd.f32 %v182, %v3848
    %v3850 = vpop.f32.mrf.mxu0
    %v3851 = vadd.f32 %v182, %v3850
    %3852 = vmatmul.bf16.gmra.mxu0 %v3829
    %v3853 = vpop.f32.mrf.mxu0
    %v3854 = vadd.f32 %v182, %v3853
    %v3855 = vpop.f32.mrf.mxu0
    %v3856 = vadd.f32 %v182, %v3855
    %3857 = vmatmul.bf16.gmra.mxu0 %v3832
    %v3858 = vpop.f32.mrf.mxu0
    %v3859 = vadd.f32 %v182, %v3858
    %v3860 = vpop.f32.mrf.mxu0
    %v3861 = vadd.f32 %v182, %v3860
    %3862 = vdwg.mxu0
    %v3863 = vmax.f32 %v3844, 0.0
    %v3864 = vmax.f32 %v3846, 0.0
    %v3865 = vmax.f32 %v3849, 0.0
    %v3866 = vmax.f32 %v3851, 0.0
    %v3867 = vmax.f32 %v3854, 0.0
    %v3868 = vmax.f32 %v3856, 0.0
    %v3869 = vmax.f32 %v3859, 0.0
    %v3870 = vmax.f32 %v3861, 0.0
    %v3871 = vpack.c.bf16 %v3863, %v3863
    %v3872 = vpack.c.bf16 %v3864, %v3864
    %v3873 = vpack.c.bf16 %v3865, %v3865
    %v3874 = vpack.c.bf16 %v3866, %v3866
    %v3875 = vpack.c.bf16 %v3867, %v3867
    %v3876 = vpack.c.bf16 %v3868, %v3868
    %v3877 = vpack.c.bf16 %v3869, %v3869
    %v3878 = vpack.c.bf16 %v3870, %v3870
    %v3880 = vshrl.u32 %v3871, 16
    %v3882 = vrot.slane %v3880, 7
    %v3883 = vshll.u32 %v3871, 16
    %v3885 = vor.u32 %v3882, %v3883
    %v3886 = vrot.slane %v3882, 4
    %v3888 = vshrl.u32 %v3872, 16
    %v3890 = vrot.slane %v3888, 7
    %v3891 = vshll.u32 %v3872, 16
    %v3893 = vor.u32 %v3890, %v3891
    %v3894 = vrot.slane %v3890, 4
    %v3896 = vshrl.u32 %v3873, 16
    %v3898 = vrot.slane %v3896, 7
    %v3899 = vshll.u32 %v3873, 16
    %v3901 = vor.u32 %v3898, %v3899
    %v3902 = vrot.slane %v3898, 4
    %v3904 = vshrl.u32 %v3874, 16
    %v3906 = vrot.slane %v3904, 7
    %v3907 = vshll.u32 %v3874, 16
    %v3909 = vor.u32 %v3906, %v3907
    %v3910 = vrot.slane %v3906, 4
    %v3912 = vshrl.u32 %v3875, 16
    %v3914 = vrot.slane %v3912, 7
    %v3915 = vshll.u32 %v3875, 16
    %v3917 = vor.u32 %v3914, %v3915
    %v3918 = vrot.slane %v3914, 4
    %v3920 = vshrl.u32 %v3876, 16
    %v3922 = vrot.slane %v3920, 7
    %v3923 = vshll.u32 %v3876, 16
    %v3925 = vor.u32 %v3922, %v3923
    %v3926 = vrot.slane %v3922, 4
    %v3928 = vshrl.u32 %v3877, 16
    %v3930 = vrot.slane %v3928, 7
    %v3931 = vshll.u32 %v3877, 16
    %v3933 = vor.u32 %v3930, %v3931
    %v3934 = vrot.slane %v3930, 4
    %v3936 = vshrl.u32 %v3878, 16
    %v3938 = vrot.slane %v3936, 7
    %v3939 = vshll.u32 %v3878, 16
    %v3941 = vor.u32 %v3938, %v3939
    %v3942 = vrot.slane %v3938, 4
    %v3959 = vld [vmem:[%s348] sm:$0xf]
    %v3960 = vsel %vm350, %v3885, %v3959
    %3961 = vst [vmem:[%s348] sm:$0xf] %v3960
    %v3962 = vld [vmem:[%s348 + $0x4] sm:$0x1]
    %v3963 = vsel %vm70, %v3886, %v3962
    %3964 = vst [vmem:[%s348 + $0x4] sm:$0x1] %v3963
    %v3965 = vld [vmem:[%s348 + $0x8] sm:$0xf]
    %v3966 = vsel %vm350, %v3893, %v3965
    %3967 = vst [vmem:[%s348 + $0x8] sm:$0xf] %v3966
    %v3968 = vld [vmem:[%s348 + $0xc] sm:$0x1]
    %v3969 = vsel %vm70, %v3894, %v3968
    %3970 = vst [vmem:[%s348 + $0xc] sm:$0x1] %v3969
    %v3971 = vld [vmem:[%s348 + $0x10] sm:$0xf]
    %v3972 = vsel %vm350, %v3901, %v3971
    %3973 = vst [vmem:[%s348 + $0x10] sm:$0xf] %v3972
    %v3974 = vld [vmem:[%s348 + $0x14] sm:$0x1]
    %v3975 = vsel %vm70, %v3902, %v3974
    %3976 = vst [vmem:[%s348 + $0x14] sm:$0x1] %v3975
    %v3977 = vld [vmem:[%s348 + $0x18] sm:$0xf]
    %v3978 = vsel %vm350, %v3909, %v3977
    %3979 = vst [vmem:[%s348 + $0x18] sm:$0xf] %v3978
    %v3980 = vld [vmem:[%s348 + $0x1c] sm:$0x1]
    %v3981 = vsel %vm70, %v3910, %v3980
    %3982 = vst [vmem:[%s348 + $0x1c] sm:$0x1] %v3981
    %v3983 = vld [vmem:[%s348 + $0x20] sm:$0xf]
    %v3984 = vsel %vm350, %v3917, %v3983
    %3985 = vst [vmem:[%s348 + $0x20] sm:$0xf] %v3984
    %v3986 = vld [vmem:[%s348 + $0x24] sm:$0x1]
    %v3987 = vsel %vm70, %v3918, %v3986
    %3988 = vst [vmem:[%s348 + $0x24] sm:$0x1] %v3987
    %v3989 = vld [vmem:[%s348 + $0x28] sm:$0xf]
    %v3990 = vsel %vm350, %v3925, %v3989
    %3991 = vst [vmem:[%s348 + $0x28] sm:$0xf] %v3990
    %v3992 = vld [vmem:[%s348 + $0x2c] sm:$0x1]
    %v3993 = vsel %vm70, %v3926, %v3992
    %3994 = vst [vmem:[%s348 + $0x2c] sm:$0x1] %v3993
    %v3995 = vld [vmem:[%s348 + $0x30] sm:$0xf]
    %v3996 = vsel %vm350, %v3933, %v3995
    %3997 = vst [vmem:[%s348 + $0x30] sm:$0xf] %v3996
    %v3998 = vld [vmem:[%s348 + $0x34] sm:$0x1]
    %v3999 = vsel %vm70, %v3934, %v3998
    %4000 = vst [vmem:[%s348 + $0x34] sm:$0x1] %v3999
    %v4001 = vld [vmem:[%s348 + $0x38] sm:$0xf]
    %v4002 = vsel %vm350, %v3941, %v4001
    %4003 = vst [vmem:[%s348 + $0x38] sm:$0xf] %v4002
    %v4004 = vld [vmem:[%s348 + $0x3c] sm:$0x1]
    %v4005 = vsel %vm70, %v3942, %v4004
    %4006 = vst [vmem:[%s348 + $0x3c] sm:$0x1] %v4005
    %s4007 = scalar_lea.vmem %s1, 32
    %v4008 = vld [vmem:[%s4007] sm:$0xf]
    %v4009 = vld [vmem:[%s4007 + $0x4] sm:$0xf]
    %v4012 = vunpack.c.l.b16 %v4008
    %v4013 = vunpack.c.l.b16 %v4009
    %v4014 = vpack.c.b16 %v4013, %v4012
    %v4016 = vsel %vm210, %v4014, 0
    %4018 = vmatpush.bf16.msra.mxu0 0
    %4019 = vmatpush.bf16.msra.mxu0 0
    %4020 = vmatpush.bf16.msra.mxu0 0
    %4021 = vmatpush.bf16.msra.mxu0 0
    %4022 = vmatpush.bf16.msra.mxu0 0
    %4023 = vmatpush.bf16.msra.mxu0 0
    %4024 = vmatpush.bf16.msra.mxu0 0
    %4025 = vmatpush.bf16.msra.mxu0 %v208
    %4026 = vmatmul.bf16.gmra.mxu0 %v4016
    %v4027 = vpop.f32.mrf.mxu0
    %v4028 = vadd.f32 %v182, %v4027
    %v4029 = vpop.f32.mrf.mxu0
    %v4030 = vadd.f32 %v182, %v4029
    %4031 = vdwg.mxu0
    %v4032 = vmax.f32 %v4028, 0.0
    %v4033 = vmax.f32 %v4030, 0.0
    %v4034 = vpack.c.bf16 %v4033, %v4032
    %v4035 = vld [vmem:[%s7] sm:$0xf]
    %v4036 = vld [vmem:[%s7 + $0x4] sm:$0xf]
    %v4037 = vld [vmem:[%s7 + $0x8] sm:$0xf]
    %v4038 = vld [vmem:[%s7 + $0xc] sm:$0xf]
    %v4039 = vld [vmem:[%s7 + $0x10] sm:$0xf]
    %v4040 = vld [vmem:[%s7 + $0x14] sm:$0xf]
    %v4041 = vld [vmem:[%s7 + $0x18] sm:$0xf]
    %v4042 = vld [vmem:[%s7 + $0x1c] sm:$0xf]
    %s4043 = scalar_lea.vmem %s1, 40
    %v4044 = vld [vmem:[%s4043] sm:$0xf]
    %v4045 = vld [vmem:[%s4043 + $0x4] sm:$0xf]
    %v4048 = vunpack.c.l.b16 %v4044
    %v4049 = vunpack.c.l.b16 %v4045
    %v4050 = vpack.c.b16 %v4049, %v4048
    %v4052 = vsel %vm210, %v4050, 0
    %4054 = vmatpush.bf16.msra.mxu0 0
    %4055 = vmatpush.bf16.msra.mxu0 0
    %4056 = vmatpush.bf16.msra.mxu0 0
    %4057 = vmatpush.bf16.msra.mxu0 0
    %4058 = vmatpush.bf16.msra.mxu0 0
    %4059 = vmatpush.bf16.msra.mxu0 0
    %4060 = vmatpush.bf16.msra.mxu0 0
    %4061 = vmatpush.bf16.msra.mxu0 %v208
    %4062 = vmatmul.bf16.gmra.mxu0 %v4052
    %v4063 = vpop.f32.mrf.mxu0
    %v4064 = vadd.f32 %v182, %v4063
    %v4065 = vpop.f32.mrf.mxu0
    %v4066 = vadd.f32 %v182, %v4065
    %4067 = vdwg.mxu0
    %v4068 = vmax.f32 %v4064, 0.0
    %v4069 = vmax.f32 %v4066, 0.0
    %v4070 = vpack.c.bf16 %v4069, %v4068
    %v4071 = vld [vmem:[%s462] sm:$0xf]
    %v4072 = vld [vmem:[%s462 + $0x4] sm:$0xf]
    %v4073 = vld [vmem:[%s462 + $0x8] sm:$0xf]
    %v4074 = vld [vmem:[%s462 + $0xc] sm:$0xf]
    %v4075 = vld [vmem:[%s462 + $0x10] sm:$0xf]
    %v4076 = vld [vmem:[%s462 + $0x14] sm:$0xf]
    %v4077 = vld [vmem:[%s462 + $0x18] sm:$0xf]
    %v4078 = vld [vmem:[%s462 + $0x1c] sm:$0xf]
    %v4087 = vunpack.c.l.b16 %v4071
    %v4088 = vunpack.c.l.b16 %v4072
    %v4089 = vunpack.c.l.b16 %v4073
    %v4090 = vunpack.c.l.b16 %v4074
    %v4091 = vunpack.c.l.b16 %v4075
    %v4092 = vunpack.c.l.b16 %v4076
    %v4093 = vunpack.c.l.b16 %v4077
    %v4094 = vunpack.c.l.b16 %v4078
    %v4095 = vpack.c.b16 %v4088, %v4087
    %v4096 = vpack.c.b16 %v4090, %v4089
    %v4097 = vpack.c.b16 %v4092, %v4091
    %v4098 = vpack.c.b16 %v4094, %v4093
    %v4104 = vsel %vm495, %v4070, 0
    %4106 = vmatpush.bf16.msra.mxu0 0
    %4107 = vmatpush.bf16.msra.mxu0 0
    %4108 = vmatpush.bf16.msra.mxu0 0
    %4109 = vmatpush.bf16.msra.mxu0 0
    %4110 = vmatpush.bf16.msra.mxu0 %v4098
    %4111 = vmatpush.bf16.msra.mxu0 %v4097
    %4112 = vmatpush.bf16.msra.mxu0 %v4096
    %4113 = vmatpush.bf16.msra.mxu0 %v4095
    %4114 = vmatmul.bf16.gmra.mxu0 %v4104
    %v4115 = vpop.f32.mrf.mxu0
    %v4116 = vadd.f32 0.0, %v4115
    %v4117 = vpop.f32.mrf.mxu0
    %v4118 = vadd.f32 0.0, %v4117
    %4119 = vdwg.mxu0
    %v4128 = vunpack.c.l.b16 %v4035
    %v4129 = vunpack.c.l.b16 %v4036
    %v4130 = vunpack.c.l.b16 %v4037
    %v4131 = vunpack.c.l.b16 %v4038
    %v4132 = vunpack.c.l.b16 %v4039
    %v4133 = vunpack.c.l.b16 %v4040
    %v4134 = vunpack.c.l.b16 %v4041
    %v4135 = vunpack.c.l.b16 %v4042
    %v4136 = vpack.c.b16 %v4129, %v4128
    %v4137 = vpack.c.b16 %v4131, %v4130
    %v4138 = vpack.c.b16 %v4133, %v4132
    %v4139 = vpack.c.b16 %v4135, %v4134
    %v4145 = vsel %vm495, %v4034, 0
    %4147 = vmatpush.bf16.msra.mxu0 0
    %4148 = vmatpush.bf16.msra.mxu0 0
    %4149 = vmatpush.bf16.msra.mxu0 0
    %4150 = vmatpush.bf16.msra.mxu0 0
    %4151 = vmatpush.bf16.msra.mxu0 %v4139
    %4152 = vmatpush.bf16.msra.mxu0 %v4138
    %4153 = vmatpush.bf16.msra.mxu0 %v4137
    %4154 = vmatpush.bf16.msra.mxu0 %v4136
    %4155 = vmatmul.bf16.gmra.mxu0 %v4145
    %v4156 = vpop.f32.mrf.mxu0
    %v4157 = vadd.f32 %v4116, %v4156
    %v4158 = vpop.f32.mrf.mxu0
    %v4159 = vadd.f32 %v4118, %v4158
    %4160 = vdwg.mxu0
    %s4161 = scalar_lea.vmem %s1, 48
    %v4162 = vld [vmem:[%s4161] sm:$0xf]
    %v4163 = vld [vmem:[%s4161 + $0x4] sm:$0xf]
    %v4166 = vunpack.c.l.b16 %v4162
    %v4167 = vunpack.c.l.b16 %v4163
    %v4168 = vpack.c.b16 %v4167, %v4166
    %v4170 = vsel %vm210, %v4168, 0
    %4172 = vmatpush.bf16.msra.mxu0 0
    %4173 = vmatpush.bf16.msra.mxu0 0
    %4174 = vmatpush.bf16.msra.mxu0 0
    %4175 = vmatpush.bf16.msra.mxu0 0
    %4176 = vmatpush.bf16.msra.mxu0 0
    %4177 = vmatpush.bf16.msra.mxu0 0
    %4178 = vmatpush.bf16.msra.mxu0 0
    %4179 = vmatpush.bf16.msra.mxu0 %v208
    %4180 = vmatmul.bf16.gmra.mxu0 %v4170
    %v4181 = vpop.f32.mrf.mxu0
    %v4182 = vadd.f32 %v182, %v4181
    %v4183 = vpop.f32.mrf.mxu0
    %v4184 = vadd.f32 %v182, %v4183
    %4185 = vdwg.mxu0
    %v4186 = vmax.f32 %v4182, 0.0
    %v4187 = vmax.f32 %v4184, 0.0
    %v4188 = vpack.c.bf16 %v4187, %v4186
    %v4189 = vld [vmem:[%s582] sm:$0xf]
    %v4190 = vld [vmem:[%s582 + $0x4] sm:$0xf]
    %v4191 = vld [vmem:[%s582 + $0x8] sm:$0xf]
    %v4192 = vld [vmem:[%s582 + $0xc] sm:$0xf]
    %v4193 = vld [vmem:[%s582 + $0x10] sm:$0xf]
    %v4194 = vld [vmem:[%s582 + $0x14] sm:$0xf]
    %v4195 = vld [vmem:[%s582 + $0x18] sm:$0xf]
    %v4196 = vld [vmem:[%s582 + $0x1c] sm:$0xf]
    %v4205 = vunpack.c.l.b16 %v4189
    %v4206 = vunpack.c.l.b16 %v4190
    %v4207 = vunpack.c.l.b16 %v4191
    %v4208 = vunpack.c.l.b16 %v4192
    %v4209 = vunpack.c.l.b16 %v4193
    %v4210 = vunpack.c.l.b16 %v4194
    %v4211 = vunpack.c.l.b16 %v4195
    %v4212 = vunpack.c.l.b16 %v4196
    %v4213 = vpack.c.b16 %v4206, %v4205
    %v4214 = vpack.c.b16 %v4208, %v4207
    %v4215 = vpack.c.b16 %v4210, %v4209
    %v4216 = vpack.c.b16 %v4212, %v4211
    %v4222 = vsel %vm495, %v4188, 0
    %4224 = vmatpush.bf16.msra.mxu0 0
    %4225 = vmatpush.bf16.msra.mxu0 0
    %4226 = vmatpush.bf16.msra.mxu0 0
    %4227 = vmatpush.bf16.msra.mxu0 0
    %4228 = vmatpush.bf16.msra.mxu0 %v4216
    %4229 = vmatpush.bf16.msra.mxu0 %v4215
    %4230 = vmatpush.bf16.msra.mxu0 %v4214
    %4231 = vmatpush.bf16.msra.mxu0 %v4213
    %4232 = vmatmul.bf16.gmra.mxu0 %v4222
    %v4233 = vpop.f32.mrf.mxu0
    %v4234 = vadd.f32 0.0, %v4233
    %v4235 = vpop.f32.mrf.mxu0
    %v4236 = vadd.f32 0.0, %v4235
    %4237 = vdwg.mxu0
    %v4238 = vadd.f32 %v4157, %v4234
    %v4239 = vadd.f32 %v4159, %v4236
    %s4240 = scalar_lea.vmem %s1, 56
    %v4241 = vld [vmem:[%s4240] sm:$0xf]
    %v4242 = vld [vmem:[%s4240 + $0x4] sm:$0xf]
    %v4245 = vunpack.c.l.b16 %v4241
    %v4246 = vunpack.c.l.b16 %v4242
    %v4247 = vpack.c.b16 %v4246, %v4245
    %v4249 = vsel %vm210, %v4247, 0
    %4251 = vmatpush.bf16.msra.mxu0 0
    %4252 = vmatpush.bf16.msra.mxu0 0
    %4253 = vmatpush.bf16.msra.mxu0 0
    %4254 = vmatpush.bf16.msra.mxu0 0
    %4255 = vmatpush.bf16.msra.mxu0 0
    %4256 = vmatpush.bf16.msra.mxu0 0
    %4257 = vmatpush.bf16.msra.mxu0 0
    %4258 = vmatpush.bf16.msra.mxu0 %v208
    %4259 = vmatmul.bf16.gmra.mxu0 %v4249
    %v4260 = vpop.f32.mrf.mxu0
    %v4261 = vadd.f32 %v182, %v4260
    %v4262 = vpop.f32.mrf.mxu0
    %v4263 = vadd.f32 %v182, %v4262
    %4264 = vdwg.mxu0
    %v4265 = vmax.f32 %v4261, 0.0
    %v4266 = vmax.f32 %v4263, 0.0
    %v4267 = vpack.c.bf16 %v4266, %v4265
    %v4268 = vld [vmem:[%s662] sm:$0xf]
    %v4269 = vld [vmem:[%s662 + $0x4] sm:$0xf]
    %v4270 = vld [vmem:[%s662 + $0x8] sm:$0xf]
    %v4271 = vld [vmem:[%s662 + $0xc] sm:$0xf]
    %v4272 = vld [vmem:[%s662 + $0x10] sm:$0xf]
    %v4273 = vld [vmem:[%s662 + $0x14] sm:$0xf]
    %v4274 = vld [vmem:[%s662 + $0x18] sm:$0xf]
    %v4275 = vld [vmem:[%s662 + $0x1c] sm:$0xf]
    %v4284 = vunpack.c.l.b16 %v4268
    %v4285 = vunpack.c.l.b16 %v4269
    %v4286 = vunpack.c.l.b16 %v4270
    %v4287 = vunpack.c.l.b16 %v4271
    %v4288 = vunpack.c.l.b16 %v4272
    %v4289 = vunpack.c.l.b16 %v4273
    %v4290 = vunpack.c.l.b16 %v4274
    %v4291 = vunpack.c.l.b16 %v4275
    %v4292 = vpack.c.b16 %v4285, %v4284
    %v4293 = vpack.c.b16 %v4287, %v4286
    %v4294 = vpack.c.b16 %v4289, %v4288
    %v4295 = vpack.c.b16 %v4291, %v4290
    %v4301 = vsel %vm495, %v4267, 0
    %4303 = vmatpush.bf16.msra.mxu0 0
    %4304 = vmatpush.bf16.msra.mxu0 0
    %4305 = vmatpush.bf16.msra.mxu0 0
    %4306 = vmatpush.bf16.msra.mxu0 0
    %4307 = vmatpush.bf16.msra.mxu0 %v4295
    %4308 = vmatpush.bf16.msra.mxu0 %v4294
    %4309 = vmatpush.bf16.msra.mxu0 %v4293
    %4310 = vmatpush.bf16.msra.mxu0 %v4292
    %4311 = vmatmul.bf16.gmra.mxu0 %v4301
    %v4312 = vpop.f32.mrf.mxu0
    %v4313 = vadd.f32 0.0, %v4312
    %v4314 = vpop.f32.mrf.mxu0
    %v4315 = vadd.f32 0.0, %v4314
    %4316 = vdwg.mxu0
    %v4317 = vadd.f32 %v4238, %v4313
    %v4318 = vadd.f32 %v4239, %v4315
    %v4319 = vadd.f32 %v4317, %v715
    %v4320 = vadd.f32 %v4318, %v715
    %v4321 = vmax.f32 %v4319, 0.0
    %v4322 = vmax.f32 %v4320, 0.0
    %v4323 = vld [vmem:[#allocation2] sm:$0xf]
    %v4324 = vld [vmem:[#allocation2 + $0x8] sm:$0xf]
    %v4325 = vld [vmem:[#allocation2 + $0x10] sm:$0xf]
    %v4326 = vld [vmem:[#allocation2 + $0x18] sm:$0xf]
    %v4327 = vld [vmem:[#allocation2 + $0x20] sm:$0xf]
    %v4328 = vld [vmem:[#allocation2 + $0x28] sm:$0xf]
    %v4329 = vld [vmem:[#allocation2 + $0x30] sm:$0xf]
    %v4330 = vld [vmem:[#allocation2 + $0x38] sm:$0xf]
    %v4331 = vld [vmem:[%s9] sm:$0xf]
    %v4332 = vld [vmem:[%s9 + $0x4] sm:$0xf]
    %v4333 = vld [vmem:[%s9 + $0x8] sm:$0xf]
    %v4334 = vld [vmem:[%s9 + $0xc] sm:$0xf]
    %v4335 = vld [vmem:[%s9 + $0x10] sm:$0xf]
    %v4336 = vld [vmem:[%s9 + $0x14] sm:$0xf]
    %v4337 = vld [vmem:[%s9 + $0x18] sm:$0xf]
    %v4338 = vld [vmem:[%s9 + $0x1c] sm:$0xf]
    %v4339 = vld [vmem:[#allocation2 + $0x4] sm:$0x1]
    %v4340 = vld [vmem:[#allocation2 + $0xc] sm:$0x1]
    %v4341 = vld [vmem:[#allocation2 + $0x14] sm:$0x1]
    %v4342 = vld [vmem:[#allocation2 + $0x1c] sm:$0x1]
    %v4343 = vld [vmem:[#allocation2 + $0x24] sm:$0x1]
    %v4344 = vld [vmem:[#allocation2 + $0x2c] sm:$0x1]
    %v4345 = vld [vmem:[#allocation2 + $0x34] sm:$0x1]
    %v4346 = vld [vmem:[#allocation2 + $0x3c] sm:$0x1]
    %v4348 = vshrl.u32 %v4323, 16
    %v4350 = vrot.slane %v4348, 4
    %v4351 = vshll.u32 %v4323, 16
    %v4353 = vrot.slane %v4351, 5
    %v4354 = vor.u32 %v4350, %v4353
    %v4355 = vrot.slane %v4354, 4
    %v4357 = vshll.u32 %v4339, 16
    %v4359 = vrot.slane %v4357, 5
    %v4360 = vsel %vm747, %v4355, %v4359
    %v4362 = vshrl.u32 %v4324, 16
    %v4364 = vrot.slane %v4362, 4
    %v4365 = vshll.u32 %v4324, 16
    %v4367 = vrot.slane %v4365, 5
    %v4368 = vor.u32 %v4364, %v4367
    %v4369 = vrot.slane %v4368, 4
    %v4371 = vshll.u32 %v4340, 16
    %v4373 = vrot.slane %v4371, 5
    %v4374 = vsel %vm747, %v4369, %v4373
    %v4376 = vshrl.u32 %v4325, 16
    %v4378 = vrot.slane %v4376, 4
    %v4379 = vshll.u32 %v4325, 16
    %v4381 = vrot.slane %v4379, 5
    %v4382 = vor.u32 %v4378, %v4381
    %v4383 = vrot.slane %v4382, 4
    %v4385 = vshll.u32 %v4341, 16
    %v4387 = vrot.slane %v4385, 5
    %v4388 = vsel %vm747, %v4383, %v4387
    %v4390 = vshrl.u32 %v4326, 16
    %v4392 = vrot.slane %v4390, 4
    %v4393 = vshll.u32 %v4326, 16
    %v4395 = vrot.slane %v4393, 5
    %v4396 = vor.u32 %v4392, %v4395
    %v4397 = vrot.slane %v4396, 4
    %v4399 = vshll.u32 %v4342, 16
    %v4401 = vrot.slane %v4399, 5
    %v4402 = vsel %vm747, %v4397, %v4401
    %v4404 = vshrl.u32 %v4327, 16
    %v4406 = vrot.slane %v4404, 4
    %v4407 = vshll.u32 %v4327, 16
    %v4409 = vrot.slane %v4407, 5
    %v4410 = vor.u32 %v4406, %v4409
    %v4411 = vrot.slane %v4410, 4
    %v4413 = vshll.u32 %v4343, 16
    %v4415 = vrot.slane %v4413, 5
    %v4416 = vsel %vm747, %v4411, %v4415
    %v4418 = vshrl.u32 %v4328, 16
    %v4420 = vrot.slane %v4418, 4
    %v4421 = vshll.u32 %v4328, 16
    %v4423 = vrot.slane %v4421, 5
    %v4424 = vor.u32 %v4420, %v4423
    %v4425 = vrot.slane %v4424, 4
    %v4427 = vshll.u32 %v4344, 16
    %v4429 = vrot.slane %v4427, 5
    %v4430 = vsel %vm747, %v4425, %v4429
    %v4432 = vshrl.u32 %v4329, 16
    %v4434 = vrot.slane %v4432, 4
    %v4435 = vshll.u32 %v4329, 16
    %v4437 = vrot.slane %v4435, 5
    %v4438 = vor.u32 %v4434, %v4437
    %v4439 = vrot.slane %v4438, 4
    %v4441 = vshll.u32 %v4345, 16
    %v4443 = vrot.slane %v4441, 5
    %v4444 = vsel %vm747, %v4439, %v4443
    %v4446 = vshrl.u32 %v4330, 16
    %v4448 = vrot.slane %v4446, 4
    %v4449 = vshll.u32 %v4330, 16
    %v4451 = vrot.slane %v4449, 5
    %v4452 = vor.u32 %v4448, %v4451
    %v4453 = vrot.slane %v4452, 4
    %v4455 = vshll.u32 %v4346, 16
    %v4457 = vrot.slane %v4455, 5
    %v4458 = vsel %vm747, %v4453, %v4457
    %v4459 = vld [vmem:[%s860] sm:$0xf]
    %v4460 = vld [vmem:[%s860 + $0x4] sm:$0xf]
    %v4461 = vld [vmem:[%s860 + $0x8] sm:$0xf]
    %v4462 = vld [vmem:[%s860 + $0xc] sm:$0xf]
    %v4463 = vld [vmem:[%s860 + $0x10] sm:$0xf]
    %v4464 = vld [vmem:[%s860 + $0x14] sm:$0xf]
    %v4465 = vld [vmem:[%s860 + $0x18] sm:$0xf]
    %v4466 = vld [vmem:[%s860 + $0x1c] sm:$0xf]
    %v4467 = vunpack.c.l.b16 %v4360
    %v4468 = vunpack.c.l.b16 %v4374
    %v4469 = vunpack.c.l.b16 %v4388
    %v4470 = vunpack.c.l.b16 %v4402
    %v4471 = vunpack.c.l.b16 %v4416
    %v4472 = vunpack.c.l.b16 %v4430
    %v4473 = vunpack.c.l.b16 %v4444
    %v4474 = vunpack.c.l.b16 %v4458
    %v4475 = vpack.c.b16 %v4468, %v4467
    %v4476 = vpack.c.b16 %v4470, %v4469
    %v4477 = vpack.c.b16 %v4472, %v4471
    %v4478 = vpack.c.b16 %v4474, %v4473
    %v4487 = vunpack.c.l.b16 %v4459
    %v4488 = vunpack.c.l.b16 %v4460
    %v4489 = vunpack.c.l.b16 %v4461
    %v4490 = vunpack.c.l.b16 %v4462
    %v4491 = vunpack.c.l.b16 %v4463
    %v4492 = vunpack.c.l.b16 %v4464
    %v4493 = vunpack.c.l.b16 %v4465
    %v4494 = vunpack.c.l.b16 %v4466
    %v4495 = vpack.c.b16 %v4488, %v4487
    %v4496 = vpack.c.b16 %v4490, %v4489
    %v4497 = vpack.c.b16 %v4492, %v4491
    %v4498 = vpack.c.b16 %v4494, %v4493
    %v4504 = vsel %vm495, %v4475, 0
    %v4507 = vsel %vm495, %v4476, 0
    %v4510 = vsel %vm495, %v4477, 0
    %v4513 = vsel %vm495, %v4478, 0
    %4515 = vmatpush.bf16.msra.mxu0 0
    %4516 = vmatpush.bf16.msra.mxu0 0
    %4517 = vmatpush.bf16.msra.mxu0 0
    %4518 = vmatpush.bf16.msra.mxu0 0
    %4519 = vmatpush.bf16.msra.mxu0 %v4498
    %4520 = vmatpush.bf16.msra.mxu0 %v4497
    %4521 = vmatpush.bf16.msra.mxu0 %v4496
    %4522 = vmatpush.bf16.msra.mxu0 %v4495
    %4523 = vmatmul.bf16.gmra.mxu0 %v4504
    %v4524 = vpop.f32.mrf.mxu0
    %v4525 = vadd.f32 0.0, %v4524
    %v4526 = vpop.f32.mrf.mxu0
    %v4527 = vadd.f32 0.0, %v4526
    %4528 = vmatmul.bf16.gmra.mxu0 %v4507
    %v4529 = vpop.f32.mrf.mxu0
    %v4530 = vadd.f32 0.0, %v4529
    %v4531 = vpop.f32.mrf.mxu0
    %v4532 = vadd.f32 0.0, %v4531
    %4533 = vmatmul.bf16.gmra.mxu0 %v4510
    %v4534 = vpop.f32.mrf.mxu0
    %v4535 = vadd.f32 0.0, %v4534
    %v4536 = vpop.f32.mrf.mxu0
    %v4537 = vadd.f32 0.0, %v4536
    %4538 = vmatmul.bf16.gmra.mxu0 %v4513
    %v4539 = vpop.f32.mrf.mxu0
    %v4540 = vadd.f32 0.0, %v4539
    %v4541 = vpop.f32.mrf.mxu0
    %v4542 = vadd.f32 0.0, %v4541
    %4543 = vdwg.mxu0
    %v4552 = vunpack.c.l.b16 %v4323
    %v4553 = vunpack.c.l.b16 %v4324
    %v4554 = vunpack.c.l.b16 %v4325
    %v4555 = vunpack.c.l.b16 %v4326
    %v4556 = vunpack.c.l.b16 %v4327
    %v4557 = vunpack.c.l.b16 %v4328
    %v4558 = vunpack.c.l.b16 %v4329
    %v4559 = vunpack.c.l.b16 %v4330
    %v4560 = vpack.c.b16 %v4553, %v4552
    %v4561 = vpack.c.b16 %v4555, %v4554
    %v4562 = vpack.c.b16 %v4557, %v4556
    %v4563 = vpack.c.b16 %v4559, %v4558
    %v4572 = vunpack.c.l.b16 %v4331
    %v4573 = vunpack.c.l.b16 %v4332
    %v4574 = vunpack.c.l.b16 %v4333
    %v4575 = vunpack.c.l.b16 %v4334
    %v4576 = vunpack.c.l.b16 %v4335
    %v4577 = vunpack.c.l.b16 %v4336
    %v4578 = vunpack.c.l.b16 %v4337
    %v4579 = vunpack.c.l.b16 %v4338
    %v4580 = vpack.c.b16 %v4573, %v4572
    %v4581 = vpack.c.b16 %v4575, %v4574
    %v4582 = vpack.c.b16 %v4577, %v4576
    %v4583 = vpack.c.b16 %v4579, %v4578
    %v4589 = vsel %vm495, %v4560, 0
    %v4592 = vsel %vm495, %v4561, 0
    %v4595 = vsel %vm495, %v4562, 0
    %v4598 = vsel %vm495, %v4563, 0
    %4600 = vmatpush.bf16.msra.mxu0 0
    %4601 = vmatpush.bf16.msra.mxu0 0
    %4602 = vmatpush.bf16.msra.mxu0 0
    %4603 = vmatpush.bf16.msra.mxu0 0
    %4604 = vmatpush.bf16.msra.mxu0 %v4583
    %4605 = vmatpush.bf16.msra.mxu0 %v4582
    %4606 = vmatpush.bf16.msra.mxu0 %v4581
    %4607 = vmatpush.bf16.msra.mxu0 %v4580
    %4608 = vmatmul.bf16.gmra.mxu0 %v4589
    %v4609 = vpop.f32.mrf.mxu0
    %v4610 = vadd.f32 %v4525, %v4609
    %v4611 = vpop.f32.mrf.mxu0
    %v4612 = vadd.f32 %v4527, %v4611
    %4613 = vmatmul.bf16.gmra.mxu0 %v4592
    %v4614 = vpop.f32.mrf.mxu0
    %v4615 = vadd.f32 %v4530, %v4614
    %v4616 = vpop.f32.mrf.mxu0
    %v4617 = vadd.f32 %v4532, %v4616
    %4618 = vmatmul.bf16.gmra.mxu0 %v4595
    %v4619 = vpop.f32.mrf.mxu0
    %v4620 = vadd.f32 %v4535, %v4619
    %v4621 = vpop.f32.mrf.mxu0
    %v4622 = vadd.f32 %v4537, %v4621
    %4623 = vmatmul.bf16.gmra.mxu0 %v4598
    %v4624 = vpop.f32.mrf.mxu0
    %v4625 = vadd.f32 %v4540, %v4624
    %v4626 = vpop.f32.mrf.mxu0
    %v4627 = vadd.f32 %v4542, %v4626
    %4628 = vdwg.mxu0
    %v4629 = vld [vmem:[#allocation2] sm:$0xe]
    %v4630 = vld [vmem:[#allocation2 + $0x8] sm:$0xe]
    %v4631 = vld [vmem:[#allocation2 + $0x10] sm:$0xe]
    %v4632 = vld [vmem:[#allocation2 + $0x18] sm:$0xe]
    %v4633 = vld [vmem:[#allocation2 + $0x20] sm:$0xe]
    %v4634 = vld [vmem:[#allocation2 + $0x28] sm:$0xe]
    %v4635 = vld [vmem:[#allocation2 + $0x30] sm:$0xe]
    %v4636 = vld [vmem:[#allocation2 + $0x38] sm:$0xe]
    %v4653 = vrot.slane %v4629, 5
    %v4654 = vrot.slane %v4653, 4
    %v4655 = vrot.slane %v4339, 5
    %v4656 = vsel %vm1057, %v4654, %v4655
    %v4657 = vrot.slane %v4630, 5
    %v4658 = vrot.slane %v4657, 4
    %v4659 = vrot.slane %v4340, 5
    %v4660 = vsel %vm1057, %v4658, %v4659
    %v4661 = vrot.slane %v4631, 5
    %v4662 = vrot.slane %v4661, 4
    %v4663 = vrot.slane %v4341, 5
    %v4664 = vsel %vm1057, %v4662, %v4663
    %v4665 = vrot.slane %v4632, 5
    %v4666 = vrot.slane %v4665, 4
    %v4667 = vrot.slane %v4342, 5
    %v4668 = vsel %vm1057, %v4666, %v4667
    %v4669 = vrot.slane %v4633, 5
    %v4670 = vrot.slane %v4669, 4
    %v4671 = vrot.slane %v4343, 5
    %v4672 = vsel %vm1057, %v4670, %v4671
    %v4673 = vrot.slane %v4634, 5
    %v4674 = vrot.slane %v4673, 4
    %v4675 = vrot.slane %v4344, 5
    %v4676 = vsel %vm1057, %v4674, %v4675
    %v4677 = vrot.slane %v4635, 5
    %v4678 = vrot.slane %v4677, 4
    %v4679 = vrot.slane %v4345, 5
    %v4680 = vsel %vm1057, %v4678, %v4679
    %v4681 = vrot.slane %v4636, 5
    %v4682 = vrot.slane %v4681, 4
    %v4683 = vrot.slane %v4346, 5
    %v4684 = vsel %vm1057, %v4682, %v4683
    %v4685 = vld [vmem:[%s1090] sm:$0xf]
    %v4686 = vld [vmem:[%s1090 + $0x4] sm:$0xf]
    %v4687 = vld [vmem:[%s1090 + $0x8] sm:$0xf]
    %v4688 = vld [vmem:[%s1090 + $0xc] sm:$0xf]
    %v4689 = vld [vmem:[%s1090 + $0x10] sm:$0xf]
    %v4690 = vld [vmem:[%s1090 + $0x14] sm:$0xf]
    %v4691 = vld [vmem:[%s1090 + $0x18] sm:$0xf]
    %v4692 = vld [vmem:[%s1090 + $0x1c] sm:$0xf]
    %v4693 = vunpack.c.l.b16 %v4656
    %v4694 = vunpack.c.l.b16 %v4660
    %v4695 = vunpack.c.l.b16 %v4664
    %v4696 = vunpack.c.l.b16 %v4668
    %v4697 = vunpack.c.l.b16 %v4672
    %v4698 = vunpack.c.l.b16 %v4676
    %v4699 = vunpack.c.l.b16 %v4680
    %v4700 = vunpack.c.l.b16 %v4684
    %v4701 = vpack.c.b16 %v4694, %v4693
    %v4702 = vpack.c.b16 %v4696, %v4695
    %v4703 = vpack.c.b16 %v4698, %v4697
    %v4704 = vpack.c.b16 %v4700, %v4699
    %v4713 = vunpack.c.l.b16 %v4685
    %v4714 = vunpack.c.l.b16 %v4686
    %v4715 = vunpack.c.l.b16 %v4687
    %v4716 = vunpack.c.l.b16 %v4688
    %v4717 = vunpack.c.l.b16 %v4689
    %v4718 = vunpack.c.l.b16 %v4690
    %v4719 = vunpack.c.l.b16 %v4691
    %v4720 = vunpack.c.l.b16 %v4692
    %v4721 = vpack.c.b16 %v4714, %v4713
    %v4722 = vpack.c.b16 %v4716, %v4715
    %v4723 = vpack.c.b16 %v4718, %v4717
    %v4724 = vpack.c.b16 %v4720, %v4719
    %v4730 = vsel %vm495, %v4701, 0
    %v4733 = vsel %vm495, %v4702, 0
    %v4736 = vsel %vm495, %v4703, 0
    %v4739 = vsel %vm495, %v4704, 0
    %4741 = vmatpush.bf16.msra.mxu0 0
    %4742 = vmatpush.bf16.msra.mxu0 0
    %4743 = vmatpush.bf16.msra.mxu0 0
    %4744 = vmatpush.bf16.msra.mxu0 0
    %4745 = vmatpush.bf16.msra.mxu0 %v4724
    %4746 = vmatpush.bf16.msra.mxu0 %v4723
    %4747 = vmatpush.bf16.msra.mxu0 %v4722
    %4748 = vmatpush.bf16.msra.mxu0 %v4721
    %4749 = vmatmul.bf16.gmra.mxu0 %v4730
    %v4750 = vpop.f32.mrf.mxu0
    %v4751 = vadd.f32 0.0, %v4750
    %v4752 = vpop.f32.mrf.mxu0
    %v4753 = vadd.f32 0.0, %v4752
    %4754 = vmatmul.bf16.gmra.mxu0 %v4733
    %v4755 = vpop.f32.mrf.mxu0
    %v4756 = vadd.f32 0.0, %v4755
    %v4757 = vpop.f32.mrf.mxu0
    %v4758 = vadd.f32 0.0, %v4757
    %4759 = vmatmul.bf16.gmra.mxu0 %v4736
    %v4760 = vpop.f32.mrf.mxu0
    %v4761 = vadd.f32 0.0, %v4760
    %v4762 = vpop.f32.mrf.mxu0
    %v4763 = vadd.f32 0.0, %v4762
    %4764 = vmatmul.bf16.gmra.mxu0 %v4739
    %v4765 = vpop.f32.mrf.mxu0
    %v4766 = vadd.f32 0.0, %v4765
    %v4767 = vpop.f32.mrf.mxu0
    %v4768 = vadd.f32 0.0, %v4767
    %4769 = vdwg.mxu0
    %v4770 = vadd.f32 %v4610, %v4751
    %v4771 = vadd.f32 %v4612, %v4753
    %v4772 = vadd.f32 %v4615, %v4756
    %v4773 = vadd.f32 %v4617, %v4758
    %v4774 = vadd.f32 %v4620, %v4761
    %v4775 = vadd.f32 %v4622, %v4763
    %v4776 = vadd.f32 %v4625, %v4766
    %v4777 = vadd.f32 %v4627, %v4768
    %v4778 = vld [vmem:[%s348] sm:$0xf]
    %v4779 = vld [vmem:[%s348 + $0x8] sm:$0xf]
    %v4780 = vld [vmem:[%s348 + $0x10] sm:$0xf]
    %v4781 = vld [vmem:[%s348 + $0x18] sm:$0xf]
    %v4782 = vld [vmem:[%s348 + $0x20] sm:$0xf]
    %v4783 = vld [vmem:[%s348 + $0x28] sm:$0xf]
    %v4784 = vld [vmem:[%s348 + $0x30] sm:$0xf]
    %v4785 = vld [vmem:[%s348 + $0x38] sm:$0xf]
    %v4786 = vld [vmem:[%s1192] sm:$0xf]
    %v4787 = vld [vmem:[%s1192 + $0x4] sm:$0xf]
    %v4788 = vld [vmem:[%s1192 + $0x8] sm:$0xf]
    %v4789 = vld [vmem:[%s1192 + $0xc] sm:$0xf]
    %v4790 = vld [vmem:[%s1192 + $0x10] sm:$0xf]
    %v4791 = vld [vmem:[%s1192 + $0x14] sm:$0xf]
    %v4792 = vld [vmem:[%s1192 + $0x18] sm:$0xf]
    %v4793 = vld [vmem:[%s1192 + $0x1c] sm:$0xf]
    %v4802 = vunpack.c.l.b16 %v4778
    %v4803 = vunpack.c.l.b16 %v4779
    %v4804 = vunpack.c.l.b16 %v4780
    %v4805 = vunpack.c.l.b16 %v4781
    %v4806 = vunpack.c.l.b16 %v4782
    %v4807 = vunpack.c.l.b16 %v4783
    %v4808 = vunpack.c.l.b16 %v4784
    %v4809 = vunpack.c.l.b16 %v4785
    %v4810 = vpack.c.b16 %v4803, %v4802
    %v4811 = vpack.c.b16 %v4805, %v4804
    %v4812 = vpack.c.b16 %v4807, %v4806
    %v4813 = vpack.c.b16 %v4809, %v4808
    %v4822 = vunpack.c.l.b16 %v4786
    %v4823 = vunpack.c.l.b16 %v4787
    %v4824 = vunpack.c.l.b16 %v4788
    %v4825 = vunpack.c.l.b16 %v4789
    %v4826 = vunpack.c.l.b16 %v4790
    %v4827 = vunpack.c.l.b16 %v4791
    %v4828 = vunpack.c.l.b16 %v4792
    %v4829 = vunpack.c.l.b16 %v4793
    %v4830 = vpack.c.b16 %v4823, %v4822
    %v4831 = vpack.c.b16 %v4825, %v4824
    %v4832 = vpack.c.b16 %v4827, %v4826
    %v4833 = vpack.c.b16 %v4829, %v4828
    %v4839 = vsel %vm495, %v4810, 0
    %v4842 = vsel %vm495, %v4811, 0
    %v4845 = vsel %vm495, %v4812, 0
    %v4848 = vsel %vm495, %v4813, 0
    %4850 = vmatpush.bf16.msra.mxu0 0
    %4851 = vmatpush.bf16.msra.mxu0 0
    %4852 = vmatpush.bf16.msra.mxu0 0
    %4853 = vmatpush.bf16.msra.mxu0 0
    %4854 = vmatpush.bf16.msra.mxu0 %v4833
    %4855 = vmatpush.bf16.msra.mxu0 %v4832
    %4856 = vmatpush.bf16.msra.mxu0 %v4831
    %4857 = vmatpush.bf16.msra.mxu0 %v4830
    %4858 = vmatmul.bf16.gmra.mxu0 %v4839
    %v4859 = vpop.f32.mrf.mxu0
    %v4860 = vadd.f32 0.0, %v4859
    %v4861 = vpop.f32.mrf.mxu0
    %v4862 = vadd.f32 0.0, %v4861
    %4863 = vmatmul.bf16.gmra.mxu0 %v4842
    %v4864 = vpop.f32.mrf.mxu0
    %v4865 = vadd.f32 0.0, %v4864
    %v4866 = vpop.f32.mrf.mxu0
    %v4867 = vadd.f32 0.0, %v4866
    %4868 = vmatmul.bf16.gmra.mxu0 %v4845
    %v4869 = vpop.f32.mrf.mxu0
    %v4870 = vadd.f32 0.0, %v4869
    %v4871 = vpop.f32.mrf.mxu0
    %v4872 = vadd.f32 0.0, %v4871
    %4873 = vmatmul.bf16.gmra.mxu0 %v4848
    %v4874 = vpop.f32.mrf.mxu0
    %v4875 = vadd.f32 0.0, %v4874
    %v4876 = vpop.f32.mrf.mxu0
    %v4877 = vadd.f32 0.0, %v4876
    %4878 = vdwg.mxu0
    %v4879 = vadd.f32 %v4770, %v4860
    %v4880 = vadd.f32 %v4771, %v4862
    %v4881 = vadd.f32 %v4772, %v4865
    %v4882 = vadd.f32 %v4773, %v4867
    %v4883 = vadd.f32 %v4774, %v4870
    %v4884 = vadd.f32 %v4775, %v4872
    %v4885 = vadd.f32 %v4776, %v4875
    %v4886 = vadd.f32 %v4777, %v4877
    %v4887 = vld [vmem:[%s348] sm:$0xf]
    %v4888 = vld [vmem:[%s348 + $0x4] sm:$0x1]
    %v4889 = vld [vmem:[%s348 + $0x8] sm:$0xf]
    %v4890 = vld [vmem:[%s348 + $0xc] sm:$0x1]
    %v4891 = vld [vmem:[%s348 + $0x10] sm:$0xf]
    %v4892 = vld [vmem:[%s348 + $0x14] sm:$0x1]
    %v4893 = vld [vmem:[%s348 + $0x18] sm:$0xf]
    %v4894 = vld [vmem:[%s348 + $0x1c] sm:$0x1]
    %v4895 = vld [vmem:[%s348 + $0x20] sm:$0xf]
    %v4896 = vld [vmem:[%s348 + $0x24] sm:$0x1]
    %v4897 = vld [vmem:[%s348 + $0x28] sm:$0xf]
    %v4898 = vld [vmem:[%s348 + $0x2c] sm:$0x1]
    %v4899 = vld [vmem:[%s348 + $0x30] sm:$0xf]
    %v4900 = vld [vmem:[%s348 + $0x34] sm:$0x1]
    %v4901 = vld [vmem:[%s348 + $0x38] sm:$0xf]
    %v4902 = vld [vmem:[%s348 + $0x3c] sm:$0x1]
    %v4904 = vshrl.u32 %v4887, 16
    %v4906 = vrot.slane %v4904, 4
    %v4907 = vshll.u32 %v4887, 16
    %v4909 = vrot.slane %v4907, 5
    %v4910 = vor.u32 %v4906, %v4909
    %v4911 = vrot.slane %v4910, 4
    %v4913 = vshll.u32 %v4888, 16
    %v4915 = vrot.slane %v4913, 5
    %v4916 = vsel %vm747, %v4911, %v4915
    %v4918 = vshrl.u32 %v4889, 16
    %v4920 = vrot.slane %v4918, 4
    %v4921 = vshll.u32 %v4889, 16
    %v4923 = vrot.slane %v4921, 5
    %v4924 = vor.u32 %v4920, %v4923
    %v4925 = vrot.slane %v4924, 4
    %v4927 = vshll.u32 %v4890, 16
    %v4929 = vrot.slane %v4927, 5
    %v4930 = vsel %vm747, %v4925, %v4929
    %v4932 = vshrl.u32 %v4891, 16
    %v4934 = vrot.slane %v4932, 4
    %v4935 = vshll.u32 %v4891, 16
    %v4937 = vrot.slane %v4935, 5
    %v4938 = vor.u32 %v4934, %v4937
    %v4939 = vrot.slane %v4938, 4
    %v4941 = vshll.u32 %v4892, 16
    %v4943 = vrot.slane %v4941, 5
    %v4944 = vsel %vm747, %v4939, %v4943
    %v4946 = vshrl.u32 %v4893, 16
    %v4948 = vrot.slane %v4946, 4
    %v4949 = vshll.u32 %v4893, 16
    %v4951 = vrot.slane %v4949, 5
    %v4952 = vor.u32 %v4948, %v4951
    %v4953 = vrot.slane %v4952, 4
    %v4955 = vshll.u32 %v4894, 16
    %v4957 = vrot.slane %v4955, 5
    %v4958 = vsel %vm747, %v4953, %v4957
    %v4960 = vshrl.u32 %v4895, 16
    %v4962 = vrot.slane %v4960, 4
    %v4963 = vshll.u32 %v4895, 16
    %v4965 = vrot.slane %v4963, 5
    %v4966 = vor.u32 %v4962, %v4965
    %v4967 = vrot.slane %v4966, 4
    %v4969 = vshll.u32 %v4896, 16
    %v4971 = vrot.slane %v4969, 5
    %v4972 = vsel %vm747, %v4967, %v4971
    %v4974 = vshrl.u32 %v4897, 16
    %v4976 = vrot.slane %v4974, 4
    %v4977 = vshll.u32 %v4897, 16
    %v4979 = vrot.slane %v4977, 5
    %v4980 = vor.u32 %v4976, %v4979
    %v4981 = vrot.slane %v4980, 4
    %v4983 = vshll.u32 %v4898, 16
    %v4985 = vrot.slane %v4983, 5
    %v4986 = vsel %vm747, %v4981, %v4985
    %v4988 = vshrl.u32 %v4899, 16
    %v4990 = vrot.slane %v4988, 4
    %v4991 = vshll.u32 %v4899, 16
    %v4993 = vrot.slane %v4991, 5
    %v4994 = vor.u32 %v4990, %v4993
    %v4995 = vrot.slane %v4994, 4
    %v4997 = vshll.u32 %v4900, 16
    %v4999 = vrot.slane %v4997, 5
    %v5000 = vsel %vm747, %v4995, %v4999
    %v5002 = vshrl.u32 %v4901, 16
    %v5004 = vrot.slane %v5002, 4
    %v5005 = vshll.u32 %v4901, 16
    %v5007 = vrot.slane %v5005, 5
    %v5008 = vor.u32 %v5004, %v5007
    %v5009 = vrot.slane %v5008, 4
    %v5011 = vshll.u32 %v4902, 16
    %v5013 = vrot.slane %v5011, 5
    %v5014 = vsel %vm747, %v5009, %v5013
    %v5015 = vld [vmem:[%s1422] sm:$0xf]
    %v5016 = vld [vmem:[%s1422 + $0x4] sm:$0xf]
    %v5017 = vld [vmem:[%s1422 + $0x8] sm:$0xf]
    %v5018 = vld [vmem:[%s1422 + $0xc] sm:$0xf]
    %v5019 = vld [vmem:[%s1422 + $0x10] sm:$0xf]
    %v5020 = vld [vmem:[%s1422 + $0x14] sm:$0xf]
    %v5021 = vld [vmem:[%s1422 + $0x18] sm:$0xf]
    %v5022 = vld [vmem:[%s1422 + $0x1c] sm:$0xf]
    %v5023 = vunpack.c.l.b16 %v4916
    %v5024 = vunpack.c.l.b16 %v4930
    %v5025 = vunpack.c.l.b16 %v4944
    %v5026 = vunpack.c.l.b16 %v4958
    %v5027 = vunpack.c.l.b16 %v4972
    %v5028 = vunpack.c.l.b16 %v4986
    %v5029 = vunpack.c.l.b16 %v5000
    %v5030 = vunpack.c.l.b16 %v5014
    %v5031 = vpack.c.b16 %v5024, %v5023
    %v5032 = vpack.c.b16 %v5026, %v5025
    %v5033 = vpack.c.b16 %v5028, %v5027
    %v5034 = vpack.c.b16 %v5030, %v5029
    %v5043 = vunpack.c.l.b16 %v5015
    %v5044 = vunpack.c.l.b16 %v5016
    %v5045 = vunpack.c.l.b16 %v5017
    %v5046 = vunpack.c.l.b16 %v5018
    %v5047 = vunpack.c.l.b16 %v5019
    %v5048 = vunpack.c.l.b16 %v5020
    %v5049 = vunpack.c.l.b16 %v5021
    %v5050 = vunpack.c.l.b16 %v5022
    %v5051 = vpack.c.b16 %v5044, %v5043
    %v5052 = vpack.c.b16 %v5046, %v5045
    %v5053 = vpack.c.b16 %v5048, %v5047
    %v5054 = vpack.c.b16 %v5050, %v5049
    %v5060 = vsel %vm495, %v5031, 0
    %v5063 = vsel %vm495, %v5032, 0
    %v5066 = vsel %vm495, %v5033, 0
    %v5069 = vsel %vm495, %v5034, 0
    %5071 = vmatpush.bf16.msra.mxu0 0
    %5072 = vmatpush.bf16.msra.mxu0 0
    %5073 = vmatpush.bf16.msra.mxu0 0
    %5074 = vmatpush.bf16.msra.mxu0 0
    %5075 = vmatpush.bf16.msra.mxu0 %v5054
    %5076 = vmatpush.bf16.msra.mxu0 %v5053
    %5077 = vmatpush.bf16.msra.mxu0 %v5052
    %5078 = vmatpush.bf16.msra.mxu0 %v5051
    %5079 = vmatmul.bf16.gmra.mxu0 %v5060
    %v5080 = vpop.f32.mrf.mxu0
    %v5081 = vadd.f32 0.0, %v5080
    %v5082 = vpop.f32.mrf.mxu0
    %v5083 = vadd.f32 0.0, %v5082
    %5084 = vmatmul.bf16.gmra.mxu0 %v5063
    %v5085 = vpop.f32.mrf.mxu0
    %v5086 = vadd.f32 0.0, %v5085
    %v5087 = vpop.f32.mrf.mxu0
    %v5088 = vadd.f32 0.0, %v5087
    %5089 = vmatmul.bf16.gmra.mxu0 %v5066
    %v5090 = vpop.f32.mrf.mxu0
    %v5091 = vadd.f32 0.0, %v5090
    %v5092 = vpop.f32.mrf.mxu0
    %v5093 = vadd.f32 0.0, %v5092
    %5094 = vmatmul.bf16.gmra.mxu0 %v5069
    %v5095 = vpop.f32.mrf.mxu0
    %v5096 = vadd.f32 0.0, %v5095
    %v5097 = vpop.f32.mrf.mxu0
    %v5098 = vadd.f32 0.0, %v5097
    %5099 = vdwg.mxu0
    %v5100 = vadd.f32 %v4879, %v5081
    %v5101 = vadd.f32 %v4880, %v5083
    %v5102 = vadd.f32 %v4881, %v5086
    %v5103 = vadd.f32 %v4882, %v5088
    %v5104 = vadd.f32 %v4883, %v5091
    %v5105 = vadd.f32 %v4884, %v5093
    %v5106 = vadd.f32 %v4885, %v5096
    %v5107 = vadd.f32 %v4886, %v5098
    %v5108 = vld [vmem:[%s348] sm:$0xe]
    %v5109 = vld [vmem:[%s348 + $0x8] sm:$0xe]
    %v5110 = vld [vmem:[%s348 + $0x10] sm:$0xe]
    %v5111 = vld [vmem:[%s348 + $0x18] sm:$0xe]
    %v5112 = vld [vmem:[%s348 + $0x20] sm:$0xe]
    %v5113 = vld [vmem:[%s348 + $0x28] sm:$0xe]
    %v5114 = vld [vmem:[%s348 + $0x30] sm:$0xe]
    %v5115 = vld [vmem:[%s348 + $0x38] sm:$0xe]
    %v5132 = vrot.slane %v5108, 5
    %v5133 = vrot.slane %v5132, 4
    %v5134 = vrot.slane %v4888, 5
    %v5135 = vsel %vm1057, %v5133, %v5134
    %v5136 = vrot.slane %v5109, 5
    %v5137 = vrot.slane %v5136, 4
    %v5138 = vrot.slane %v4890, 5
    %v5139 = vsel %vm1057, %v5137, %v5138
    %v5140 = vrot.slane %v5110, 5
    %v5141 = vrot.slane %v5140, 4
    %v5142 = vrot.slane %v4892, 5
    %v5143 = vsel %vm1057, %v5141, %v5142
    %v5144 = vrot.slane %v5111, 5
    %v5145 = vrot.slane %v5144, 4
    %v5146 = vrot.slane %v4894, 5
    %v5147 = vsel %vm1057, %v5145, %v5146
    %v5148 = vrot.slane %v5112, 5
    %v5149 = vrot.slane %v5148, 4
    %v5150 = vrot.slane %v4896, 5
    %v5151 = vsel %vm1057, %v5149, %v5150
    %v5152 = vrot.slane %v5113, 5
    %v5153 = vrot.slane %v5152, 4
    %v5154 = vrot.slane %v4898, 5
    %v5155 = vsel %vm1057, %v5153, %v5154
    %v5156 = vrot.slane %v5114, 5
    %v5157 = vrot.slane %v5156, 4
    %v5158 = vrot.slane %v4900, 5
    %v5159 = vsel %vm1057, %v5157, %v5158
    %v5160 = vrot.slane %v5115, 5
    %v5161 = vrot.slane %v5160, 4
    %v5162 = vrot.slane %v4902, 5
    %v5163 = vsel %vm1057, %v5161, %v5162
    %v5164 = vld [vmem:[%s1572] sm:$0xf]
    %v5165 = vld [vmem:[%s1572 + $0x4] sm:$0xf]
    %v5166 = vld [vmem:[%s1572 + $0x8] sm:$0xf]
    %v5167 = vld [vmem:[%s1572 + $0xc] sm:$0xf]
    %v5168 = vld [vmem:[%s1572 + $0x10] sm:$0xf]
    %v5169 = vld [vmem:[%s1572 + $0x14] sm:$0xf]
    %v5170 = vld [vmem:[%s1572 + $0x18] sm:$0xf]
    %v5171 = vld [vmem:[%s1572 + $0x1c] sm:$0xf]
    %v5172 = vunpack.c.l.b16 %v5135
    %v5173 = vunpack.c.l.b16 %v5139
    %v5174 = vunpack.c.l.b16 %v5143
    %v5175 = vunpack.c.l.b16 %v5147
    %v5176 = vunpack.c.l.b16 %v5151
    %v5177 = vunpack.c.l.b16 %v5155
    %v5178 = vunpack.c.l.b16 %v5159
    %v5179 = vunpack.c.l.b16 %v5163
    %v5180 = vpack.c.b16 %v5173, %v5172
    %v5181 = vpack.c.b16 %v5175, %v5174
    %v5182 = vpack.c.b16 %v5177, %v5176
    %v5183 = vpack.c.b16 %v5179, %v5178
    %v5192 = vunpack.c.l.b16 %v5164
    %v5193 = vunpack.c.l.b16 %v5165
    %v5194 = vunpack.c.l.b16 %v5166
    %v5195 = vunpack.c.l.b16 %v5167
    %v5196 = vunpack.c.l.b16 %v5168
    %v5197 = vunpack.c.l.b16 %v5169
    %v5198 = vunpack.c.l.b16 %v5170
    %v5199 = vunpack.c.l.b16 %v5171
    %v5200 = vpack.c.b16 %v5193, %v5192
    %v5201 = vpack.c.b16 %v5195, %v5194
    %v5202 = vpack.c.b16 %v5197, %v5196
    %v5203 = vpack.c.b16 %v5199, %v5198
    %v5209 = vsel %vm495, %v5180, 0
    %v5212 = vsel %vm495, %v5181, 0
    %v5215 = vsel %vm495, %v5182, 0
    %v5218 = vsel %vm495, %v5183, 0
    %5220 = vmatpush.bf16.msra.mxu0 0
    %5221 = vmatpush.bf16.msra.mxu0 0
    %5222 = vmatpush.bf16.msra.mxu0 0
    %5223 = vmatpush.bf16.msra.mxu0 0
    %5224 = vmatpush.bf16.msra.mxu0 %v5203
    %5225 = vmatpush.bf16.msra.mxu0 %v5202
    %5226 = vmatpush.bf16.msra.mxu0 %v5201
    %5227 = vmatpush.bf16.msra.mxu0 %v5200
    %5228 = vmatmul.bf16.gmra.mxu0 %v5209
    %v5229 = vpop.f32.mrf.mxu0
    %v5230 = vadd.f32 0.0, %v5229
    %v5231 = vpop.f32.mrf.mxu0
    %v5232 = vadd.f32 0.0, %v5231
    %5233 = vmatmul.bf16.gmra.mxu0 %v5212
    %v5234 = vpop.f32.mrf.mxu0
    %v5235 = vadd.f32 0.0, %v5234
    %v5236 = vpop.f32.mrf.mxu0
    %v5237 = vadd.f32 0.0, %v5236
    %5238 = vmatmul.bf16.gmra.mxu0 %v5215
    %v5239 = vpop.f32.mrf.mxu0
    %v5240 = vadd.f32 0.0, %v5239
    %v5241 = vpop.f32.mrf.mxu0
    %v5242 = vadd.f32 0.0, %v5241
    %5243 = vmatmul.bf16.gmra.mxu0 %v5218
    %v5244 = vpop.f32.mrf.mxu0
    %v5245 = vadd.f32 0.0, %v5244
    %v5246 = vpop.f32.mrf.mxu0
    %v5247 = vadd.f32 0.0, %v5246
    %5248 = vdwg.mxu0
    %v5249 = vadd.f32 %v5100, %v5230
    %v5250 = vadd.f32 %v5101, %v5232
    %v5251 = vadd.f32 %v5102, %v5235
    %v5252 = vadd.f32 %v5103, %v5237
    %v5253 = vadd.f32 %v5104, %v5240
    %v5254 = vadd.f32 %v5105, %v5242
    %v5255 = vadd.f32 %v5106, %v5245
    %v5256 = vadd.f32 %v5107, %v5247
    %v5257 = vld [vmem:[%s1666] sm:$0xf]
    %v5258 = vld [vmem:[%s1666 + $0x8] sm:$0xf]
    %v5259 = vld [vmem:[%s1666 + $0x10] sm:$0xf]
    %v5260 = vld [vmem:[%s1666 + $0x18] sm:$0xf]
    %v5261 = vld [vmem:[%s1666 + $0x20] sm:$0xf]
    %v5262 = vld [vmem:[%s1666 + $0x28] sm:$0xf]
    %v5263 = vld [vmem:[%s1666 + $0x30] sm:$0xf]
    %v5264 = vld [vmem:[%s1666 + $0x38] sm:$0xf]
    %v5265 = vld [vmem:[%s1675] sm:$0xf]
    %v5266 = vld [vmem:[%s1675 + $0x4] sm:$0xf]
    %v5267 = vld [vmem:[%s1675 + $0x8] sm:$0xf]
    %v5268 = vld [vmem:[%s1675 + $0xc] sm:$0xf]
    %v5269 = vld [vmem:[%s1675 + $0x10] sm:$0xf]
    %v5270 = vld [vmem:[%s1675 + $0x14] sm:$0xf]
    %v5271 = vld [vmem:[%s1675 + $0x18] sm:$0xf]
    %v5272 = vld [vmem:[%s1675 + $0x1c] sm:$0xf]
    %v5281 = vunpack.c.l.b16 %v5257
    %v5282 = vunpack.c.l.b16 %v5258
    %v5283 = vunpack.c.l.b16 %v5259
    %v5284 = vunpack.c.l.b16 %v5260
    %v5285 = vunpack.c.l.b16 %v5261
    %v5286 = vunpack.c.l.b16 %v5262
    %v5287 = vunpack.c.l.b16 %v5263
    %v5288 = vunpack.c.l.b16 %v5264
    %v5289 = vpack.c.b16 %v5282, %v5281
    %v5290 = vpack.c.b16 %v5284, %v5283
    %v5291 = vpack.c.b16 %v5286, %v5285
    %v5292 = vpack.c.b16 %v5288, %v5287
    %v5301 = vunpack.c.l.b16 %v5265
    %v5302 = vunpack.c.l.b16 %v5266
    %v5303 = vunpack.c.l.b16 %v5267
    %v5304 = vunpack.c.l.b16 %v5268
    %v5305 = vunpack.c.l.b16 %v5269
    %v5306 = vunpack.c.l.b16 %v5270
    %v5307 = vunpack.c.l.b16 %v5271
    %v5308 = vunpack.c.l.b16 %v5272
    %v5309 = vpack.c.b16 %v5302, %v5301
    %v5310 = vpack.c.b16 %v5304, %v5303
    %v5311 = vpack.c.b16 %v5306, %v5305
    %v5312 = vpack.c.b16 %v5308, %v5307
    %v5318 = vsel %vm495, %v5289, 0
    %v5321 = vsel %vm495, %v5290, 0
    %v5324 = vsel %vm495, %v5291, 0
    %v5327 = vsel %vm495, %v5292, 0
    %5329 = vmatpush.bf16.msra.mxu0 0
    %5330 = vmatpush.bf16.msra.mxu0 0
    %5331 = vmatpush.bf16.msra.mxu0 0
    %5332 = vmatpush.bf16.msra.mxu0 0
    %5333 = vmatpush.bf16.msra.mxu0 %v5312
    %5334 = vmatpush.bf16.msra.mxu0 %v5311
    %5335 = vmatpush.bf16.msra.mxu0 %v5310
    %5336 = vmatpush.bf16.msra.mxu0 %v5309
    %5337 = vmatmul.bf16.gmra.mxu0 %v5318
    %v5338 = vpop.f32.mrf.mxu0
    %v5339 = vadd.f32 0.0, %v5338
    %v5340 = vpop.f32.mrf.mxu0
    %v5341 = vadd.f32 0.0, %v5340
    %5342 = vmatmul.bf16.gmra.mxu0 %v5321
    %v5343 = vpop.f32.mrf.mxu0
    %v5344 = vadd.f32 0.0, %v5343
    %v5345 = vpop.f32.mrf.mxu0
    %v5346 = vadd.f32 0.0, %v5345
    %5347 = vmatmul.bf16.gmra.mxu0 %v5324
    %v5348 = vpop.f32.mrf.mxu0
    %v5349 = vadd.f32 0.0, %v5348
    %v5350 = vpop.f32.mrf.mxu0
    %v5351 = vadd.f32 0.0, %v5350
    %5352 = vmatmul.bf16.gmra.mxu0 %v5327
    %v5353 = vpop.f32.mrf.mxu0
    %v5354 = vadd.f32 0.0, %v5353
    %v5355 = vpop.f32.mrf.mxu0
    %v5356 = vadd.f32 0.0, %v5355
    %5357 = vdwg.mxu0
    %v5358 = vadd.f32 %v5249, %v5339
    %v5359 = vadd.f32 %v5250, %v5341
    %v5360 = vadd.f32 %v5251, %v5344
    %v5361 = vadd.f32 %v5252, %v5346
    %v5362 = vadd.f32 %v5253, %v5349
    %v5363 = vadd.f32 %v5254, %v5351
    %v5364 = vadd.f32 %v5255, %v5354
    %v5365 = vadd.f32 %v5256, %v5356
    %v5366 = vld [vmem:[%s1666] sm:$0xf]
    %v5367 = vld [vmem:[%s1666 + $0x4] sm:$0x1]
    %v5368 = vld [vmem:[%s1666 + $0x8] sm:$0xf]
    %v5369 = vld [vmem:[%s1666 + $0xc] sm:$0x1]
    %v5370 = vld [vmem:[%s1666 + $0x10] sm:$0xf]
    %v5371 = vld [vmem:[%s1666 + $0x14] sm:$0x1]
    %v5372 = vld [vmem:[%s1666 + $0x18] sm:$0xf]
    %v5373 = vld [vmem:[%s1666 + $0x1c] sm:$0x1]
    %v5374 = vld [vmem:[%s1666 + $0x20] sm:$0xf]
    %v5375 = vld [vmem:[%s1666 + $0x24] sm:$0x1]
    %v5376 = vld [vmem:[%s1666 + $0x28] sm:$0xf]
    %v5377 = vld [vmem:[%s1666 + $0x2c] sm:$0x1]
    %v5378 = vld [vmem:[%s1666 + $0x30] sm:$0xf]
    %v5379 = vld [vmem:[%s1666 + $0x34] sm:$0x1]
    %v5380 = vld [vmem:[%s1666 + $0x38] sm:$0xf]
    %v5381 = vld [vmem:[%s1666 + $0x3c] sm:$0x1]
    %v5383 = vshrl.u32 %v5366, 16
    %v5385 = vrot.slane %v5383, 4
    %v5386 = vshll.u32 %v5366, 16
    %v5388 = vrot.slane %v5386, 5
    %v5389 = vor.u32 %v5385, %v5388
    %v5390 = vrot.slane %v5389, 4
    %v5392 = vshll.u32 %v5367, 16
    %v5394 = vrot.slane %v5392, 5
    %v5395 = vsel %vm747, %v5390, %v5394
    %v5397 = vshrl.u32 %v5368, 16
    %v5399 = vrot.slane %v5397, 4
    %v5400 = vshll.u32 %v5368, 16
    %v5402 = vrot.slane %v5400, 5
    %v5403 = vor.u32 %v5399, %v5402
    %v5404 = vrot.slane %v5403, 4
    %v5406 = vshll.u32 %v5369, 16
    %v5408 = vrot.slane %v5406, 5
    %v5409 = vsel %vm747, %v5404, %v5408
    %v5411 = vshrl.u32 %v5370, 16
    %v5413 = vrot.slane %v5411, 4
    %v5414 = vshll.u32 %v5370, 16
    %v5416 = vrot.slane %v5414, 5
    %v5417 = vor.u32 %v5413, %v5416
    %v5418 = vrot.slane %v5417, 4
    %v5420 = vshll.u32 %v5371, 16
    %v5422 = vrot.slane %v5420, 5
    %v5423 = vsel %vm747, %v5418, %v5422
    %v5425 = vshrl.u32 %v5372, 16
    %v5427 = vrot.slane %v5425, 4
    %v5428 = vshll.u32 %v5372, 16
    %v5430 = vrot.slane %v5428, 5
    %v5431 = vor.u32 %v5427, %v5430
    %v5432 = vrot.slane %v5431, 4
    %v5434 = vshll.u32 %v5373, 16
    %v5436 = vrot.slane %v5434, 5
    %v5437 = vsel %vm747, %v5432, %v5436
    %v5439 = vshrl.u32 %v5374, 16
    %v5441 = vrot.slane %v5439, 4
    %v5442 = vshll.u32 %v5374, 16
    %v5444 = vrot.slane %v5442, 5
    %v5445 = vor.u32 %v5441, %v5444
    %v5446 = vrot.slane %v5445, 4
    %v5448 = vshll.u32 %v5375, 16
    %v5450 = vrot.slane %v5448, 5
    %v5451 = vsel %vm747, %v5446, %v5450
    %v5453 = vshrl.u32 %v5376, 16
    %v5455 = vrot.slane %v5453, 4
    %v5456 = vshll.u32 %v5376, 16
    %v5458 = vrot.slane %v5456, 5
    %v5459 = vor.u32 %v5455, %v5458
    %v5460 = vrot.slane %v5459, 4
    %v5462 = vshll.u32 %v5377, 16
    %v5464 = vrot.slane %v5462, 5
    %v5465 = vsel %vm747, %v5460, %v5464
    %v5467 = vshrl.u32 %v5378, 16
    %v5469 = vrot.slane %v5467, 4
    %v5470 = vshll.u32 %v5378, 16
    %v5472 = vrot.slane %v5470, 5
    %v5473 = vor.u32 %v5469, %v5472
    %v5474 = vrot.slane %v5473, 4
    %v5476 = vshll.u32 %v5379, 16
    %v5478 = vrot.slane %v5476, 5
    %v5479 = vsel %vm747, %v5474, %v5478
    %v5481 = vshrl.u32 %v5380, 16
    %v5483 = vrot.slane %v5481, 4
    %v5484 = vshll.u32 %v5380, 16
    %v5486 = vrot.slane %v5484, 5
    %v5487 = vor.u32 %v5483, %v5486
    %v5488 = vrot.slane %v5487, 4
    %v5490 = vshll.u32 %v5381, 16
    %v5492 = vrot.slane %v5490, 5
    %v5493 = vsel %vm747, %v5488, %v5492
    %v5494 = vld [vmem:[%s1905] sm:$0xf]
    %v5495 = vld [vmem:[%s1905 + $0x4] sm:$0xf]
    %v5496 = vld [vmem:[%s1905 + $0x8] sm:$0xf]
    %v5497 = vld [vmem:[%s1905 + $0xc] sm:$0xf]
    %v5498 = vld [vmem:[%s1905 + $0x10] sm:$0xf]
    %v5499 = vld [vmem:[%s1905 + $0x14] sm:$0xf]
    %v5500 = vld [vmem:[%s1905 + $0x18] sm:$0xf]
    %v5501 = vld [vmem:[%s1905 + $0x1c] sm:$0xf]
    %v5502 = vunpack.c.l.b16 %v5395
    %v5503 = vunpack.c.l.b16 %v5409
    %v5504 = vunpack.c.l.b16 %v5423
    %v5505 = vunpack.c.l.b16 %v5437
    %v5506 = vunpack.c.l.b16 %v5451
    %v5507 = vunpack.c.l.b16 %v5465
    %v5508 = vunpack.c.l.b16 %v5479
    %v5509 = vunpack.c.l.b16 %v5493
    %v5510 = vpack.c.b16 %v5503, %v5502
    %v5511 = vpack.c.b16 %v5505, %v5504
    %v5512 = vpack.c.b16 %v5507, %v5506
    %v5513 = vpack.c.b16 %v5509, %v5508
    %v5522 = vunpack.c.l.b16 %v5494
    %v5523 = vunpack.c.l.b16 %v5495
    %v5524 = vunpack.c.l.b16 %v5496
    %v5525 = vunpack.c.l.b16 %v5497
    %v5526 = vunpack.c.l.b16 %v5498
    %v5527 = vunpack.c.l.b16 %v5499
    %v5528 = vunpack.c.l.b16 %v5500
    %v5529 = vunpack.c.l.b16 %v5501
    %v5530 = vpack.c.b16 %v5523, %v5522
    %v5531 = vpack.c.b16 %v5525, %v5524
    %v5532 = vpack.c.b16 %v5527, %v5526
    %v5533 = vpack.c.b16 %v5529, %v5528
    %v5539 = vsel %vm495, %v5510, 0
    %v5542 = vsel %vm495, %v5511, 0
    %v5545 = vsel %vm495, %v5512, 0
    %v5548 = vsel %vm495, %v5513, 0
    %5550 = vmatpush.bf16.msra.mxu0 0
    %5551 = vmatpush.bf16.msra.mxu0 0
    %5552 = vmatpush.bf16.msra.mxu0 0
    %5553 = vmatpush.bf16.msra.mxu0 0
    %5554 = vmatpush.bf16.msra.mxu0 %v5533
    %5555 = vmatpush.bf16.msra.mxu0 %v5532
    %5556 = vmatpush.bf16.msra.mxu0 %v5531
    %5557 = vmatpush.bf16.msra.mxu0 %v5530
    %5558 = vmatmul.bf16.gmra.mxu0 %v5539
    %v5559 = vpop.f32.mrf.mxu0
    %v5560 = vadd.f32 0.0, %v5559
    %v5561 = vpop.f32.mrf.mxu0
    %v5562 = vadd.f32 0.0, %v5561
    %5563 = vmatmul.bf16.gmra.mxu0 %v5542
    %v5564 = vpop.f32.mrf.mxu0
    %v5565 = vadd.f32 0.0, %v5564
    %v5566 = vpop.f32.mrf.mxu0
    %v5567 = vadd.f32 0.0, %v5566
    %5568 = vmatmul.bf16.gmra.mxu0 %v5545
    %v5569 = vpop.f32.mrf.mxu0
    %v5570 = vadd.f32 0.0, %v5569
    %v5571 = vpop.f32.mrf.mxu0
    %v5572 = vadd.f32 0.0, %v5571
    %5573 = vmatmul.bf16.gmra.mxu0 %v5548
    %v5574 = vpop.f32.mrf.mxu0
    %v5575 = vadd.f32 0.0, %v5574
    %v5576 = vpop.f32.mrf.mxu0
    %v5577 = vadd.f32 0.0, %v5576
    %5578 = vdwg.mxu0
    %v5579 = vadd.f32 %v5358, %v5560
    %v5580 = vadd.f32 %v5359, %v5562
    %v5581 = vadd.f32 %v5360, %v5565
    %v5582 = vadd.f32 %v5361, %v5567
    %v5583 = vadd.f32 %v5362, %v5570
    %v5584 = vadd.f32 %v5363, %v5572
    %v5585 = vadd.f32 %v5364, %v5575
    %v5586 = vadd.f32 %v5365, %v5577
    %v5587 = vld [vmem:[%s1666] sm:$0xe]
    %v5588 = vld [vmem:[%s1666 + $0x8] sm:$0xe]
    %v5589 = vld [vmem:[%s1666 + $0x10] sm:$0xe]
    %v5590 = vld [vmem:[%s1666 + $0x18] sm:$0xe]
    %v5591 = vld [vmem:[%s1666 + $0x20] sm:$0xe]
    %v5592 = vld [vmem:[%s1666 + $0x28] sm:$0xe]
    %v5593 = vld [vmem:[%s1666 + $0x30] sm:$0xe]
    %v5594 = vld [vmem:[%s1666 + $0x38] sm:$0xe]
    %v5611 = vrot.slane %v5587, 5
    %v5612 = vrot.slane %v5611, 4
    %v5613 = vrot.slane %v5367, 5
    %v5614 = vsel %vm1057, %v5612, %v5613
    %v5615 = vrot.slane %v5588, 5
    %v5616 = vrot.slane %v5615, 4
    %v5617 = vrot.slane %v5369, 5
    %v5618 = vsel %vm1057, %v5616, %v5617
    %v5619 = vrot.slane %v5589, 5
    %v5620 = vrot.slane %v5619, 4
    %v5621 = vrot.slane %v5371, 5
    %v5622 = vsel %vm1057, %v5620, %v5621
    %v5623 = vrot.slane %v5590, 5
    %v5624 = vrot.slane %v5623, 4
    %v5625 = vrot.slane %v5373, 5
    %v5626 = vsel %vm1057, %v5624, %v5625
    %v5627 = vrot.slane %v5591, 5
    %v5628 = vrot.slane %v5627, 4
    %v5629 = vrot.slane %v5375, 5
    %v5630 = vsel %vm1057, %v5628, %v5629
    %v5631 = vrot.slane %v5592, 5
    %v5632 = vrot.slane %v5631, 4
    %v5633 = vrot.slane %v5377, 5
    %v5634 = vsel %vm1057, %v5632, %v5633
    %v5635 = vrot.slane %v5593, 5
    %v5636 = vrot.slane %v5635, 4
    %v5637 = vrot.slane %v5379, 5
    %v5638 = vsel %vm1057, %v5636, %v5637
    %v5639 = vrot.slane %v5594, 5
    %v5640 = vrot.slane %v5639, 4
    %v5641 = vrot.slane %v5381, 5
    %v5642 = vsel %vm1057, %v5640, %v5641
    %v5643 = vld [vmem:[%s2055] sm:$0xf]
    %v5644 = vld [vmem:[%s2055 + $0x4] sm:$0xf]
    %v5645 = vld [vmem:[%s2055 + $0x8] sm:$0xf]
    %v5646 = vld [vmem:[%s2055 + $0xc] sm:$0xf]
    %v5647 = vld [vmem:[%s2055 + $0x10] sm:$0xf]
    %v5648 = vld [vmem:[%s2055 + $0x14] sm:$0xf]
    %v5649 = vld [vmem:[%s2055 + $0x18] sm:$0xf]
    %v5650 = vld [vmem:[%s2055 + $0x1c] sm:$0xf]
    %v5651 = vunpack.c.l.b16 %v5614
    %v5652 = vunpack.c.l.b16 %v5618
    %v5653 = vunpack.c.l.b16 %v5622
    %v5654 = vunpack.c.l.b16 %v5626
    %v5655 = vunpack.c.l.b16 %v5630
    %v5656 = vunpack.c.l.b16 %v5634
    %v5657 = vunpack.c.l.b16 %v5638
    %v5658 = vunpack.c.l.b16 %v5642
    %v5659 = vpack.c.b16 %v5652, %v5651
    %v5660 = vpack.c.b16 %v5654, %v5653
    %v5661 = vpack.c.b16 %v5656, %v5655
    %v5662 = vpack.c.b16 %v5658, %v5657
    %v5671 = vunpack.c.l.b16 %v5643
    %v5672 = vunpack.c.l.b16 %v5644
    %v5673 = vunpack.c.l.b16 %v5645
    %v5674 = vunpack.c.l.b16 %v5646
    %v5675 = vunpack.c.l.b16 %v5647
    %v5676 = vunpack.c.l.b16 %v5648
    %v5677 = vunpack.c.l.b16 %v5649
    %v5678 = vunpack.c.l.b16 %v5650
    %v5679 = vpack.c.b16 %v5672, %v5671
    %v5680 = vpack.c.b16 %v5674, %v5673
    %v5681 = vpack.c.b16 %v5676, %v5675
    %v5682 = vpack.c.b16 %v5678, %v5677
    %v5688 = vsel %vm495, %v5659, 0
    %v5691 = vsel %vm495, %v5660, 0
    %v5694 = vsel %vm495, %v5661, 0
    %v5697 = vsel %vm495, %v5662, 0
    %5699 = vmatpush.bf16.msra.mxu0 0
    %5700 = vmatpush.bf16.msra.mxu0 0
    %5701 = vmatpush.bf16.msra.mxu0 0
    %5702 = vmatpush.bf16.msra.mxu0 0
    %5703 = vmatpush.bf16.msra.mxu0 %v5682
    %5704 = vmatpush.bf16.msra.mxu0 %v5681
    %5705 = vmatpush.bf16.msra.mxu0 %v5680
    %5706 = vmatpush.bf16.msra.mxu0 %v5679
    %5707 = vmatmul.bf16.gmra.mxu0 %v5688
    %v5708 = vpop.f32.mrf.mxu0
    %v5709 = vadd.f32 0.0, %v5708
    %v5710 = vpop.f32.mrf.mxu0
    %v5711 = vadd.f32 0.0, %v5710
    %5712 = vmatmul.bf16.gmra.mxu0 %v5691
    %v5713 = vpop.f32.mrf.mxu0
    %v5714 = vadd.f32 0.0, %v5713
    %v5715 = vpop.f32.mrf.mxu0
    %v5716 = vadd.f32 0.0, %v5715
    %5717 = vmatmul.bf16.gmra.mxu0 %v5694
    %v5718 = vpop.f32.mrf.mxu0
    %v5719 = vadd.f32 0.0, %v5718
    %v5720 = vpop.f32.mrf.mxu0
    %v5721 = vadd.f32 0.0, %v5720
    %5722 = vmatmul.bf16.gmra.mxu0 %v5697
    %v5723 = vpop.f32.mrf.mxu0
    %v5724 = vadd.f32 0.0, %v5723
    %v5725 = vpop.f32.mrf.mxu0
    %v5726 = vadd.f32 0.0, %v5725
    %5727 = vdwg.mxu0
    %v5728 = vadd.f32 %v5579, %v5709
    %v5729 = vadd.f32 %v5580, %v5711
    %v5730 = vadd.f32 %v5581, %v5714
    %v5731 = vadd.f32 %v5582, %v5716
    %v5732 = vadd.f32 %v5583, %v5719
    %v5733 = vadd.f32 %v5584, %v5721
    %v5734 = vadd.f32 %v5585, %v5724
    %v5735 = vadd.f32 %v5586, %v5726
    %v5736 = vadd.f32 %v5728, %v2150
    %v5737 = vadd.f32 %v5729, %v2150
    %v5738 = vadd.f32 %v5730, %v2150
    %v5739 = vadd.f32 %v5731, %v2150
    %v5740 = vadd.f32 %v5732, %v2150
    %v5741 = vadd.f32 %v5733, %v2150
    %v5742 = vadd.f32 %v5734, %v2150
    %v5743 = vadd.f32 %v5735, %v2150
    %v5744 = vmax.f32 %v5736, 0.0
    %v5745 = vmax.f32 %v5737, 0.0
    %v5746 = vmax.f32 %v5738, 0.0
    %v5747 = vmax.f32 %v5739, 0.0
    %v5748 = vmax.f32 %v5740, 0.0
    %v5749 = vmax.f32 %v5741, 0.0
    %v5750 = vmax.f32 %v5742, 0.0
    %v5751 = vmax.f32 %v5743, 0.0
    %v5752 = vpack.c.bf16 %v5745, %v5744
    %v5753 = vpack.c.bf16 %v5747, %v5746
    %v5754 = vpack.c.bf16 %v5749, %v5748
    %v5755 = vpack.c.bf16 %v5751, %v5750
    %5756 = vmatpush.bf16.msra.mxu0 0
    %5757 = vmatpush.bf16.msra.mxu0 0
    %5758 = vmatpush.bf16.msra.mxu0 0
    %5759 = vmatpush.bf16.msra.mxu0 0
    %5760 = vmatpush.bf16.msra.mxu0 %v5755
    %5761 = vmatpush.bf16.msra.mxu0 %v5754
    %5762 = vmatpush.bf16.msra.mxu0 %v5753
    %5763 = vmatpush.bf16.msra.mxu0 %v5752
    %5764 = vmatmul.bf16.gmra.mxu0 %v2193
    %v5765 = vpop.f32.mrf.mxu0
    %v5766 = vadd.f32 0.0, %v5765
    %v5767 = vpop.f32.mrf.mxu0
    %v5768 = vadd.f32 0.0, %v5767
    %5769 = vmatmul.bf16.gmra.mxu0 %v2196
    %v5770 = vpop.f32.mrf.mxu0
    %v5771 = vadd.f32 0.0, %v5770
    %v5772 = vpop.f32.mrf.mxu0
    %v5773 = vadd.f32 0.0, %v5772
    %5774 = vmatmul.bf16.gmra.mxu0 %v2199
    %v5775 = vpop.f32.mrf.mxu0
    %v5776 = vadd.f32 0.0, %v5775
    %v5777 = vpop.f32.mrf.mxu0
    %v5778 = vadd.f32 0.0, %v5777
    %5779 = vmatmul.bf16.gmra.mxu0 %v2202
    %v5780 = vpop.f32.mrf.mxu0
    %v5781 = vadd.f32 0.0, %v5780
    %v5782 = vpop.f32.mrf.mxu0
    %v5783 = vadd.f32 0.0, %v5782
    %5784 = vdwg.mxu0
    %v5785 = vpack.c.bf16 %v5768, %v5766
    %v5786 = vld [vmem:[%s11] sm:$0xf]
    %v5787 = vld [vmem:[%s11 + $0x4] sm:$0xf]
    %v5788 = vld [vmem:[%s11 + $0x8] sm:$0xf]
    %v5789 = vld [vmem:[%s11 + $0xc] sm:$0xf]
    %v5790 = vpack.c.bf16 %v5773, %v5771
    %v5791 = vld [vmem:[%s2239] sm:$0xf]
    %v5792 = vld [vmem:[%s2239 + $0x4] sm:$0xf]
    %v5793 = vld [vmem:[%s2239 + $0x8] sm:$0xf]
    %v5794 = vld [vmem:[%s2239 + $0xc] sm:$0xf]
    %v5799 = vunpack.c.l.b16 %v5791
    %v5800 = vunpack.c.l.b16 %v5792
    %v5801 = vunpack.c.l.b16 %v5793
    %v5802 = vunpack.c.l.b16 %v5794
    %v5803 = vpack.c.b16 %v5800, %v5799
    %v5804 = vpack.c.b16 %v5802, %v5801
    %v5808 = vsel %vm2256, %v5790, 0
    %5810 = vmatpush.bf16.msra.mxu0 0
    %5811 = vmatpush.bf16.msra.mxu0 0
    %5812 = vmatpush.bf16.msra.mxu0 0
    %5813 = vmatpush.bf16.msra.mxu0 0
    %5814 = vmatpush.bf16.msra.mxu0 0
    %5815 = vmatpush.bf16.msra.mxu0 0
    %5816 = vmatpush.bf16.msra.mxu0 %v5804
    %5817 = vmatpush.bf16.msra.mxu0 %v5803
    %5818 = vmatmul.bf16.gmra.mxu0 %v5808
    %v5819 = vpop.f32.mrf.mxu0
    %v5820 = vadd.f32 0.0, %v5819
    %v5821 = vpop.f32.mrf.mxu0
    %v5822 = vadd.f32 0.0, %v5821
    %5823 = vdwg.mxu0
    %v5828 = vunpack.c.l.b16 %v5786
    %v5829 = vunpack.c.l.b16 %v5787
    %v5830 = vunpack.c.l.b16 %v5788
    %v5831 = vunpack.c.l.b16 %v5789
    %v5832 = vpack.c.b16 %v5829, %v5828
    %v5833 = vpack.c.b16 %v5831, %v5830
    %v5837 = vsel %vm2256, %v5785, 0
    %5839 = vmatpush.bf16.msra.mxu0 0
    %5840 = vmatpush.bf16.msra.mxu0 0
    %5841 = vmatpush.bf16.msra.mxu0 0
    %5842 = vmatpush.bf16.msra.mxu0 0
    %5843 = vmatpush.bf16.msra.mxu0 0
    %5844 = vmatpush.bf16.msra.mxu0 0
    %5845 = vmatpush.bf16.msra.mxu0 %v5833
    %5846 = vmatpush.bf16.msra.mxu0 %v5832
    %5847 = vmatmul.bf16.gmra.mxu0 %v5837
    %v5848 = vpop.f32.mrf.mxu0
    %v5849 = vadd.f32 %v5820, %v5848
    %v5850 = vpop.f32.mrf.mxu0
    %v5851 = vadd.f32 %v5822, %v5850
    %5852 = vdwg.mxu0
    %v5853 = vpack.c.bf16 %v5778, %v5776
    %v5854 = vld [vmem:[%s2304] sm:$0xf]
    %v5855 = vld [vmem:[%s2304 + $0x4] sm:$0xf]
    %v5856 = vld [vmem:[%s2304 + $0x8] sm:$0xf]
    %v5857 = vld [vmem:[%s2304 + $0xc] sm:$0xf]
    %v5862 = vunpack.c.l.b16 %v5854
    %v5863 = vunpack.c.l.b16 %v5855
    %v5864 = vunpack.c.l.b16 %v5856
    %v5865 = vunpack.c.l.b16 %v5857
    %v5866 = vpack.c.b16 %v5863, %v5862
    %v5867 = vpack.c.b16 %v5865, %v5864
    %v5871 = vsel %vm2256, %v5853, 0
    %5873 = vmatpush.bf16.msra.mxu0 0
    %5874 = vmatpush.bf16.msra.mxu0 0
    %5875 = vmatpush.bf16.msra.mxu0 0
    %5876 = vmatpush.bf16.msra.mxu0 0
    %5877 = vmatpush.bf16.msra.mxu0 0
    %5878 = vmatpush.bf16.msra.mxu0 0
    %5879 = vmatpush.bf16.msra.mxu0 %v5867
    %5880 = vmatpush.bf16.msra.mxu0 %v5866
    %5881 = vmatmul.bf16.gmra.mxu0 %v5871
    %v5882 = vpop.f32.mrf.mxu0
    %v5883 = vadd.f32 0.0, %v5882
    %v5884 = vpop.f32.mrf.mxu0
    %v5885 = vadd.f32 0.0, %v5884
    %5886 = vdwg.mxu0
    %v5887 = vadd.f32 %v5849, %v5883
    %v5888 = vadd.f32 %v5851, %v5885
    %v5889 = vpack.c.bf16 %v5783, %v5781
    %v5890 = vld [vmem:[%s2341] sm:$0xf]
    %v5891 = vld [vmem:[%s2341 + $0x4] sm:$0xf]
    %v5892 = vld [vmem:[%s2341 + $0x8] sm:$0xf]
    %v5893 = vld [vmem:[%s2341 + $0xc] sm:$0xf]
    %v5898 = vunpack.c.l.b16 %v5890
    %v5899 = vunpack.c.l.b16 %v5891
    %v5900 = vunpack.c.l.b16 %v5892
    %v5901 = vunpack.c.l.b16 %v5893
    %v5902 = vpack.c.b16 %v5899, %v5898
    %v5903 = vpack.c.b16 %v5901, %v5900
    %v5907 = vsel %vm2256, %v5889, 0
    %5909 = vmatpush.bf16.msra.mxu0 0
    %5910 = vmatpush.bf16.msra.mxu0 0
    %5911 = vmatpush.bf16.msra.mxu0 0
    %5912 = vmatpush.bf16.msra.mxu0 0
    %5913 = vmatpush.bf16.msra.mxu0 0
    %5914 = vmatpush.bf16.msra.mxu0 0
    %5915 = vmatpush.bf16.msra.mxu0 %v5903
    %5916 = vmatpush.bf16.msra.mxu0 %v5902
    %5917 = vmatmul.bf16.gmra.mxu0 %v5907
    %v5918 = vpop.f32.mrf.mxu0
    %v5919 = vadd.f32 0.0, %v5918
    %v5920 = vpop.f32.mrf.mxu0
    %v5921 = vadd.f32 0.0, %v5920
    %5922 = vdwg.mxu0
    %v5923 = vadd.f32 %v5887, %v5919
    %v5924 = vadd.f32 %v5888, %v5921
    %v5925 = vadd.f32 %v5923, %v2378
    %v5926 = vadd.f32 %v5924, %v2378
    %v5927 = vmax.f32 %v5925, 0.0
    %v5928 = vmax.f32 %v5926, 0.0
    %v5929 = vadd.f32 %v5927, %v4321
    %v5930 = vadd.f32 %v5928, %v4322
    %v5931 = vpack.c.bf16 %v5929, %v5929
    %v5932 = vpack.c.bf16 %v5930, %v5930
    %v5934 = vshll.u32 %v5931, 16
    %v5936 = vrot.slane %v5934, 5
    %v5937 = vshrl.u32 %v5931, 16
    %v5939 = vrot.slane %v5937, 4
    %v5940 = vor.u32 %v5939, %v5936
    %v5941 = vrot.slane %v5940, 4
    %v5944 = vld [vmem:[#allocation3] sm:$0x8]
    %v5945 = vsel %vm2401, %v5936, %v5944
    %5946 = vst [vmem:[#allocation3] sm:$0x8] %v5945
    %v5947 = vld [vmem:[#allocation3 + $0x4] sm:$0x3]
    %v5948 = vsel %vm2407, %v5941, %v5947
    %5949 = vst [vmem:[#allocation3 + $0x4] sm:$0x3] %v5948
    %v5950 = vrot.slane %v5937, 7
    %v5951 = vor.u32 %v5950, %v5934
    %v5952 = vrot.slane %v5950, 4
    %v5955 = vld [vmem:[#allocation3 + $0x4] sm:$0xc]
    %v5956 = vsel %vm2418, %v5951, %v5955
    %5957 = vst [vmem:[#allocation3 + $0x4] sm:$0xc] %v5956
    %v5958 = vld [vmem:[#allocation3 + $0x8] sm:$0x1]
    %v5959 = vsel %vm70, %v5952, %v5958
    %5960 = vst [vmem:[#allocation3 + $0x8] sm:$0x1] %v5959
    %v5962 = vshrl.u32 %v5932, 16
    %v5964 = vrot.slane %v5962, 6
    %v5965 = vshll.u32 %v5932, 16
    %v5967 = vrot.slane %v5965, 7
    %v5968 = vor.u32 %v5964, %v5967
    %v5970 = vld [vmem:[#allocation3 + $0x8] sm:$0xe]
    %v5971 = vsel %vm2436, %v5968, %v5970
    %5972 = vst [vmem:[#allocation3 + $0x8] sm:$0xe] %v5971
    %v5973 = vrot.slane %v5962, 5
    %v5974 = vrot.slane %v5965, 6
    %v5975 = vor.u32 %v5973, %v5974
    %v5976 = vrot.slane %v5975, 4
    %v5978 = vld [vmem:[#allocation3 + $0xc] sm:$0x7]
    %v5979 = vsel %vm2447, %v5976, %v5978
    %5980 = vst [vmem:[#allocation3 + $0xc] sm:$0x7] %v5979
    %s5981 = scalar_lea.vmem %s2, 24
    %v5982 = vld [vmem:[%s5981] sm:$0xff]
    %v5983 = vld [vmem:[%s5981 + $0x8] sm:$0xff]
    %v5984 = vld [vmem:[%s5981 + $0x10] sm:$0x3f]
    %v5985 = vld [vmem:[#allocation3] sm:$0xf]
    %v5986 = vld [vmem:[#allocation3 + $0x4] sm:$0xf]
    %v5987 = vld [vmem:[#allocation3 + $0x8] sm:$0x7]
    %v5988 = vld [vmem:[%s13] sm:$0xf]
    %v5989 = vld [vmem:[%s13 + $0x4] sm:$0xf]
    %v5990 = vld [vmem:[%s13 + $0x8] sm:$0xf]
    %v5991 = vld [vmem:[%s13 + $0xc] sm:$0xf]
    %v5992 = vld [vmem:[%s13 + $0x10] sm:$0xf]
    %v5993 = vld [vmem:[%s13 + $0x14] sm:$0xf]
    %v5994 = vld [vmem:[%s13 + $0x18] sm:$0xf]
    %v5995 = vld [vmem:[%s13 + $0x1c] sm:$0xf]
    %v5999 = vunpack.c.l.b16 %v5985
    %v6000 = vunpack.c.l.b16 %v5986
    %v6001 = vunpack.c.l.b16 %v5987
    %v6002 = vpack.c.b16 %v6000, %v5999
    %v6003 = vpack.c.b16 %v6001, %v6001
    %v6012 = vunpack.c.l.b16 %v5988
    %v6013 = vunpack.c.l.b16 %v5989
    %v6014 = vunpack.c.l.b16 %v5990
    %v6015 = vunpack.c.l.b16 %v5991
    %v6016 = vunpack.c.l.b16 %v5992
    %v6017 = vunpack.c.l.b16 %v5993
    %v6018 = vunpack.c.l.b16 %v5994
    %v6019 = vunpack.c.l.b16 %v5995
    %v6020 = vpack.c.b16 %v6013, %v6012
    %v6021 = vpack.c.b16 %v6015, %v6014
    %v6022 = vpack.c.b16 %v6017, %v6016
    %v6023 = vpack.c.b16 %v6019, %v6018
    %v6029 = vsel %vm495, %v6002, 0
    %v6032 = vsel %vm495, %v6003, 0
    %6034 = vmatpush.bf16.msra.mxu0 0
    %6035 = vmatpush.bf16.msra.mxu0 0
    %6036 = vmatpush.bf16.msra.mxu0 0
    %6037 = vmatpush.bf16.msra.mxu0 0
    %6038 = vmatpush.bf16.msra.mxu0 %v6023
    %6039 = vmatpush.bf16.msra.mxu0 %v6022
    %6040 = vmatpush.bf16.msra.mxu0 %v6021
    %6041 = vmatpush.bf16.msra.mxu0 %v6020
    %6042 = vmatmul.bf16.gmra.mxu0 %v6029
    %v6043 = vpop.f32.mrf.mxu0
    %v6044 = vadd.f32 0.0, %v6043
    %v6045 = vpop.f32.mrf.mxu0
    %v6046 = vadd.f32 0.0, %v6045
    %6047 = vmatmul.bf16.gmra.mxu0 %v6032
    %v6048 = vpop.f32.mrf.mxu0
    %v6049 = vadd.f32 0.0, %v6048
    %v6050 = vpop.f32.mrf.mxu0
    %6051 = vdwg.mxu0
    %v6052 = vadd.f32 %v5982, %v6044
    %v6053 = vadd.f32 %v5983, %v6046
    %v6054 = vadd.f32 %v5984, %v6049
    %v6055 = vld [vmem:[#allocation3 + $0x8] sm:$0xf]
    %v6056 = vld [vmem:[%s2525] sm:$0xf]
    %v6057 = vld [vmem:[%s2525 + $0x4] sm:$0xf]
    %v6058 = vld [vmem:[%s2525 + $0x8] sm:$0xf]
    %v6059 = vld [vmem:[%s2525 + $0xc] sm:$0xf]
    %v6060 = vld [vmem:[%s2525 + $0x10] sm:$0xf]
    %v6061 = vld [vmem:[%s2525 + $0x14] sm:$0xf]
    %v6062 = vld [vmem:[%s2525 + $0x18] sm:$0xf]
    %v6063 = vld [vmem:[%s2525 + $0x1c] sm:$0xf]
    %v6065 = vunpack.c.l.b16 %v6055
    %v6066 = vpack.c.b16 %v6065, %v6065
    %v6067 = vshrl.u32 %v6002, 16
    %v6069 = vshll.u32 %v6002, 16
    %v6071 = vrot.slane %v6069, 1
    %v6072 = vor.u32 %v6067, %v6071
    %v6074 = vshll.u32 %v6066, 16
    %v6076 = vrot.slane %v6074, 1
    %v6077 = vsel %vm2537, %v6072, %v6076
    %v6078 = vshrl.u32 %v6066, 16
    %v6080 = vor.u32 %v6078, %v6076
    %v6089 = vunpack.c.l.b16 %v6056
    %v6090 = vunpack.c.l.b16 %v6057
    %v6091 = vunpack.c.l.b16 %v6058
    %v6092 = vunpack.c.l.b16 %v6059
    %v6093 = vunpack.c.l.b16 %v6060
    %v6094 = vunpack.c.l.b16 %v6061
    %v6095 = vunpack.c.l.b16 %v6062
    %v6096 = vunpack.c.l.b16 %v6063
    %v6097 = vpack.c.b16 %v6090, %v6089
    %v6098 = vpack.c.b16 %v6092, %v6091
    %v6099 = vpack.c.b16 %v6094, %v6093
    %v6100 = vpack.c.b16 %v6096, %v6095
    %v6106 = vsel %vm495, %v6077, 0
    %v6109 = vsel %vm495, %v6080, 0
    %6111 = vmatpush.bf16.msra.mxu0 0
    %6112 = vmatpush.bf16.msra.mxu0 0
    %6113 = vmatpush.bf16.msra.mxu0 0
    %6114 = vmatpush.bf16.msra.mxu0 0
    %6115 = vmatpush.bf16.msra.mxu0 %v6100
    %6116 = vmatpush.bf16.msra.mxu0 %v6099
    %6117 = vmatpush.bf16.msra.mxu0 %v6098
    %6118 = vmatpush.bf16.msra.mxu0 %v6097
    %6119 = vmatmul.bf16.gmra.mxu0 %v6106
    %v6120 = vpop.f32.mrf.mxu0
    %v6121 = vadd.f32 0.0, %v6120
    %v6122 = vpop.f32.mrf.mxu0
    %v6123 = vadd.f32 0.0, %v6122
    %6124 = vmatmul.bf16.gmra.mxu0 %v6109
    %v6125 = vpop.f32.mrf.mxu0
    %v6126 = vadd.f32 0.0, %v6125
    %v6127 = vpop.f32.mrf.mxu0
    %6128 = vdwg.mxu0
    %v6129 = vadd.f32 %v6052, %v6121
    %v6130 = vadd.f32 %v6053, %v6123
    %v6131 = vadd.f32 %v6054, %v6126
    %v6132 = vld [vmem:[#allocation3] sm:$0xe]
    %v6133 = vld [vmem:[%s2604] sm:$0xf]
    %v6134 = vld [vmem:[%s2604 + $0x4] sm:$0xf]
    %v6135 = vld [vmem:[%s2604 + $0x8] sm:$0xf]
    %v6136 = vld [vmem:[%s2604 + $0xc] sm:$0xf]
    %v6137 = vld [vmem:[%s2604 + $0x10] sm:$0xf]
    %v6138 = vld [vmem:[%s2604 + $0x14] sm:$0xf]
    %v6139 = vld [vmem:[%s2604 + $0x18] sm:$0xf]
    %v6140 = vld [vmem:[%s2604 + $0x1c] sm:$0xf]
    %v6142 = vunpack.c.l.b16 %v6132
    %v6143 = vpack.c.b16 %v6000, %v6142
    %v6144 = vrot.slane %v6143, 1
    %v6145 = vrot.slane %v6066, 1
    %v6146 = vsel %vm2616, %v6144, %v6145
    %v6155 = vunpack.c.l.b16 %v6133
    %v6156 = vunpack.c.l.b16 %v6134
    %v6157 = vunpack.c.l.b16 %v6135
    %v6158 = vunpack.c.l.b16 %v6136
    %v6159 = vunpack.c.l.b16 %v6137
    %v6160 = vunpack.c.l.b16 %v6138
    %v6161 = vunpack.c.l.b16 %v6139
    %v6162 = vunpack.c.l.b16 %v6140
    %v6163 = vpack.c.b16 %v6156, %v6155
    %v6164 = vpack.c.b16 %v6158, %v6157
    %v6165 = vpack.c.b16 %v6160, %v6159
    %v6166 = vpack.c.b16 %v6162, %v6161
    %v6172 = vsel %vm495, %v6146, 0
    %v6175 = vsel %vm495, %v6145, 0
    %6177 = vmatpush.bf16.msra.mxu0 0
    %6178 = vmatpush.bf16.msra.mxu0 0
    %6179 = vmatpush.bf16.msra.mxu0 0
    %6180 = vmatpush.bf16.msra.mxu0 0
    %6181 = vmatpush.bf16.msra.mxu0 %v6166
    %6182 = vmatpush.bf16.msra.mxu0 %v6165
    %6183 = vmatpush.bf16.msra.mxu0 %v6164
    %6184 = vmatpush.bf16.msra.mxu0 %v6163
    %6185 = vmatmul.bf16.gmra.mxu0 %v6172
    %v6186 = vpop.f32.mrf.mxu0
    %v6187 = vadd.f32 0.0, %v6186
    %v6188 = vpop.f32.mrf.mxu0
    %v6189 = vadd.f32 0.0, %v6188
    %6190 = vmatmul.bf16.gmra.mxu0 %v6175
    %v6191 = vpop.f32.mrf.mxu0
    %v6192 = vadd.f32 0.0, %v6191
    %v6193 = vpop.f32.mrf.mxu0
    %6194 = vdwg.mxu0
    %v6195 = vadd.f32 %v6129, %v6187
    %v6196 = vadd.f32 %v6130, %v6189
    %v6197 = vadd.f32 %v6131, %v6192
    %v6198 = vld [vmem:[#allocation3] sm:$0x8]
    %v6199 = vld [vmem:[#allocation3 + $0x4] sm:$0xf]
    %v6200 = vld [vmem:[#allocation3 + $0x8] sm:$0xf]
    %v6201 = vld [vmem:[#allocation3 + $0xc] sm:$0x3]
    %v6202 = vld [vmem:[%s2675] sm:$0xf]
    %v6203 = vld [vmem:[%s2675 + $0x4] sm:$0xf]
    %v6204 = vld [vmem:[%s2675 + $0x8] sm:$0xf]
    %v6205 = vld [vmem:[%s2675 + $0xc] sm:$0xf]
    %v6206 = vld [vmem:[%s2675 + $0x10] sm:$0xf]
    %v6207 = vld [vmem:[%s2675 + $0x14] sm:$0xf]
    %v6208 = vld [vmem:[%s2675 + $0x18] sm:$0xf]
    %v6209 = vld [vmem:[%s2675 + $0x1c] sm:$0xf]
    %v6214 = vunpack.c.l.b16 %v6198
    %v6215 = vunpack.c.l.b16 %v6199
    %v6216 = vunpack.c.l.b16 %v6200
    %v6217 = vunpack.c.l.b16 %v6201
    %v6218 = vpack.c.b16 %v6215, %v6214
    %v6219 = vpack.c.b16 %v6217, %v6216
    %v6220 = vrot.slane %v6218, 3
    %v6221 = vrot.slane %v6219, 3
    %v6222 = vsel %vm2694, %v6220, %v6221
    %v6231 = vunpack.c.l.b16 %v6202
    %v6232 = vunpack.c.l.b16 %v6203
    %v6233 = vunpack.c.l.b16 %v6204
    %v6234 = vunpack.c.l.b16 %v6205
    %v6235 = vunpack.c.l.b16 %v6206
    %v6236 = vunpack.c.l.b16 %v6207
    %v6237 = vunpack.c.l.b16 %v6208
    %v6238 = vunpack.c.l.b16 %v6209
    %v6239 = vpack.c.b16 %v6232, %v6231
    %v6240 = vpack.c.b16 %v6234, %v6233
    %v6241 = vpack.c.b16 %v6236, %v6235
    %v6242 = vpack.c.b16 %v6238, %v6237
    %v6248 = vsel %vm495, %v6222, 0
    %v6251 = vsel %vm495, %v6221, 0
    %6253 = vmatpush.bf16.msra.mxu0 0
    %6254 = vmatpush.bf16.msra.mxu0 0
    %6255 = vmatpush.bf16.msra.mxu0 0
    %6256 = vmatpush.bf16.msra.mxu0 0
    %6257 = vmatpush.bf16.msra.mxu0 %v6242
    %6258 = vmatpush.bf16.msra.mxu0 %v6241
    %6259 = vmatpush.bf16.msra.mxu0 %v6240
    %6260 = vmatpush.bf16.msra.mxu0 %v6239
    %6261 = vmatmul.bf16.gmra.mxu0 %v6248
    %v6262 = vpop.f32.mrf.mxu0
    %v6263 = vadd.f32 0.0, %v6262
    %v6264 = vpop.f32.mrf.mxu0
    %v6265 = vadd.f32 0.0, %v6264
    %6266 = vmatmul.bf16.gmra.mxu0 %v6251
    %v6267 = vpop.f32.mrf.mxu0
    %v6268 = vadd.f32 0.0, %v6267
    %v6269 = vpop.f32.mrf.mxu0
    %6270 = vdwg.mxu0
    %v6271 = vadd.f32 %v6195, %v6263
    %v6272 = vadd.f32 %v6196, %v6265
    %v6273 = vadd.f32 %v6197, %v6268
    %v6274 = vld [vmem:[#allocation3 + $0xc] sm:$0x7]
    %v6275 = vld [vmem:[%s2750] sm:$0xf]
    %v6276 = vld [vmem:[%s2750 + $0x4] sm:$0xf]
    %v6277 = vld [vmem:[%s2750 + $0x8] sm:$0xf]
    %v6278 = vld [vmem:[%s2750 + $0xc] sm:$0xf]
    %v6279 = vld [vmem:[%s2750 + $0x10] sm:$0xf]
    %v6280 = vld [vmem:[%s2750 + $0x14] sm:$0xf]
    %v6281 = vld [vmem:[%s2750 + $0x18] sm:$0xf]
    %v6282 = vld [vmem:[%s2750 + $0x1c] sm:$0xf]
    %v6284 = vunpack.c.l.b16 %v6274
    %v6285 = vpack.c.b16 %v6284, %v6216
    %v6287 = vshrl.u32 %v6218, 16
    %v6289 = vrot.slane %v6287, 3
    %v6290 = vshll.u32 %v6218, 16
    %v6292 = vrot.slane %v6290, 4
    %v6293 = vor.u32 %v6289, %v6292
    %v6295 = vshrl.u32 %v6285, 16
    %v6297 = vrot.slane %v6295, 3
    %v6298 = vshll.u32 %v6285, 16
    %v6300 = vrot.slane %v6298, 4
    %v6301 = vor.u32 %v6297, %v6300
    %v6302 = vsel %vm2762, %v6293, %v6301
    %v6311 = vunpack.c.l.b16 %v6275
    %v6312 = vunpack.c.l.b16 %v6276
    %v6313 = vunpack.c.l.b16 %v6277
    %v6314 = vunpack.c.l.b16 %v6278
    %v6315 = vunpack.c.l.b16 %v6279
    %v6316 = vunpack.c.l.b16 %v6280
    %v6317 = vunpack.c.l.b16 %v6281
    %v6318 = vunpack.c.l.b16 %v6282
    %v6319 = vpack.c.b16 %v6312, %v6311
    %v6320 = vpack.c.b16 %v6314, %v6313
    %v6321 = vpack.c.b16 %v6316, %v6315
    %v6322 = vpack.c.b16 %v6318, %v6317
    %v6328 = vsel %vm495, %v6302, 0
    %v6331 = vsel %vm495, %v6301, 0
    %6333 = vmatpush.bf16.msra.mxu0 0
    %6334 = vmatpush.bf16.msra.mxu0 0
    %6335 = vmatpush.bf16.msra.mxu0 0
    %6336 = vmatpush.bf16.msra.mxu0 0
    %6337 = vmatpush.bf16.msra.mxu0 %v6322
    %6338 = vmatpush.bf16.msra.mxu0 %v6321
    %6339 = vmatpush.bf16.msra.mxu0 %v6320
    %6340 = vmatpush.bf16.msra.mxu0 %v6319
    %6341 = vmatmul.bf16.gmra.mxu0 %v6328
    %v6342 = vpop.f32.mrf.mxu0
    %v6343 = vadd.f32 0.0, %v6342
    %v6344 = vpop.f32.mrf.mxu0
    %v6345 = vadd.f32 0.0, %v6344
    %6346 = vmatmul.bf16.gmra.mxu0 %v6331
    %v6347 = vpop.f32.mrf.mxu0
    %v6348 = vadd.f32 0.0, %v6347
    %v6349 = vpop.f32.mrf.mxu0
    %6350 = vdwg.mxu0
    %v6351 = vadd.f32 %v6271, %v6343
    %v6352 = vadd.f32 %v6272, %v6345
    %v6353 = vadd.f32 %v6273, %v6348
    %v6354 = vld [vmem:[%s2831] sm:$0xf]
    %v6355 = vld [vmem:[%s2831 + $0x4] sm:$0xf]
    %v6356 = vld [vmem:[%s2831 + $0x8] sm:$0xf]
    %v6357 = vld [vmem:[%s2831 + $0xc] sm:$0xf]
    %v6358 = vld [vmem:[%s2831 + $0x10] sm:$0xf]
    %v6359 = vld [vmem:[%s2831 + $0x14] sm:$0xf]
    %v6360 = vld [vmem:[%s2831 + $0x18] sm:$0xf]
    %v6361 = vld [vmem:[%s2831 + $0x1c] sm:$0xf]
    %v6362 = vpack.c.b16 %v6216, %v6215
    %v6363 = vpack.c.b16 %v6284, %v6284
    %v6372 = vunpack.c.l.b16 %v6354
    %v6373 = vunpack.c.l.b16 %v6355
    %v6374 = vunpack.c.l.b16 %v6356
    %v6375 = vunpack.c.l.b16 %v6357
    %v6376 = vunpack.c.l.b16 %v6358
    %v6377 = vunpack.c.l.b16 %v6359
    %v6378 = vunpack.c.l.b16 %v6360
    %v6379 = vunpack.c.l.b16 %v6361
    %v6380 = vpack.c.b16 %v6373, %v6372
    %v6381 = vpack.c.b16 %v6375, %v6374
    %v6382 = vpack.c.b16 %v6377, %v6376
    %v6383 = vpack.c.b16 %v6379, %v6378
    %v6389 = vsel %vm495, %v6362, 0
    %v6392 = vsel %vm495, %v6363, 0
    %6394 = vmatpush.bf16.msra.mxu0 0
    %6395 = vmatpush.bf16.msra.mxu0 0
    %6396 = vmatpush.bf16.msra.mxu0 0
    %6397 = vmatpush.bf16.msra.mxu0 0
    %6398 = vmatpush.bf16.msra.mxu0 %v6383
    %6399 = vmatpush.bf16.msra.mxu0 %v6382
    %6400 = vmatpush.bf16.msra.mxu0 %v6381
    %6401 = vmatpush.bf16.msra.mxu0 %v6380
    %6402 = vmatmul.bf16.gmra.mxu0 %v6389
    %v6403 = vpop.f32.mrf.mxu0
    %v6404 = vadd.f32 0.0, %v6403
    %v6405 = vpop.f32.mrf.mxu0
    %v6406 = vadd.f32 0.0, %v6405
    %6407 = vmatmul.bf16.gmra.mxu0 %v6392
    %v6408 = vpop.f32.mrf.mxu0
    %v6409 = vadd.f32 0.0, %v6408
    %v6410 = vpop.f32.mrf.mxu0
    %6411 = vdwg.mxu0
    %v6412 = vadd.f32 %v6351, %v6404
    %v6413 = vadd.f32 %v6352, %v6406
    %v6414 = vadd.f32 %v6353, %v6409
    %v6415 = vld [vmem:[#allocation3 + $0x4] sm:$0xc]
    %v6416 = vld [vmem:[#allocation3 + $0x8] sm:$0xf]
    %v6417 = vld [vmem:[#allocation3 + $0xc] sm:$0xf]
    %v6418 = vld [vmem:[#allocation3 + $0x10] sm:$0x1]
    %v6419 = vld [vmem:[%s2897] sm:$0xf]
    %v6420 = vld [vmem:[%s2897 + $0x4] sm:$0xf]
    %v6421 = vld [vmem:[%s2897 + $0x8] sm:$0xf]
    %v6422 = vld [vmem:[%s2897 + $0xc] sm:$0xf]
    %v6423 = vld [vmem:[%s2897 + $0x10] sm:$0xf]
    %v6424 = vld [vmem:[%s2897 + $0x14] sm:$0xf]
    %v6425 = vld [vmem:[%s2897 + $0x18] sm:$0xf]
    %v6426 = vld [vmem:[%s2897 + $0x1c] sm:$0xf]
    %v6431 = vunpack.c.l.b16 %v6415
    %v6432 = vunpack.c.l.b16 %v6416
    %v6433 = vunpack.c.l.b16 %v6417
    %v6434 = vunpack.c.l.b16 %v6418
    %v6435 = vpack.c.b16 %v6432, %v6431
    %v6436 = vpack.c.b16 %v6434, %v6433
    %v6437 = vrot.slane %v6435, 2
    %v6438 = vrot.slane %v6436, 2
    %v6439 = vsel %vm2916, %v6437, %v6438
    %v6448 = vunpack.c.l.b16 %v6419
    %v6449 = vunpack.c.l.b16 %v6420
    %v6450 = vunpack.c.l.b16 %v6421
    %v6451 = vunpack.c.l.b16 %v6422
    %v6452 = vunpack.c.l.b16 %v6423
    %v6453 = vunpack.c.l.b16 %v6424
    %v6454 = vunpack.c.l.b16 %v6425
    %v6455 = vunpack.c.l.b16 %v6426
    %v6456 = vpack.c.b16 %v6449, %v6448
    %v6457 = vpack.c.b16 %v6451, %v6450
    %v6458 = vpack.c.b16 %v6453, %v6452
    %v6459 = vpack.c.b16 %v6455, %v6454
    %v6465 = vsel %vm495, %v6439, 0
    %v6468 = vsel %vm495, %v6438, 0
    %6470 = vmatpush.bf16.msra.mxu0 0
    %6471 = vmatpush.bf16.msra.mxu0 0
    %6472 = vmatpush.bf16.msra.mxu0 0
    %6473 = vmatpush.bf16.msra.mxu0 0
    %6474 = vmatpush.bf16.msra.mxu0 %v6459
    %6475 = vmatpush.bf16.msra.mxu0 %v6458
    %6476 = vmatpush.bf16.msra.mxu0 %v6457
    %6477 = vmatpush.bf16.msra.mxu0 %v6456
    %6478 = vmatmul.bf16.gmra.mxu0 %v6465
    %v6479 = vpop.f32.mrf.mxu0
    %v6480 = vadd.f32 0.0, %v6479
    %v6481 = vpop.f32.mrf.mxu0
    %v6482 = vadd.f32 0.0, %v6481
    %6483 = vmatmul.bf16.gmra.mxu0 %v6468
    %v6484 = vpop.f32.mrf.mxu0
    %v6485 = vadd.f32 0.0, %v6484
    %v6486 = vpop.f32.mrf.mxu0
    %6487 = vdwg.mxu0
    %v6488 = vadd.f32 %v6412, %v6480
    %v6489 = vadd.f32 %v6413, %v6482
    %v6490 = vadd.f32 %v6414, %v6485
    %v6491 = vld [vmem:[#allocation3 + $0x10] sm:$0x3]
    %v6492 = vld [vmem:[%s2972] sm:$0xf]
    %v6493 = vld [vmem:[%s2972 + $0x4] sm:$0xf]
    %v6494 = vld [vmem:[%s2972 + $0x8] sm:$0xf]
    %v6495 = vld [vmem:[%s2972 + $0xc] sm:$0xf]
    %v6496 = vld [vmem:[%s2972 + $0x10] sm:$0xf]
    %v6497 = vld [vmem:[%s2972 + $0x14] sm:$0xf]
    %v6498 = vld [vmem:[%s2972 + $0x18] sm:$0xf]
    %v6499 = vld [vmem:[%s2972 + $0x1c] sm:$0xf]
    %v6501 = vunpack.c.l.b16 %v6491
    %v6502 = vpack.c.b16 %v6501, %v6433
    %v6504 = vshrl.u32 %v6435, 16
    %v6506 = vrot.slane %v6504, 2
    %v6507 = vshll.u32 %v6435, 16
    %v6509 = vrot.slane %v6507, 3
    %v6510 = vor.u32 %v6506, %v6509
    %v6512 = vshrl.u32 %v6502, 16
    %v6514 = vrot.slane %v6512, 2
    %v6515 = vshll.u32 %v6502, 16
    %v6517 = vrot.slane %v6515, 3
    %v6518 = vor.u32 %v6514, %v6517
    %v6519 = vsel %vm2984, %v6510, %v6518
    %v6528 = vunpack.c.l.b16 %v6492
    %v6529 = vunpack.c.l.b16 %v6493
    %v6530 = vunpack.c.l.b16 %v6494
    %v6531 = vunpack.c.l.b16 %v6495
    %v6532 = vunpack.c.l.b16 %v6496
    %v6533 = vunpack.c.l.b16 %v6497
    %v6534 = vunpack.c.l.b16 %v6498
    %v6535 = vunpack.c.l.b16 %v6499
    %v6536 = vpack.c.b16 %v6529, %v6528
    %v6537 = vpack.c.b16 %v6531, %v6530
    %v6538 = vpack.c.b16 %v6533, %v6532
    %v6539 = vpack.c.b16 %v6535, %v6534
    %v6545 = vsel %vm495, %v6519, 0
    %v6548 = vsel %vm495, %v6518, 0
    %6550 = vmatpush.bf16.msra.mxu0 0
    %6551 = vmatpush.bf16.msra.mxu0 0
    %6552 = vmatpush.bf16.msra.mxu0 0
    %6553 = vmatpush.bf16.msra.mxu0 0
    %6554 = vmatpush.bf16.msra.mxu0 %v6539
    %6555 = vmatpush.bf16.msra.mxu0 %v6538
    %6556 = vmatpush.bf16.msra.mxu0 %v6537
    %6557 = vmatpush.bf16.msra.mxu0 %v6536
    %6558 = vmatmul.bf16.gmra.mxu0 %v6545
    %v6559 = vpop.f32.mrf.mxu0
    %v6560 = vadd.f32 0.0, %v6559
    %v6561 = vpop.f32.mrf.mxu0
    %v6562 = vadd.f32 0.0, %v6561
    %6563 = vmatmul.bf16.gmra.mxu0 %v6548
    %v6564 = vpop.f32.mrf.mxu0
    %v6565 = vadd.f32 0.0, %v6564
    %v6566 = vpop.f32.mrf.mxu0
    %6567 = vdwg.mxu0
    %v6568 = vadd.f32 %v6488, %v6560
    %v6569 = vadd.f32 %v6489, %v6562
    %v6570 = vadd.f32 %v6490, %v6565
    %v6571 = vld [vmem:[#allocation3 + $0x4] sm:$0x8]
    %v6572 = vld [vmem:[%s3054] sm:$0xf]
    %v6573 = vld [vmem:[%s3054 + $0x4] sm:$0xf]
    %v6574 = vld [vmem:[%s3054 + $0x8] sm:$0xf]
    %v6575 = vld [vmem:[%s3054 + $0xc] sm:$0xf]
    %v6576 = vld [vmem:[%s3054 + $0x10] sm:$0xf]
    %v6577 = vld [vmem:[%s3054 + $0x14] sm:$0xf]
    %v6578 = vld [vmem:[%s3054 + $0x18] sm:$0xf]
    %v6579 = vld [vmem:[%s3054 + $0x1c] sm:$0xf]
    %v6581 = vunpack.c.l.b16 %v6571
    %v6582 = vpack.c.b16 %v6432, %v6581
    %v6583 = vrot.slane %v6582, 3
    %v6584 = vrot.slane %v6502, 3
    %v6585 = vsel %vm2694, %v6583, %v6584
    %v6594 = vunpack.c.l.b16 %v6572
    %v6595 = vunpack.c.l.b16 %v6573
    %v6596 = vunpack.c.l.b16 %v6574
    %v6597 = vunpack.c.l.b16 %v6575
    %v6598 = vunpack.c.l.b16 %v6576
    %v6599 = vunpack.c.l.b16 %v6577
    %v6600 = vunpack.c.l.b16 %v6578
    %v6601 = vunpack.c.l.b16 %v6579
    %v6602 = vpack.c.b16 %v6595, %v6594
    %v6603 = vpack.c.b16 %v6597, %v6596
    %v6604 = vpack.c.b16 %v6599, %v6598
    %v6605 = vpack.c.b16 %v6601, %v6600
    %v6611 = vsel %vm495, %v6585, 0
    %v6614 = vsel %vm495, %v6584, 0
    %6616 = vmatpush.bf16.msra.mxu0 0
    %6617 = vmatpush.bf16.msra.mxu0 0
    %6618 = vmatpush.bf16.msra.mxu0 0
    %6619 = vmatpush.bf16.msra.mxu0 0
    %6620 = vmatpush.bf16.msra.mxu0 %v6605
    %6621 = vmatpush.bf16.msra.mxu0 %v6604
    %6622 = vmatpush.bf16.msra.mxu0 %v6603
    %6623 = vmatpush.bf16.msra.mxu0 %v6602
    %6624 = vmatmul.bf16.gmra.mxu0 %v6611
    %v6625 = vpop.f32.mrf.mxu0
    %v6626 = vadd.f32 0.0, %v6625
    %v6627 = vpop.f32.mrf.mxu0
    %v6628 = vadd.f32 0.0, %v6627
    %6629 = vmatmul.bf16.gmra.mxu0 %v6614
    %v6630 = vpop.f32.mrf.mxu0
    %v6631 = vadd.f32 0.0, %v6630
    %v6632 = vpop.f32.mrf.mxu0
    %6633 = vdwg.mxu0
    %v6634 = vadd.f32 %v6568, %v6626
    %v6635 = vadd.f32 %v6569, %v6628
    %v6636 = vadd.f32 %v6570, %v6631
    %v6637 = vmax.f32 %v6634, 0.0
    %v6638 = vmax.f32 %v6635, 0.0
    %v6639 = vmax.f32 %v6636, 0.0
    %v6640 = vmul.f32 %v6637, %v3126
    %v6641 = vmul.f32 %v6638, %v3131
    %v6642 = vmul.f32 %v6639, %v3136
    %v6643 = vpack.c.bf16 %v6640, %v6640
    %v6644 = vpack.c.bf16 %v6641, %v6641
    %v6645 = vpack.c.bf16 %v6642, %v6642
    %v6647 = vshll.u32 %v6643, 16
    %v6649 = vrot.slane %v6647, 5
    %v6650 = vshrl.u32 %v6643, 16
    %v6652 = vrot.slane %v6650, 4
    %v6653 = vor.u32 %v6652, %v6649
    %v6654 = vrot.slane %v6653, 4
    %v6656 = vshll.u32 %v6644, 16
    %v6658 = vrot.slane %v6656, 5
    %v6659 = vsel %vm747, %v6654, %v6658
    %v6660 = vshrl.u32 %v6644, 16
    %v6662 = vrot.slane %v6660, 4
    %v6663 = vor.u32 %v6662, %v6658
    %v6664 = vrot.slane %v6663, 4
    %v6666 = vshll.u32 %v6645, 16
    %v6668 = vrot.slane %v6666, 5
    %v6669 = vsel %vm747, %v6664, %v6668
    %v6670 = vshrl.u32 %v6645, 16
    %v6672 = vrot.slane %v6670, 4
    %v6673 = vor.u32 %v6672, %v6668
    %v6674 = vrot.slane %v6673, 4
    %6675 = vrot.lane.b32.xlu0 %v6649, 64
    %v6676 = vpop.permute.xlu0 %6675
    %6677 = vrot.lane.b32.xlu0 %v6659, 64
    %v6678 = vpop.permute.xlu0 %6677
    %6679 = vrot.lane.b32.xlu0 %v6669, 64
    %v6680 = vpop.permute.xlu0 %6679
    %6681 = vrot.lane.b32.xlu0 %v6674, 64
    %v6682 = vpop.permute.xlu0 %6681
    %v6687 = vld [vmem:[#allocation4] sm:$0x8]
    %v6688 = vsel %vm3186, %v6676, %v6687
    %6689 = vst [vmem:[#allocation4] sm:$0x8] %v6688
    %6690 = vst.msk [vmem:[#allocation4 + $0x4] sm:$0xf] %vm139, %v6678
    %6691 = vst.msk [vmem:[#allocation4 + $0x8] sm:$0xf] %vm139, %v6680
    %v6692 = vld [vmem:[#allocation4 + $0xc] sm:$0x7]
    %v6693 = vsel %vm3194, %v6682, %v6692
    %6694 = vst [vmem:[#allocation4 + $0xc] sm:$0x7] %v6693
    %v6695 = vld [vmem:[#allocation4] sm:$0xf]
    %v6696 = vld [vmem:[#allocation4 + $0x4] sm:$0xf]
    %v6697 = vld [vmem:[#allocation4 + $0x8] sm:$0x7]
    %v6698 = vld [vmem:[%s14] sm:$0xf]
    %v6699 = vld [vmem:[%s14 + $0x4] sm:$0xf]
    %v6700 = vld [vmem:[%s14 + $0x8] sm:$0xf]
    %v6701 = vld [vmem:[%s14 + $0xc] sm:$0xf]
    %v6702 = vld [vmem:[#allocation4 + $0x8] sm:$0xf]
    %v6703 = vld [vmem:[%s3206] sm:$0xf]
    %v6704 = vld [vmem:[%s3206 + $0x4] sm:$0xf]
    %v6705 = vld [vmem:[%s3206 + $0x8] sm:$0xf]
    %v6706 = vld [vmem:[%s3206 + $0xc] sm:$0xf]
    %v6710 = vunpack.c.l.b16 %v6695
    %v6711 = vunpack.c.l.b16 %v6696
    %v6712 = vunpack.c.l.b16 %v6702
    %v6713 = vpack.c.b16 %v6711, %v6710
    %v6714 = vpack.c.b16 %v6712, %v6712
    %v6716 = vshrl.u32 %v6713, 16
    %v6718 = vshll.u32 %v6713, 16
    %v6720 = vrot.slane %v6718, 1
    %v6721 = vor.u32 %v6716, %v6720
    %v6723 = vshll.u32 %v6714, 16
    %v6725 = vrot.slane %v6723, 1
    %v6726 = vsel %vm2537, %v6721, %v6725
    %v6727 = vshrl.u32 %v6714, 16
    %v6729 = vor.u32 %v6727, %v6725
    %v6734 = vunpack.c.l.b16 %v6703
    %v6735 = vunpack.c.l.b16 %v6704
    %v6736 = vunpack.c.l.b16 %v6705
    %v6737 = vunpack.c.l.b16 %v6706
    %v6738 = vpack.c.b16 %v6735, %v6734
    %v6739 = vpack.c.b16 %v6737, %v6736
    %v6743 = vsel %vm2256, %v6726, 0
    %v6746 = vsel %vm2256, %v6729, 0
    %6748 = vmatpush.bf16.msra.mxu0 0
    %6749 = vmatpush.bf16.msra.mxu0 0
    %6750 = vmatpush.bf16.msra.mxu0 0
    %6751 = vmatpush.bf16.msra.mxu0 0
    %6752 = vmatpush.bf16.msra.mxu0 0
    %6753 = vmatpush.bf16.msra.mxu0 0
    %6754 = vmatpush.bf16.msra.mxu0 %v6739
    %6755 = vmatpush.bf16.msra.mxu0 %v6738
    %6756 = vmatmul.bf16.gmra.mxu0 %v6743
    %v6757 = vpop.f32.mrf.mxu0
    %v6758 = vadd.f32 0.0, %v6757
    %v6759 = vpop.f32.mrf.mxu0
    %v6760 = vadd.f32 0.0, %v6759
    %6761 = vmatmul.bf16.gmra.mxu0 %v6746
    %v6762 = vpop.f32.mrf.mxu0
    %v6763 = vadd.f32 0.0, %v6762
    %v6764 = vpop.f32.mrf.mxu0
    %6765 = vdwg.mxu0
    %v6767 = vunpack.c.l.b16 %v6697
    %v6768 = vpack.c.b16 %v6767, %v6767
    %v6773 = vunpack.c.l.b16 %v6698
    %v6774 = vunpack.c.l.b16 %v6699
    %v6775 = vunpack.c.l.b16 %v6700
    %v6776 = vunpack.c.l.b16 %v6701
    %v6777 = vpack.c.b16 %v6774, %v6773
    %v6778 = vpack.c.b16 %v6776, %v6775
    %v6781 = vsel %vm2256, %v6713, 0
    %v6784 = vsel %vm2256, %v6768, 0
    %6786 = vmatpush.bf16.msra.mxu0 0
    %6787 = vmatpush.bf16.msra.mxu0 0
    %6788 = vmatpush.bf16.msra.mxu0 0
    %6789 = vmatpush.bf16.msra.mxu0 0
    %6790 = vmatpush.bf16.msra.mxu0 0
    %6791 = vmatpush.bf16.msra.mxu0 0
    %6792 = vmatpush.bf16.msra.mxu0 %v6778
    %6793 = vmatpush.bf16.msra.mxu0 %v6777
    %6794 = vmatmul.bf16.gmra.mxu0 %v6781
    %v6795 = vpop.f32.mrf.mxu0
    %v6796 = vadd.f32 %v6758, %v6795
    %v6797 = vpop.f32.mrf.mxu0
    %v6798 = vadd.f32 %v6760, %v6797
    %6799 = vmatmul.bf16.gmra.mxu0 %v6784
    %v6800 = vpop.f32.mrf.mxu0
    %v6801 = vadd.f32 %v6763, %v6800
    %v6802 = vpop.f32.mrf.mxu0
    %6803 = vdwg.mxu0
    %v6804 = vld [vmem:[#allocation4] sm:$0xe]
    %v6805 = vld [vmem:[%s3309] sm:$0xf]
    %v6806 = vld [vmem:[%s3309 + $0x4] sm:$0xf]
    %v6807 = vld [vmem:[%s3309 + $0x8] sm:$0xf]
    %v6808 = vld [vmem:[%s3309 + $0xc] sm:$0xf]
    %v6810 = vunpack.c.l.b16 %v6804
    %v6811 = vpack.c.b16 %v6711, %v6810
    %v6812 = vrot.slane %v6811, 1
    %v6813 = vrot.slane %v6714, 1
    %v6814 = vsel %vm2616, %v6812, %v6813
    %v6819 = vunpack.c.l.b16 %v6805
    %v6820 = vunpack.c.l.b16 %v6806
    %v6821 = vunpack.c.l.b16 %v6807
    %v6822 = vunpack.c.l.b16 %v6808
    %v6823 = vpack.c.b16 %v6820, %v6819
    %v6824 = vpack.c.b16 %v6822, %v6821
    %v6828 = vsel %vm2256, %v6814, 0
    %v6831 = vsel %vm2256, %v6813, 0
    %6833 = vmatpush.bf16.msra.mxu0 0
    %6834 = vmatpush.bf16.msra.mxu0 0
    %6835 = vmatpush.bf16.msra.mxu0 0
    %6836 = vmatpush.bf16.msra.mxu0 0
    %6837 = vmatpush.bf16.msra.mxu0 0
    %6838 = vmatpush.bf16.msra.mxu0 0
    %6839 = vmatpush.bf16.msra.mxu0 %v6824
    %6840 = vmatpush.bf16.msra.mxu0 %v6823
    %6841 = vmatmul.bf16.gmra.mxu0 %v6828
    %v6842 = vpop.f32.mrf.mxu0
    %v6843 = vadd.f32 0.0, %v6842
    %v6844 = vpop.f32.mrf.mxu0
    %v6845 = vadd.f32 0.0, %v6844
    %6846 = vmatmul.bf16.gmra.mxu0 %v6831
    %v6847 = vpop.f32.mrf.mxu0
    %v6848 = vadd.f32 0.0, %v6847
    %v6849 = vpop.f32.mrf.mxu0
    %6850 = vdwg.mxu0
    %v6851 = vadd.f32 %v6796, %v6843
    %v6852 = vadd.f32 %v6798, %v6845
    %v6853 = vadd.f32 %v6801, %v6848
    %v6854 = vld [vmem:[#allocation4] sm:$0x8]
    %v6855 = vld [vmem:[#allocation4 + $0x4] sm:$0xf]
    %v6856 = vld [vmem:[#allocation4 + $0x8] sm:$0xf]
    %v6857 = vld [vmem:[#allocation4 + $0xc] sm:$0x3]
    %v6858 = vld [vmem:[%s3363] sm:$0xf]
    %v6859 = vld [vmem:[%s3363 + $0x4] sm:$0xf]
    %v6860 = vld [vmem:[%s3363 + $0x8] sm:$0xf]
    %v6861 = vld [vmem:[%s3363 + $0xc] sm:$0xf]
    %v6866 = vunpack.c.l.b16 %v6854
    %v6867 = vunpack.c.l.b16 %v6855
    %v6868 = vunpack.c.l.b16 %v6856
    %v6869 = vunpack.c.l.b16 %v6857
    %v6870 = vpack.c.b16 %v6867, %v6866
    %v6871 = vpack.c.b16 %v6869, %v6868
    %v6872 = vrot.slane %v6870, 3
    %v6873 = vrot.slane %v6871, 3
    %v6874 = vsel %vm2694, %v6872, %v6873
    %v6879 = vunpack.c.l.b16 %v6858
    %v6880 = vunpack.c.l.b16 %v6859
    %v6881 = vunpack.c.l.b16 %v6860
    %v6882 = vunpack.c.l.b16 %v6861
    %v6883 = vpack.c.b16 %v6880, %v6879
    %v6884 = vpack.c.b16 %v6882, %v6881
    %v6888 = vsel %vm2256, %v6874, 0
    %v6891 = vsel %vm2256, %v6873, 0
    %6893 = vmatpush.bf16.msra.mxu0 0
    %6894 = vmatpush.bf16.msra.mxu0 0
    %6895 = vmatpush.bf16.msra.mxu0 0
    %6896 = vmatpush.bf16.msra.mxu0 0
    %6897 = vmatpush.bf16.msra.mxu0 0
    %6898 = vmatpush.bf16.msra.mxu0 0
    %6899 = vmatpush.bf16.msra.mxu0 %v6884
    %6900 = vmatpush.bf16.msra.mxu0 %v6883
    %6901 = vmatmul.bf16.gmra.mxu0 %v6888
    %v6902 = vpop.f32.mrf.mxu0
    %v6903 = vadd.f32 0.0, %v6902
    %v6904 = vpop.f32.mrf.mxu0
    %v6905 = vadd.f32 0.0, %v6904
    %6906 = vmatmul.bf16.gmra.mxu0 %v6891
    %v6907 = vpop.f32.mrf.mxu0
    %v6908 = vadd.f32 0.0, %v6907
    %v6909 = vpop.f32.mrf.mxu0
    %6910 = vdwg.mxu0
    %v6911 = vadd.f32 %v6851, %v6903
    %v6912 = vadd.f32 %v6852, %v6905
    %v6913 = vadd.f32 %v6853, %v6908
    %v6914 = vld [vmem:[#allocation4 + $0xc] sm:$0x7]
    %v6915 = vld [vmem:[%s3421] sm:$0xf]
    %v6916 = vld [vmem:[%s3421 + $0x4] sm:$0xf]
    %v6917 = vld [vmem:[%s3421 + $0x8] sm:$0xf]
    %v6918 = vld [vmem:[%s3421 + $0xc] sm:$0xf]
    %v6920 = vunpack.c.l.b16 %v6914
    %v6921 = vpack.c.b16 %v6920, %v6868
    %v6923 = vshrl.u32 %v6870, 16
    %v6925 = vrot.slane %v6923, 3
    %v6926 = vshll.u32 %v6870, 16
    %v6928 = vrot.slane %v6926, 4
    %v6929 = vor.u32 %v6925, %v6928
    %v6931 = vshrl.u32 %v6921, 16
    %v6933 = vrot.slane %v6931, 3
    %v6934 = vshll.u32 %v6921, 16
    %v6936 = vrot.slane %v6934, 4
    %v6937 = vor.u32 %v6933, %v6936
    %v6938 = vsel %vm2762, %v6929, %v6937
    %v6943 = vunpack.c.l.b16 %v6915
    %v6944 = vunpack.c.l.b16 %v6916
    %v6945 = vunpack.c.l.b16 %v6917
    %v6946 = vunpack.c.l.b16 %v6918
    %v6947 = vpack.c.b16 %v6944, %v6943
    %v6948 = vpack.c.b16 %v6946, %v6945
    %v6952 = vsel %vm2256, %v6938, 0
    %v6955 = vsel %vm2256, %v6937, 0
    %6957 = vmatpush.bf16.msra.mxu0 0
    %6958 = vmatpush.bf16.msra.mxu0 0
    %6959 = vmatpush.bf16.msra.mxu0 0
    %6960 = vmatpush.bf16.msra.mxu0 0
    %6961 = vmatpush.bf16.msra.mxu0 0
    %6962 = vmatpush.bf16.msra.mxu0 0
    %6963 = vmatpush.bf16.msra.mxu0 %v6948
    %6964 = vmatpush.bf16.msra.mxu0 %v6947
    %6965 = vmatmul.bf16.gmra.mxu0 %v6952
    %v6966 = vpop.f32.mrf.mxu0
    %v6967 = vadd.f32 0.0, %v6966
    %v6968 = vpop.f32.mrf.mxu0
    %v6969 = vadd.f32 0.0, %v6968
    %6970 = vmatmul.bf16.gmra.mxu0 %v6955
    %v6971 = vpop.f32.mrf.mxu0
    %v6972 = vadd.f32 0.0, %v6971
    %v6973 = vpop.f32.mrf.mxu0
    %6974 = vdwg.mxu0
    %v6975 = vadd.f32 %v6911, %v6967
    %v6976 = vadd.f32 %v6912, %v6969
    %v6977 = vadd.f32 %v6913, %v6972
    %v6978 = vld [vmem:[%s3485] sm:$0xf]
    %v6979 = vld [vmem:[%s3485 + $0x4] sm:$0xf]
    %v6980 = vld [vmem:[%s3485 + $0x8] sm:$0xf]
    %v6981 = vld [vmem:[%s3485 + $0xc] sm:$0xf]
    %v6982 = vpack.c.b16 %v6868, %v6867
    %v6983 = vpack.c.b16 %v6920, %v6920
    %v6988 = vunpack.c.l.b16 %v6978
    %v6989 = vunpack.c.l.b16 %v6979
    %v6990 = vunpack.c.l.b16 %v6980
    %v6991 = vunpack.c.l.b16 %v6981
    %v6992 = vpack.c.b16 %v6989, %v6988
    %v6993 = vpack.c.b16 %v6991, %v6990
    %v6997 = vsel %vm2256, %v6982, 0
    %v7000 = vsel %vm2256, %v6983, 0
    %7002 = vmatpush.bf16.msra.mxu0 0
    %7003 = vmatpush.bf16.msra.mxu0 0
    %7004 = vmatpush.bf16.msra.mxu0 0
    %7005 = vmatpush.bf16.msra.mxu0 0
    %7006 = vmatpush.bf16.msra.mxu0 0
    %7007 = vmatpush.bf16.msra.mxu0 0
    %7008 = vmatpush.bf16.msra.mxu0 %v6993
    %7009 = vmatpush.bf16.msra.mxu0 %v6992
    %7010 = vmatmul.bf16.gmra.mxu0 %v6997
    %v7011 = vpop.f32.mrf.mxu0
    %v7012 = vadd.f32 0.0, %v7011
    %v7013 = vpop.f32.mrf.mxu0
    %v7014 = vadd.f32 0.0, %v7013
    %7015 = vmatmul.bf16.gmra.mxu0 %v7000
    %v7016 = vpop.f32.mrf.mxu0
    %v7017 = vadd.f32 0.0, %v7016
    %v7018 = vpop.f32.mrf.mxu0
    %7019 = vdwg.mxu0
    %v7020 = vadd.f32 %v6975, %v7012
    %v7021 = vadd.f32 %v6976, %v7014
    %v7022 = vadd.f32 %v6977, %v7017
    %v7023 = vld [vmem:[#allocation4 + $0x4] sm:$0xc]
    %v7024 = vld [vmem:[#allocation4 + $0x8] sm:$0xf]
    %v7025 = vld [vmem:[#allocation4 + $0xc] sm:$0xf]
    %v7026 = vld [vmem:[#allocation4 + $0x10] sm:$0x1]
    %v7027 = vld [vmem:[%s3535] sm:$0xf]
    %v7028 = vld [vmem:[%s3535 + $0x4] sm:$0xf]
    %v7029 = vld [vmem:[%s3535 + $0x8] sm:$0xf]
    %v7030 = vld [vmem:[%s3535 + $0xc] sm:$0xf]
    %v7035 = vunpack.c.l.b16 %v7023
    %v7036 = vunpack.c.l.b16 %v7024
    %v7037 = vunpack.c.l.b16 %v7025
    %v7038 = vunpack.c.l.b16 %v7026
    %v7039 = vpack.c.b16 %v7036, %v7035
    %v7040 = vpack.c.b16 %v7038, %v7037
    %v7041 = vrot.slane %v7039, 2
    %v7042 = vrot.slane %v7040, 2
    %v7043 = vsel %vm2916, %v7041, %v7042
    %v7048 = vunpack.c.l.b16 %v7027
    %v7049 = vunpack.c.l.b16 %v7028
    %v7050 = vunpack.c.l.b16 %v7029
    %v7051 = vunpack.c.l.b16 %v7030
    %v7052 = vpack.c.b16 %v7049, %v7048
    %v7053 = vpack.c.b16 %v7051, %v7050
    %v7057 = vsel %vm2256, %v7043, 0
    %v7060 = vsel %vm2256, %v7042, 0
    %7062 = vmatpush.bf16.msra.mxu0 0
    %7063 = vmatpush.bf16.msra.mxu0 0
    %7064 = vmatpush.bf16.msra.mxu0 0
    %7065 = vmatpush.bf16.msra.mxu0 0
    %7066 = vmatpush.bf16.msra.mxu0 0
    %7067 = vmatpush.bf16.msra.mxu0 0
    %7068 = vmatpush.bf16.msra.mxu0 %v7053
    %7069 = vmatpush.bf16.msra.mxu0 %v7052
    %7070 = vmatmul.bf16.gmra.mxu0 %v7057
    %v7071 = vpop.f32.mrf.mxu0
    %v7072 = vadd.f32 0.0, %v7071
    %v7073 = vpop.f32.mrf.mxu0
    %v7074 = vadd.f32 0.0, %v7073
    %7075 = vmatmul.bf16.gmra.mxu0 %v7060
    %v7076 = vpop.f32.mrf.mxu0
    %v7077 = vadd.f32 0.0, %v7076
    %v7078 = vpop.f32.mrf.mxu0
    %7079 = vdwg.mxu0
    %v7080 = vadd.f32 %v7020, %v7072
    %v7081 = vadd.f32 %v7021, %v7074
    %v7082 = vadd.f32 %v7022, %v7077
    %v7083 = vld [vmem:[#allocation4 + $0x10] sm:$0x3]
    %v7084 = vld [vmem:[%s3593] sm:$0xf]
    %v7085 = vld [vmem:[%s3593 + $0x4] sm:$0xf]
    %v7086 = vld [vmem:[%s3593 + $0x8] sm:$0xf]
    %v7087 = vld [vmem:[%s3593 + $0xc] sm:$0xf]
    %v7089 = vunpack.c.l.b16 %v7083
    %v7090 = vpack.c.b16 %v7089, %v7037
    %v7092 = vshrl.u32 %v7039, 16
    %v7094 = vrot.slane %v7092, 2
    %v7095 = vshll.u32 %v7039, 16
    %v7097 = vrot.slane %v7095, 3
    %v7098 = vor.u32 %v7094, %v7097
    %v7100 = vshrl.u32 %v7090, 16
    %v7102 = vrot.slane %v7100, 2
    %v7103 = vshll.u32 %v7090, 16
    %v7105 = vrot.slane %v7103, 3
    %v7106 = vor.u32 %v7102, %v7105
    %v7107 = vsel %vm2984, %v7098, %v7106
    %v7112 = vunpack.c.l.b16 %v7084
    %v7113 = vunpack.c.l.b16 %v7085
    %v7114 = vunpack.c.l.b16 %v7086
    %v7115 = vunpack.c.l.b16 %v7087
    %v7116 = vpack.c.b16 %v7113, %v7112
    %v7117 = vpack.c.b16 %v7115, %v7114
    %v7121 = vsel %vm2256, %v7107, 0
    %v7124 = vsel %vm2256, %v7106, 0
    %7126 = vmatpush.bf16.msra.mxu0 0
    %7127 = vmatpush.bf16.msra.mxu0 0
    %7128 = vmatpush.bf16.msra.mxu0 0
    %7129 = vmatpush.bf16.msra.mxu0 0
    %7130 = vmatpush.bf16.msra.mxu0 0
    %7131 = vmatpush.bf16.msra.mxu0 0
    %7132 = vmatpush.bf16.msra.mxu0 %v7117
    %7133 = vmatpush.bf16.msra.mxu0 %v7116
    %7134 = vmatmul.bf16.gmra.mxu0 %v7121
    %v7135 = vpop.f32.mrf.mxu0
    %v7136 = vadd.f32 0.0, %v7135
    %v7137 = vpop.f32.mrf.mxu0
    %v7138 = vadd.f32 0.0, %v7137
    %7139 = vmatmul.bf16.gmra.mxu0 %v7124
    %v7140 = vpop.f32.mrf.mxu0
    %v7141 = vadd.f32 0.0, %v7140
    %v7142 = vpop.f32.mrf.mxu0
    %7143 = vdwg.mxu0
    %v7144 = vadd.f32 %v7080, %v7136
    %v7145 = vadd.f32 %v7081, %v7138
    %v7146 = vadd.f32 %v7082, %v7141
    %v7147 = vld [vmem:[#allocation4 + $0x4] sm:$0x8]
    %v7148 = vld [vmem:[%s3658] sm:$0xf]
    %v7149 = vld [vmem:[%s3658 + $0x4] sm:$0xf]
    %v7150 = vld [vmem:[%s3658 + $0x8] sm:$0xf]
    %v7151 = vld [vmem:[%s3658 + $0xc] sm:$0xf]
    %v7153 = vunpack.c.l.b16 %v7147
    %v7154 = vpack.c.b16 %v7036, %v7153
    %v7155 = vrot.slane %v7154, 3
    %v7156 = vrot.slane %v7090, 3
    %v7157 = vsel %vm2694, %v7155, %v7156
    %v7162 = vunpack.c.l.b16 %v7148
    %v7163 = vunpack.c.l.b16 %v7149
    %v7164 = vunpack.c.l.b16 %v7150
    %v7165 = vunpack.c.l.b16 %v7151
    %v7166 = vpack.c.b16 %v7163, %v7162
    %v7167 = vpack.c.b16 %v7165, %v7164
    %v7171 = vsel %vm2256, %v7157, 0
    %v7174 = vsel %vm2256, %v7156, 0
    %7176 = vmatpush.bf16.msra.mxu0 0
    %7177 = vmatpush.bf16.msra.mxu0 0
    %7178 = vmatpush.bf16.msra.mxu0 0
    %7179 = vmatpush.bf16.msra.mxu0 0
    %7180 = vmatpush.bf16.msra.mxu0 0
    %7181 = vmatpush.bf16.msra.mxu0 0
    %7182 = vmatpush.bf16.msra.mxu0 %v7167
    %7183 = vmatpush.bf16.msra.mxu0 %v7166
    %7184 = vmatmul.bf16.gmra.mxu0 %v7171
    %v7185 = vpop.f32.mrf.mxu0
    %v7186 = vadd.f32 0.0, %v7185
    %v7187 = vpop.f32.mrf.mxu0
    %v7188 = vadd.f32 0.0, %v7187
    %7189 = vmatmul.bf16.gmra.mxu0 %v7174
    %v7190 = vpop.f32.mrf.mxu0
    %v7191 = vadd.f32 0.0, %v7190
    %v7192 = vpop.f32.mrf.mxu0
    %7193 = vdwg.mxu0
    %v7194 = vadd.f32 %v7144, %v7186
    %v7195 = vadd.f32 %v7145, %v7188
    %v7196 = vadd.f32 %v7146, %v7191
    %v7197 = vadd.f32 %v7194, %v3709
    %v7198 = vadd.f32 %v7195, %v3709
    %v7199 = vadd.f32 %v7196, %v3709
    %v7200 = vmax.f32 %v7197, 0.0
    %v7201 = vmax.f32 %v7198, 0.0
    %v7202 = vmax.f32 %v7199, 0.0
    %v7203 = vadd.f32 %v7200, %v6637
    %v7204 = vadd.f32 %v7201, %v6638
    %v7205 = vadd.f32 %v7202, %v6639
    %v7206 = vpack.c.bf16 %v7204, %v7203
    %v7207 = vpack.c.bf16 %v7205, %v7205
    %v7209 = vsel %vm495, %v7206, 0
    %v7212 = vsel %vm495, %v7207, 0
    %7214 = vmatpush.bf16.msra.mxu0 0
    %7215 = vmatpush.bf16.msra.mxu0 0
    %7216 = vmatpush.bf16.msra.mxu0 0
    %7217 = vmatpush.bf16.msra.mxu0 0
    %7218 = vmatpush.bf16.msra.mxu0 %v3744
    %7219 = vmatpush.bf16.msra.mxu0 %v3743
    %7220 = vmatpush.bf16.msra.mxu0 %v3742
    %7221 = vmatpush.bf16.msra.mxu0 %v3741
    %7222 = vmatmul.bf16.gmra.mxu0 %v7209
    %v7223 = vpop.f32.mrf.mxu0
    %v7224 = vadd.f32 %v3723, %v7223
    %v7225 = vpop.f32.mrf.mxu0
    %v7226 = vadd.f32 %v3723, %v7225
    %7227 = vmatmul.bf16.gmra.mxu0 %v7212
    %v7228 = vpop.f32.mrf.mxu0
    %v7229 = vadd.f32 %v3723, %v7228
    %v7230 = vpop.f32.mrf.mxu0
    %7231 = vdwg.mxu0
    %v7232 = vmax.f32 %v7224, 0.0
    %v7233 = vmax.f32 %v7226, 0.0
    %v7234 = vmax.f32 %v7229, 0.0
    %v7235 = vmul.f32 %v7232, %v3126
    %v7236 = vmul.f32 %v7233, %v3131
    %v7237 = vmul.f32 %v7234, %v3136
    %v7238 = vsel %vm495, %v7235, 0.0
    %v7239 = vsel %vm495, %v7236, 0.0
    %v7240 = vadd.f32 %v7238, %v7239
    %v7241 = vsel %vm3782, %v7237, 0.0
    %v7242 = vadd.f32 %v7240, %v7241
    %v7243 = vrot.slane %v7242, 4
    %v7244 = vadd.f32 %v7242, %v7243
    %v7245 = vrot.slane %v7244, 2
    %v7246 = vadd.f32 %v7244, %v7245
    %v7247 = vrot.slane %v7246, 1
    %v7248 = vadd.f32 %v7246, %v7247
    %v7249 = vmul.f32 %v7248, 0.0625
    %s7250 = scalar_lea.vmem [#allocation5], 1
    %7251 = vst.msk [vmem:[%s7250] sm:$0x1] %vm63, %v7249
    // Predicated region
    $region74: #{tower_representation.1} parent=1 // pred_check
      _
    $region75: #{tower_representation.1} parent=1 // pred_check_branch
      %7253 = sbr.rel (0) target = $region77
    $region76: #{tower_representation.1} parent=1 // pred_region
      %7255 = vsyncadd [#allocation6], 0
      %s7256 = sshll.u32 [#allocation5], 4
      %s7257 = int_to_ptr.vmem [resolvable:$true] %s7256
      %s7258 = sshll.u32 %s18, 4
      %s7259 = int_to_ptr.hbm [resolvable:$true] %s7258
      %7264 = dma.vmem_to_hbm [thread:$0]  %s7257, 32, %s7259, [#allocation6], 16, 16, 1
    $region77: #{tower_representation.1} parent=1 // pred_fallthru
      _
    // Predicated region
    $region78: #{tower_representation.1} parent=1 // pred_check
      _
    $region79: #{tower_representation.1} parent=1 // pred_check_branch
      %7266 = sbr.rel (0) target = $region81
    $region80: #{tower_representation.1} parent=1 // pred_region
      %7268 = dma.done [#allocation6], 32
    $region81: #{tower_representation.1} parent=1 // pred_fallthru
      _
    %7269 = vsyncpa [#allocation6], 1

</llo_original>
